<compile_context>
chip_gen: v5e
topology: v5e:2x2
jax: 0.10.0
libtpu: 0.0.40
codegen_flags: <defaults>
</compile_context>

<pallas_src>
import functools

import jax
import jax.numpy as jnp
from jax import lax
from jax.experimental import pallas as pl
from jax.experimental.pallas import tpu as pltpu


# ----------------------------------------------------------------------------
# Fused kernel: whole bidirectional GRU stack in one pallas_call.
# Ref layout: x_ref, [w_ih_i, w_hh_i, bgx_i, bhn_i]*nlayers, out_ref,
#             gx_r_sc, gx_z_sc, gx_n_sc, h_sc
# ----------------------------------------------------------------------------
def _stacked_bigru_kernel(nlayers, *refs):
    x_ref = refs[0]
    layer_refs = refs[1:1 + 4 * nlayers]
    out_ref = refs[1 + 4 * nlayers]
    gx_r_sc, gx_z_sc, gx_n_sc, h_sc = refs[2 + 4 * nlayers:]

    slen, bsz, _ = x_ref.shape
    H2 = h_sc.shape[-1]          # 2*H : fused [fwd || bwd] hidden width
    H = H2 // 2

    for i in range(nlayers):
        w_ih_ref, w_hh_ref, bgx_ref, bhn_ref = layer_refs[4 * i:4 * i + 4]

        # Loop-invariant loads, hoisted once per layer.  At H=32 all weights
        # fit comfortably in vregs.
        # TODO(synk): for H>=256 read per-gate weights from the VMEM ref
        # inside the loop and use bf16 matmul operands (f32 accumulation).
        wih_r = w_ih_ref[0]      # (Din, 2H)  [W_ih_f_g || W_ih_b_g]
        wih_z = w_ih_ref[1]
        wih_n = w_ih_ref[2]
        whh_r = w_hh_ref[0]      # (2H, 2H)   blockdiag(W_hh_f_g, W_hh_b_g)
        whh_z = w_hh_ref[1]
        whh_n = w_hh_ref[2]
        bgx_r = bgx_ref[0]       # (bsz, 2H)  folded b_ih (+ b_hh for r,z)
        bgx_z = bgx_ref[1]
        bgx_n = bgx_ref[2]
        bhn = bhn_ref[...]       # (bsz, 2H)  b_hh of the n gate

        off_in = (i - 1) * H2    # previous layer's slab inside out_ref

        # ---- Phase 1: in-kernel input projection (off the serial chain) ----
        # gx_g[t][:, :H]  = y[t]        @ W_ih_f_g  (+ folded bias)
        # gx_g[t][:, H:]  = y[slen-1-t] @ W_ih_b_g  (+ folded bias)
        # (backward half stored time-reversed so the recurrence reads gx[t]).
        def fill_body(t, carry):
            if i == 0:
                y_t = x_ref[t]                                  # (bsz, Din)
            else:
                y_t = out_ref[t][:, off_in:off_in + H2]         # (bsz, 2H)
            tb = slen - 1 - t
            for gref, w, b in ((gx_r_sc, wih_r, bgx_r),
                               (gx_z_sc, wih_z, bgx_z),
                               (gx_n_sc, wih_n, bgx_n)):
                res = jnp.dot(y_t, w, preferred_element_type=jnp.float32) + b
                gref[t, :, 0:H] = res[:, 0:H]                   # fwd @ t
                gref[tb, :, H:H2] = res[:, H:H2]                # bwd @ slen-1-t
            return carry

        lax.fori_loop(0, slen, fill_body, 0, unroll=(slen <= 32))

        # ---- Phase 2: fused fwd+bwd recurrence -----------------------------
        # h = [h_f || h_b]; block-diagonal W_hh keeps the chains independent
        # while running each sigmoid/tanh/VPU op once on a (bsz, 2H) slab.
        def step(t, h):
            gh_r = jnp.dot(h, whh_r, preferred_element_type=jnp.float32)
            gh_z = jnp.dot(h, whh_z, preferred_element_type=jnp.float32)
            gh_n = jnp.dot(h, whh_n, preferred_element_type=jnp.float32)
            r = jax.nn.sigmoid(gx_r_sc[t] + gh_r)
            z = jax.nn.sigmoid(gx_z_sc[t] + gh_z)
            n = jnp.tanh(gx_n_sc[t] + r * (gh_n + bhn))
            h_new = n + z * (h - n)              # == (1-z)*n + z*h
            h_sc[t] = h_new                      # one full-width store / step
            return h_new

        h = jnp.zeros((bsz, H2), jnp.float32)    # init_hidden is zeros
        if slen <= 32:
            for t in range(slen):                # full unroll
                h = step(t, h)
        else:
            UNROLL = 8                           # explicit partial unroll
            n_main = slen // UNROLL

            def outer(c, h):
                t0 = pl.multiple_of(c * UNROLL, UNROLL)
                for u in range(UNROLL):
                    h = step(t0 + u, h)
                return h

            h = lax.fori_loop(0, n_main, outer, h)
            for t in range(n_main * UNROLL, slen):
                h = step(t, h)

        # ---- Phase 3: un-scramble + write this layer's concat slab ---------
        # h_sc[t][:, :H] is the fwd output at time t; h_sc[t][:, H:] is the
        # bwd output at true time slen-1-t.
        off_out = i * H2

        def unscramble(t, carry):
            tb = slen - 1 - t
            hf = h_sc[t]
            hb = h_sc[tb]
            out_ref[t, :, off_out:off_out + H] = hf[:, 0:H]
            out_ref[t, :, off_out + H:off_out + H2] = hb[:, H:H2]
            return carry

        lax.fori_loop(0, slen, unscramble, 0, unroll=(slen <= 32))


# ----------------------------------------------------------------------------
# Wrapper: parameter re-layout (one-time prep) + single pallas_call.
# ----------------------------------------------------------------------------
def _prep_layer_params(p, H, bsz):
    """Reformat one layer's PyTorch-style GRU params into the fused layout."""
    H2 = 2 * H
    w_ih, w_hh, bgx = [], [], []
    zH = jnp.zeros((H, H), jnp.float32)
    for g in range(3):                                    # gate order r, z, n
        sl = slice(g * H, (g + 1) * H)
        # Input weights: [W_ih_f_g || W_ih_b_g] -> (Din, 2H)
        w_ih.append(jnp.concatenate([p["w_ih_f"][:, sl], p["w_ih_b"][:, sl]],
                                    axis=1))
        # Recurrent weights: blockdiag(W_hh_f_g, W_hh_b_g) -> (2H, 2H)
        top = jnp.concatenate([p["w_hh_f"][:, sl], zH], axis=1)
        bot = jnp.concatenate([zH, p["w_hh_b"][:, sl]], axis=1)
        w_hh.append(jnp.concatenate([top, bot], axis=0))
        # Folded bias: b_ih (all gates) + b_hh (r, z gates only).
        bf = p["b_ih_f"][sl] + (p["b_hh_f"][sl] if g < 2 else 0.0)
        bb = p["b_ih_b"][sl] + (p["b_hh_b"][sl] if g < 2 else 0.0)
        bgx.append(jnp.concatenate([bf, bb]))
    w_ih = jnp.stack(w_ih)                                          # (3,Din,2H)
    w_hh = jnp.stack(w_hh)                                          # (3,2H,2H)
    bgx = jnp.broadcast_to(jnp.stack(bgx)[:, None, :], (3, bsz, H2))
    bhn = jnp.broadcast_to(
        jnp.concatenate([p["b_hh_f"][2 * H:], p["b_hh_b"][2 * H:]])[None, :],
        (bsz, H2))
    return w_ih, w_hh, bgx, bhn


def _vmem_bytes(shape, itemsize=4):
    """Tile-padded VMEM footprint estimate for one buffer."""
    shape = tuple(int(d) for d in shape)
    if len(shape) < 2:
        shape = (1,) + shape
    lead = 1
    for d in shape[:-2]:
        lead *= d
    sub = -(-shape[-2] // 8) * 8
    lane = -(-shape[-1] // 128) * 128
    return lead * sub * lane * itemsize


def encoder_rnn_forward(x, params, *, num_units, nlayers, bidir, concat,
                        return_last):
    """x: [bsz, slen, input_size] batch-first (PyTorch convention)."""
    assert bidir, "only the bidirectional configuration is implemented"
    if return_last:
        # TODO(synk): return_last path (final hidden per direction).
        raise NotImplementedError
    H = num_units
    H2 = 2 * H
    bsz, slen, _ = x.shape

    # LockedDropout: identity in eval mode. TODO(synk): training-mode mask.
    x_tm = jnp.transpose(x, (1, 0, 2)).astype(jnp.float32)      # time-major

    inputs = [x_tm]
    for i in range(nlayers):
        inputs += list(_prep_layer_params(params[i], H, bsz))

    out_shape = (slen, bsz, nlayers * H2)
    scratch = [pltpu.VMEM((slen, bsz, H2), jnp.float32) for _ in range(4)]

    vmem_est = sum(_vmem_bytes(a.shape) for a in inputs)
    vmem_est += _vmem_bytes(out_shape) + 4 * _vmem_bytes((slen, bsz, H2))
    vmem_limit = int(min(max(2 * vmem_est + (2 << 20), 4 << 20), 64 << 20))
    # TODO(synk): for long sequences that exceed the VMEM budget, chunk the
    # time axis with a carried (h_f, h_b) state instead of full residency.

    vmem = pl.BlockSpec(memory_space=pltpu.MemorySpace.VMEM)
    out_tm = pl.pallas_call(
        functools.partial(_stacked_bigru_kernel, nlayers),
        out_shape=jax.ShapeDtypeStruct(out_shape, jnp.float32),
        in_specs=[vmem] * len(inputs),
        out_specs=vmem,
        scratch_shapes=scratch,
        compiler_params=pltpu.CompilerParams(vmem_limit_bytes=vmem_limit),
    )(*inputs)

    out = jnp.transpose(out_tm, (1, 0, 2))                      # batch-first
    if concat:
        return out
    return out[..., (nlayers - 1) * H2:]


# ----------------------------------------------------------------------------
# Pure-JAX reference (lax.scan) for correctness check.
# ----------------------------------------------------------------------------
def gru_layer_ref(x_tm, w_ih, w_hh, b_ih, b_hh, h0):
    H = h0.shape[-1]

    def step(h, x):
        gx = x @ w_ih + b_ih
        gh = h @ w_hh + b_hh
        r = jax.nn.sigmoid(gx[:, :H] + gh[:, :H])
        z = jax.nn.sigmoid(gx[:, H:2 * H] + gh[:, H:2 * H])
        n = jnp.tanh(gx[:, 2 * H:] + r * gh[:, 2 * H:])
        h_new = (1.0 - z) * n + z * h
        return h_new, h_new

    _, ys = lax.scan(step, h0, x_tm)
    return ys


def encoder_rnn_ref(x, params, *, num_units, nlayers, bidir, concat,
                    return_last):
    bsz, slen, _ = x.shape
    out_tm = jnp.transpose(x, (1, 0, 2)).astype(jnp.float32)
    layer_outputs = []
    for i in range(nlayers):
        p = params[i]
        h0 = jnp.zeros((bsz, num_units), jnp.float32)
        fwd = gru_layer_ref(out_tm, p["w_ih_f"], p["w_hh_f"],
                            p["b_ih_f"], p["b_hh_f"], h0)
        if bidir:
            bwd = gru_layer_ref(out_tm[::-1], p["w_ih_b"], p["w_hh_b"],
                                p["b_ih_b"], p["b_hh_b"], h0)
            out_tm = jnp.concatenate([fwd, bwd[::-1]], axis=-1)
        else:
            out_tm = fwd
        layer_outputs.append(jnp.transpose(out_tm, (1, 0, 2)))
    if concat:
        return jnp.concatenate(layer_outputs, axis=2)
    return layer_outputs[-1]


# ----------------------------------------------------------------------------
# Deterministic parameter construction (weights ~ N(0, 0.1), PyTorch gate
# order r,z,n, weights stored transposed as (in, 3H)).  Biases are small
# nonzero normals so the bias-folding path is exercised by the check.
# ----------------------------------------------------------------------------
def make_params(key, *, input_size, num_units, nlayers, bidir):
    params = []
    dirs = 2 if bidir else 1
    H = num_units
    for i in range(nlayers):
        in_sz = input_size if i == 0 else num_units * dirs
        layer = {}
        for sfx in (["f", "b"] if bidir else ["f"]):
            key, k1, k2, k3, k4 = jax.random.split(key, 5)
            layer[f"w_ih_{sfx}"] = 0.1 * jax.random.normal(
                k1, (in_sz, 3 * H), jnp.float32)
            layer[f"w_hh_{sfx}"] = 0.1 * jax.random.normal(
                k2, (H, 3 * H), jnp.float32)
            layer[f"b_ih_{sfx}"] = 0.1 * jax.random.normal(
                k3, (3 * H,), jnp.float32)
            layer[f"b_hh_{sfx}"] = 0.1 * jax.random.normal(
                k4, (3 * H,), jnp.float32)
        params.append(layer)
    return params


if __name__ == "__main__":
    # Module config: EncoderRNN(input_size=16, num_units=32, nlayers=2,
    #                           concat=True, bidir=True, dropout=0.2,
    #                           return_last=False), eval mode.
    input_size, num_units, nlayers = 16, 32, 2
    bidir, concat, return_last = True, True, False
    bsz, slen = 2, 8

    key = jax.random.PRNGKey(0)
    key, kx = jax.random.split(key)
    x = jax.random.normal(kx, (bsz, slen, input_size), jnp.float32)
    params = make_params(key, input_size=input_size, num_units=num_units,
                         nlayers=nlayers, bidir=bidir)

    fwd = functools.partial(encoder_rnn_forward, num_units=num_units,
                            nlayers=nlayers, bidir=bidir, concat=concat,
                            return_last=return_last)
    out = jax.jit(lambda x: fwd(x, params))(x)
    out = jax.block_until_ready(out)

    expected_feat = nlayers * (2 if bidir else 1) * num_units
    assert out.shape == (bsz, slen, expected_feat), out.shape

    ref = encoder_rnn_ref(x, params, num_units=num_units, nlayers=nlayers,
                          bidir=bidir, concat=concat, return_last=return_last)
    max_err = float(jnp.max(jnp.abs(out - ref)))
    assert max_err < 1e-4, max_err

    print("KERNEL_OK")
</pallas_src>

<mosaic_0001>
module attributes {stable_mosaic.version = 11 : i64} {
  func.func @_stacked_bigru_kernel(%arg0: memref<8x2x16xf32, #tpu.memory_space<vmem>>, %arg1: memref<3x16x64xf32, #tpu.memory_space<vmem>>, %arg2: memref<3x64x64xf32, #tpu.memory_space<vmem>>, %arg3: memref<3x2x64xf32, #tpu.memory_space<vmem>>, %arg4: memref<2x64xf32, #tpu.memory_space<vmem>>, %arg5: memref<3x64x64xf32, #tpu.memory_space<vmem>>, %arg6: memref<3x64x64xf32, #tpu.memory_space<vmem>>, %arg7: memref<3x2x64xf32, #tpu.memory_space<vmem>>, %arg8: memref<2x64xf32, #tpu.memory_space<vmem>>, %arg9: memref<8x2x128xf32, #tpu.memory_space<vmem>>, %arg10: memref<8x2x64xf32, #tpu.memory_space<vmem>>, %arg11: memref<8x2x64xf32, #tpu.memory_space<vmem>>, %arg12: memref<8x2x64xf32, #tpu.memory_space<vmem>>, %arg13: memref<8x2x64xf32, #tpu.memory_space<vmem>>) attributes {dimension_semantics = [], scalar_prefetch = 0 : i64, scratch_operands = 4 : i64, tpu.core_type = #tpu.core_type<tc>} {
    %c0 = arith.constant 0 : index
    %c0_0 = arith.constant 0 : index
    %c0_1 = arith.constant 0 : index
    %0 = vector.load %arg1[%c0, %c0_0, %c0_1] : memref<3x16x64xf32, #tpu.memory_space<vmem>>, vector<1x16x64xf32>
    %1 = vector.shape_cast %0 : vector<1x16x64xf32> to vector<16x64xf32>
    %c1 = arith.constant 1 : index
    %c0_2 = arith.constant 0 : index
    %c0_3 = arith.constant 0 : index
    %2 = vector.load %arg1[%c1, %c0_2, %c0_3] : memref<3x16x64xf32, #tpu.memory_space<vmem>>, vector<1x16x64xf32>
    %3 = vector.shape_cast %2 : vector<1x16x64xf32> to vector<16x64xf32>
    %c2 = arith.constant 2 : index
    %c0_4 = arith.constant 0 : index
    %c0_5 = arith.constant 0 : index
    %4 = vector.load %arg1[%c2, %c0_4, %c0_5] : memref<3x16x64xf32, #tpu.memory_space<vmem>>, vector<1x16x64xf32>
    %5 = vector.shape_cast %4 : vector<1x16x64xf32> to vector<16x64xf32>
    %c0_6 = arith.constant 0 : index
    %c0_7 = arith.constant 0 : index
    %c0_8 = arith.constant 0 : index
    %6 = vector.load %arg2[%c0_6, %c0_7, %c0_8] : memref<3x64x64xf32, #tpu.memory_space<vmem>>, vector<1x64x64xf32>
    %7 = vector.shape_cast %6 : vector<1x64x64xf32> to vector<64x64xf32>
    %c1_9 = arith.constant 1 : index
    %c0_10 = arith.constant 0 : index
    %c0_11 = arith.constant 0 : index
    %8 = vector.load %arg2[%c1_9, %c0_10, %c0_11] : memref<3x64x64xf32, #tpu.memory_space<vmem>>, vector<1x64x64xf32>
    %9 = vector.shape_cast %8 : vector<1x64x64xf32> to vector<64x64xf32>
    %c2_12 = arith.constant 2 : index
    %c0_13 = arith.constant 0 : index
    %c0_14 = arith.constant 0 : index
    %10 = vector.load %arg2[%c2_12, %c0_13, %c0_14] : memref<3x64x64xf32, #tpu.memory_space<vmem>>, vector<1x64x64xf32>
    %11 = vector.shape_cast %10 : vector<1x64x64xf32> to vector<64x64xf32>
    %c0_15 = arith.constant 0 : index
    %c0_16 = arith.constant 0 : index
    %c0_17 = arith.constant 0 : index
    %12 = vector.load %arg3[%c0_15, %c0_16, %c0_17] : memref<3x2x64xf32, #tpu.memory_space<vmem>>, vector<1x2x64xf32>
    %13 = vector.shape_cast %12 : vector<1x2x64xf32> to vector<2x64xf32>
    %c1_18 = arith.constant 1 : index
    %c0_19 = arith.constant 0 : index
    %c0_20 = arith.constant 0 : index
    %14 = vector.load %arg3[%c1_18, %c0_19, %c0_20] : memref<3x2x64xf32, #tpu.memory_space<vmem>>, vector<1x2x64xf32>
    %15 = vector.shape_cast %14 : vector<1x2x64xf32> to vector<2x64xf32>
    %c2_21 = arith.constant 2 : index
    %c0_22 = arith.constant 0 : index
    %c0_23 = arith.constant 0 : index
    %16 = vector.load %arg3[%c2_21, %c0_22, %c0_23] : memref<3x2x64xf32, #tpu.memory_space<vmem>>, vector<1x2x64xf32>
    %17 = vector.shape_cast %16 : vector<1x2x64xf32> to vector<2x64xf32>
    %c0_24 = arith.constant 0 : index
    %c0_25 = arith.constant 0 : index
    %18 = vector.load %arg4[%c0_24, %c0_25] : memref<2x64xf32, #tpu.memory_space<vmem>>, vector<2x64xf32>
    %c0_i32 = arith.constant 0 : i32
    %19 = arith.index_cast %c0_i32 : i32 to index
    %c0_26 = arith.constant 0 : index
    %c0_27 = arith.constant 0 : index
    %20 = vector.load %arg0[%19, %c0_26, %c0_27] : memref<8x2x16xf32, #tpu.memory_space<vmem>>, vector<1x2x16xf32>
    %21 = vector.shape_cast %20 : vector<1x2x16xf32> to vector<2x16xf32>
    %c7_i32 = arith.constant 7 : i32
    %22 = arith.subi %c7_i32, %c0_i32 : i32
    %cst = arith.constant dense<0.000000e+00> : vector<2x64xf32>
    %23 = tpu.matmul %21, %1, %cst {dimension_numbers = #tpu.dot_dimension_numbers<[1], [0], [0], [1], [0, 0, 1, 1], [], []>} : vector<2x16xf32>, vector<16x64xf32>, vector<2x64xf32> -> vector<2x64xf32>
    %24 = arith.addf %23, %13 : vector<2x64xf32>
    %25 = vector.extract_strided_slice %24 {offsets = [0, 0], sizes = [2, 32], strides = [1, 1]} : vector<2x64xf32> to vector<2x32xf32>
    %26 = arith.index_cast %c0_i32 : i32 to index
    %c0_28 = arith.constant 0 : index
    %c0_29 = arith.constant 0 : index
    %27 = vector.load %arg10[%26, %c0_28, %c0_29] : memref<8x2x64xf32, #tpu.memory_space<vmem>>, vector<1x2x32xf32>
    %28 = vector.shape_cast %27 : vector<1x2x32xf32> to vector<2x32xf32>
    %29 = vector.shape_cast %25 : vector<2x32xf32> to vector<1x2x32xf32>
    tpu.vector_store %arg10[%26, %c0_28, %c0_29], %29 {strides = array<i32>} : memref<8x2x64xf32, #tpu.memory_space<vmem>>, vector<1x2x32xf32>,
    %30 = vector.extract_strided_slice %24 {offsets = [0, 32], sizes = [2, 32], strides = [1, 1]} : vector<2x64xf32> to vector<2x32xf32>
    %31 = arith.index_cast %22 : i32 to index
    %c0_30 = arith.constant 0 : index
    %c32 = arith.constant 32 : index
    %32 = vector.load %arg10[%31, %c0_30, %c32] : memref<8x2x64xf32, #tpu.memory_space<vmem>>, vector<1x2x32xf32>
    %33 = vector.shape_cast %32 : vector<1x2x32xf32> to vector<2x32xf32>
    %34 = vector.shape_cast %30 : vector<2x32xf32> to vector<1x2x32xf32>
    tpu.vector_store %arg10[%31, %c0_30, %c32], %34 {strides = array<i32>} : memref<8x2x64xf32, #tpu.memory_space<vmem>>, vector<1x2x32xf32>,
    %cst_31 = arith.constant dense<0.000000e+00> : vector<2x64xf32>
    %35 = tpu.matmul %21, %3, %cst_31 {dimension_numbers = #tpu.dot_dimension_numbers<[1], [0], [0], [1], [0, 0, 1, 1], [], []>} : vector<2x16xf32>, vector<16x64xf32>, vector<2x64xf32> -> vector<2x64xf32>
    %36 = arith.addf %35, %15 : vector<2x64xf32>
    %37 = vector.extract_strided_slice %36 {offsets = [0, 0], sizes = [2, 32], strides = [1, 1]} : vector<2x64xf32> to vector<2x32xf32>
    %38 = arith.index_cast %c0_i32 : i32 to index
    %c0_32 = arith.constant 0 : index
    %c0_33 = arith.constant 0 : index
    %39 = vector.load %arg11[%38, %c0_32, %c0_33] : memref<8x2x64xf32, #tpu.memory_space<vmem>>, vector<1x2x32xf32>
    %40 = vector.shape_cast %39 : vector<1x2x32xf32> to vector<2x32xf32>
    %41 = vector.shape_cast %37 : vector<2x32xf32> to vector<1x2x32xf32>
    tpu.vector_store %arg11[%38, %c0_32, %c0_33], %41 {strides = array<i32>} : memref<8x2x64xf32, #tpu.memory_space<vmem>>, vector<1x2x32xf32>,
    %42 = vector.extract_strided_slice %36 {offsets = [0, 32], sizes = [2, 32], strides = [1, 1]} : vector<2x64xf32> to vector<2x32xf32>
    %43 = arith.index_cast %22 : i32 to index
    %c0_34 = arith.constant 0 : index
    %c32_35 = arith.constant 32 : index
    %44 = vector.load %arg11[%43, %c0_34, %c32_35] : memref<8x2x64xf32, #tpu.memory_space<vmem>>, vector<1x2x32xf32>
    %45 = vector.shape_cast %44 : vector<1x2x32xf32> to vector<2x32xf32>
    %46 = vector.shape_cast %42 : vector<2x32xf32> to vector<1x2x32xf32>
    tpu.vector_store %arg11[%43, %c0_34, %c32_35], %46 {strides = array<i32>} : memref<8x2x64xf32, #tpu.memory_space<vmem>>, vector<1x2x32xf32>,
    %cst_36 = arith.constant dense<0.000000e+00> : vector<2x64xf32>
    %47 = tpu.matmul %21, %5, %cst_36 {dimension_numbers = #tpu.dot_dimension_numbers<[1], [0], [0], [1], [0, 0, 1, 1], [], []>} : vector<2x16xf32>, vector<16x64xf32>, vector<2x64xf32> -> vector<2x64xf32>
    %48 = arith.addf %47, %17 : vector<2x64xf32>
    %49 = vector.extract_strided_slice %48 {offsets = [0, 0], sizes = [2, 32], strides = [1, 1]} : vector<2x64xf32> to vector<2x32xf32>
    %50 = arith.index_cast %c0_i32 : i32 to index
    %c0_37 = arith.constant 0 : index
    %c0_38 = arith.constant 0 : index
    %51 = vector.load %arg12[%50, %c0_37, %c0_38] : memref<8x2x64xf32, #tpu.memory_space<vmem>>, vector<1x2x32xf32>
    %52 = vector.shape_cast %51 : vector<1x2x32xf32> to vector<2x32xf32>
    %53 = vector.shape_cast %49 : vector<2x32xf32> to vector<1x2x32xf32>
    tpu.vector_store %arg12[%50, %c0_37, %c0_38], %53 {strides = array<i32>} : memref<8x2x64xf32, #tpu.memory_space<vmem>>, vector<1x2x32xf32>,
    %54 = vector.extract_strided_slice %48 {offsets = [0, 32], sizes = [2, 32], strides = [1, 1]} : vector<2x64xf32> to vector<2x32xf32>
    %55 = arith.index_cast %22 : i32 to index
    %c0_39 = arith.constant 0 : index
    %c32_40 = arith.constant 32 : index
    %56 = vector.load %arg12[%55, %c0_39, %c32_40] : memref<8x2x64xf32, #tpu.memory_space<vmem>>, vector<1x2x32xf32>
    %57 = vector.shape_cast %56 : vector<1x2x32xf32> to vector<2x32xf32>
    %58 = vector.shape_cast %54 : vector<2x32xf32> to vector<1x2x32xf32>
    tpu.vector_store %arg12[%55, %c0_39, %c32_40], %58 {strides = array<i32>} : memref<8x2x64xf32, #tpu.memory_space<vmem>>, vector<1x2x32xf32>,
    %c1_i32 = arith.constant 1 : i32
    %59 = arith.index_cast %c1_i32 : i32 to index
    %c0_41 = arith.constant 0 : index
    %c0_42 = arith.constant 0 : index
    %60 = vector.load %arg0[%59, %c0_41, %c0_42] : memref<8x2x16xf32, #tpu.memory_space<vmem>>, vector<1x2x16xf32>
    %61 = vector.shape_cast %60 : vector<1x2x16xf32> to vector<2x16xf32>
    %c7_i32_43 = arith.constant 7 : i32
    %62 = arith.subi %c7_i32_43, %c1_i32 : i32
    %cst_44 = arith.constant dense<0.000000e+00> : vector<2x64xf32>
    %63 = tpu.matmul %61, %1, %cst_44 {dimension_numbers = #tpu.dot_dimension_numbers<[1], [0], [0], [1], [0, 0, 1, 1], [], []>} : vector<2x16xf32>, vector<16x64xf32>, vector<2x64xf32> -> vector<2x64xf32>
    %64 = arith.addf %63, %13 : vector<2x64xf32>
    %65 = vector.extract_strided_slice %64 {offsets = [0, 0], sizes = [2, 32], strides = [1, 1]} : vector<2x64xf32> to vector<2x32xf32>
    %66 = arith.index_cast %c1_i32 : i32 to index
    %c0_45 = arith.constant 0 : index
    %c0_46 = arith.constant 0 : index
    %67 = vector.load %arg10[%66, %c0_45, %c0_46] : memref<8x2x64xf32, #tpu.memory_space<vmem>>, vector<1x2x32xf32>
    %68 = vector.shape_cast %67 : vector<1x2x32xf32> to vector<2x32xf32>
    %69 = vector.shape_cast %65 : vector<2x32xf32> to vector<1x2x32xf32>
    tpu.vector_store %arg10[%66, %c0_45, %c0_46], %69 {strides = array<i32>} : memref<8x2x64xf32, #tpu.memory_space<vmem>>, vector<1x2x32xf32>,
    %70 = vector.extract_strided_slice %64 {offsets = [0, 32], sizes = [2, 32], strides = [1, 1]} : vector<2x64xf32> to vector<2x32xf32>
    %71 = arith.index_cast %62 : i32 to index
    %c0_47 = arith.constant 0 : index
    %c32_48 = arith.constant 32 : index
    %72 = vector.load %arg10[%71, %c0_47, %c32_48] : memref<8x2x64xf32, #tpu.memory_space<vmem>>, vector<1x2x32xf32>
    %73 = vector.shape_cast %72 : vector<1x2x32xf32> to vector<2x32xf32>
    %74 = vector.shape_cast %70 : vector<2x32xf32> to vector<1x2x32xf32>
    tpu.vector_store %arg10[%71, %c0_47, %c32_48], %74 {strides = array<i32>} : memref<8x2x64xf32, #tpu.memory_space<vmem>>, vector<1x2x32xf32>,
    %cst_49 = arith.constant dense<0.000000e+00> : vector<2x64xf32>
    %75 = tpu.matmul %61, %3, %cst_49 {dimension_numbers = #tpu.dot_dimension_numbers<[1], [0], [0], [1], [0, 0, 1, 1], [], []>} : vector<2x16xf32>, vector<16x64xf32>, vector<2x64xf32> -> vector<2x64xf32>
    %76 = arith.addf %75, %15 : vector<2x64xf32>
    %77 = vector.extract_strided_slice %76 {offsets = [0, 0], sizes = [2, 32], strides = [1, 1]} : vector<2x64xf32> to vector<2x32xf32>
    %78 = arith.index_cast %c1_i32 : i32 to index
    %c0_50 = arith.constant 0 : index
    %c0_51 = arith.constant 0 : index
    %79 = vector.load %arg11[%78, %c0_50, %c0_51] : memref<8x2x64xf32, #tpu.memory_space<vmem>>, vector<1x2x32xf32>
    %80 = vector.shape_cast %79 : vector<1x2x32xf32> to vector<2x32xf32>
    %81 = vector.shape_cast %77 : vector<2x32xf32> to vector<1x2x32xf32>
    tpu.vector_store %arg11[%78, %c0_50, %c0_51], %81 {strides = array<i32>} : memref<8x2x64xf32, #tpu.memory_space<vmem>>, vector<1x2x32xf32>,
    %82 = vector.extract_strided_slice %76 {offsets = [0, 32], sizes = [2, 32], strides = [1, 1]} : vector<2x64xf32> to vector<2x32xf32>
    %83 = arith.index_cast %62 : i32 to index
    %c0_52 = arith.constant 0 : index
    %c32_53 = arith.constant 32 : index
    %84 = vector.load %arg11[%83, %c0_52, %c32_53] : memref<8x2x64xf32, #tpu.memory_space<vmem>>, vector<1x2x32xf32>
    %85 = vector.shape_cast %84 : vector<1x2x32xf32> to vector<2x32xf32>
    %86 = vector.shape_cast %82 : vector<2x32xf32> to vector<1x2x32xf32>
    tpu.vector_store %arg11[%83, %c0_52, %c32_53], %86 {strides = array<i32>} : memref<8x2x64xf32, #tpu.memory_space<vmem>>, vector<1x2x32xf32>,
    %cst_54 = arith.constant dense<0.000000e+00> : vector<2x64xf32>
    %87 = tpu.matmul %61, %5, %cst_54 {dimension_numbers = #tpu.dot_dimension_numbers<[1], [0], [0], [1], [0, 0, 1, 1], [], []>} : vector<2x16xf32>, vector<16x64xf32>, vector<2x64xf32> -> vector<2x64xf32>
    %88 = arith.addf %87, %17 : vector<2x64xf32>
    %89 = vector.extract_strided_slice %88 {offsets = [0, 0], sizes = [2, 32], strides = [1, 1]} : vector<2x64xf32> to vector<2x32xf32>
    %90 = arith.index_cast %c1_i32 : i32 to index
    %c0_55 = arith.constant 0 : index
    %c0_56 = arith.constant 0 : index
    %91 = vector.load %arg12[%90, %c0_55, %c0_56] : memref<8x2x64xf32, #tpu.memory_space<vmem>>, vector<1x2x32xf32>
    %92 = vector.shape_cast %91 : vector<1x2x32xf32> to vector<2x32xf32>
    %93 = vector.shape_cast %89 : vector<2x32xf32> to vector<1x2x32xf32>
    tpu.vector_store %arg12[%90, %c0_55, %c0_56], %93 {strides = array<i32>} : memref<8x2x64xf32, #tpu.memory_space<vmem>>, vector<1x2x32xf32>,
    %94 = vector.extract_strided_slice %88 {offsets = [0, 32], sizes = [2, 32], strides = [1, 1]} : vector<2x64xf32> to vector<2x32xf32>
    %95 = arith.index_cast %62 : i32 to index
    %c0_57 = arith.constant 0 : index
    %c32_58 = arith.constant 32 : index
    %96 = vector.load %arg12[%95, %c0_57, %c32_58] : memref<8x2x64xf32, #tpu.memory_space<vmem>>, vector<1x2x32xf32>
    %97 = vector.shape_cast %96 : vector<1x2x32xf32> to vector<2x32xf32>
    %98 = vector.shape_cast %94 : vector<2x32xf32> to vector<1x2x32xf32>
    tpu.vector_store %arg12[%95, %c0_57, %c32_58], %98 {strides = array<i32>} : memref<8x2x64xf32, #tpu.memory_space<vmem>>, vector<1x2x32xf32>,
    %c2_i32 = arith.constant 2 : i32
    %99 = arith.index_cast %c2_i32 : i32 to index
    %c0_59 = arith.constant 0 : index
    %c0_60 = arith.constant 0 : index
    %100 = vector.load %arg0[%99, %c0_59, %c0_60] : memref<8x2x16xf32, #tpu.memory_space<vmem>>, vector<1x2x16xf32>
    %101 = vector.shape_cast %100 : vector<1x2x16xf32> to vector<2x16xf32>
    %c7_i32_61 = arith.constant 7 : i32
    %102 = arith.subi %c7_i32_61, %c2_i32 : i32
    %cst_62 = arith.constant dense<0.000000e+00> : vector<2x64xf32>
    %103 = tpu.matmul %101, %1, %cst_62 {dimension_numbers = #tpu.dot_dimension_numbers<[1], [0], [0], [1], [0, 0, 1, 1], [], []>} : vector<2x16xf32>, vector<16x64xf32>, vector<2x64xf32> -> vector<2x64xf32>
    %104 = arith.addf %103, %13 : vector<2x64xf32>
    %105 = vector.extract_strided_slice %104 {offsets = [0, 0], sizes = [2, 32], strides = [1, 1]} : vector<2x64xf32> to vector<2x32xf32>
    %106 = arith.index_cast %c2_i32 : i32 to index
    %c0_63 = arith.constant 0 : index
    %c0_64 = arith.constant 0 : index
    %107 = vector.load %arg10[%106, %c0_63, %c0_64] : memref<8x2x64xf32, #tpu.memory_space<vmem>>, vector<1x2x32xf32>
    %108 = vector.shape_cast %107 : vector<1x2x32xf32> to vector<2x32xf32>
    %109 = vector.shape_cast %105 : vector<2x32xf32> to vector<1x2x32xf32>
    tpu.vector_store %arg10[%106, %c0_63, %c0_64], %109 {strides = array<i32>} : memref<8x2x64xf32, #tpu.memory_space<vmem>>, vector<1x2x32xf32>,
    %110 = vector.extract_strided_slice %104 {offsets = [0, 32], sizes = [2, 32], strides = [1, 1]} : vector<2x64xf32> to vector<2x32xf32>
    %111 = arith.index_cast %102 : i32 to index
    %c0_65 = arith.constant 0 : index
    %c32_66 = arith.constant 32 : index
    %112 = vector.load %arg10[%111, %c0_65, %c32_66] : memref<8x2x64xf32, #tpu.memory_space<vmem>>, vector<1x2x32xf32>
    %113 = vector.shape_cast %112 : vector<1x2x32xf32> to vector<2x32xf32>
    %114 = vector.shape_cast %110 : vector<2x32xf32> to vector<1x2x32xf32>
    tpu.vector_store %arg10[%111, %c0_65, %c32_66], %114 {strides = array<i32>} : memref<8x2x64xf32, #tpu.memory_space<vmem>>, vector<1x2x32xf32>,
    %cst_67 = arith.constant dense<0.000000e+00> : vector<2x64xf32>
    %115 = tpu.matmul %101, %3, %cst_67 {dimension_numbers = #tpu.dot_dimension_numbers<[1], [0], [0], [1], [0, 0, 1, 1], [], []>} : vector<2x16xf32>, vector<16x64xf32>, vector<2x64xf32> -> vector<2x64xf32>
    %116 = arith.addf %115, %15 : vector<2x64xf32>
    %117 = vector.extract_strided_slice %116 {offsets = [0, 0], sizes = [2, 32], strides = [1, 1]} : vector<2x64xf32> to vector<2x32xf32>
    %118 = arith.index_cast %c2_i32 : i32 to index
    %c0_68 = arith.constant 0 : index
    %c0_69 = arith.constant 0 : index
    %119 = vector.load %arg11[%118, %c0_68, %c0_69] : memref<8x2x64xf32, #tpu.memory_space<vmem>>, vector<1x2x32xf32>
    %120 = vector.shape_cast %119 : vector<1x2x32xf32> to vector<2x32xf32>
    %121 = vector.shape_cast %117 : vector<2x32xf32> to vector<1x2x32xf32>
    tpu.vector_store %arg11[%118, %c0_68, %c0_69], %121 {strides = array<i32>} : memref<8x2x64xf32, #tpu.memory_space<vmem>>, vector<1x2x32xf32>,
    %122 = vector.extract_strided_slice %116 {offsets = [0, 32], sizes = [2, 32], strides = [1, 1]} : vector<2x64xf32> to vector<2x32xf32>
    %123 = arith.index_cast %102 : i32 to index
    %c0_70 = arith.constant 0 : index
    %c32_71 = arith.constant 32 : index
    %124 = vector.load %arg11[%123, %c0_70, %c32_71] : memref<8x2x64xf32, #tpu.memory_space<vmem>>, vector<1x2x32xf32>
    %125 = vector.shape_cast %124 : vector<1x2x32xf32> to vector<2x32xf32>
    %126 = vector.shape_cast %122 : vector<2x32xf32> to vector<1x2x32xf32>
    tpu.vector_store %arg11[%123, %c0_70, %c32_71], %126 {strides = array<i32>} : memref<8x2x64xf32, #tpu.memory_space<vmem>>, vector<1x2x32xf32>,
    %cst_72 = arith.constant dense<0.000000e+00> : vector<2x64xf32>
    %127 = tpu.matmul %101, %5, %cst_72 {dimension_numbers = #tpu.dot_dimension_numbers<[1], [0], [0], [1], [0, 0, 1, 1], [], []>} : vector<2x16xf32>, vector<16x64xf32>, vector<2x64xf32> -> vector<2x64xf32>
    %128 = arith.addf %127, %17 : vector<2x64xf32>
    %129 = vector.extract_strided_slice %128 {offsets = [0, 0], sizes = [2, 32], strides = [1, 1]} : vector<2x64xf32> to vector<2x32xf32>
    %130 = arith.index_cast %c2_i32 : i32 to index
    %c0_73 = arith.constant 0 : index
    %c0_74 = arith.constant 0 : index
    %131 = vector.load %arg12[%130, %c0_73, %c0_74] : memref<8x2x64xf32, #tpu.memory_space<vmem>>, vector<1x2x32xf32>
    %132 = vector.shape_cast %131 : vector<1x2x32xf32> to vector<2x32xf32>
    %133 = vector.shape_cast %129 : vector<2x32xf32> to vector<1x2x32xf32>
    tpu.vector_store %arg12[%130, %c0_73, %c0_74], %133 {strides = array<i32>} : memref<8x2x64xf32, #tpu.memory_space<vmem>>, vector<1x2x32xf32>,
    %134 = vector.extract_strided_slice %128 {offsets = [0, 32], sizes = [2, 32], strides = [1, 1]} : vector<2x64xf32> to vector<2x32xf32>
    %135 = arith.index_cast %102 : i32 to index
    %c0_75 = arith.constant 0 : index
    %c32_76 = arith.constant 32 : index
    %136 = vector.load %arg12[%135, %c0_75, %c32_76] : memref<8x2x64xf32, #tpu.memory_space<vmem>>, vector<1x2x32xf32>
    %137 = vector.shape_cast %136 : vector<1x2x32xf32> to vector<2x32xf32>
    %138 = vector.shape_cast %134 : vector<2x32xf32> to vector<1x2x32xf32>
    tpu.vector_store %arg12[%135, %c0_75, %c32_76], %138 {strides = array<i32>} : memref<8x2x64xf32, #tpu.memory_space<vmem>>, vector<1x2x32xf32>,
    %c3_i32 = arith.constant 3 : i32
    %139 = arith.index_cast %c3_i32 : i32 to index
    %c0_77 = arith.constant 0 : index
    %c0_78 = arith.constant 0 : index
    %140 = vector.load %arg0[%139, %c0_77, %c0_78] : memref<8x2x16xf32, #tpu.memory_space<vmem>>, vector<1x2x16xf32>
    %141 = vector.shape_cast %140 : vector<1x2x16xf32> to vector<2x16xf32>
    %c7_i32_79 = arith.constant 7 : i32
    %142 = arith.subi %c7_i32_79, %c3_i32 : i32
    %cst_80 = arith.constant dense<0.000000e+00> : vector<2x64xf32>
    %143 = tpu.matmul %141, %1, %cst_80 {dimension_numbers = #tpu.dot_dimension_numbers<[1], [0], [0], [1], [0, 0, 1, 1], [], []>} : vector<2x16xf32>, vector<16x64xf32>, vector<2x64xf32> -> vector<2x64xf32>
    %144 = arith.addf %143, %13 : vector<2x64xf32>
    %145 = vector.extract_strided_slice %144 {offsets = [0, 0], sizes = [2, 32], strides = [1, 1]} : vector<2x64xf32> to vector<2x32xf32>
    %146 = arith.index_cast %c3_i32 : i32 to index
    %c0_81 = arith.constant 0 : index
    %c0_82 = arith.constant 0 : index
    %147 = vector.load %arg10[%146, %c0_81, %c0_82] : memref<8x2x64xf32, #tpu.memory_space<vmem>>, vector<1x2x32xf32>
    %148 = vector.shape_cast %147 : vector<1x2x32xf32> to vector<2x32xf32>
    %149 = vector.shape_cast %145 : vector<2x32xf32> to vector<1x2x32xf32>
    tpu.vector_store %arg10[%146, %c0_81, %c0_82], %149 {strides = array<i32>} : memref<8x2x64xf32, #tpu.memory_space<vmem>>, vector<1x2x32xf32>,
    %150 = vector.extract_strided_slice %144 {offsets = [0, 32], sizes = [2, 32], strides = [1, 1]} : vector<2x64xf32> to vector<2x32xf32>
    %151 = arith.index_cast %142 : i32 to index
    %c0_83 = arith.constant 0 : index
    %c32_84 = arith.constant 32 : index
    %152 = vector.load %arg10[%151, %c0_83, %c32_84] : memref<8x2x64xf32, #tpu.memory_space<vmem>>, vector<1x2x32xf32>
    %153 = vector.shape_cast %152 : vector<1x2x32xf32> to vector<2x32xf32>
    %154 = vector.shape_cast %150 : vector<2x32xf32> to vector<1x2x32xf32>
    tpu.vector_store %arg10[%151, %c0_83, %c32_84], %154 {strides = array<i32>} : memref<8x2x64xf32, #tpu.memory_space<vmem>>, vector<1x2x32xf32>,
    %cst_85 = arith.constant dense<0.000000e+00> : vector<2x64xf32>
    %155 = tpu.matmul %141, %3, %cst_85 {dimension_numbers = #tpu.dot_dimension_numbers<[1], [0], [0], [1], [0, 0, 1, 1], [], []>} : vector<2x16xf32>, vector<16x64xf32>, vector<2x64xf32> -> vector<2x64xf32>
    %156 = arith.addf %155, %15 : vector<2x64xf32>
    %157 = vector.extract_strided_slice %156 {offsets = [0, 0], sizes = [2, 32], strides = [1, 1]} : vector<2x64xf32> to vector<2x32xf32>
    %158 = arith.index_cast %c3_i32 : i32 to index
    %c0_86 = arith.constant 0 : index
    %c0_87 = arith.constant 0 : index
    %159 = vector.load %arg11[%158, %c0_86, %c0_87] : memref<8x2x64xf32, #tpu.memory_space<vmem>>, vector<1x2x32xf32>
    %160 = vector.shape_cast %159 : vector<1x2x32xf32> to vector<2x32xf32>
    %161 = vector.shape_cast %157 : vector<2x32xf32> to vector<1x2x32xf32>
    tpu.vector_store %arg11[%158, %c0_86, %c0_87], %161 {strides = array<i32>} : memref<8x2x64xf32, #tpu.memory_space<vmem>>, vector<1x2x32xf32>,
    %162 = vector.extract_strided_slice %156 {offsets = [0, 32], sizes = [2, 32], strides = [1, 1]} : vector<2x64xf32> to vector<2x32xf32>
    %163 = arith.index_cast %142 : i32 to index
    %c0_88 = arith.constant 0 : index
    %c32_89 = arith.constant 32 : index
    %164 = vector.load %arg11[%163, %c0_88, %c32_89] : memref<8x2x64xf32, #tpu.memory_space<vmem>>, vector<1x2x32xf32>
    %165 = vector.shape_cast %164 : vector<1x2x32xf32> to vector<2x32xf32>
    %166 = vector.shape_cast %162 : vector<2x32xf32> to vector<1x2x32xf32>
    tpu.vector_store %arg11[%163, %c0_88, %c32_89], %166 {strides = array<i32>} : memref<8x2x64xf32, #tpu.memory_space<vmem>>, vector<1x2x32xf32>,
    %cst_90 = arith.constant dense<0.000000e+00> : vector<2x64xf32>
    %167 = tpu.matmul %141, %5, %cst_90 {dimension_numbers = #tpu.dot_dimension_numbers<[1], [0], [0], [1], [0, 0, 1, 1], [], []>} : vector<2x16xf32>, vector<16x64xf32>, vector<2x64xf32> -> vector<2x64xf32>
    %168 = arith.addf %167, %17 : vector<2x64xf32>
    %169 = vector.extract_strided_slice %168 {offsets = [0, 0], sizes = [2, 32], strides = [1, 1]} : vector<2x64xf32> to vector<2x32xf32>
    %170 = arith.index_cast %c3_i32 : i32 to index
    %c0_91 = arith.constant 0 : index
    %c0_92 = arith.constant 0 : index
    %171 = vector.load %arg12[%170, %c0_91, %c0_92] : memref<8x2x64xf32, #tpu.memory_space<vmem>>, vector<1x2x32xf32>
    %172 = vector.shape_cast %171 : vector<1x2x32xf32> to vector<2x32xf32>
    %173 = vector.shape_cast %169 : vector<2x32xf32> to vector<1x2x32xf32>
    tpu.vector_store %arg12[%170, %c0_91, %c0_92], %173 {strides = array<i32>} : memref<8x2x64xf32, #tpu.memory_space<vmem>>, vector<1x2x32xf32>,
    %174 = vector.extract_strided_slice %168 {offsets = [0, 32], sizes = [2, 32], strides = [1, 1]} : vector<2x64xf32> to vector<2x32xf32>
    %175 = arith.index_cast %142 : i32 to index
    %c0_93 = arith.constant 0 : index
    %c32_94 = arith.constant 32 : index
    %176 = vector.load %arg12[%175, %c0_93, %c32_94] : memref<8x2x64xf32, #tpu.memory_space<vmem>>, vector<1x2x32xf32>
    %177 = vector.shape_cast %176 : vector<1x2x32xf32> to vector<2x32xf32>
    %178 = vector.shape_cast %174 : vector<2x32xf32> to vector<1x2x32xf32>
    tpu.vector_store %arg12[%175, %c0_93, %c32_94], %178 {strides = array<i32>} : memref<8x2x64xf32, #tpu.memory_space<vmem>>, vector<1x2x32xf32>,
    %c4_i32 = arith.constant 4 : i32
    %179 = arith.index_cast %c4_i32 : i32 to index
    %c0_95 = arith.constant 0 : index
    %c0_96 = arith.constant 0 : index
    %180 = vector.load %arg0[%179, %c0_95, %c0_96] : memref<8x2x16xf32, #tpu.memory_space<vmem>>, vector<1x2x16xf32>
    %181 = vector.shape_cast %180 : vector<1x2x16xf32> to vector<2x16xf32>
    %c7_i32_97 = arith.constant 7 : i32
    %182 = arith.subi %c7_i32_97, %c4_i32 : i32
    %cst_98 = arith.constant dense<0.000000e+00> : vector<2x64xf32>
    %183 = tpu.matmul %181, %1, %cst_98 {dimension_numbers = #tpu.dot_dimension_numbers<[1], [0], [0], [1], [0, 0, 1, 1], [], []>} : vector<2x16xf32>, vector<16x64xf32>, vector<2x64xf32> -> vector<2x64xf32>
    %184 = arith.addf %183, %13 : vector<2x64xf32>
    %185 = vector.extract_strided_slice %184 {offsets = [0, 0], sizes = [2, 32], strides = [1, 1]} : vector<2x64xf32> to vector<2x32xf32>
    %186 = arith.index_cast %c4_i32 : i32 to index
    %c0_99 = arith.constant 0 : index
    %c0_100 = arith.constant 0 : index
    %187 = vector.load %arg10[%186, %c0_99, %c0_100] : memref<8x2x64xf32, #tpu.memory_space<vmem>>, vector<1x2x32xf32>
    %188 = vector.shape_cast %187 : vector<1x2x32xf32> to vector<2x32xf32>
    %189 = vector.shape_cast %185 : vector<2x32xf32> to vector<1x2x32xf32>
    tpu.vector_store %arg10[%186, %c0_99, %c0_100], %189 {strides = array<i32>} : memref<8x2x64xf32, #tpu.memory_space<vmem>>, vector<1x2x32xf32>,
    %190 = vector.extract_strided_slice %184 {offsets = [0, 32], sizes = [2, 32], strides = [1, 1]} : vector<2x64xf32> to vector<2x32xf32>
    %191 = arith.index_cast %182 : i32 to index
    %c0_101 = arith.constant 0 : index
    %c32_102 = arith.constant 32 : index
    %192 = vector.load %arg10[%191, %c0_101, %c32_102] : memref<8x2x64xf32, #tpu.memory_space<vmem>>, vector<1x2x32xf32>
    %193 = vector.shape_cast %192 : vector<1x2x32xf32> to vector<2x32xf32>
    %194 = vector.shape_cast %190 : vector<2x32xf32> to vector<1x2x32xf32>
    tpu.vector_store %arg10[%191, %c0_101, %c32_102], %194 {strides = array<i32>} : memref<8x2x64xf32, #tpu.memory_space<vmem>>, vector<1x2x32xf32>,
    %cst_103 = arith.constant dense<0.000000e+00> : vector<2x64xf32>
    %195 = tpu.matmul %181, %3, %cst_103 {dimension_numbers = #tpu.dot_dimension_numbers<[1], [0], [0], [1], [0, 0, 1, 1], [], []>} : vector<2x16xf32>, vector<16x64xf32>, vector<2x64xf32> -> vector<2x64xf32>
    %196 = arith.addf %195, %15 : vector<2x64xf32>
    %197 = vector.extract_strided_slice %196 {offsets = [0, 0], sizes = [2, 32], strides = [1, 1]} : vector<2x64xf32> to vector<2x32xf32>
    %198 = arith.index_cast %c4_i32 : i32 to index
    %c0_104 = arith.constant 0 : index
    %c0_105 = arith.constant 0 : index
    %199 = vector.load %arg11[%198, %c0_104, %c0_105] : memref<8x2x64xf32, #tpu.memory_space<vmem>>, vector<1x2x32xf32>
    %200 = vector.shape_cast %199 : vector<1x2x32xf32> to vector<2x32xf32>
    %201 = vector.shape_cast %197 : vector<2x32xf32> to vector<1x2x32xf32>
    tpu.vector_store %arg11[%198, %c0_104, %c0_105], %201 {strides = array<i32>} : memref<8x2x64xf32, #tpu.memory_space<vmem>>, vector<1x2x32xf32>,
    %202 = vector.extract_strided_slice %196 {offsets = [0, 32], sizes = [2, 32], strides = [1, 1]} : vector<2x64xf32> to vector<2x32xf32>
    %203 = arith.index_cast %182 : i32 to index
    %c0_106 = arith.constant 0 : index
    %c32_107 = arith.constant 32 : index
    %204 = vector.load %arg11[%203, %c0_106, %c32_107] : memref<8x2x64xf32, #tpu.memory_space<vmem>>, vector<1x2x32xf32>
    %205 = vector.shape_cast %204 : vector<1x2x32xf32> to vector<2x32xf32>
    %206 = vector.shape_cast %202 : vector<2x32xf32> to vector<1x2x32xf32>
    tpu.vector_store %arg11[%203, %c0_106, %c32_107], %206 {strides = array<i32>} : memref<8x2x64xf32, #tpu.memory_space<vmem>>, vector<1x2x32xf32>,
    %cst_108 = arith.constant dense<0.000000e+00> : vector<2x64xf32>
    %207 = tpu.matmul %181, %5, %cst_108 {dimension_numbers = #tpu.dot_dimension_numbers<[1], [0], [0], [1], [0, 0, 1, 1], [], []>} : vector<2x16xf32>, vector<16x64xf32>, vector<2x64xf32> -> vector<2x64xf32>
    %208 = arith.addf %207, %17 : vector<2x64xf32>
    %209 = vector.extract_strided_slice %208 {offsets = [0, 0], sizes = [2, 32], strides = [1, 1]} : vector<2x64xf32> to vector<2x32xf32>
    %210 = arith.index_cast %c4_i32 : i32 to index
    %c0_109 = arith.constant 0 : index
    %c0_110 = arith.constant 0 : index
    %211 = vector.load %arg12[%210, %c0_109, %c0_110] : memref<8x2x64xf32, #tpu.memory_space<vmem>>, vector<1x2x32xf32>
    %212 = vector.shape_cast %211 : vector<1x2x32xf32> to vector<2x32xf32>
    %213 = vector.shape_cast %209 : vector<2x32xf32> to vector<1x2x32xf32>
    tpu.vector_store %arg12[%210, %c0_109, %c0_110], %213 {strides = array<i32>} : memref<8x2x64xf32, #tpu.memory_space<vmem>>, vector<1x2x32xf32>,
    %214 = vector.extract_strided_slice %208 {offsets = [0, 32], sizes = [2, 32], strides = [1, 1]} : vector<2x64xf32> to vector<2x32xf32>
    %215 = arith.index_cast %182 : i32 to index
    %c0_111 = arith.constant 0 : index
    %c32_112 = arith.constant 32 : index
    %216 = vector.load %arg12[%215, %c0_111, %c32_112] : memref<8x2x64xf32, #tpu.memory_space<vmem>>, vector<1x2x32xf32>
    %217 = vector.shape_cast %216 : vector<1x2x32xf32> to vector<2x32xf32>
    %218 = vector.shape_cast %214 : vector<2x32xf32> to vector<1x2x32xf32>
    tpu.vector_store %arg12[%215, %c0_111, %c32_112], %218 {strides = array<i32>} : memref<8x2x64xf32, #tpu.memory_space<vmem>>, vector<1x2x32xf32>,
    %c5_i32 = arith.constant 5 : i32
    %219 = arith.index_cast %c5_i32 : i32 to index
    %c0_113 = arith.constant 0 : index
    %c0_114 = arith.constant 0 : index
    %220 = vector.load %arg0[%219, %c0_113, %c0_114] : memref<8x2x16xf32, #tpu.memory_space<vmem>>, vector<1x2x16xf32>
    %221 = vector.shape_cast %220 : vector<1x2x16xf32> to vector<2x16xf32>
    %c7_i32_115 = arith.constant 7 : i32
    %222 = arith.subi %c7_i32_115, %c5_i32 : i32
    %cst_116 = arith.constant dense<0.000000e+00> : vector<2x64xf32>
    %223 = tpu.matmul %221, %1, %cst_116 {dimension_numbers = #tpu.dot_dimension_numbers<[1], [0], [0], [1], [0, 0, 1, 1], [], []>} : vector<2x16xf32>, vector<16x64xf32>, vector<2x64xf32> -> vector<2x64xf32>
    %224 = arith.addf %223, %13 : vector<2x64xf32>
    %225 = vector.extract_strided_slice %224 {offsets = [0, 0], sizes = [2, 32], strides = [1, 1]} : vector<2x64xf32> to vector<2x32xf32>
    %226 = arith.index_cast %c5_i32 : i32 to index
    %c0_117 = arith.constant 0 : index
    %c0_118 = arith.constant 0 : index
    %227 = vector.load %arg10[%226, %c0_117, %c0_118] : memref<8x2x64xf32, #tpu.memory_space<vmem>>, vector<1x2x32xf32>
    %228 = vector.shape_cast %227 : vector<1x2x32xf32> to vector<2x32xf32>
    %229 = vector.shape_cast %225 : vector<2x32xf32> to vector<1x2x32xf32>
    tpu.vector_store %arg10[%226, %c0_117, %c0_118], %229 {strides = array<i32>} : memref<8x2x64xf32, #tpu.memory_space<vmem>>, vector<1x2x32xf32>,
    %230 = vector.extract_strided_slice %224 {offsets = [0, 32], sizes = [2, 32], strides = [1, 1]} : vector<2x64xf32> to vector<2x32xf32>
    %231 = arith.index_cast %222 : i32 to index
    %c0_119 = arith.constant 0 : index
    %c32_120 = arith.constant 32 : index
    %232 = vector.load %arg10[%231, %c0_119, %c32_120] : memref<8x2x64xf32, #tpu.memory_space<vmem>>, vector<1x2x32xf32>
    %233 = vector.shape_cast %232 : vector<1x2x32xf32> to vector<2x32xf32>
    %234 = vector.shape_cast %230 : vector<2x32xf32> to vector<1x2x32xf32>
    tpu.vector_store %arg10[%231, %c0_119, %c32_120], %234 {strides = array<i32>} : memref<8x2x64xf32, #tpu.memory_space<vmem>>, vector<1x2x32xf32>,
    %cst_121 = arith.constant dense<0.000000e+00> : vector<2x64xf32>
    %235 = tpu.matmul %221, %3, %cst_121 {dimension_numbers = #tpu.dot_dimension_numbers<[1], [0], [0], [1], [0, 0, 1, 1], [], []>} : vector<2x16xf32>, vector<16x64xf32>, vector<2x64xf32> -> vector<2x64xf32>
    %236 = arith.addf %235, %15 : vector<2x64xf32>
    %237 = vector.extract_strided_slice %236 {offsets = [0, 0], sizes = [2, 32], strides = [1, 1]} : vector<2x64xf32> to vector<2x32xf32>
    %238 = arith.index_cast %c5_i32 : i32 to index
    %c0_122 = arith.constant 0 : index
    %c0_123 = arith.constant 0 : index
    %239 = vector.load %arg11[%238, %c0_122, %c0_123] : memref<8x2x64xf32, #tpu.memory_space<vmem>>, vector<1x2x32xf32>
    %240 = vector.shape_cast %239 : vector<1x2x32xf32> to vector<2x32xf32>
    %241 = vector.shape_cast %237 : vector<2x32xf32> to vector<1x2x32xf32>
    tpu.vector_store %arg11[%238, %c0_122, %c0_123], %241 {strides = array<i32>} : memref<8x2x64xf32, #tpu.memory_space<vmem>>, vector<1x2x32xf32>,
    %242 = vector.extract_strided_slice %236 {offsets = [0, 32], sizes = [2, 32], strides = [1, 1]} : vector<2x64xf32> to vector<2x32xf32>
    %243 = arith.index_cast %222 : i32 to index
    %c0_124 = arith.constant 0 : index
    %c32_125 = arith.constant 32 : index
    %244 = vector.load %arg11[%243, %c0_124, %c32_125] : memref<8x2x64xf32, #tpu.memory_space<vmem>>, vector<1x2x32xf32>
    %245 = vector.shape_cast %244 : vector<1x2x32xf32> to vector<2x32xf32>
    %246 = vector.shape_cast %242 : vector<2x32xf32> to vector<1x2x32xf32>
    tpu.vector_store %arg11[%243, %c0_124, %c32_125], %246 {strides = array<i32>} : memref<8x2x64xf32, #tpu.memory_space<vmem>>, vector<1x2x32xf32>,
    %cst_126 = arith.constant dense<0.000000e+00> : vector<2x64xf32>
    %247 = tpu.matmul %221, %5, %cst_126 {dimension_numbers = #tpu.dot_dimension_numbers<[1], [0], [0], [1], [0, 0, 1, 1], [], []>} : vector<2x16xf32>, vector<16x64xf32>, vector<2x64xf32> -> vector<2x64xf32>
    %248 = arith.addf %247, %17 : vector<2x64xf32>
    %249 = vector.extract_strided_slice %248 {offsets = [0, 0], sizes = [2, 32], strides = [1, 1]} : vector<2x64xf32> to vector<2x32xf32>
    %250 = arith.index_cast %c5_i32 : i32 to index
    %c0_127 = arith.constant 0 : index
    %c0_128 = arith.constant 0 : index
    %251 = vector.load %arg12[%250, %c0_127, %c0_128] : memref<8x2x64xf32, #tpu.memory_space<vmem>>, vector<1x2x32xf32>
    %252 = vector.shape_cast %251 : vector<1x2x32xf32> to vector<2x32xf32>
    %253 = vector.shape_cast %249 : vector<2x32xf32> to vector<1x2x32xf32>
    tpu.vector_store %arg12[%250, %c0_127, %c0_128], %253 {strides = array<i32>} : memref<8x2x64xf32, #tpu.memory_space<vmem>>, vector<1x2x32xf32>,
    %254 = vector.extract_strided_slice %248 {offsets = [0, 32], sizes = [2, 32], strides = [1, 1]} : vector<2x64xf32> to vector<2x32xf32>
    %255 = arith.index_cast %222 : i32 to index
    %c0_129 = arith.constant 0 : index
    %c32_130 = arith.constant 32 : index
    %256 = vector.load %arg12[%255, %c0_129, %c32_130] : memref<8x2x64xf32, #tpu.memory_space<vmem>>, vector<1x2x32xf32>
    %257 = vector.shape_cast %256 : vector<1x2x32xf32> to vector<2x32xf32>
    %258 = vector.shape_cast %254 : vector<2x32xf32> to vector<1x2x32xf32>
    tpu.vector_store %arg12[%255, %c0_129, %c32_130], %258 {strides = array<i32>} : memref<8x2x64xf32, #tpu.memory_space<vmem>>, vector<1x2x32xf32>,
    %c6_i32 = arith.constant 6 : i32
    %259 = arith.index_cast %c6_i32 : i32 to index
    %c0_131 = arith.constant 0 : index
    %c0_132 = arith.constant 0 : index
    %260 = vector.load %arg0[%259, %c0_131, %c0_132] : memref<8x2x16xf32, #tpu.memory_space<vmem>>, vector<1x2x16xf32>
    %261 = vector.shape_cast %260 : vector<1x2x16xf32> to vector<2x16xf32>
    %c7_i32_133 = arith.constant 7 : i32
    %262 = arith.subi %c7_i32_133, %c6_i32 : i32
    %cst_134 = arith.constant dense<0.000000e+00> : vector<2x64xf32>
    %263 = tpu.matmul %261, %1, %cst_134 {dimension_numbers = #tpu.dot_dimension_numbers<[1], [0], [0], [1], [0, 0, 1, 1], [], []>} : vector<2x16xf32>, vector<16x64xf32>, vector<2x64xf32> -> vector<2x64xf32>
    %264 = arith.addf %263, %13 : vector<2x64xf32>
    %265 = vector.extract_strided_slice %264 {offsets = [0, 0], sizes = [2, 32], strides = [1, 1]} : vector<2x64xf32> to vector<2x32xf32>
    %266 = arith.index_cast %c6_i32 : i32 to index
    %c0_135 = arith.constant 0 : index
    %c0_136 = arith.constant 0 : index
    %267 = vector.load %arg10[%266, %c0_135, %c0_136] : memref<8x2x64xf32, #tpu.memory_space<vmem>>, vector<1x2x32xf32>
    %268 = vector.shape_cast %267 : vector<1x2x32xf32> to vector<2x32xf32>
    %269 = vector.shape_cast %265 : vector<2x32xf32> to vector<1x2x32xf32>
    tpu.vector_store %arg10[%266, %c0_135, %c0_136], %269 {strides = array<i32>} : memref<8x2x64xf32, #tpu.memory_space<vmem>>, vector<1x2x32xf32>,
    %270 = vector.extract_strided_slice %264 {offsets = [0, 32], sizes = [2, 32], strides = [1, 1]} : vector<2x64xf32> to vector<2x32xf32>
    %271 = arith.index_cast %262 : i32 to index
    %c0_137 = arith.constant 0 : index
    %c32_138 = arith.constant 32 : index
    %272 = vector.load %arg10[%271, %c0_137, %c32_138] : memref<8x2x64xf32, #tpu.memory_space<vmem>>, vector<1x2x32xf32>
    %273 = vector.shape_cast %272 : vector<1x2x32xf32> to vector<2x32xf32>
    %274 = vector.shape_cast %270 : vector<2x32xf32> to vector<1x2x32xf32>
    tpu.vector_store %arg10[%271, %c0_137, %c32_138], %274 {strides = array<i32>} : memref<8x2x64xf32, #tpu.memory_space<vmem>>, vector<1x2x32xf32>,
    %cst_139 = arith.constant dense<0.000000e+00> : vector<2x64xf32>
    %275 = tpu.matmul %261, %3, %cst_139 {dimension_numbers = #tpu.dot_dimension_numbers<[1], [0], [0], [1], [0, 0, 1, 1], [], []>} : vector<2x16xf32>, vector<16x64xf32>, vector<2x64xf32> -> vector<2x64xf32>
    %276 = arith.addf %275, %15 : vector<2x64xf32>
    %277 = vector.extract_strided_slice %276 {offsets = [0, 0], sizes = [2, 32], strides = [1, 1]} : vector<2x64xf32> to vector<2x32xf32>
    %278 = arith.index_cast %c6_i32 : i32 to index
    %c0_140 = arith.constant 0 : index
    %c0_141 = arith.constant 0 : index
    %279 = vector.load %arg11[%278, %c0_140, %c0_141] : memref<8x2x64xf32, #tpu.memory_space<vmem>>, vector<1x2x32xf32>
    %280 = vector.shape_cast %279 : vector<1x2x32xf32> to vector<2x32xf32>
    %281 = vector.shape_cast %277 : vector<2x32xf32> to vector<1x2x32xf32>
    tpu.vector_store %arg11[%278, %c0_140, %c0_141], %281 {strides = array<i32>} : memref<8x2x64xf32, #tpu.memory_space<vmem>>, vector<1x2x32xf32>,
    %282 = vector.extract_strided_slice %276 {offsets = [0, 32], sizes = [2, 32], strides = [1, 1]} : vector<2x64xf32> to vector<2x32xf32>
    %283 = arith.index_cast %262 : i32 to index
    %c0_142 = arith.constant 0 : index
    %c32_143 = arith.constant 32 : index
    %284 = vector.load %arg11[%283, %c0_142, %c32_143] : memref<8x2x64xf32, #tpu.memory_space<vmem>>, vector<1x2x32xf32>
    %285 = vector.shape_cast %284 : vector<1x2x32xf32> to vector<2x32xf32>
    %286 = vector.shape_cast %282 : vector<2x32xf32> to vector<1x2x32xf32>
    tpu.vector_store %arg11[%283, %c0_142, %c32_143], %286 {strides = array<i32>} : memref<8x2x64xf32, #tpu.memory_space<vmem>>, vector<1x2x32xf32>,
    %cst_144 = arith.constant dense<0.000000e+00> : vector<2x64xf32>
    %287 = tpu.matmul %261, %5, %cst_144 {dimension_numbers = #tpu.dot_dimension_numbers<[1], [0], [0], [1], [0, 0, 1, 1], [], []>} : vector<2x16xf32>, vector<16x64xf32>, vector<2x64xf32> -> vector<2x64xf32>
    %288 = arith.addf %287, %17 : vector<2x64xf32>
    %289 = vector.extract_strided_slice %288 {offsets = [0, 0], sizes = [2, 32], strides = [1, 1]} : vector<2x64xf32> to vector<2x32xf32>
    %290 = arith.index_cast %c6_i32 : i32 to index
    %c0_145 = arith.constant 0 : index
    %c0_146 = arith.constant 0 : index
    %291 = vector.load %arg12[%290, %c0_145, %c0_146] : memref<8x2x64xf32, #tpu.memory_space<vmem>>, vector<1x2x32xf32>
    %292 = vector.shape_cast %291 : vector<1x2x32xf32> to vector<2x32xf32>
    %293 = vector.shape_cast %289 : vector<2x32xf32> to vector<1x2x32xf32>
    tpu.vector_store %arg12[%290, %c0_145, %c0_146], %293 {strides = array<i32>} : memref<8x2x64xf32, #tpu.memory_space<vmem>>, vector<1x2x32xf32>,
    %294 = vector.extract_strided_slice %288 {offsets = [0, 32], sizes = [2, 32], strides = [1, 1]} : vector<2x64xf32> to vector<2x32xf32>
    %295 = arith.index_cast %262 : i32 to index
    %c0_147 = arith.constant 0 : index
    %c32_148 = arith.constant 32 : index
    %296 = vector.load %arg12[%295, %c0_147, %c32_148] : memref<8x2x64xf32, #tpu.memory_space<vmem>>, vector<1x2x32xf32>
    %297 = vector.shape_cast %296 : vector<1x2x32xf32> to vector<2x32xf32>
    %298 = vector.shape_cast %294 : vector<2x32xf32> to vector<1x2x32xf32>
    tpu.vector_store %arg12[%295, %c0_147, %c32_148], %298 {strides = array<i32>} : memref<8x2x64xf32, #tpu.memory_space<vmem>>, vector<1x2x32xf32>,
    %c7_i32_149 = arith.constant 7 : i32
    %299 = arith.index_cast %c7_i32_149 : i32 to index
    %c0_150 = arith.constant 0 : index
    %c0_151 = arith.constant 0 : index
    %300 = vector.load %arg0[%299, %c0_150, %c0_151] : memref<8x2x16xf32, #tpu.memory_space<vmem>>, vector<1x2x16xf32>
    %301 = vector.shape_cast %300 : vector<1x2x16xf32> to vector<2x16xf32>
    %c7_i32_152 = arith.constant 7 : i32
    %302 = arith.subi %c7_i32_152, %c7_i32_149 : i32
    %cst_153 = arith.constant dense<0.000000e+00> : vector<2x64xf32>
    %303 = tpu.matmul %301, %1, %cst_153 {dimension_numbers = #tpu.dot_dimension_numbers<[1], [0], [0], [1], [0, 0, 1, 1], [], []>} : vector<2x16xf32>, vector<16x64xf32>, vector<2x64xf32> -> vector<2x64xf32>
    %304 = arith.addf %303, %13 : vector<2x64xf32>
    %305 = vector.extract_strided_slice %304 {offsets = [0, 0], sizes = [2, 32], strides = [1, 1]} : vector<2x64xf32> to vector<2x32xf32>
    %306 = arith.index_cast %c7_i32_149 : i32 to index
    %c0_154 = arith.constant 0 : index
    %c0_155 = arith.constant 0 : index
    %307 = vector.load %arg10[%306, %c0_154, %c0_155] : memref<8x2x64xf32, #tpu.memory_space<vmem>>, vector<1x2x32xf32>
    %308 = vector.shape_cast %307 : vector<1x2x32xf32> to vector<2x32xf32>
    %309 = vector.shape_cast %305 : vector<2x32xf32> to vector<1x2x32xf32>
    tpu.vector_store %arg10[%306, %c0_154, %c0_155], %309 {strides = array<i32>} : memref<8x2x64xf32, #tpu.memory_space<vmem>>, vector<1x2x32xf32>,
    %310 = vector.extract_strided_slice %304 {offsets = [0, 32], sizes = [2, 32], strides = [1, 1]} : vector<2x64xf32> to vector<2x32xf32>
    %311 = arith.index_cast %302 : i32 to index
    %c0_156 = arith.constant 0 : index
    %c32_157 = arith.constant 32 : index
    %312 = vector.load %arg10[%311, %c0_156, %c32_157] : memref<8x2x64xf32, #tpu.memory_space<vmem>>, vector<1x2x32xf32>
    %313 = vector.shape_cast %312 : vector<1x2x32xf32> to vector<2x32xf32>
    %314 = vector.shape_cast %310 : vector<2x32xf32> to vector<1x2x32xf32>
    tpu.vector_store %arg10[%311, %c0_156, %c32_157], %314 {strides = array<i32>} : memref<8x2x64xf32, #tpu.memory_space<vmem>>, vector<1x2x32xf32>,
    %cst_158 = arith.constant dense<0.000000e+00> : vector<2x64xf32>
    %315 = tpu.matmul %301, %3, %cst_158 {dimension_numbers = #tpu.dot_dimension_numbers<[1], [0], [0], [1], [0, 0, 1, 1], [], []>} : vector<2x16xf32>, vector<16x64xf32>, vector<2x64xf32> -> vector<2x64xf32>
    %316 = arith.addf %315, %15 : vector<2x64xf32>
    %317 = vector.extract_strided_slice %316 {offsets = [0, 0], sizes = [2, 32], strides = [1, 1]} : vector<2x64xf32> to vector<2x32xf32>
    %318 = arith.index_cast %c7_i32_149 : i32 to index
    %c0_159 = arith.constant 0 : index
    %c0_160 = arith.constant 0 : index
    %319 = vector.load %arg11[%318, %c0_159, %c0_160] : memref<8x2x64xf32, #tpu.memory_space<vmem>>, vector<1x2x32xf32>
    %320 = vector.shape_cast %319 : vector<1x2x32xf32> to vector<2x32xf32>
    %321 = vector.shape_cast %317 : vector<2x32xf32> to vector<1x2x32xf32>
    tpu.vector_store %arg11[%318, %c0_159, %c0_160], %321 {strides = array<i32>} : memref<8x2x64xf32, #tpu.memory_space<vmem>>, vector<1x2x32xf32>,
    %322 = vector.extract_strided_slice %316 {offsets = [0, 32], sizes = [2, 32], strides = [1, 1]} : vector<2x64xf32> to vector<2x32xf32>
    %323 = arith.index_cast %302 : i32 to index
    %c0_161 = arith.constant 0 : index
    %c32_162 = arith.constant 32 : index
    %324 = vector.load %arg11[%323, %c0_161, %c32_162] : memref<8x2x64xf32, #tpu.memory_space<vmem>>, vector<1x2x32xf32>
    %325 = vector.shape_cast %324 : vector<1x2x32xf32> to vector<2x32xf32>
    %326 = vector.shape_cast %322 : vector<2x32xf32> to vector<1x2x32xf32>
    tpu.vector_store %arg11[%323, %c0_161, %c32_162], %326 {strides = array<i32>} : memref<8x2x64xf32, #tpu.memory_space<vmem>>, vector<1x2x32xf32>,
    %cst_163 = arith.constant dense<0.000000e+00> : vector<2x64xf32>
    %327 = tpu.matmul %301, %5, %cst_163 {dimension_numbers = #tpu.dot_dimension_numbers<[1], [0], [0], [1], [0, 0, 1, 1], [], []>} : vector<2x16xf32>, vector<16x64xf32>, vector<2x64xf32> -> vector<2x64xf32>
    %328 = arith.addf %327, %17 : vector<2x64xf32>
    %329 = vector.extract_strided_slice %328 {offsets = [0, 0], sizes = [2, 32], strides = [1, 1]} : vector<2x64xf32> to vector<2x32xf32>
    %330 = arith.index_cast %c7_i32_149 : i32 to index
    %c0_164 = arith.constant 0 : index
    %c0_165 = arith.constant 0 : index
    %331 = vector.load %arg12[%330, %c0_164, %c0_165] : memref<8x2x64xf32, #tpu.memory_space<vmem>>, vector<1x2x32xf32>
    %332 = vector.shape_cast %331 : vector<1x2x32xf32> to vector<2x32xf32>
    %333 = vector.shape_cast %329 : vector<2x32xf32> to vector<1x2x32xf32>
    tpu.vector_store %arg12[%330, %c0_164, %c0_165], %333 {strides = array<i32>} : memref<8x2x64xf32, #tpu.memory_space<vmem>>, vector<1x2x32xf32>,
    %334 = vector.extract_strided_slice %328 {offsets = [0, 32], sizes = [2, 32], strides = [1, 1]} : vector<2x64xf32> to vector<2x32xf32>
    %335 = arith.index_cast %302 : i32 to index
    %c0_166 = arith.constant 0 : index
    %c32_167 = arith.constant 32 : index
    %336 = vector.load %arg12[%335, %c0_166, %c32_167] : memref<8x2x64xf32, #tpu.memory_space<vmem>>, vector<1x2x32xf32>
    %337 = vector.shape_cast %336 : vector<1x2x32xf32> to vector<2x32xf32>
    %338 = vector.shape_cast %334 : vector<2x32xf32> to vector<1x2x32xf32>
    tpu.vector_store %arg12[%335, %c0_166, %c32_167], %338 {strides = array<i32>} : memref<8x2x64xf32, #tpu.memory_space<vmem>>, vector<1x2x32xf32>,
    %c8_i32 = arith.constant 8 : i32
    %cst_168 = arith.constant 0.000000e+00 : f32
    %339 = vector.broadcast %cst_168 : f32 to vector<2x64xf32>
    %cst_169 = arith.constant dense<0.000000e+00> : vector<2x64xf32>
    %340 = tpu.matmul %339, %7, %cst_169 {dimension_numbers = #tpu.dot_dimension_numbers<[1], [0], [0], [1], [0, 0, 1, 1], [], []>} : vector<2x64xf32>, vector<64x64xf32>, vector<2x64xf32> -> vector<2x64xf32>
    %cst_170 = arith.constant dense<0.000000e+00> : vector<2x64xf32>
    %341 = tpu.matmul %339, %9, %cst_170 {dimension_numbers = #tpu.dot_dimension_numbers<[1], [0], [0], [1], [0, 0, 1, 1], [], []>} : vector<2x64xf32>, vector<64x64xf32>, vector<2x64xf32> -> vector<2x64xf32>
    %cst_171 = arith.constant dense<0.000000e+00> : vector<2x64xf32>
    %342 = tpu.matmul %339, %11, %cst_171 {dimension_numbers = #tpu.dot_dimension_numbers<[1], [0], [0], [1], [0, 0, 1, 1], [], []>} : vector<2x64xf32>, vector<64x64xf32>, vector<2x64xf32> -> vector<2x64xf32>
    %c0_172 = arith.constant 0 : index
    %c0_173 = arith.constant 0 : index
    %c0_174 = arith.constant 0 : index
    %343 = vector.load %arg10[%c0_172, %c0_173, %c0_174] : memref<8x2x64xf32, #tpu.memory_space<vmem>>, vector<1x2x64xf32>
    %344 = vector.shape_cast %343 : vector<1x2x64xf32> to vector<2x64xf32>
    %345 = arith.addf %344, %340 : vector<2x64xf32>
    %346 = arith.negf %345 : vector<2x64xf32>
    %347 = math.exp %346 : vector<2x64xf32>
    %cst_175 = arith.constant 1.000000e+00 : f32
    %348 = vector.broadcast %cst_175 : f32 to vector<2x64xf32>
    %349 = arith.addf %348, %347 : vector<2x64xf32>
    %350 = arith.divf %348, %349 : vector<2x64xf32>
    %c0_176 = arith.constant 0 : index
    %c0_177 = arith.constant 0 : index
    %c0_178 = arith.constant 0 : index
    %351 = vector.load %arg11[%c0_176, %c0_177, %c0_178] : memref<8x2x64xf32, #tpu.memory_space<vmem>>, vector<1x2x64xf32>
    %352 = vector.shape_cast %351 : vector<1x2x64xf32> to vector<2x64xf32>
    %353 = arith.addf %352, %341 : vector<2x64xf32>
    %354 = arith.negf %353 : vector<2x64xf32>
    %355 = math.exp %354 : vector<2x64xf32>
    %cst_179 = arith.constant 1.000000e+00 : f32
    %356 = vector.broadcast %cst_179 : f32 to vector<2x64xf32>
    %357 = arith.addf %356, %355 : vector<2x64xf32>
    %358 = arith.divf %356, %357 : vector<2x64xf32>
    %c0_180 = arith.constant 0 : index
    %c0_181 = arith.constant 0 : index
    %c0_182 = arith.constant 0 : index
    %359 = vector.load %arg12[%c0_180, %c0_181, %c0_182] : memref<8x2x64xf32, #tpu.memory_space<vmem>>, vector<1x2x64xf32>
    %360 = vector.shape_cast %359 : vector<1x2x64xf32> to vector<2x64xf32>
    %361 = arith.addf %342, %18 : vector<2x64xf32>
    %362 = arith.mulf %350, %361 : vector<2x64xf32>
    %363 = arith.addf %360, %362 : vector<2x64xf32>
    %364 = math.tanh %363 : vector<2x64xf32>
    %365 = arith.subf %339, %364 : vector<2x64xf32>
    %366 = arith.mulf %358, %365 : vector<2x64xf32>
    %367 = arith.addf %364, %366 : vector<2x64xf32>
    %c0_183 = arith.constant 0 : index
    %c0_184 = arith.constant 0 : index
    %c0_185 = arith.constant 0 : index
    %368 = vector.load %arg13[%c0_183, %c0_184, %c0_185] : memref<8x2x64xf32, #tpu.memory_space<vmem>>, vector<1x2x64xf32>
    %369 = vector.shape_cast %368 : vector<1x2x64xf32> to vector<2x64xf32>
    %370 = vector.shape_cast %367 : vector<2x64xf32> to vector<1x2x64xf32>
    tpu.vector_store %arg13[%c0_183, %c0_184, %c0_185], %370 {strides = array<i32>} : memref<8x2x64xf32, #tpu.memory_space<vmem>>, vector<1x2x64xf32>,
    %cst_186 = arith.constant dense<0.000000e+00> : vector<2x64xf32>
    %371 = tpu.matmul %367, %7, %cst_186 {dimension_numbers = #tpu.dot_dimension_numbers<[1], [0], [0], [1], [0, 0, 1, 1], [], []>} : vector<2x64xf32>, vector<64x64xf32>, vector<2x64xf32> -> vector<2x64xf32>
    %cst_187 = arith.constant dense<0.000000e+00> : vector<2x64xf32>
    %372 = tpu.matmul %367, %9, %cst_187 {dimension_numbers = #tpu.dot_dimension_numbers<[1], [0], [0], [1], [0, 0, 1, 1], [], []>} : vector<2x64xf32>, vector<64x64xf32>, vector<2x64xf32> -> vector<2x64xf32>
    %cst_188 = arith.constant dense<0.000000e+00> : vector<2x64xf32>
    %373 = tpu.matmul %367, %11, %cst_188 {dimension_numbers = #tpu.dot_dimension_numbers<[1], [0], [0], [1], [0, 0, 1, 1], [], []>} : vector<2x64xf32>, vector<64x64xf32>, vector<2x64xf32> -> vector<2x64xf32>
    %c1_189 = arith.constant 1 : index
    %c0_190 = arith.constant 0 : index
    %c0_191 = arith.constant 0 : index
    %374 = vector.load %arg10[%c1_189, %c0_190, %c0_191] : memref<8x2x64xf32, #tpu.memory_space<vmem>>, vector<1x2x64xf32>
    %375 = vector.shape_cast %374 : vector<1x2x64xf32> to vector<2x64xf32>
    %376 = arith.addf %375, %371 : vector<2x64xf32>
    %377 = arith.negf %376 : vector<2x64xf32>
    %378 = math.exp %377 : vector<2x64xf32>
    %cst_192 = arith.constant 1.000000e+00 : f32
    %379 = vector.broadcast %cst_192 : f32 to vector<2x64xf32>
    %380 = arith.addf %379, %378 : vector<2x64xf32>
    %381 = arith.divf %379, %380 : vector<2x64xf32>
    %c1_193 = arith.constant 1 : index
    %c0_194 = arith.constant 0 : index
    %c0_195 = arith.constant 0 : index
    %382 = vector.load %arg11[%c1_193, %c0_194, %c0_195] : memref<8x2x64xf32, #tpu.memory_space<vmem>>, vector<1x2x64xf32>
    %383 = vector.shape_cast %382 : vector<1x2x64xf32> to vector<2x64xf32>
    %384 = arith.addf %383, %372 : vector<2x64xf32>
    %385 = arith.negf %384 : vector<2x64xf32>
    %386 = math.exp %385 : vector<2x64xf32>
    %cst_196 = arith.constant 1.000000e+00 : f32
    %387 = vector.broadcast %cst_196 : f32 to vector<2x64xf32>
    %388 = arith.addf %387, %386 : vector<2x64xf32>
    %389 = arith.divf %387, %388 : vector<2x64xf32>
    %c1_197 = arith.constant 1 : index
    %c0_198 = arith.constant 0 : index
    %c0_199 = arith.constant 0 : index
    %390 = vector.load %arg12[%c1_197, %c0_198, %c0_199] : memref<8x2x64xf32, #tpu.memory_space<vmem>>, vector<1x2x64xf32>
    %391 = vector.shape_cast %390 : vector<1x2x64xf32> to vector<2x64xf32>
    %392 = arith.addf %373, %18 : vector<2x64xf32>
    %393 = arith.mulf %381, %392 : vector<2x64xf32>
    %394 = arith.addf %391, %393 : vector<2x64xf32>
    %395 = math.tanh %394 : vector<2x64xf32>
    %396 = arith.subf %367, %395 : vector<2x64xf32>
    %397 = arith.mulf %389, %396 : vector<2x64xf32>
    %398 = arith.addf %395, %397 : vector<2x64xf32>
    %c1_200 = arith.constant 1 : index
    %c0_201 = arith.constant 0 : index
    %c0_202 = arith.constant 0 : index
    %399 = vector.load %arg13[%c1_200, %c0_201, %c0_202] : memref<8x2x64xf32, #tpu.memory_space<vmem>>, vector<1x2x64xf32>
    %400 = vector.shape_cast %399 : vector<1x2x64xf32> to vector<2x64xf32>
    %401 = vector.shape_cast %398 : vector<2x64xf32> to vector<1x2x64xf32>
    tpu.vector_store %arg13[%c1_200, %c0_201, %c0_202], %401 {strides = array<i32>} : memref<8x2x64xf32, #tpu.memory_space<vmem>>, vector<1x2x64xf32>,
    %cst_203 = arith.constant dense<0.000000e+00> : vector<2x64xf32>
    %402 = tpu.matmul %398, %7, %cst_203 {dimension_numbers = #tpu.dot_dimension_numbers<[1], [0], [0], [1], [0, 0, 1, 1], [], []>} : vector<2x64xf32>, vector<64x64xf32>, vector<2x64xf32> -> vector<2x64xf32>
    %cst_204 = arith.constant dense<0.000000e+00> : vector<2x64xf32>
    %403 = tpu.matmul %398, %9, %cst_204 {dimension_numbers = #tpu.dot_dimension_numbers<[1], [0], [0], [1], [0, 0, 1, 1], [], []>} : vector<2x64xf32>, vector<64x64xf32>, vector<2x64xf32> -> vector<2x64xf32>
    %cst_205 = arith.constant dense<0.000000e+00> : vector<2x64xf32>
    %404 = tpu.matmul %398, %11, %cst_205 {dimension_numbers = #tpu.dot_dimension_numbers<[1], [0], [0], [1], [0, 0, 1, 1], [], []>} : vector<2x64xf32>, vector<64x64xf32>, vector<2x64xf32> -> vector<2x64xf32>
    %c2_206 = arith.constant 2 : index
    %c0_207 = arith.constant 0 : index
    %c0_208 = arith.constant 0 : index
    %405 = vector.load %arg10[%c2_206, %c0_207, %c0_208] : memref<8x2x64xf32, #tpu.memory_space<vmem>>, vector<1x2x64xf32>
    %406 = vector.shape_cast %405 : vector<1x2x64xf32> to vector<2x64xf32>
    %407 = arith.addf %406, %402 : vector<2x64xf32>
    %408 = arith.negf %407 : vector<2x64xf32>
    %409 = math.exp %408 : vector<2x64xf32>
    %cst_209 = arith.constant 1.000000e+00 : f32
    %410 = vector.broadcast %cst_209 : f32 to vector<2x64xf32>
    %411 = arith.addf %410, %409 : vector<2x64xf32>
    %412 = arith.divf %410, %411 : vector<2x64xf32>
    %c2_210 = arith.constant 2 : index
    %c0_211 = arith.constant 0 : index
    %c0_212 = arith.constant 0 : index
    %413 = vector.load %arg11[%c2_210, %c0_211, %c0_212] : memref<8x2x64xf32, #tpu.memory_space<vmem>>, vector<1x2x64xf32>
    %414 = vector.shape_cast %413 : vector<1x2x64xf32> to vector<2x64xf32>
    %415 = arith.addf %414, %403 : vector<2x64xf32>
    %416 = arith.negf %415 : vector<2x64xf32>
    %417 = math.exp %416 : vector<2x64xf32>
    %cst_213 = arith.constant 1.000000e+00 : f32
    %418 = vector.broadcast %cst_213 : f32 to vector<2x64xf32>
    %419 = arith.addf %418, %417 : vector<2x64xf32>
    %420 = arith.divf %418, %419 : vector<2x64xf32>
    %c2_214 = arith.constant 2 : index
    %c0_215 = arith.constant 0 : index
    %c0_216 = arith.constant 0 : index
    %421 = vector.load %arg12[%c2_214, %c0_215, %c0_216] : memref<8x2x64xf32, #tpu.memory_space<vmem>>, vector<1x2x64xf32>
    %422 = vector.shape_cast %421 : vector<1x2x64xf32> to vector<2x64xf32>
    %423 = arith.addf %404, %18 : vector<2x64xf32>
    %424 = arith.mulf %412, %423 : vector<2x64xf32>
    %425 = arith.addf %422, %424 : vector<2x64xf32>
    %426 = math.tanh %425 : vector<2x64xf32>
    %427 = arith.subf %398, %426 : vector<2x64xf32>
    %428 = arith.mulf %420, %427 : vector<2x64xf32>
    %429 = arith.addf %426, %428 : vector<2x64xf32>
    %c2_217 = arith.constant 2 : index
    %c0_218 = arith.constant 0 : index
    %c0_219 = arith.constant 0 : index
    %430 = vector.load %arg13[%c2_217, %c0_218, %c0_219] : memref<8x2x64xf32, #tpu.memory_space<vmem>>, vector<1x2x64xf32>
    %431 = vector.shape_cast %430 : vector<1x2x64xf32> to vector<2x64xf32>
    %432 = vector.shape_cast %429 : vector<2x64xf32> to vector<1x2x64xf32>
    tpu.vector_store %arg13[%c2_217, %c0_218, %c0_219], %432 {strides = array<i32>} : memref<8x2x64xf32, #tpu.memory_space<vmem>>, vector<1x2x64xf32>,
    %cst_220 = arith.constant dense<0.000000e+00> : vector<2x64xf32>
    %433 = tpu.matmul %429, %7, %cst_220 {dimension_numbers = #tpu.dot_dimension_numbers<[1], [0], [0], [1], [0, 0, 1, 1], [], []>} : vector<2x64xf32>, vector<64x64xf32>, vector<2x64xf32> -> vector<2x64xf32>
    %cst_221 = arith.constant dense<0.000000e+00> : vector<2x64xf32>
    %434 = tpu.matmul %429, %9, %cst_221 {dimension_numbers = #tpu.dot_dimension_numbers<[1], [0], [0], [1], [0, 0, 1, 1], [], []>} : vector<2x64xf32>, vector<64x64xf32>, vector<2x64xf32> -> vector<2x64xf32>
    %cst_222 = arith.constant dense<0.000000e+00> : vector<2x64xf32>
    %435 = tpu.matmul %429, %11, %cst_222 {dimension_numbers = #tpu.dot_dimension_numbers<[1], [0], [0], [1], [0, 0, 1, 1], [], []>} : vector<2x64xf32>, vector<64x64xf32>, vector<2x64xf32> -> vector<2x64xf32>
    %c3 = arith.constant 3 : index
    %c0_223 = arith.constant 0 : index
    %c0_224 = arith.constant 0 : index
    %436 = vector.load %arg10[%c3, %c0_223, %c0_224] : memref<8x2x64xf32, #tpu.memory_space<vmem>>, vector<1x2x64xf32>
    %437 = vector.shape_cast %436 : vector<1x2x64xf32> to vector<2x64xf32>
    %438 = arith.addf %437, %433 : vector<2x64xf32>
    %439 = arith.negf %438 : vector<2x64xf32>
    %440 = math.exp %439 : vector<2x64xf32>
    %cst_225 = arith.constant 1.000000e+00 : f32
    %441 = vector.broadcast %cst_225 : f32 to vector<2x64xf32>
    %442 = arith.addf %441, %440 : vector<2x64xf32>
    %443 = arith.divf %441, %442 : vector<2x64xf32>
    %c3_226 = arith.constant 3 : index
    %c0_227 = arith.constant 0 : index
    %c0_228 = arith.constant 0 : index
    %444 = vector.load %arg11[%c3_226, %c0_227, %c0_228] : memref<8x2x64xf32, #tpu.memory_space<vmem>>, vector<1x2x64xf32>
    %445 = vector.shape_cast %444 : vector<1x2x64xf32> to vector<2x64xf32>
    %446 = arith.addf %445, %434 : vector<2x64xf32>
    %447 = arith.negf %446 : vector<2x64xf32>
    %448 = math.exp %447 : vector<2x64xf32>
    %cst_229 = arith.constant 1.000000e+00 : f32
    %449 = vector.broadcast %cst_229 : f32 to vector<2x64xf32>
    %450 = arith.addf %449, %448 : vector<2x64xf32>
    %451 = arith.divf %449, %450 : vector<2x64xf32>
    %c3_230 = arith.constant 3 : index
    %c0_231 = arith.constant 0 : index
    %c0_232 = arith.constant 0 : index
    %452 = vector.load %arg12[%c3_230, %c0_231, %c0_232] : memref<8x2x64xf32, #tpu.memory_space<vmem>>, vector<1x2x64xf32>
    %453 = vector.shape_cast %452 : vector<1x2x64xf32> to vector<2x64xf32>
    %454 = arith.addf %435, %18 : vector<2x64xf32>
    %455 = arith.mulf %443, %454 : vector<2x64xf32>
    %456 = arith.addf %453, %455 : vector<2x64xf32>
    %457 = math.tanh %456 : vector<2x64xf32>
    %458 = arith.subf %429, %457 : vector<2x64xf32>
    %459 = arith.mulf %451, %458 : vector<2x64xf32>
    %460 = arith.addf %457, %459 : vector<2x64xf32>
    %c3_233 = arith.constant 3 : index
    %c0_234 = arith.constant 0 : index
    %c0_235 = arith.constant 0 : index
    %461 = vector.load %arg13[%c3_233, %c0_234, %c0_235] : memref<8x2x64xf32, #tpu.memory_space<vmem>>, vector<1x2x64xf32>
    %462 = vector.shape_cast %461 : vector<1x2x64xf32> to vector<2x64xf32>
    %463 = vector.shape_cast %460 : vector<2x64xf32> to vector<1x2x64xf32>
    tpu.vector_store %arg13[%c3_233, %c0_234, %c0_235], %463 {strides = array<i32>} : memref<8x2x64xf32, #tpu.memory_space<vmem>>, vector<1x2x64xf32>,
    %cst_236 = arith.constant dense<0.000000e+00> : vector<2x64xf32>
    %464 = tpu.matmul %460, %7, %cst_236 {dimension_numbers = #tpu.dot_dimension_numbers<[1], [0], [0], [1], [0, 0, 1, 1], [], []>} : vector<2x64xf32>, vector<64x64xf32>, vector<2x64xf32> -> vector<2x64xf32>
    %cst_237 = arith.constant dense<0.000000e+00> : vector<2x64xf32>
    %465 = tpu.matmul %460, %9, %cst_237 {dimension_numbers = #tpu.dot_dimension_numbers<[1], [0], [0], [1], [0, 0, 1, 1], [], []>} : vector<2x64xf32>, vector<64x64xf32>, vector<2x64xf32> -> vector<2x64xf32>
    %cst_238 = arith.constant dense<0.000000e+00> : vector<2x64xf32>
    %466 = tpu.matmul %460, %11, %cst_238 {dimension_numbers = #tpu.dot_dimension_numbers<[1], [0], [0], [1], [0, 0, 1, 1], [], []>} : vector<2x64xf32>, vector<64x64xf32>, vector<2x64xf32> -> vector<2x64xf32>
    %c4 = arith.constant 4 : index
    %c0_239 = arith.constant 0 : index
    %c0_240 = arith.constant 0 : index
    %467 = vector.load %arg10[%c4, %c0_239, %c0_240] : memref<8x2x64xf32, #tpu.memory_space<vmem>>, vector<1x2x64xf32>
    %468 = vector.shape_cast %467 : vector<1x2x64xf32> to vector<2x64xf32>
    %469 = arith.addf %468, %464 : vector<2x64xf32>
    %470 = arith.negf %469 : vector<2x64xf32>
    %471 = math.exp %470 : vector<2x64xf32>
    %cst_241 = arith.constant 1.000000e+00 : f32
    %472 = vector.broadcast %cst_241 : f32 to vector<2x64xf32>
    %473 = arith.addf %472, %471 : vector<2x64xf32>
    %474 = arith.divf %472, %473 : vector<2x64xf32>
    %c4_242 = arith.constant 4 : index
    %c0_243 = arith.constant 0 : index
    %c0_244 = arith.constant 0 : index
    %475 = vector.load %arg11[%c4_242, %c0_243, %c0_244] : memref<8x2x64xf32, #tpu.memory_space<vmem>>, vector<1x2x64xf32>
    %476 = vector.shape_cast %475 : vector<1x2x64xf32> to vector<2x64xf32>
    %477 = arith.addf %476, %465 : vector<2x64xf32>
    %478 = arith.negf %477 : vector<2x64xf32>
    %479 = math.exp %478 : vector<2x64xf32>
    %cst_245 = arith.constant 1.000000e+00 : f32
    %480 = vector.broadcast %cst_245 : f32 to vector<2x64xf32>
    %481 = arith.addf %480, %479 : vector<2x64xf32>
    %482 = arith.divf %480, %481 : vector<2x64xf32>
    %c4_246 = arith.constant 4 : index
    %c0_247 = arith.constant 0 : index
    %c0_248 = arith.constant 0 : index
    %483 = vector.load %arg12[%c4_246, %c0_247, %c0_248] : memref<8x2x64xf32, #tpu.memory_space<vmem>>, vector<1x2x64xf32>
    %484 = vector.shape_cast %483 : vector<1x2x64xf32> to vector<2x64xf32>
    %485 = arith.addf %466, %18 : vector<2x64xf32>
    %486 = arith.mulf %474, %485 : vector<2x64xf32>
    %487 = arith.addf %484, %486 : vector<2x64xf32>
    %488 = math.tanh %487 : vector<2x64xf32>
    %489 = arith.subf %460, %488 : vector<2x64xf32>
    %490 = arith.mulf %482, %489 : vector<2x64xf32>
    %491 = arith.addf %488, %490 : vector<2x64xf32>
    %c4_249 = arith.constant 4 : index
    %c0_250 = arith.constant 0 : index
    %c0_251 = arith.constant 0 : index
    %492 = vector.load %arg13[%c4_249, %c0_250, %c0_251] : memref<8x2x64xf32, #tpu.memory_space<vmem>>, vector<1x2x64xf32>
    %493 = vector.shape_cast %492 : vector<1x2x64xf32> to vector<2x64xf32>
    %494 = vector.shape_cast %491 : vector<2x64xf32> to vector<1x2x64xf32>
    tpu.vector_store %arg13[%c4_249, %c0_250, %c0_251], %494 {strides = array<i32>} : memref<8x2x64xf32, #tpu.memory_space<vmem>>, vector<1x2x64xf32>,
    %cst_252 = arith.constant dense<0.000000e+00> : vector<2x64xf32>
    %495 = tpu.matmul %491, %7, %cst_252 {dimension_numbers = #tpu.dot_dimension_numbers<[1], [0], [0], [1], [0, 0, 1, 1], [], []>} : vector<2x64xf32>, vector<64x64xf32>, vector<2x64xf32> -> vector<2x64xf32>
    %cst_253 = arith.constant dense<0.000000e+00> : vector<2x64xf32>
    %496 = tpu.matmul %491, %9, %cst_253 {dimension_numbers = #tpu.dot_dimension_numbers<[1], [0], [0], [1], [0, 0, 1, 1], [], []>} : vector<2x64xf32>, vector<64x64xf32>, vector<2x64xf32> -> vector<2x64xf32>
    %cst_254 = arith.constant dense<0.000000e+00> : vector<2x64xf32>
    %497 = tpu.matmul %491, %11, %cst_254 {dimension_numbers = #tpu.dot_dimension_numbers<[1], [0], [0], [1], [0, 0, 1, 1], [], []>} : vector<2x64xf32>, vector<64x64xf32>, vector<2x64xf32> -> vector<2x64xf32>
    %c5 = arith.constant 5 : index
    %c0_255 = arith.constant 0 : index
    %c0_256 = arith.constant 0 : index
    %498 = vector.load %arg10[%c5, %c0_255, %c0_256] : memref<8x2x64xf32, #tpu.memory_space<vmem>>, vector<1x2x64xf32>
    %499 = vector.shape_cast %498 : vector<1x2x64xf32> to vector<2x64xf32>
    %500 = arith.addf %499, %495 : vector<2x64xf32>
    %501 = arith.negf %500 : vector<2x64xf32>
    %502 = math.exp %501 : vector<2x64xf32>
    %cst_257 = arith.constant 1.000000e+00 : f32
    %503 = vector.broadcast %cst_257 : f32 to vector<2x64xf32>
    %504 = arith.addf %503, %502 : vector<2x64xf32>
    %505 = arith.divf %503, %504 : vector<2x64xf32>
    %c5_258 = arith.constant 5 : index
    %c0_259 = arith.constant 0 : index
    %c0_260 = arith.constant 0 : index
    %506 = vector.load %arg11[%c5_258, %c0_259, %c0_260] : memref<8x2x64xf32, #tpu.memory_space<vmem>>, vector<1x2x64xf32>
    %507 = vector.shape_cast %506 : vector<1x2x64xf32> to vector<2x64xf32>
    %508 = arith.addf %507, %496 : vector<2x64xf32>
    %509 = arith.negf %508 : vector<2x64xf32>
    %510 = math.exp %509 : vector<2x64xf32>
    %cst_261 = arith.constant 1.000000e+00 : f32
    %511 = vector.broadcast %cst_261 : f32 to vector<2x64xf32>
    %512 = arith.addf %511, %510 : vector<2x64xf32>
    %513 = arith.divf %511, %512 : vector<2x64xf32>
    %c5_262 = arith.constant 5 : index
    %c0_263 = arith.constant 0 : index
    %c0_264 = arith.constant 0 : index
    %514 = vector.load %arg12[%c5_262, %c0_263, %c0_264] : memref<8x2x64xf32, #tpu.memory_space<vmem>>, vector<1x2x64xf32>
    %515 = vector.shape_cast %514 : vector<1x2x64xf32> to vector<2x64xf32>
    %516 = arith.addf %497, %18 : vector<2x64xf32>
    %517 = arith.mulf %505, %516 : vector<2x64xf32>
    %518 = arith.addf %515, %517 : vector<2x64xf32>
    %519 = math.tanh %518 : vector<2x64xf32>
    %520 = arith.subf %491, %519 : vector<2x64xf32>
    %521 = arith.mulf %513, %520 : vector<2x64xf32>
    %522 = arith.addf %519, %521 : vector<2x64xf32>
    %c5_265 = arith.constant 5 : index
    %c0_266 = arith.constant 0 : index
    %c0_267 = arith.constant 0 : index
    %523 = vector.load %arg13[%c5_265, %c0_266, %c0_267] : memref<8x2x64xf32, #tpu.memory_space<vmem>>, vector<1x2x64xf32>
    %524 = vector.shape_cast %523 : vector<1x2x64xf32> to vector<2x64xf32>
    %525 = vector.shape_cast %522 : vector<2x64xf32> to vector<1x2x64xf32>
    tpu.vector_store %arg13[%c5_265, %c0_266, %c0_267], %525 {strides = array<i32>} : memref<8x2x64xf32, #tpu.memory_space<vmem>>, vector<1x2x64xf32>,
    %cst_268 = arith.constant dense<0.000000e+00> : vector<2x64xf32>
    %526 = tpu.matmul %522, %7, %cst_268 {dimension_numbers = #tpu.dot_dimension_numbers<[1], [0], [0], [1], [0, 0, 1, 1], [], []>} : vector<2x64xf32>, vector<64x64xf32>, vector<2x64xf32> -> vector<2x64xf32>
    %cst_269 = arith.constant dense<0.000000e+00> : vector<2x64xf32>
    %527 = tpu.matmul %522, %9, %cst_269 {dimension_numbers = #tpu.dot_dimension_numbers<[1], [0], [0], [1], [0, 0, 1, 1], [], []>} : vector<2x64xf32>, vector<64x64xf32>, vector<2x64xf32> -> vector<2x64xf32>
    %cst_270 = arith.constant dense<0.000000e+00> : vector<2x64xf32>
    %528 = tpu.matmul %522, %11, %cst_270 {dimension_numbers = #tpu.dot_dimension_numbers<[1], [0], [0], [1], [0, 0, 1, 1], [], []>} : vector<2x64xf32>, vector<64x64xf32>, vector<2x64xf32> -> vector<2x64xf32>
    %c6 = arith.constant 6 : index
    %c0_271 = arith.constant 0 : index
    %c0_272 = arith.constant 0 : index
    %529 = vector.load %arg10[%c6, %c0_271, %c0_272] : memref<8x2x64xf32, #tpu.memory_space<vmem>>, vector<1x2x64xf32>
    %530 = vector.shape_cast %529 : vector<1x2x64xf32> to vector<2x64xf32>
    %531 = arith.addf %530, %526 : vector<2x64xf32>
    %532 = arith.negf %531 : vector<2x64xf32>
    %533 = math.exp %532 : vector<2x64xf32>
    %cst_273 = arith.constant 1.000000e+00 : f32
    %534 = vector.broadcast %cst_273 : f32 to vector<2x64xf32>
    %535 = arith.addf %534, %533 : vector<2x64xf32>
    %536 = arith.divf %534, %535 : vector<2x64xf32>
    %c6_274 = arith.constant 6 : index
    %c0_275 = arith.constant 0 : index
    %c0_276 = arith.constant 0 : index
    %537 = vector.load %arg11[%c6_274, %c0_275, %c0_276] : memref<8x2x64xf32, #tpu.memory_space<vmem>>, vector<1x2x64xf32>
    %538 = vector.shape_cast %537 : vector<1x2x64xf32> to vector<2x64xf32>
    %539 = arith.addf %538, %527 : vector<2x64xf32>
    %540 = arith.negf %539 : vector<2x64xf32>
    %541 = math.exp %540 : vector<2x64xf32>
    %cst_277 = arith.constant 1.000000e+00 : f32
    %542 = vector.broadcast %cst_277 : f32 to vector<2x64xf32>
    %543 = arith.addf %542, %541 : vector<2x64xf32>
    %544 = arith.divf %542, %543 : vector<2x64xf32>
    %c6_278 = arith.constant 6 : index
    %c0_279 = arith.constant 0 : index
    %c0_280 = arith.constant 0 : index
    %545 = vector.load %arg12[%c6_278, %c0_279, %c0_280] : memref<8x2x64xf32, #tpu.memory_space<vmem>>, vector<1x2x64xf32>
    %546 = vector.shape_cast %545 : vector<1x2x64xf32> to vector<2x64xf32>
    %547 = arith.addf %528, %18 : vector<2x64xf32>
    %548 = arith.mulf %536, %547 : vector<2x64xf32>
    %549 = arith.addf %546, %548 : vector<2x64xf32>
    %550 = math.tanh %549 : vector<2x64xf32>
    %551 = arith.subf %522, %550 : vector<2x64xf32>
    %552 = arith.mulf %544, %551 : vector<2x64xf32>
    %553 = arith.addf %550, %552 : vector<2x64xf32>
    %c6_281 = arith.constant 6 : index
    %c0_282 = arith.constant 0 : index
    %c0_283 = arith.constant 0 : index
    %554 = vector.load %arg13[%c6_281, %c0_282, %c0_283] : memref<8x2x64xf32, #tpu.memory_space<vmem>>, vector<1x2x64xf32>
    %555 = vector.shape_cast %554 : vector<1x2x64xf32> to vector<2x64xf32>
    %556 = vector.shape_cast %553 : vector<2x64xf32> to vector<1x2x64xf32>
    tpu.vector_store %arg13[%c6_281, %c0_282, %c0_283], %556 {strides = array<i32>} : memref<8x2x64xf32, #tpu.memory_space<vmem>>, vector<1x2x64xf32>,
    %cst_284 = arith.constant dense<0.000000e+00> : vector<2x64xf32>
    %557 = tpu.matmul %553, %7, %cst_284 {dimension_numbers = #tpu.dot_dimension_numbers<[1], [0], [0], [1], [0, 0, 1, 1], [], []>} : vector<2x64xf32>, vector<64x64xf32>, vector<2x64xf32> -> vector<2x64xf32>
    %cst_285 = arith.constant dense<0.000000e+00> : vector<2x64xf32>
    %558 = tpu.matmul %553, %9, %cst_285 {dimension_numbers = #tpu.dot_dimension_numbers<[1], [0], [0], [1], [0, 0, 1, 1], [], []>} : vector<2x64xf32>, vector<64x64xf32>, vector<2x64xf32> -> vector<2x64xf32>
    %cst_286 = arith.constant dense<0.000000e+00> : vector<2x64xf32>
    %559 = tpu.matmul %553, %11, %cst_286 {dimension_numbers = #tpu.dot_dimension_numbers<[1], [0], [0], [1], [0, 0, 1, 1], [], []>} : vector<2x64xf32>, vector<64x64xf32>, vector<2x64xf32> -> vector<2x64xf32>
    %c7 = arith.constant 7 : index
    %c0_287 = arith.constant 0 : index
    %c0_288 = arith.constant 0 : index
    %560 = vector.load %arg10[%c7, %c0_287, %c0_288] : memref<8x2x64xf32, #tpu.memory_space<vmem>>, vector<1x2x64xf32>
    %561 = vector.shape_cast %560 : vector<1x2x64xf32> to vector<2x64xf32>
    %562 = arith.addf %561, %557 : vector<2x64xf32>
    %563 = arith.negf %562 : vector<2x64xf32>
    %564 = math.exp %563 : vector<2x64xf32>
    %cst_289 = arith.constant 1.000000e+00 : f32
    %565 = vector.broadcast %cst_289 : f32 to vector<2x64xf32>
    %566 = arith.addf %565, %564 : vector<2x64xf32>
    %567 = arith.divf %565, %566 : vector<2x64xf32>
    %c7_290 = arith.constant 7 : index
    %c0_291 = arith.constant 0 : index
    %c0_292 = arith.constant 0 : index
    %568 = vector.load %arg11[%c7_290, %c0_291, %c0_292] : memref<8x2x64xf32, #tpu.memory_space<vmem>>, vector<1x2x64xf32>
    %569 = vector.shape_cast %568 : vector<1x2x64xf32> to vector<2x64xf32>
    %570 = arith.addf %569, %558 : vector<2x64xf32>
    %571 = arith.negf %570 : vector<2x64xf32>
    %572 = math.exp %571 : vector<2x64xf32>
    %cst_293 = arith.constant 1.000000e+00 : f32
    %573 = vector.broadcast %cst_293 : f32 to vector<2x64xf32>
    %574 = arith.addf %573, %572 : vector<2x64xf32>
    %575 = arith.divf %573, %574 : vector<2x64xf32>
    %c7_294 = arith.constant 7 : index
    %c0_295 = arith.constant 0 : index
    %c0_296 = arith.constant 0 : index
    %576 = vector.load %arg12[%c7_294, %c0_295, %c0_296] : memref<8x2x64xf32, #tpu.memory_space<vmem>>, vector<1x2x64xf32>
    %577 = vector.shape_cast %576 : vector<1x2x64xf32> to vector<2x64xf32>
    %578 = arith.addf %559, %18 : vector<2x64xf32>
    %579 = arith.mulf %567, %578 : vector<2x64xf32>
    %580 = arith.addf %577, %579 : vector<2x64xf32>
    %581 = math.tanh %580 : vector<2x64xf32>
    %582 = arith.subf %553, %581 : vector<2x64xf32>
    %583 = arith.mulf %575, %582 : vector<2x64xf32>
    %584 = arith.addf %581, %583 : vector<2x64xf32>
    %c7_297 = arith.constant 7 : index
    %c0_298 = arith.constant 0 : index
    %c0_299 = arith.constant 0 : index
    %585 = vector.load %arg13[%c7_297, %c0_298, %c0_299] : memref<8x2x64xf32, #tpu.memory_space<vmem>>, vector<1x2x64xf32>
    %586 = vector.shape_cast %585 : vector<1x2x64xf32> to vector<2x64xf32>
    %587 = vector.shape_cast %584 : vector<2x64xf32> to vector<1x2x64xf32>
    tpu.vector_store %arg13[%c7_297, %c0_298, %c0_299], %587 {strides = array<i32>} : memref<8x2x64xf32, #tpu.memory_space<vmem>>, vector<1x2x64xf32>,
    %c0_i32_300 = arith.constant 0 : i32
    %c7_i32_301 = arith.constant 7 : i32
    %588 = arith.subi %c7_i32_301, %c0_i32_300 : i32
    %589 = arith.index_cast %c0_i32_300 : i32 to index
    %c0_302 = arith.constant 0 : index
    %c0_303 = arith.constant 0 : index
    %590 = vector.load %arg13[%589, %c0_302, %c0_303] : memref<8x2x64xf32, #tpu.memory_space<vmem>>, vector<1x2x64xf32>
    %591 = vector.shape_cast %590 : vector<1x2x64xf32> to vector<2x64xf32>
    %592 = arith.index_cast %588 : i32 to index
    %c0_304 = arith.constant 0 : index
    %c0_305 = arith.constant 0 : index
    %593 = vector.load %arg13[%592, %c0_304, %c0_305] : memref<8x2x64xf32, #tpu.memory_space<vmem>>, vector<1x2x64xf32>
    %594 = vector.shape_cast %593 : vector<1x2x64xf32> to vector<2x64xf32>
    %595 = vector.extract_strided_slice %591 {offsets = [0, 0], sizes = [2, 32], strides = [1, 1]} : vector<2x64xf32> to vector<2x32xf32>
    %596 = arith.index_cast %c0_i32_300 : i32 to index
    %c0_306 = arith.constant 0 : index
    %c0_307 = arith.constant 0 : index
    %597 = vector.load %arg9[%596, %c0_306, %c0_307] : memref<8x2x128xf32, #tpu.memory_space<vmem>>, vector<1x2x32xf32>
    %598 = vector.shape_cast %597 : vector<1x2x32xf32> to vector<2x32xf32>
    %599 = vector.shape_cast %595 : vector<2x32xf32> to vector<1x2x32xf32>
    tpu.vector_store %arg9[%596, %c0_306, %c0_307], %599 {strides = array<i32>} : memref<8x2x128xf32, #tpu.memory_space<vmem>>, vector<1x2x32xf32>,
    %600 = vector.extract_strided_slice %594 {offsets = [0, 32], sizes = [2, 32], strides = [1, 1]} : vector<2x64xf32> to vector<2x32xf32>
    %601 = arith.index_cast %c0_i32_300 : i32 to index
    %c0_308 = arith.constant 0 : index
    %c32_309 = arith.constant 32 : index
    %602 = vector.load %arg9[%601, %c0_308, %c32_309] : memref<8x2x128xf32, #tpu.memory_space<vmem>>, vector<1x2x32xf32>
    %603 = vector.shape_cast %602 : vector<1x2x32xf32> to vector<2x32xf32>
    %604 = vector.shape_cast %600 : vector<2x32xf32> to vector<1x2x32xf32>
    tpu.vector_store %arg9[%601, %c0_308, %c32_309], %604 {strides = array<i32>} : memref<8x2x128xf32, #tpu.memory_space<vmem>>, vector<1x2x32xf32>,
    %c1_i32_310 = arith.constant 1 : i32
    %c7_i32_311 = arith.constant 7 : i32
    %605 = arith.subi %c7_i32_311, %c1_i32_310 : i32
    %606 = arith.index_cast %c1_i32_310 : i32 to index
    %c0_312 = arith.constant 0 : index
    %c0_313 = arith.constant 0 : index
    %607 = vector.load %arg13[%606, %c0_312, %c0_313] : memref<8x2x64xf32, #tpu.memory_space<vmem>>, vector<1x2x64xf32>
    %608 = vector.shape_cast %607 : vector<1x2x64xf32> to vector<2x64xf32>
    %609 = arith.index_cast %605 : i32 to index
    %c0_314 = arith.constant 0 : index
    %c0_315 = arith.constant 0 : index
    %610 = vector.load %arg13[%609, %c0_314, %c0_315] : memref<8x2x64xf32, #tpu.memory_space<vmem>>, vector<1x2x64xf32>
    %611 = vector.shape_cast %610 : vector<1x2x64xf32> to vector<2x64xf32>
    %612 = vector.extract_strided_slice %608 {offsets = [0, 0], sizes = [2, 32], strides = [1, 1]} : vector<2x64xf32> to vector<2x32xf32>
    %613 = arith.index_cast %c1_i32_310 : i32 to index
    %c0_316 = arith.constant 0 : index
    %c0_317 = arith.constant 0 : index
    %614 = vector.load %arg9[%613, %c0_316, %c0_317] : memref<8x2x128xf32, #tpu.memory_space<vmem>>, vector<1x2x32xf32>
    %615 = vector.shape_cast %614 : vector<1x2x32xf32> to vector<2x32xf32>
    %616 = vector.shape_cast %612 : vector<2x32xf32> to vector<1x2x32xf32>
    tpu.vector_store %arg9[%613, %c0_316, %c0_317], %616 {strides = array<i32>} : memref<8x2x128xf32, #tpu.memory_space<vmem>>, vector<1x2x32xf32>,
    %617 = vector.extract_strided_slice %611 {offsets = [0, 32], sizes = [2, 32], strides = [1, 1]} : vector<2x64xf32> to vector<2x32xf32>
    %618 = arith.index_cast %c1_i32_310 : i32 to index
    %c0_318 = arith.constant 0 : index
    %c32_319 = arith.constant 32 : index
    %619 = vector.load %arg9[%618, %c0_318, %c32_319] : memref<8x2x128xf32, #tpu.memory_space<vmem>>, vector<1x2x32xf32>
    %620 = vector.shape_cast %619 : vector<1x2x32xf32> to vector<2x32xf32>
    %621 = vector.shape_cast %617 : vector<2x32xf32> to vector<1x2x32xf32>
    tpu.vector_store %arg9[%618, %c0_318, %c32_319], %621 {strides = array<i32>} : memref<8x2x128xf32, #tpu.memory_space<vmem>>, vector<1x2x32xf32>,
    %c2_i32_320 = arith.constant 2 : i32
    %c7_i32_321 = arith.constant 7 : i32
    %622 = arith.subi %c7_i32_321, %c2_i32_320 : i32
    %623 = arith.index_cast %c2_i32_320 : i32 to index
    %c0_322 = arith.constant 0 : index
    %c0_323 = arith.constant 0 : index
    %624 = vector.load %arg13[%623, %c0_322, %c0_323] : memref<8x2x64xf32, #tpu.memory_space<vmem>>, vector<1x2x64xf32>
    %625 = vector.shape_cast %624 : vector<1x2x64xf32> to vector<2x64xf32>
    %626 = arith.index_cast %622 : i32 to index
    %c0_324 = arith.constant 0 : index
    %c0_325 = arith.constant 0 : index
    %627 = vector.load %arg13[%626, %c0_324, %c0_325] : memref<8x2x64xf32, #tpu.memory_space<vmem>>, vector<1x2x64xf32>
    %628 = vector.shape_cast %627 : vector<1x2x64xf32> to vector<2x64xf32>
    %629 = vector.extract_strided_slice %625 {offsets = [0, 0], sizes = [2, 32], strides = [1, 1]} : vector<2x64xf32> to vector<2x32xf32>
    %630 = arith.index_cast %c2_i32_320 : i32 to index
    %c0_326 = arith.constant 0 : index
    %c0_327 = arith.constant 0 : index
    %631 = vector.load %arg9[%630, %c0_326, %c0_327] : memref<8x2x128xf32, #tpu.memory_space<vmem>>, vector<1x2x32xf32>
    %632 = vector.shape_cast %631 : vector<1x2x32xf32> to vector<2x32xf32>
    %633 = vector.shape_cast %629 : vector<2x32xf32> to vector<1x2x32xf32>
    tpu.vector_store %arg9[%630, %c0_326, %c0_327], %633 {strides = array<i32>} : memref<8x2x128xf32, #tpu.memory_space<vmem>>, vector<1x2x32xf32>,
    %634 = vector.extract_strided_slice %628 {offsets = [0, 32], sizes = [2, 32], strides = [1, 1]} : vector<2x64xf32> to vector<2x32xf32>
    %635 = arith.index_cast %c2_i32_320 : i32 to index
    %c0_328 = arith.constant 0 : index
    %c32_329 = arith.constant 32 : index
    %636 = vector.load %arg9[%635, %c0_328, %c32_329] : memref<8x2x128xf32, #tpu.memory_space<vmem>>, vector<1x2x32xf32>
    %637 = vector.shape_cast %636 : vector<1x2x32xf32> to vector<2x32xf32>
    %638 = vector.shape_cast %634 : vector<2x32xf32> to vector<1x2x32xf32>
    tpu.vector_store %arg9[%635, %c0_328, %c32_329], %638 {strides = array<i32>} : memref<8x2x128xf32, #tpu.memory_space<vmem>>, vector<1x2x32xf32>,
    %c3_i32_330 = arith.constant 3 : i32
    %c7_i32_331 = arith.constant 7 : i32
    %639 = arith.subi %c7_i32_331, %c3_i32_330 : i32
    %640 = arith.index_cast %c3_i32_330 : i32 to index
    %c0_332 = arith.constant 0 : index
    %c0_333 = arith.constant 0 : index
    %641 = vector.load %arg13[%640, %c0_332, %c0_333] : memref<8x2x64xf32, #tpu.memory_space<vmem>>, vector<1x2x64xf32>
    %642 = vector.shape_cast %641 : vector<1x2x64xf32> to vector<2x64xf32>
    %643 = arith.index_cast %639 : i32 to index
    %c0_334 = arith.constant 0 : index
    %c0_335 = arith.constant 0 : index
    %644 = vector.load %arg13[%643, %c0_334, %c0_335] : memref<8x2x64xf32, #tpu.memory_space<vmem>>, vector<1x2x64xf32>
    %645 = vector.shape_cast %644 : vector<1x2x64xf32> to vector<2x64xf32>
    %646 = vector.extract_strided_slice %642 {offsets = [0, 0], sizes = [2, 32], strides = [1, 1]} : vector<2x64xf32> to vector<2x32xf32>
    %647 = arith.index_cast %c3_i32_330 : i32 to index
    %c0_336 = arith.constant 0 : index
    %c0_337 = arith.constant 0 : index
    %648 = vector.load %arg9[%647, %c0_336, %c0_337] : memref<8x2x128xf32, #tpu.memory_space<vmem>>, vector<1x2x32xf32>
    %649 = vector.shape_cast %648 : vector<1x2x32xf32> to vector<2x32xf32>
    %650 = vector.shape_cast %646 : vector<2x32xf32> to vector<1x2x32xf32>
    tpu.vector_store %arg9[%647, %c0_336, %c0_337], %650 {strides = array<i32>} : memref<8x2x128xf32, #tpu.memory_space<vmem>>, vector<1x2x32xf32>,
    %651 = vector.extract_strided_slice %645 {offsets = [0, 32], sizes = [2, 32], strides = [1, 1]} : vector<2x64xf32> to vector<2x32xf32>
    %652 = arith.index_cast %c3_i32_330 : i32 to index
    %c0_338 = arith.constant 0 : index
    %c32_339 = arith.constant 32 : index
    %653 = vector.load %arg9[%652, %c0_338, %c32_339] : memref<8x2x128xf32, #tpu.memory_space<vmem>>, vector<1x2x32xf32>
    %654 = vector.shape_cast %653 : vector<1x2x32xf32> to vector<2x32xf32>
    %655 = vector.shape_cast %651 : vector<2x32xf32> to vector<1x2x32xf32>
    tpu.vector_store %arg9[%652, %c0_338, %c32_339], %655 {strides = array<i32>} : memref<8x2x128xf32, #tpu.memory_space<vmem>>, vector<1x2x32xf32>,
    %c4_i32_340 = arith.constant 4 : i32
    %c7_i32_341 = arith.constant 7 : i32
    %656 = arith.subi %c7_i32_341, %c4_i32_340 : i32
    %657 = arith.index_cast %c4_i32_340 : i32 to index
    %c0_342 = arith.constant 0 : index
    %c0_343 = arith.constant 0 : index
    %658 = vector.load %arg13[%657, %c0_342, %c0_343] : memref<8x2x64xf32, #tpu.memory_space<vmem>>, vector<1x2x64xf32>
    %659 = vector.shape_cast %658 : vector<1x2x64xf32> to vector<2x64xf32>
    %660 = arith.index_cast %656 : i32 to index
    %c0_344 = arith.constant 0 : index
    %c0_345 = arith.constant 0 : index
    %661 = vector.load %arg13[%660, %c0_344, %c0_345] : memref<8x2x64xf32, #tpu.memory_space<vmem>>, vector<1x2x64xf32>
    %662 = vector.shape_cast %661 : vector<1x2x64xf32> to vector<2x64xf32>
    %663 = vector.extract_strided_slice %659 {offsets = [0, 0], sizes = [2, 32], strides = [1, 1]} : vector<2x64xf32> to vector<2x32xf32>
    %664 = arith.index_cast %c4_i32_340 : i32 to index
    %c0_346 = arith.constant 0 : index
    %c0_347 = arith.constant 0 : index
    %665 = vector.load %arg9[%664, %c0_346, %c0_347] : memref<8x2x128xf32, #tpu.memory_space<vmem>>, vector<1x2x32xf32>
    %666 = vector.shape_cast %665 : vector<1x2x32xf32> to vector<2x32xf32>
    %667 = vector.shape_cast %663 : vector<2x32xf32> to vector<1x2x32xf32>
    tpu.vector_store %arg9[%664, %c0_346, %c0_347], %667 {strides = array<i32>} : memref<8x2x128xf32, #tpu.memory_space<vmem>>, vector<1x2x32xf32>,
    %668 = vector.extract_strided_slice %662 {offsets = [0, 32], sizes = [2, 32], strides = [1, 1]} : vector<2x64xf32> to vector<2x32xf32>
    %669 = arith.index_cast %c4_i32_340 : i32 to index
    %c0_348 = arith.constant 0 : index
    %c32_349 = arith.constant 32 : index
    %670 = vector.load %arg9[%669, %c0_348, %c32_349] : memref<8x2x128xf32, #tpu.memory_space<vmem>>, vector<1x2x32xf32>
    %671 = vector.shape_cast %670 : vector<1x2x32xf32> to vector<2x32xf32>
    %672 = vector.shape_cast %668 : vector<2x32xf32> to vector<1x2x32xf32>
    tpu.vector_store %arg9[%669, %c0_348, %c32_349], %672 {strides = array<i32>} : memref<8x2x128xf32, #tpu.memory_space<vmem>>, vector<1x2x32xf32>,
    %c5_i32_350 = arith.constant 5 : i32
    %c7_i32_351 = arith.constant 7 : i32
    %673 = arith.subi %c7_i32_351, %c5_i32_350 : i32
    %674 = arith.index_cast %c5_i32_350 : i32 to index
    %c0_352 = arith.constant 0 : index
    %c0_353 = arith.constant 0 : index
    %675 = vector.load %arg13[%674, %c0_352, %c0_353] : memref<8x2x64xf32, #tpu.memory_space<vmem>>, vector<1x2x64xf32>
    %676 = vector.shape_cast %675 : vector<1x2x64xf32> to vector<2x64xf32>
    %677 = arith.index_cast %673 : i32 to index
    %c0_354 = arith.constant 0 : index
    %c0_355 = arith.constant 0 : index
    %678 = vector.load %arg13[%677, %c0_354, %c0_355] : memref<8x2x64xf32, #tpu.memory_space<vmem>>, vector<1x2x64xf32>
    %679 = vector.shape_cast %678 : vector<1x2x64xf32> to vector<2x64xf32>
    %680 = vector.extract_strided_slice %676 {offsets = [0, 0], sizes = [2, 32], strides = [1, 1]} : vector<2x64xf32> to vector<2x32xf32>
    %681 = arith.index_cast %c5_i32_350 : i32 to index
    %c0_356 = arith.constant 0 : index
    %c0_357 = arith.constant 0 : index
    %682 = vector.load %arg9[%681, %c0_356, %c0_357] : memref<8x2x128xf32, #tpu.memory_space<vmem>>, vector<1x2x32xf32>
    %683 = vector.shape_cast %682 : vector<1x2x32xf32> to vector<2x32xf32>
    %684 = vector.shape_cast %680 : vector<2x32xf32> to vector<1x2x32xf32>
    tpu.vector_store %arg9[%681, %c0_356, %c0_357], %684 {strides = array<i32>} : memref<8x2x128xf32, #tpu.memory_space<vmem>>, vector<1x2x32xf32>,
    %685 = vector.extract_strided_slice %679 {offsets = [0, 32], sizes = [2, 32], strides = [1, 1]} : vector<2x64xf32> to vector<2x32xf32>
    %686 = arith.index_cast %c5_i32_350 : i32 to index
    %c0_358 = arith.constant 0 : index
    %c32_359 = arith.constant 32 : index
    %687 = vector.load %arg9[%686, %c0_358, %c32_359] : memref<8x2x128xf32, #tpu.memory_space<vmem>>, vector<1x2x32xf32>
    %688 = vector.shape_cast %687 : vector<1x2x32xf32> to vector<2x32xf32>
    %689 = vector.shape_cast %685 : vector<2x32xf32> to vector<1x2x32xf32>
    tpu.vector_store %arg9[%686, %c0_358, %c32_359], %689 {strides = array<i32>} : memref<8x2x128xf32, #tpu.memory_space<vmem>>, vector<1x2x32xf32>,
    %c6_i32_360 = arith.constant 6 : i32
    %c7_i32_361 = arith.constant 7 : i32
    %690 = arith.subi %c7_i32_361, %c6_i32_360 : i32
    %691 = arith.index_cast %c6_i32_360 : i32 to index
    %c0_362 = arith.constant 0 : index
    %c0_363 = arith.constant 0 : index
    %692 = vector.load %arg13[%691, %c0_362, %c0_363] : memref<8x2x64xf32, #tpu.memory_space<vmem>>, vector<1x2x64xf32>
    %693 = vector.shape_cast %692 : vector<1x2x64xf32> to vector<2x64xf32>
    %694 = arith.index_cast %690 : i32 to index
    %c0_364 = arith.constant 0 : index
    %c0_365 = arith.constant 0 : index
    %695 = vector.load %arg13[%694, %c0_364, %c0_365] : memref<8x2x64xf32, #tpu.memory_space<vmem>>, vector<1x2x64xf32>
    %696 = vector.shape_cast %695 : vector<1x2x64xf32> to vector<2x64xf32>
    %697 = vector.extract_strided_slice %693 {offsets = [0, 0], sizes = [2, 32], strides = [1, 1]} : vector<2x64xf32> to vector<2x32xf32>
    %698 = arith.index_cast %c6_i32_360 : i32 to index
    %c0_366 = arith.constant 0 : index
    %c0_367 = arith.constant 0 : index
    %699 = vector.load %arg9[%698, %c0_366, %c0_367] : memref<8x2x128xf32, #tpu.memory_space<vmem>>, vector<1x2x32xf32>
    %700 = vector.shape_cast %699 : vector<1x2x32xf32> to vector<2x32xf32>
    %701 = vector.shape_cast %697 : vector<2x32xf32> to vector<1x2x32xf32>
    tpu.vector_store %arg9[%698, %c0_366, %c0_367], %701 {strides = array<i32>} : memref<8x2x128xf32, #tpu.memory_space<vmem>>, vector<1x2x32xf32>,
    %702 = vector.extract_strided_slice %696 {offsets = [0, 32], sizes = [2, 32], strides = [1, 1]} : vector<2x64xf32> to vector<2x32xf32>
    %703 = arith.index_cast %c6_i32_360 : i32 to index
    %c0_368 = arith.constant 0 : index
    %c32_369 = arith.constant 32 : index
    %704 = vector.load %arg9[%703, %c0_368, %c32_369] : memref<8x2x128xf32, #tpu.memory_space<vmem>>, vector<1x2x32xf32>
    %705 = vector.shape_cast %704 : vector<1x2x32xf32> to vector<2x32xf32>
    %706 = vector.shape_cast %702 : vector<2x32xf32> to vector<1x2x32xf32>
    tpu.vector_store %arg9[%703, %c0_368, %c32_369], %706 {strides = array<i32>} : memref<8x2x128xf32, #tpu.memory_space<vmem>>, vector<1x2x32xf32>,
    %c7_i32_370 = arith.constant 7 : i32
    %c7_i32_371 = arith.constant 7 : i32
    %707 = arith.subi %c7_i32_371, %c7_i32_370 : i32
    %708 = arith.index_cast %c7_i32_370 : i32 to index
    %c0_372 = arith.constant 0 : index
    %c0_373 = arith.constant 0 : index
    %709 = vector.load %arg13[%708, %c0_372, %c0_373] : memref<8x2x64xf32, #tpu.memory_space<vmem>>, vector<1x2x64xf32>
    %710 = vector.shape_cast %709 : vector<1x2x64xf32> to vector<2x64xf32>
    %711 = arith.index_cast %707 : i32 to index
    %c0_374 = arith.constant 0 : index
    %c0_375 = arith.constant 0 : index
    %712 = vector.load %arg13[%711, %c0_374, %c0_375] : memref<8x2x64xf32, #tpu.memory_space<vmem>>, vector<1x2x64xf32>
    %713 = vector.shape_cast %712 : vector<1x2x64xf32> to vector<2x64xf32>
    %714 = vector.extract_strided_slice %710 {offsets = [0, 0], sizes = [2, 32], strides = [1, 1]} : vector<2x64xf32> to vector<2x32xf32>
    %715 = arith.index_cast %c7_i32_370 : i32 to index
    %c0_376 = arith.constant 0 : index
    %c0_377 = arith.constant 0 : index
    %716 = vector.load %arg9[%715, %c0_376, %c0_377] : memref<8x2x128xf32, #tpu.memory_space<vmem>>, vector<1x2x32xf32>
    %717 = vector.shape_cast %716 : vector<1x2x32xf32> to vector<2x32xf32>
    %718 = vector.shape_cast %714 : vector<2x32xf32> to vector<1x2x32xf32>
    tpu.vector_store %arg9[%715, %c0_376, %c0_377], %718 {strides = array<i32>} : memref<8x2x128xf32, #tpu.memory_space<vmem>>, vector<1x2x32xf32>,
    %719 = vector.extract_strided_slice %713 {offsets = [0, 32], sizes = [2, 32], strides = [1, 1]} : vector<2x64xf32> to vector<2x32xf32>
    %720 = arith.index_cast %c7_i32_370 : i32 to index
    %c0_378 = arith.constant 0 : index
    %c32_379 = arith.constant 32 : index
    %721 = vector.load %arg9[%720, %c0_378, %c32_379] : memref<8x2x128xf32, #tpu.memory_space<vmem>>, vector<1x2x32xf32>
    %722 = vector.shape_cast %721 : vector<1x2x32xf32> to vector<2x32xf32>
    %723 = vector.shape_cast %719 : vector<2x32xf32> to vector<1x2x32xf32>
    tpu.vector_store %arg9[%720, %c0_378, %c32_379], %723 {strides = array<i32>} : memref<8x2x128xf32, #tpu.memory_space<vmem>>, vector<1x2x32xf32>,
    %c8_i32_380 = arith.constant 8 : i32
    %c0_381 = arith.constant 0 : index
    %c0_382 = arith.constant 0 : index
    %c0_383 = arith.constant 0 : index
    %724 = vector.load %arg5[%c0_381, %c0_382, %c0_383] : memref<3x64x64xf32, #tpu.memory_space<vmem>>, vector<1x64x64xf32>
    %725 = vector.shape_cast %724 : vector<1x64x64xf32> to vector<64x64xf32>
    %c1_384 = arith.constant 1 : index
    %c0_385 = arith.constant 0 : index
    %c0_386 = arith.constant 0 : index
    %726 = vector.load %arg5[%c1_384, %c0_385, %c0_386] : memref<3x64x64xf32, #tpu.memory_space<vmem>>, vector<1x64x64xf32>
    %727 = vector.shape_cast %726 : vector<1x64x64xf32> to vector<64x64xf32>
    %c2_387 = arith.constant 2 : index
    %c0_388 = arith.constant 0 : index
    %c0_389 = arith.constant 0 : index
    %728 = vector.load %arg5[%c2_387, %c0_388, %c0_389] : memref<3x64x64xf32, #tpu.memory_space<vmem>>, vector<1x64x64xf32>
    %729 = vector.shape_cast %728 : vector<1x64x64xf32> to vector<64x64xf32>
    %c0_390 = arith.constant 0 : index
    %c0_391 = arith.constant 0 : index
    %c0_392 = arith.constant 0 : index
    %730 = vector.load %arg6[%c0_390, %c0_391, %c0_392] : memref<3x64x64xf32, #tpu.memory_space<vmem>>, vector<1x64x64xf32>
    %731 = vector.shape_cast %730 : vector<1x64x64xf32> to vector<64x64xf32>
    %c1_393 = arith.constant 1 : index
    %c0_394 = arith.constant 0 : index
    %c0_395 = arith.constant 0 : index
    %732 = vector.load %arg6[%c1_393, %c0_394, %c0_395] : memref<3x64x64xf32, #tpu.memory_space<vmem>>, vector<1x64x64xf32>
    %733 = vector.shape_cast %732 : vector<1x64x64xf32> to vector<64x64xf32>
    %c2_396 = arith.constant 2 : index
    %c0_397 = arith.constant 0 : index
    %c0_398 = arith.constant 0 : index
    %734 = vector.load %arg6[%c2_396, %c0_397, %c0_398] : memref<3x64x64xf32, #tpu.memory_space<vmem>>, vector<1x64x64xf32>
    %735 = vector.shape_cast %734 : vector<1x64x64xf32> to vector<64x64xf32>
    %c0_399 = arith.constant 0 : index
    %c0_400 = arith.constant 0 : index
    %c0_401 = arith.constant 0 : index
    %736 = vector.load %arg7[%c0_399, %c0_400, %c0_401] : memref<3x2x64xf32, #tpu.memory_space<vmem>>, vector<1x2x64xf32>
    %737 = vector.shape_cast %736 : vector<1x2x64xf32> to vector<2x64xf32>
    %c1_402 = arith.constant 1 : index
    %c0_403 = arith.constant 0 : index
    %c0_404 = arith.constant 0 : index
    %738 = vector.load %arg7[%c1_402, %c0_403, %c0_404] : memref<3x2x64xf32, #tpu.memory_space<vmem>>, vector<1x2x64xf32>
    %739 = vector.shape_cast %738 : vector<1x2x64xf32> to vector<2x64xf32>
    %c2_405 = arith.constant 2 : index
    %c0_406 = arith.constant 0 : index
    %c0_407 = arith.constant 0 : index
    %740 = vector.load %arg7[%c2_405, %c0_406, %c0_407] : memref<3x2x64xf32, #tpu.memory_space<vmem>>, vector<1x2x64xf32>
    %741 = vector.shape_cast %740 : vector<1x2x64xf32> to vector<2x64xf32>
    %c0_408 = arith.constant 0 : index
    %c0_409 = arith.constant 0 : index
    %742 = vector.load %arg8[%c0_408, %c0_409] : memref<2x64xf32, #tpu.memory_space<vmem>>, vector<2x64xf32>
    %c0_i32_410 = arith.constant 0 : i32
    %743 = arith.index_cast %c0_i32_410 : i32 to index
    %c0_411 = arith.constant 0 : index
    %c0_412 = arith.constant 0 : index
    %744 = vector.load %arg9[%743, %c0_411, %c0_412] : memref<8x2x128xf32, #tpu.memory_space<vmem>>, vector<1x2x128xf32>
    %745 = vector.shape_cast %744 : vector<1x2x128xf32> to vector<2x128xf32>
    %746 = vector.extract_strided_slice %745 {offsets = [0, 0], sizes = [2, 64], strides = [1, 1]} : vector<2x128xf32> to vector<2x64xf32>
    %c7_i32_413 = arith.constant 7 : i32
    %747 = arith.subi %c7_i32_413, %c0_i32_410 : i32
    %cst_414 = arith.constant dense<0.000000e+00> : vector<2x64xf32>
    %748 = tpu.matmul %746, %725, %cst_414 {dimension_numbers = #tpu.dot_dimension_numbers<[1], [0], [0], [1], [0, 0, 1, 1], [], []>} : vector<2x64xf32>, vector<64x64xf32>, vector<2x64xf32> -> vector<2x64xf32>
    %749 = arith.addf %748, %737 : vector<2x64xf32>
    %750 = vector.extract_strided_slice %749 {offsets = [0, 0], sizes = [2, 32], strides = [1, 1]} : vector<2x64xf32> to vector<2x32xf32>
    %751 = arith.index_cast %c0_i32_410 : i32 to index
    %c0_415 = arith.constant 0 : index
    %c0_416 = arith.constant 0 : index
    %752 = vector.load %arg10[%751, %c0_415, %c0_416] : memref<8x2x64xf32, #tpu.memory_space<vmem>>, vector<1x2x32xf32>
    %753 = vector.shape_cast %752 : vector<1x2x32xf32> to vector<2x32xf32>
    %754 = vector.shape_cast %750 : vector<2x32xf32> to vector<1x2x32xf32>
    tpu.vector_store %arg10[%751, %c0_415, %c0_416], %754 {strides = array<i32>} : memref<8x2x64xf32, #tpu.memory_space<vmem>>, vector<1x2x32xf32>,
    %755 = vector.extract_strided_slice %749 {offsets = [0, 32], sizes = [2, 32], strides = [1, 1]} : vector<2x64xf32> to vector<2x32xf32>
    %756 = arith.index_cast %747 : i32 to index
    %c0_417 = arith.constant 0 : index
    %c32_418 = arith.constant 32 : index
    %757 = vector.load %arg10[%756, %c0_417, %c32_418] : memref<8x2x64xf32, #tpu.memory_space<vmem>>, vector<1x2x32xf32>
    %758 = vector.shape_cast %757 : vector<1x2x32xf32> to vector<2x32xf32>
    %759 = vector.shape_cast %755 : vector<2x32xf32> to vector<1x2x32xf32>
    tpu.vector_store %arg10[%756, %c0_417, %c32_418], %759 {strides = array<i32>} : memref<8x2x64xf32, #tpu.memory_space<vmem>>, vector<1x2x32xf32>,
    %cst_419 = arith.constant dense<0.000000e+00> : vector<2x64xf32>
    %760 = tpu.matmul %746, %727, %cst_419 {dimension_numbers = #tpu.dot_dimension_numbers<[1], [0], [0], [1], [0, 0, 1, 1], [], []>} : vector<2x64xf32>, vector<64x64xf32>, vector<2x64xf32> -> vector<2x64xf32>
    %761 = arith.addf %760, %739 : vector<2x64xf32>
    %762 = vector.extract_strided_slice %761 {offsets = [0, 0], sizes = [2, 32], strides = [1, 1]} : vector<2x64xf32> to vector<2x32xf32>
    %763 = arith.index_cast %c0_i32_410 : i32 to index
    %c0_420 = arith.constant 0 : index
    %c0_421 = arith.constant 0 : index
    %764 = vector.load %arg11[%763, %c0_420, %c0_421] : memref<8x2x64xf32, #tpu.memory_space<vmem>>, vector<1x2x32xf32>
    %765 = vector.shape_cast %764 : vector<1x2x32xf32> to vector<2x32xf32>
    %766 = vector.shape_cast %762 : vector<2x32xf32> to vector<1x2x32xf32>
    tpu.vector_store %arg11[%763, %c0_420, %c0_421], %766 {strides = array<i32>} : memref<8x2x64xf32, #tpu.memory_space<vmem>>, vector<1x2x32xf32>,
    %767 = vector.extract_strided_slice %761 {offsets = [0, 32], sizes = [2, 32], strides = [1, 1]} : vector<2x64xf32> to vector<2x32xf32>
    %768 = arith.index_cast %747 : i32 to index
    %c0_422 = arith.constant 0 : index
    %c32_423 = arith.constant 32 : index
    %769 = vector.load %arg11[%768, %c0_422, %c32_423] : memref<8x2x64xf32, #tpu.memory_space<vmem>>, vector<1x2x32xf32>
    %770 = vector.shape_cast %769 : vector<1x2x32xf32> to vector<2x32xf32>
    %771 = vector.shape_cast %767 : vector<2x32xf32> to vector<1x2x32xf32>
    tpu.vector_store %arg11[%768, %c0_422, %c32_423], %771 {strides = array<i32>} : memref<8x2x64xf32, #tpu.memory_space<vmem>>, vector<1x2x32xf32>,
    %cst_424 = arith.constant dense<0.000000e+00> : vector<2x64xf32>
    %772 = tpu.matmul %746, %729, %cst_424 {dimension_numbers = #tpu.dot_dimension_numbers<[1], [0], [0], [1], [0, 0, 1, 1], [], []>} : vector<2x64xf32>, vector<64x64xf32>, vector<2x64xf32> -> vector<2x64xf32>
    %773 = arith.addf %772, %741 : vector<2x64xf32>
    %774 = vector.extract_strided_slice %773 {offsets = [0, 0], sizes = [2, 32], strides = [1, 1]} : vector<2x64xf32> to vector<2x32xf32>
    %775 = arith.index_cast %c0_i32_410 : i32 to index
    %c0_425 = arith.constant 0 : index
    %c0_426 = arith.constant 0 : index
    %776 = vector.load %arg12[%775, %c0_425, %c0_426] : memref<8x2x64xf32, #tpu.memory_space<vmem>>, vector<1x2x32xf32>
    %777 = vector.shape_cast %776 : vector<1x2x32xf32> to vector<2x32xf32>
    %778 = vector.shape_cast %774 : vector<2x32xf32> to vector<1x2x32xf32>
    tpu.vector_store %arg12[%775, %c0_425, %c0_426], %778 {strides = array<i32>} : memref<8x2x64xf32, #tpu.memory_space<vmem>>, vector<1x2x32xf32>,
    %779 = vector.extract_strided_slice %773 {offsets = [0, 32], sizes = [2, 32], strides = [1, 1]} : vector<2x64xf32> to vector<2x32xf32>
    %780 = arith.index_cast %747 : i32 to index
    %c0_427 = arith.constant 0 : index
    %c32_428 = arith.constant 32 : index
    %781 = vector.load %arg12[%780, %c0_427, %c32_428] : memref<8x2x64xf32, #tpu.memory_space<vmem>>, vector<1x2x32xf32>
    %782 = vector.shape_cast %781 : vector<1x2x32xf32> to vector<2x32xf32>
    %783 = vector.shape_cast %779 : vector<2x32xf32> to vector<1x2x32xf32>
    tpu.vector_store %arg12[%780, %c0_427, %c32_428], %783 {strides = array<i32>} : memref<8x2x64xf32, #tpu.memory_space<vmem>>, vector<1x2x32xf32>,
    %c1_i32_429 = arith.constant 1 : i32
    %784 = arith.index_cast %c1_i32_429 : i32 to index
    %c0_430 = arith.constant 0 : index
    %c0_431 = arith.constant 0 : index
    %785 = vector.load %arg9[%784, %c0_430, %c0_431] : memref<8x2x128xf32, #tpu.memory_space<vmem>>, vector<1x2x128xf32>
    %786 = vector.shape_cast %785 : vector<1x2x128xf32> to vector<2x128xf32>
    %787 = vector.extract_strided_slice %786 {offsets = [0, 0], sizes = [2, 64], strides = [1, 1]} : vector<2x128xf32> to vector<2x64xf32>
    %c7_i32_432 = arith.constant 7 : i32
    %788 = arith.subi %c7_i32_432, %c1_i32_429 : i32
    %cst_433 = arith.constant dense<0.000000e+00> : vector<2x64xf32>
    %789 = tpu.matmul %787, %725, %cst_433 {dimension_numbers = #tpu.dot_dimension_numbers<[1], [0], [0], [1], [0, 0, 1, 1], [], []>} : vector<2x64xf32>, vector<64x64xf32>, vector<2x64xf32> -> vector<2x64xf32>
    %790 = arith.addf %789, %737 : vector<2x64xf32>
    %791 = vector.extract_strided_slice %790 {offsets = [0, 0], sizes = [2, 32], strides = [1, 1]} : vector<2x64xf32> to vector<2x32xf32>
    %792 = arith.index_cast %c1_i32_429 : i32 to index
    %c0_434 = arith.constant 0 : index
    %c0_435 = arith.constant 0 : index
    %793 = vector.load %arg10[%792, %c0_434, %c0_435] : memref<8x2x64xf32, #tpu.memory_space<vmem>>, vector<1x2x32xf32>
    %794 = vector.shape_cast %793 : vector<1x2x32xf32> to vector<2x32xf32>
    %795 = vector.shape_cast %791 : vector<2x32xf32> to vector<1x2x32xf32>
    tpu.vector_store %arg10[%792, %c0_434, %c0_435], %795 {strides = array<i32>} : memref<8x2x64xf32, #tpu.memory_space<vmem>>, vector<1x2x32xf32>,
    %796 = vector.extract_strided_slice %790 {offsets = [0, 32], sizes = [2, 32], strides = [1, 1]} : vector<2x64xf32> to vector<2x32xf32>
    %797 = arith.index_cast %788 : i32 to index
    %c0_436 = arith.constant 0 : index
    %c32_437 = arith.constant 32 : index
    %798 = vector.load %arg10[%797, %c0_436, %c32_437] : memref<8x2x64xf32, #tpu.memory_space<vmem>>, vector<1x2x32xf32>
    %799 = vector.shape_cast %798 : vector<1x2x32xf32> to vector<2x32xf32>
    %800 = vector.shape_cast %796 : vector<2x32xf32> to vector<1x2x32xf32>
    tpu.vector_store %arg10[%797, %c0_436, %c32_437], %800 {strides = array<i32>} : memref<8x2x64xf32, #tpu.memory_space<vmem>>, vector<1x2x32xf32>,
    %cst_438 = arith.constant dense<0.000000e+00> : vector<2x64xf32>
    %801 = tpu.matmul %787, %727, %cst_438 {dimension_numbers = #tpu.dot_dimension_numbers<[1], [0], [0], [1], [0, 0, 1, 1], [], []>} : vector<2x64xf32>, vector<64x64xf32>, vector<2x64xf32> -> vector<2x64xf32>
    %802 = arith.addf %801, %739 : vector<2x64xf32>
    %803 = vector.extract_strided_slice %802 {offsets = [0, 0], sizes = [2, 32], strides = [1, 1]} : vector<2x64xf32> to vector<2x32xf32>
    %804 = arith.index_cast %c1_i32_429 : i32 to index
    %c0_439 = arith.constant 0 : index
    %c0_440 = arith.constant 0 : index
    %805 = vector.load %arg11[%804, %c0_439, %c0_440] : memref<8x2x64xf32, #tpu.memory_space<vmem>>, vector<1x2x32xf32>
    %806 = vector.shape_cast %805 : vector<1x2x32xf32> to vector<2x32xf32>
    %807 = vector.shape_cast %803 : vector<2x32xf32> to vector<1x2x32xf32>
    tpu.vector_store %arg11[%804, %c0_439, %c0_440], %807 {strides = array<i32>} : memref<8x2x64xf32, #tpu.memory_space<vmem>>, vector<1x2x32xf32>,
    %808 = vector.extract_strided_slice %802 {offsets = [0, 32], sizes = [2, 32], strides = [1, 1]} : vector<2x64xf32> to vector<2x32xf32>
    %809 = arith.index_cast %788 : i32 to index
    %c0_441 = arith.constant 0 : index
    %c32_442 = arith.constant 32 : index
    %810 = vector.load %arg11[%809, %c0_441, %c32_442] : memref<8x2x64xf32, #tpu.memory_space<vmem>>, vector<1x2x32xf32>
    %811 = vector.shape_cast %810 : vector<1x2x32xf32> to vector<2x32xf32>
    %812 = vector.shape_cast %808 : vector<2x32xf32> to vector<1x2x32xf32>
    tpu.vector_store %arg11[%809, %c0_441, %c32_442], %812 {strides = array<i32>} : memref<8x2x64xf32, #tpu.memory_space<vmem>>, vector<1x2x32xf32>,
    %cst_443 = arith.constant dense<0.000000e+00> : vector<2x64xf32>
    %813 = tpu.matmul %787, %729, %cst_443 {dimension_numbers = #tpu.dot_dimension_numbers<[1], [0], [0], [1], [0, 0, 1, 1], [], []>} : vector<2x64xf32>, vector<64x64xf32>, vector<2x64xf32> -> vector<2x64xf32>
    %814 = arith.addf %813, %741 : vector<2x64xf32>
    %815 = vector.extract_strided_slice %814 {offsets = [0, 0], sizes = [2, 32], strides = [1, 1]} : vector<2x64xf32> to vector<2x32xf32>
    %816 = arith.index_cast %c1_i32_429 : i32 to index
    %c0_444 = arith.constant 0 : index
    %c0_445 = arith.constant 0 : index
    %817 = vector.load %arg12[%816, %c0_444, %c0_445] : memref<8x2x64xf32, #tpu.memory_space<vmem>>, vector<1x2x32xf32>
    %818 = vector.shape_cast %817 : vector<1x2x32xf32> to vector<2x32xf32>
    %819 = vector.shape_cast %815 : vector<2x32xf32> to vector<1x2x32xf32>
    tpu.vector_store %arg12[%816, %c0_444, %c0_445], %819 {strides = array<i32>} : memref<8x2x64xf32, #tpu.memory_space<vmem>>, vector<1x2x32xf32>,
    %820 = vector.extract_strided_slice %814 {offsets = [0, 32], sizes = [2, 32], strides = [1, 1]} : vector<2x64xf32> to vector<2x32xf32>
    %821 = arith.index_cast %788 : i32 to index
    %c0_446 = arith.constant 0 : index
    %c32_447 = arith.constant 32 : index
    %822 = vector.load %arg12[%821, %c0_446, %c32_447] : memref<8x2x64xf32, #tpu.memory_space<vmem>>, vector<1x2x32xf32>
    %823 = vector.shape_cast %822 : vector<1x2x32xf32> to vector<2x32xf32>
    %824 = vector.shape_cast %820 : vector<2x32xf32> to vector<1x2x32xf32>
    tpu.vector_store %arg12[%821, %c0_446, %c32_447], %824 {strides = array<i32>} : memref<8x2x64xf32, #tpu.memory_space<vmem>>, vector<1x2x32xf32>,
    %c2_i32_448 = arith.constant 2 : i32
    %825 = arith.index_cast %c2_i32_448 : i32 to index
    %c0_449 = arith.constant 0 : index
    %c0_450 = arith.constant 0 : index
    %826 = vector.load %arg9[%825, %c0_449, %c0_450] : memref<8x2x128xf32, #tpu.memory_space<vmem>>, vector<1x2x128xf32>
    %827 = vector.shape_cast %826 : vector<1x2x128xf32> to vector<2x128xf32>
    %828 = vector.extract_strided_slice %827 {offsets = [0, 0], sizes = [2, 64], strides = [1, 1]} : vector<2x128xf32> to vector<2x64xf32>
    %c7_i32_451 = arith.constant 7 : i32
    %829 = arith.subi %c7_i32_451, %c2_i32_448 : i32
    %cst_452 = arith.constant dense<0.000000e+00> : vector<2x64xf32>
    %830 = tpu.matmul %828, %725, %cst_452 {dimension_numbers = #tpu.dot_dimension_numbers<[1], [0], [0], [1], [0, 0, 1, 1], [], []>} : vector<2x64xf32>, vector<64x64xf32>, vector<2x64xf32> -> vector<2x64xf32>
    %831 = arith.addf %830, %737 : vector<2x64xf32>
    %832 = vector.extract_strided_slice %831 {offsets = [0, 0], sizes = [2, 32], strides = [1, 1]} : vector<2x64xf32> to vector<2x32xf32>
    %833 = arith.index_cast %c2_i32_448 : i32 to index
    %c0_453 = arith.constant 0 : index
    %c0_454 = arith.constant 0 : index
    %834 = vector.load %arg10[%833, %c0_453, %c0_454] : memref<8x2x64xf32, #tpu.memory_space<vmem>>, vector<1x2x32xf32>
    %835 = vector.shape_cast %834 : vector<1x2x32xf32> to vector<2x32xf32>
    %836 = vector.shape_cast %832 : vector<2x32xf32> to vector<1x2x32xf32>
    tpu.vector_store %arg10[%833, %c0_453, %c0_454], %836 {strides = array<i32>} : memref<8x2x64xf32, #tpu.memory_space<vmem>>, vector<1x2x32xf32>,
    %837 = vector.extract_strided_slice %831 {offsets = [0, 32], sizes = [2, 32], strides = [1, 1]} : vector<2x64xf32> to vector<2x32xf32>
    %838 = arith.index_cast %829 : i32 to index
    %c0_455 = arith.constant 0 : index
    %c32_456 = arith.constant 32 : index
    %839 = vector.load %arg10[%838, %c0_455, %c32_456] : memref<8x2x64xf32, #tpu.memory_space<vmem>>, vector<1x2x32xf32>
    %840 = vector.shape_cast %839 : vector<1x2x32xf32> to vector<2x32xf32>
    %841 = vector.shape_cast %837 : vector<2x32xf32> to vector<1x2x32xf32>
    tpu.vector_store %arg10[%838, %c0_455, %c32_456], %841 {strides = array<i32>} : memref<8x2x64xf32, #tpu.memory_space<vmem>>, vector<1x2x32xf32>,
    %cst_457 = arith.constant dense<0.000000e+00> : vector<2x64xf32>
    %842 = tpu.matmul %828, %727, %cst_457 {dimension_numbers = #tpu.dot_dimension_numbers<[1], [0], [0], [1], [0, 0, 1, 1], [], []>} : vector<2x64xf32>, vector<64x64xf32>, vector<2x64xf32> -> vector<2x64xf32>
    %843 = arith.addf %842, %739 : vector<2x64xf32>
    %844 = vector.extract_strided_slice %843 {offsets = [0, 0], sizes = [2, 32], strides = [1, 1]} : vector<2x64xf32> to vector<2x32xf32>
    %845 = arith.index_cast %c2_i32_448 : i32 to index
    %c0_458 = arith.constant 0 : index
    %c0_459 = arith.constant 0 : index
    %846 = vector.load %arg11[%845, %c0_458, %c0_459] : memref<8x2x64xf32, #tpu.memory_space<vmem>>, vector<1x2x32xf32>
    %847 = vector.shape_cast %846 : vector<1x2x32xf32> to vector<2x32xf32>
    %848 = vector.shape_cast %844 : vector<2x32xf32> to vector<1x2x32xf32>
    tpu.vector_store %arg11[%845, %c0_458, %c0_459], %848 {strides = array<i32>} : memref<8x2x64xf32, #tpu.memory_space<vmem>>, vector<1x2x32xf32>,
    %849 = vector.extract_strided_slice %843 {offsets = [0, 32], sizes = [2, 32], strides = [1, 1]} : vector<2x64xf32> to vector<2x32xf32>
    %850 = arith.index_cast %829 : i32 to index
    %c0_460 = arith.constant 0 : index
    %c32_461 = arith.constant 32 : index
    %851 = vector.load %arg11[%850, %c0_460, %c32_461] : memref<8x2x64xf32, #tpu.memory_space<vmem>>, vector<1x2x32xf32>
    %852 = vector.shape_cast %851 : vector<1x2x32xf32> to vector<2x32xf32>
    %853 = vector.shape_cast %849 : vector<2x32xf32> to vector<1x2x32xf32>
    tpu.vector_store %arg11[%850, %c0_460, %c32_461], %853 {strides = array<i32>} : memref<8x2x64xf32, #tpu.memory_space<vmem>>, vector<1x2x32xf32>,
    %cst_462 = arith.constant dense<0.000000e+00> : vector<2x64xf32>
    %854 = tpu.matmul %828, %729, %cst_462 {dimension_numbers = #tpu.dot_dimension_numbers<[1], [0], [0], [1], [0, 0, 1, 1], [], []>} : vector<2x64xf32>, vector<64x64xf32>, vector<2x64xf32> -> vector<2x64xf32>
    %855 = arith.addf %854, %741 : vector<2x64xf32>
    %856 = vector.extract_strided_slice %855 {offsets = [0, 0], sizes = [2, 32], strides = [1, 1]} : vector<2x64xf32> to vector<2x32xf32>
    %857 = arith.index_cast %c2_i32_448 : i32 to index
    %c0_463 = arith.constant 0 : index
    %c0_464 = arith.constant 0 : index
    %858 = vector.load %arg12[%857, %c0_463, %c0_464] : memref<8x2x64xf32, #tpu.memory_space<vmem>>, vector<1x2x32xf32>
    %859 = vector.shape_cast %858 : vector<1x2x32xf32> to vector<2x32xf32>
    %860 = vector.shape_cast %856 : vector<2x32xf32> to vector<1x2x32xf32>
    tpu.vector_store %arg12[%857, %c0_463, %c0_464], %860 {strides = array<i32>} : memref<8x2x64xf32, #tpu.memory_space<vmem>>, vector<1x2x32xf32>,
    %861 = vector.extract_strided_slice %855 {offsets = [0, 32], sizes = [2, 32], strides = [1, 1]} : vector<2x64xf32> to vector<2x32xf32>
    %862 = arith.index_cast %829 : i32 to index
    %c0_465 = arith.constant 0 : index
    %c32_466 = arith.constant 32 : index
    %863 = vector.load %arg12[%862, %c0_465, %c32_466] : memref<8x2x64xf32, #tpu.memory_space<vmem>>, vector<1x2x32xf32>
    %864 = vector.shape_cast %863 : vector<1x2x32xf32> to vector<2x32xf32>
    %865 = vector.shape_cast %861 : vector<2x32xf32> to vector<1x2x32xf32>
    tpu.vector_store %arg12[%862, %c0_465, %c32_466], %865 {strides = array<i32>} : memref<8x2x64xf32, #tpu.memory_space<vmem>>, vector<1x2x32xf32>,
    %c3_i32_467 = arith.constant 3 : i32
    %866 = arith.index_cast %c3_i32_467 : i32 to index
    %c0_468 = arith.constant 0 : index
    %c0_469 = arith.constant 0 : index
    %867 = vector.load %arg9[%866, %c0_468, %c0_469] : memref<8x2x128xf32, #tpu.memory_space<vmem>>, vector<1x2x128xf32>
    %868 = vector.shape_cast %867 : vector<1x2x128xf32> to vector<2x128xf32>
    %869 = vector.extract_strided_slice %868 {offsets = [0, 0], sizes = [2, 64], strides = [1, 1]} : vector<2x128xf32> to vector<2x64xf32>
    %c7_i32_470 = arith.constant 7 : i32
    %870 = arith.subi %c7_i32_470, %c3_i32_467 : i32
    %cst_471 = arith.constant dense<0.000000e+00> : vector<2x64xf32>
    %871 = tpu.matmul %869, %725, %cst_471 {dimension_numbers = #tpu.dot_dimension_numbers<[1], [0], [0], [1], [0, 0, 1, 1], [], []>} : vector<2x64xf32>, vector<64x64xf32>, vector<2x64xf32> -> vector<2x64xf32>
    %872 = arith.addf %871, %737 : vector<2x64xf32>
    %873 = vector.extract_strided_slice %872 {offsets = [0, 0], sizes = [2, 32], strides = [1, 1]} : vector<2x64xf32> to vector<2x32xf32>
    %874 = arith.index_cast %c3_i32_467 : i32 to index
    %c0_472 = arith.constant 0 : index
    %c0_473 = arith.constant 0 : index
    %875 = vector.load %arg10[%874, %c0_472, %c0_473] : memref<8x2x64xf32, #tpu.memory_space<vmem>>, vector<1x2x32xf32>
    %876 = vector.shape_cast %875 : vector<1x2x32xf32> to vector<2x32xf32>
    %877 = vector.shape_cast %873 : vector<2x32xf32> to vector<1x2x32xf32>
    tpu.vector_store %arg10[%874, %c0_472, %c0_473], %877 {strides = array<i32>} : memref<8x2x64xf32, #tpu.memory_space<vmem>>, vector<1x2x32xf32>,
    %878 = vector.extract_strided_slice %872 {offsets = [0, 32], sizes = [2, 32], strides = [1, 1]} : vector<2x64xf32> to vector<2x32xf32>
    %879 = arith.index_cast %870 : i32 to index
    %c0_474 = arith.constant 0 : index
    %c32_475 = arith.constant 32 : index
    %880 = vector.load %arg10[%879, %c0_474, %c32_475] : memref<8x2x64xf32, #tpu.memory_space<vmem>>, vector<1x2x32xf32>
    %881 = vector.shape_cast %880 : vector<1x2x32xf32> to vector<2x32xf32>
    %882 = vector.shape_cast %878 : vector<2x32xf32> to vector<1x2x32xf32>
    tpu.vector_store %arg10[%879, %c0_474, %c32_475], %882 {strides = array<i32>} : memref<8x2x64xf32, #tpu.memory_space<vmem>>, vector<1x2x32xf32>,
    %cst_476 = arith.constant dense<0.000000e+00> : vector<2x64xf32>
    %883 = tpu.matmul %869, %727, %cst_476 {dimension_numbers = #tpu.dot_dimension_numbers<[1], [0], [0], [1], [0, 0, 1, 1], [], []>} : vector<2x64xf32>, vector<64x64xf32>, vector<2x64xf32> -> vector<2x64xf32>
    %884 = arith.addf %883, %739 : vector<2x64xf32>
    %885 = vector.extract_strided_slice %884 {offsets = [0, 0], sizes = [2, 32], strides = [1, 1]} : vector<2x64xf32> to vector<2x32xf32>
    %886 = arith.index_cast %c3_i32_467 : i32 to index
    %c0_477 = arith.constant 0 : index
    %c0_478 = arith.constant 0 : index
    %887 = vector.load %arg11[%886, %c0_477, %c0_478] : memref<8x2x64xf32, #tpu.memory_space<vmem>>, vector<1x2x32xf32>
    %888 = vector.shape_cast %887 : vector<1x2x32xf32> to vector<2x32xf32>
    %889 = vector.shape_cast %885 : vector<2x32xf32> to vector<1x2x32xf32>
    tpu.vector_store %arg11[%886, %c0_477, %c0_478], %889 {strides = array<i32>} : memref<8x2x64xf32, #tpu.memory_space<vmem>>, vector<1x2x32xf32>,
    %890 = vector.extract_strided_slice %884 {offsets = [0, 32], sizes = [2, 32], strides = [1, 1]} : vector<2x64xf32> to vector<2x32xf32>
    %891 = arith.index_cast %870 : i32 to index
    %c0_479 = arith.constant 0 : index
    %c32_480 = arith.constant 32 : index
    %892 = vector.load %arg11[%891, %c0_479, %c32_480] : memref<8x2x64xf32, #tpu.memory_space<vmem>>, vector<1x2x32xf32>
    %893 = vector.shape_cast %892 : vector<1x2x32xf32> to vector<2x32xf32>
    %894 = vector.shape_cast %890 : vector<2x32xf32> to vector<1x2x32xf32>
    tpu.vector_store %arg11[%891, %c0_479, %c32_480], %894 {strides = array<i32>} : memref<8x2x64xf32, #tpu.memory_space<vmem>>, vector<1x2x32xf32>,
    %cst_481 = arith.constant dense<0.000000e+00> : vector<2x64xf32>
    %895 = tpu.matmul %869, %729, %cst_481 {dimension_numbers = #tpu.dot_dimension_numbers<[1], [0], [0], [1], [0, 0, 1, 1], [], []>} : vector<2x64xf32>, vector<64x64xf32>, vector<2x64xf32> -> vector<2x64xf32>
    %896 = arith.addf %895, %741 : vector<2x64xf32>
    %897 = vector.extract_strided_slice %896 {offsets = [0, 0], sizes = [2, 32], strides = [1, 1]} : vector<2x64xf32> to vector<2x32xf32>
    %898 = arith.index_cast %c3_i32_467 : i32 to index
    %c0_482 = arith.constant 0 : index
    %c0_483 = arith.constant 0 : index
    %899 = vector.load %arg12[%898, %c0_482, %c0_483] : memref<8x2x64xf32, #tpu.memory_space<vmem>>, vector<1x2x32xf32>
    %900 = vector.shape_cast %899 : vector<1x2x32xf32> to vector<2x32xf32>
    %901 = vector.shape_cast %897 : vector<2x32xf32> to vector<1x2x32xf32>
    tpu.vector_store %arg12[%898, %c0_482, %c0_483], %901 {strides = array<i32>} : memref<8x2x64xf32, #tpu.memory_space<vmem>>, vector<1x2x32xf32>,
    %902 = vector.extract_strided_slice %896 {offsets = [0, 32], sizes = [2, 32], strides = [1, 1]} : vector<2x64xf32> to vector<2x32xf32>
    %903 = arith.index_cast %870 : i32 to index
    %c0_484 = arith.constant 0 : index
    %c32_485 = arith.constant 32 : index
    %904 = vector.load %arg12[%903, %c0_484, %c32_485] : memref<8x2x64xf32, #tpu.memory_space<vmem>>, vector<1x2x32xf32>
    %905 = vector.shape_cast %904 : vector<1x2x32xf32> to vector<2x32xf32>
    %906 = vector.shape_cast %902 : vector<2x32xf32> to vector<1x2x32xf32>
    tpu.vector_store %arg12[%903, %c0_484, %c32_485], %906 {strides = array<i32>} : memref<8x2x64xf32, #tpu.memory_space<vmem>>, vector<1x2x32xf32>,
    %c4_i32_486 = arith.constant 4 : i32
    %907 = arith.index_cast %c4_i32_486 : i32 to index
    %c0_487 = arith.constant 0 : index
    %c0_488 = arith.constant 0 : index
    %908 = vector.load %arg9[%907, %c0_487, %c0_488] : memref<8x2x128xf32, #tpu.memory_space<vmem>>, vector<1x2x128xf32>
    %909 = vector.shape_cast %908 : vector<1x2x128xf32> to vector<2x128xf32>
    %910 = vector.extract_strided_slice %909 {offsets = [0, 0], sizes = [2, 64], strides = [1, 1]} : vector<2x128xf32> to vector<2x64xf32>
    %c7_i32_489 = arith.constant 7 : i32
    %911 = arith.subi %c7_i32_489, %c4_i32_486 : i32
    %cst_490 = arith.constant dense<0.000000e+00> : vector<2x64xf32>
    %912 = tpu.matmul %910, %725, %cst_490 {dimension_numbers = #tpu.dot_dimension_numbers<[1], [0], [0], [1], [0, 0, 1, 1], [], []>} : vector<2x64xf32>, vector<64x64xf32>, vector<2x64xf32> -> vector<2x64xf32>
    %913 = arith.addf %912, %737 : vector<2x64xf32>
    %914 = vector.extract_strided_slice %913 {offsets = [0, 0], sizes = [2, 32], strides = [1, 1]} : vector<2x64xf32> to vector<2x32xf32>
    %915 = arith.index_cast %c4_i32_486 : i32 to index
    %c0_491 = arith.constant 0 : index
    %c0_492 = arith.constant 0 : index
    %916 = vector.load %arg10[%915, %c0_491, %c0_492] : memref<8x2x64xf32, #tpu.memory_space<vmem>>, vector<1x2x32xf32>
    %917 = vector.shape_cast %916 : vector<1x2x32xf32> to vector<2x32xf32>
    %918 = vector.shape_cast %914 : vector<2x32xf32> to vector<1x2x32xf32>
    tpu.vector_store %arg10[%915, %c0_491, %c0_492], %918 {strides = array<i32>} : memref<8x2x64xf32, #tpu.memory_space<vmem>>, vector<1x2x32xf32>,
    %919 = vector.extract_strided_slice %913 {offsets = [0, 32], sizes = [2, 32], strides = [1, 1]} : vector<2x64xf32> to vector<2x32xf32>
    %920 = arith.index_cast %911 : i32 to index
    %c0_493 = arith.constant 0 : index
    %c32_494 = arith.constant 32 : index
    %921 = vector.load %arg10[%920, %c0_493, %c32_494] : memref<8x2x64xf32, #tpu.memory_space<vmem>>, vector<1x2x32xf32>
    %922 = vector.shape_cast %921 : vector<1x2x32xf32> to vector<2x32xf32>
    %923 = vector.shape_cast %919 : vector<2x32xf32> to vector<1x2x32xf32>
    tpu.vector_store %arg10[%920, %c0_493, %c32_494], %923 {strides = array<i32>} : memref<8x2x64xf32, #tpu.memory_space<vmem>>, vector<1x2x32xf32>,
    %cst_495 = arith.constant dense<0.000000e+00> : vector<2x64xf32>
    %924 = tpu.matmul %910, %727, %cst_495 {dimension_numbers = #tpu.dot_dimension_numbers<[1], [0], [0], [1], [0, 0, 1, 1], [], []>} : vector<2x64xf32>, vector<64x64xf32>, vector<2x64xf32> -> vector<2x64xf32>
    %925 = arith.addf %924, %739 : vector<2x64xf32>
    %926 = vector.extract_strided_slice %925 {offsets = [0, 0], sizes = [2, 32], strides = [1, 1]} : vector<2x64xf32> to vector<2x32xf32>
    %927 = arith.index_cast %c4_i32_486 : i32 to index
    %c0_496 = arith.constant 0 : index
    %c0_497 = arith.constant 0 : index
    %928 = vector.load %arg11[%927, %c0_496, %c0_497] : memref<8x2x64xf32, #tpu.memory_space<vmem>>, vector<1x2x32xf32>
    %929 = vector.shape_cast %928 : vector<1x2x32xf32> to vector<2x32xf32>
    %930 = vector.shape_cast %926 : vector<2x32xf32> to vector<1x2x32xf32>
    tpu.vector_store %arg11[%927, %c0_496, %c0_497], %930 {strides = array<i32>} : memref<8x2x64xf32, #tpu.memory_space<vmem>>, vector<1x2x32xf32>,
    %931 = vector.extract_strided_slice %925 {offsets = [0, 32], sizes = [2, 32], strides = [1, 1]} : vector<2x64xf32> to vector<2x32xf32>
    %932 = arith.index_cast %911 : i32 to index
    %c0_498 = arith.constant 0 : index
    %c32_499 = arith.constant 32 : index
    %933 = vector.load %arg11[%932, %c0_498, %c32_499] : memref<8x2x64xf32, #tpu.memory_space<vmem>>, vector<1x2x32xf32>
    %934 = vector.shape_cast %933 : vector<1x2x32xf32> to vector<2x32xf32>
    %935 = vector.shape_cast %931 : vector<2x32xf32> to vector<1x2x32xf32>
    tpu.vector_store %arg11[%932, %c0_498, %c32_499], %935 {strides = array<i32>} : memref<8x2x64xf32, #tpu.memory_space<vmem>>, vector<1x2x32xf32>,
    %cst_500 = arith.constant dense<0.000000e+00> : vector<2x64xf32>
    %936 = tpu.matmul %910, %729, %cst_500 {dimension_numbers = #tpu.dot_dimension_numbers<[1], [0], [0], [1], [0, 0, 1, 1], [], []>} : vector<2x64xf32>, vector<64x64xf32>, vector<2x64xf32> -> vector<2x64xf32>
    %937 = arith.addf %936, %741 : vector<2x64xf32>
    %938 = vector.extract_strided_slice %937 {offsets = [0, 0], sizes = [2, 32], strides = [1, 1]} : vector<2x64xf32> to vector<2x32xf32>
    %939 = arith.index_cast %c4_i32_486 : i32 to index
    %c0_501 = arith.constant 0 : index
    %c0_502 = arith.constant 0 : index
    %940 = vector.load %arg12[%939, %c0_501, %c0_502] : memref<8x2x64xf32, #tpu.memory_space<vmem>>, vector<1x2x32xf32>
    %941 = vector.shape_cast %940 : vector<1x2x32xf32> to vector<2x32xf32>
    %942 = vector.shape_cast %938 : vector<2x32xf32> to vector<1x2x32xf32>
    tpu.vector_store %arg12[%939, %c0_501, %c0_502], %942 {strides = array<i32>} : memref<8x2x64xf32, #tpu.memory_space<vmem>>, vector<1x2x32xf32>,
    %943 = vector.extract_strided_slice %937 {offsets = [0, 32], sizes = [2, 32], strides = [1, 1]} : vector<2x64xf32> to vector<2x32xf32>
    %944 = arith.index_cast %911 : i32 to index
    %c0_503 = arith.constant 0 : index
    %c32_504 = arith.constant 32 : index
    %945 = vector.load %arg12[%944, %c0_503, %c32_504] : memref<8x2x64xf32, #tpu.memory_space<vmem>>, vector<1x2x32xf32>
    %946 = vector.shape_cast %945 : vector<1x2x32xf32> to vector<2x32xf32>
    %947 = vector.shape_cast %943 : vector<2x32xf32> to vector<1x2x32xf32>
    tpu.vector_store %arg12[%944, %c0_503, %c32_504], %947 {strides = array<i32>} : memref<8x2x64xf32, #tpu.memory_space<vmem>>, vector<1x2x32xf32>,
    %c5_i32_505 = arith.constant 5 : i32
    %948 = arith.index_cast %c5_i32_505 : i32 to index
    %c0_506 = arith.constant 0 : index
    %c0_507 = arith.constant 0 : index
    %949 = vector.load %arg9[%948, %c0_506, %c0_507] : memref<8x2x128xf32, #tpu.memory_space<vmem>>, vector<1x2x128xf32>
    %950 = vector.shape_cast %949 : vector<1x2x128xf32> to vector<2x128xf32>
    %951 = vector.extract_strided_slice %950 {offsets = [0, 0], sizes = [2, 64], strides = [1, 1]} : vector<2x128xf32> to vector<2x64xf32>
    %c7_i32_508 = arith.constant 7 : i32
    %952 = arith.subi %c7_i32_508, %c5_i32_505 : i32
    %cst_509 = arith.constant dense<0.000000e+00> : vector<2x64xf32>
    %953 = tpu.matmul %951, %725, %cst_509 {dimension_numbers = #tpu.dot_dimension_numbers<[1], [0], [0], [1], [0, 0, 1, 1], [], []>} : vector<2x64xf32>, vector<64x64xf32>, vector<2x64xf32> -> vector<2x64xf32>
    %954 = arith.addf %953, %737 : vector<2x64xf32>
    %955 = vector.extract_strided_slice %954 {offsets = [0, 0], sizes = [2, 32], strides = [1, 1]} : vector<2x64xf32> to vector<2x32xf32>
    %956 = arith.index_cast %c5_i32_505 : i32 to index
    %c0_510 = arith.constant 0 : index
    %c0_511 = arith.constant 0 : index
    %957 = vector.load %arg10[%956, %c0_510, %c0_511] : memref<8x2x64xf32, #tpu.memory_space<vmem>>, vector<1x2x32xf32>
    %958 = vector.shape_cast %957 : vector<1x2x32xf32> to vector<2x32xf32>
    %959 = vector.shape_cast %955 : vector<2x32xf32> to vector<1x2x32xf32>
    tpu.vector_store %arg10[%956, %c0_510, %c0_511], %959 {strides = array<i32>} : memref<8x2x64xf32, #tpu.memory_space<vmem>>, vector<1x2x32xf32>,
    %960 = vector.extract_strided_slice %954 {offsets = [0, 32], sizes = [2, 32], strides = [1, 1]} : vector<2x64xf32> to vector<2x32xf32>
    %961 = arith.index_cast %952 : i32 to index
    %c0_512 = arith.constant 0 : index
    %c32_513 = arith.constant 32 : index
    %962 = vector.load %arg10[%961, %c0_512, %c32_513] : memref<8x2x64xf32, #tpu.memory_space<vmem>>, vector<1x2x32xf32>
    %963 = vector.shape_cast %962 : vector<1x2x32xf32> to vector<2x32xf32>
    %964 = vector.shape_cast %960 : vector<2x32xf32> to vector<1x2x32xf32>
    tpu.vector_store %arg10[%961, %c0_512, %c32_513], %964 {strides = array<i32>} : memref<8x2x64xf32, #tpu.memory_space<vmem>>, vector<1x2x32xf32>,
    %cst_514 = arith.constant dense<0.000000e+00> : vector<2x64xf32>
    %965 = tpu.matmul %951, %727, %cst_514 {dimension_numbers = #tpu.dot_dimension_numbers<[1], [0], [0], [1], [0, 0, 1, 1], [], []>} : vector<2x64xf32>, vector<64x64xf32>, vector<2x64xf32> -> vector<2x64xf32>
    %966 = arith.addf %965, %739 : vector<2x64xf32>
    %967 = vector.extract_strided_slice %966 {offsets = [0, 0], sizes = [2, 32], strides = [1, 1]} : vector<2x64xf32> to vector<2x32xf32>
    %968 = arith.index_cast %c5_i32_505 : i32 to index
    %c0_515 = arith.constant 0 : index
    %c0_516 = arith.constant 0 : index
    %969 = vector.load %arg11[%968, %c0_515, %c0_516] : memref<8x2x64xf32, #tpu.memory_space<vmem>>, vector<1x2x32xf32>
    %970 = vector.shape_cast %969 : vector<1x2x32xf32> to vector<2x32xf32>
    %971 = vector.shape_cast %967 : vector<2x32xf32> to vector<1x2x32xf32>
    tpu.vector_store %arg11[%968, %c0_515, %c0_516], %971 {strides = array<i32>} : memref<8x2x64xf32, #tpu.memory_space<vmem>>, vector<1x2x32xf32>,
    %972 = vector.extract_strided_slice %966 {offsets = [0, 32], sizes = [2, 32], strides = [1, 1]} : vector<2x64xf32> to vector<2x32xf32>
    %973 = arith.index_cast %952 : i32 to index
    %c0_517 = arith.constant 0 : index
    %c32_518 = arith.constant 32 : index
    %974 = vector.load %arg11[%973, %c0_517, %c32_518] : memref<8x2x64xf32, #tpu.memory_space<vmem>>, vector<1x2x32xf32>
    %975 = vector.shape_cast %974 : vector<1x2x32xf32> to vector<2x32xf32>
    %976 = vector.shape_cast %972 : vector<2x32xf32> to vector<1x2x32xf32>
    tpu.vector_store %arg11[%973, %c0_517, %c32_518], %976 {strides = array<i32>} : memref<8x2x64xf32, #tpu.memory_space<vmem>>, vector<1x2x32xf32>,
    %cst_519 = arith.constant dense<0.000000e+00> : vector<2x64xf32>
    %977 = tpu.matmul %951, %729, %cst_519 {dimension_numbers = #tpu.dot_dimension_numbers<[1], [0], [0], [1], [0, 0, 1, 1], [], []>} : vector<2x64xf32>, vector<64x64xf32>, vector<2x64xf32> -> vector<2x64xf32>
    %978 = arith.addf %977, %741 : vector<2x64xf32>
    %979 = vector.extract_strided_slice %978 {offsets = [0, 0], sizes = [2, 32], strides = [1, 1]} : vector<2x64xf32> to vector<2x32xf32>
    %980 = arith.index_cast %c5_i32_505 : i32 to index
    %c0_520 = arith.constant 0 : index
    %c0_521 = arith.constant 0 : index
    %981 = vector.load %arg12[%980, %c0_520, %c0_521] : memref<8x2x64xf32, #tpu.memory_space<vmem>>, vector<1x2x32xf32>
    %982 = vector.shape_cast %981 : vector<1x2x32xf32> to vector<2x32xf32>
    %983 = vector.shape_cast %979 : vector<2x32xf32> to vector<1x2x32xf32>
    tpu.vector_store %arg12[%980, %c0_520, %c0_521], %983 {strides = array<i32>} : memref<8x2x64xf32, #tpu.memory_space<vmem>>, vector<1x2x32xf32>,
    %984 = vector.extract_strided_slice %978 {offsets = [0, 32], sizes = [2, 32], strides = [1, 1]} : vector<2x64xf32> to vector<2x32xf32>
    %985 = arith.index_cast %952 : i32 to index
    %c0_522 = arith.constant 0 : index
    %c32_523 = arith.constant 32 : index
    %986 = vector.load %arg12[%985, %c0_522, %c32_523] : memref<8x2x64xf32, #tpu.memory_space<vmem>>, vector<1x2x32xf32>
    %987 = vector.shape_cast %986 : vector<1x2x32xf32> to vector<2x32xf32>
    %988 = vector.shape_cast %984 : vector<2x32xf32> to vector<1x2x32xf32>
    tpu.vector_store %arg12[%985, %c0_522, %c32_523], %988 {strides = array<i32>} : memref<8x2x64xf32, #tpu.memory_space<vmem>>, vector<1x2x32xf32>,
    %c6_i32_524 = arith.constant 6 : i32
    %989 = arith.index_cast %c6_i32_524 : i32 to index
    %c0_525 = arith.constant 0 : index
    %c0_526 = arith.constant 0 : index
    %990 = vector.load %arg9[%989, %c0_525, %c0_526] : memref<8x2x128xf32, #tpu.memory_space<vmem>>, vector<1x2x128xf32>
    %991 = vector.shape_cast %990 : vector<1x2x128xf32> to vector<2x128xf32>
    %992 = vector.extract_strided_slice %991 {offsets = [0, 0], sizes = [2, 64], strides = [1, 1]} : vector<2x128xf32> to vector<2x64xf32>
    %c7_i32_527 = arith.constant 7 : i32
    %993 = arith.subi %c7_i32_527, %c6_i32_524 : i32
    %cst_528 = arith.constant dense<0.000000e+00> : vector<2x64xf32>
    %994 = tpu.matmul %992, %725, %cst_528 {dimension_numbers = #tpu.dot_dimension_numbers<[1], [0], [0], [1], [0, 0, 1, 1], [], []>} : vector<2x64xf32>, vector<64x64xf32>, vector<2x64xf32> -> vector<2x64xf32>
    %995 = arith.addf %994, %737 : vector<2x64xf32>
    %996 = vector.extract_strided_slice %995 {offsets = [0, 0], sizes = [2, 32], strides = [1, 1]} : vector<2x64xf32> to vector<2x32xf32>
    %997 = arith.index_cast %c6_i32_524 : i32 to index
    %c0_529 = arith.constant 0 : index
    %c0_530 = arith.constant 0 : index
    %998 = vector.load %arg10[%997, %c0_529, %c0_530] : memref<8x2x64xf32, #tpu.memory_space<vmem>>, vector<1x2x32xf32>
    %999 = vector.shape_cast %998 : vector<1x2x32xf32> to vector<2x32xf32>
    %1000 = vector.shape_cast %996 : vector<2x32xf32> to vector<1x2x32xf32>
    tpu.vector_store %arg10[%997, %c0_529, %c0_530], %1000 {strides = array<i32>} : memref<8x2x64xf32, #tpu.memory_space<vmem>>, vector<1x2x32xf32>,
    %1001 = vector.extract_strided_slice %995 {offsets = [0, 32], sizes = [2, 32], strides = [1, 1]} : vector<2x64xf32> to vector<2x32xf32>
    %1002 = arith.index_cast %993 : i32 to index
    %c0_531 = arith.constant 0 : index
    %c32_532 = arith.constant 32 : index
    %1003 = vector.load %arg10[%1002, %c0_531, %c32_532] : memref<8x2x64xf32, #tpu.memory_space<vmem>>, vector<1x2x32xf32>
    %1004 = vector.shape_cast %1003 : vector<1x2x32xf32> to vector<2x32xf32>
    %1005 = vector.shape_cast %1001 : vector<2x32xf32> to vector<1x2x32xf32>
    tpu.vector_store %arg10[%1002, %c0_531, %c32_532], %1005 {strides = array<i32>} : memref<8x2x64xf32, #tpu.memory_space<vmem>>, vector<1x2x32xf32>,
    %cst_533 = arith.constant dense<0.000000e+00> : vector<2x64xf32>
    %1006 = tpu.matmul %992, %727, %cst_533 {dimension_numbers = #tpu.dot_dimension_numbers<[1], [0], [0], [1], [0, 0, 1, 1], [], []>} : vector<2x64xf32>, vector<64x64xf32>, vector<2x64xf32> -> vector<2x64xf32>
    %1007 = arith.addf %1006, %739 : vector<2x64xf32>
    %1008 = vector.extract_strided_slice %1007 {offsets = [0, 0], sizes = [2, 32], strides = [1, 1]} : vector<2x64xf32> to vector<2x32xf32>
    %1009 = arith.index_cast %c6_i32_524 : i32 to index
    %c0_534 = arith.constant 0 : index
    %c0_535 = arith.constant 0 : index
    %1010 = vector.load %arg11[%1009, %c0_534, %c0_535] : memref<8x2x64xf32, #tpu.memory_space<vmem>>, vector<1x2x32xf32>
    %1011 = vector.shape_cast %1010 : vector<1x2x32xf32> to vector<2x32xf32>
    %1012 = vector.shape_cast %1008 : vector<2x32xf32> to vector<1x2x32xf32>
    tpu.vector_store %arg11[%1009, %c0_534, %c0_535], %1012 {strides = array<i32>} : memref<8x2x64xf32, #tpu.memory_space<vmem>>, vector<1x2x32xf32>,
    %1013 = vector.extract_strided_slice %1007 {offsets = [0, 32], sizes = [2, 32], strides = [1, 1]} : vector<2x64xf32> to vector<2x32xf32>
    %1014 = arith.index_cast %993 : i32 to index
    %c0_536 = arith.constant 0 : index
    %c32_537 = arith.constant 32 : index
    %1015 = vector.load %arg11[%1014, %c0_536, %c32_537] : memref<8x2x64xf32, #tpu.memory_space<vmem>>, vector<1x2x32xf32>
    %1016 = vector.shape_cast %1015 : vector<1x2x32xf32> to vector<2x32xf32>
    %1017 = vector.shape_cast %1013 : vector<2x32xf32> to vector<1x2x32xf32>
    tpu.vector_store %arg11[%1014, %c0_536, %c32_537], %1017 {strides = array<i32>} : memref<8x2x64xf32, #tpu.memory_space<vmem>>, vector<1x2x32xf32>,
    %cst_538 = arith.constant dense<0.000000e+00> : vector<2x64xf32>
    %1018 = tpu.matmul %992, %729, %cst_538 {dimension_numbers = #tpu.dot_dimension_numbers<[1], [0], [0], [1], [0, 0, 1, 1], [], []>} : vector<2x64xf32>, vector<64x64xf32>, vector<2x64xf32> -> vector<2x64xf32>
    %1019 = arith.addf %1018, %741 : vector<2x64xf32>
    %1020 = vector.extract_strided_slice %1019 {offsets = [0, 0], sizes = [2, 32], strides = [1, 1]} : vector<2x64xf32> to vector<2x32xf32>
    %1021 = arith.index_cast %c6_i32_524 : i32 to index
    %c0_539 = arith.constant 0 : index
    %c0_540 = arith.constant 0 : index
    %1022 = vector.load %arg12[%1021, %c0_539, %c0_540] : memref<8x2x64xf32, #tpu.memory_space<vmem>>, vector<1x2x32xf32>
    %1023 = vector.shape_cast %1022 : vector<1x2x32xf32> to vector<2x32xf32>
    %1024 = vector.shape_cast %1020 : vector<2x32xf32> to vector<1x2x32xf32>
    tpu.vector_store %arg12[%1021, %c0_539, %c0_540], %1024 {strides = array<i32>} : memref<8x2x64xf32, #tpu.memory_space<vmem>>, vector<1x2x32xf32>,
    %1025 = vector.extract_strided_slice %1019 {offsets = [0, 32], sizes = [2, 32], strides = [1, 1]} : vector<2x64xf32> to vector<2x32xf32>
    %1026 = arith.index_cast %993 : i32 to index
    %c0_541 = arith.constant 0 : index
    %c32_542 = arith.constant 32 : index
    %1027 = vector.load %arg12[%1026, %c0_541, %c32_542] : memref<8x2x64xf32, #tpu.memory_space<vmem>>, vector<1x2x32xf32>
    %1028 = vector.shape_cast %1027 : vector<1x2x32xf32> to vector<2x32xf32>
    %1029 = vector.shape_cast %1025 : vector<2x32xf32> to vector<1x2x32xf32>
    tpu.vector_store %arg12[%1026, %c0_541, %c32_542], %1029 {strides = array<i32>} : memref<8x2x64xf32, #tpu.memory_space<vmem>>, vector<1x2x32xf32>,
    %c7_i32_543 = arith.constant 7 : i32
    %1030 = arith.index_cast %c7_i32_543 : i32 to index
    %c0_544 = arith.constant 0 : index
    %c0_545 = arith.constant 0 : index
    %1031 = vector.load %arg9[%1030, %c0_544, %c0_545] : memref<8x2x128xf32, #tpu.memory_space<vmem>>, vector<1x2x128xf32>
    %1032 = vector.shape_cast %1031 : vector<1x2x128xf32> to vector<2x128xf32>
    %1033 = vector.extract_strided_slice %1032 {offsets = [0, 0], sizes = [2, 64], strides = [1, 1]} : vector<2x128xf32> to vector<2x64xf32>
    %c7_i32_546 = arith.constant 7 : i32
    %1034 = arith.subi %c7_i32_546, %c7_i32_543 : i32
    %cst_547 = arith.constant dense<0.000000e+00> : vector<2x64xf32>
    %1035 = tpu.matmul %1033, %725, %cst_547 {dimension_numbers = #tpu.dot_dimension_numbers<[1], [0], [0], [1], [0, 0, 1, 1], [], []>} : vector<2x64xf32>, vector<64x64xf32>, vector<2x64xf32> -> vector<2x64xf32>
    %1036 = arith.addf %1035, %737 : vector<2x64xf32>
    %1037 = vector.extract_strided_slice %1036 {offsets = [0, 0], sizes = [2, 32], strides = [1, 1]} : vector<2x64xf32> to vector<2x32xf32>
    %1038 = arith.index_cast %c7_i32_543 : i32 to index
    %c0_548 = arith.constant 0 : index
    %c0_549 = arith.constant 0 : index
    %1039 = vector.load %arg10[%1038, %c0_548, %c0_549] : memref<8x2x64xf32, #tpu.memory_space<vmem>>, vector<1x2x32xf32>
    %1040 = vector.shape_cast %1039 : vector<1x2x32xf32> to vector<2x32xf32>
    %1041 = vector.shape_cast %1037 : vector<2x32xf32> to vector<1x2x32xf32>
    tpu.vector_store %arg10[%1038, %c0_548, %c0_549], %1041 {strides = array<i32>} : memref<8x2x64xf32, #tpu.memory_space<vmem>>, vector<1x2x32xf32>,
    %1042 = vector.extract_strided_slice %1036 {offsets = [0, 32], sizes = [2, 32], strides = [1, 1]} : vector<2x64xf32> to vector<2x32xf32>
    %1043 = arith.index_cast %1034 : i32 to index
    %c0_550 = arith.constant 0 : index
    %c32_551 = arith.constant 32 : index
    %1044 = vector.load %arg10[%1043, %c0_550, %c32_551] : memref<8x2x64xf32, #tpu.memory_space<vmem>>, vector<1x2x32xf32>
    %1045 = vector.shape_cast %1044 : vector<1x2x32xf32> to vector<2x32xf32>
    %1046 = vector.shape_cast %1042 : vector<2x32xf32> to vector<1x2x32xf32>
    tpu.vector_store %arg10[%1043, %c0_550, %c32_551], %1046 {strides = array<i32>} : memref<8x2x64xf32, #tpu.memory_space<vmem>>, vector<1x2x32xf32>,
    %cst_552 = arith.constant dense<0.000000e+00> : vector<2x64xf32>
    %1047 = tpu.matmul %1033, %727, %cst_552 {dimension_numbers = #tpu.dot_dimension_numbers<[1], [0], [0], [1], [0, 0, 1, 1], [], []>} : vector<2x64xf32>, vector<64x64xf32>, vector<2x64xf32> -> vector<2x64xf32>
    %1048 = arith.addf %1047, %739 : vector<2x64xf32>
    %1049 = vector.extract_strided_slice %1048 {offsets = [0, 0], sizes = [2, 32], strides = [1, 1]} : vector<2x64xf32> to vector<2x32xf32>
    %1050 = arith.index_cast %c7_i32_543 : i32 to index
    %c0_553 = arith.constant 0 : index
    %c0_554 = arith.constant 0 : index
    %1051 = vector.load %arg11[%1050, %c0_553, %c0_554] : memref<8x2x64xf32, #tpu.memory_space<vmem>>, vector<1x2x32xf32>
    %1052 = vector.shape_cast %1051 : vector<1x2x32xf32> to vector<2x32xf32>
    %1053 = vector.shape_cast %1049 : vector<2x32xf32> to vector<1x2x32xf32>
    tpu.vector_store %arg11[%1050, %c0_553, %c0_554], %1053 {strides = array<i32>} : memref<8x2x64xf32, #tpu.memory_space<vmem>>, vector<1x2x32xf32>,
    %1054 = vector.extract_strided_slice %1048 {offsets = [0, 32], sizes = [2, 32], strides = [1, 1]} : vector<2x64xf32> to vector<2x32xf32>
    %1055 = arith.index_cast %1034 : i32 to index
    %c0_555 = arith.constant 0 : index
    %c32_556 = arith.constant 32 : index
    %1056 = vector.load %arg11[%1055, %c0_555, %c32_556] : memref<8x2x64xf32, #tpu.memory_space<vmem>>, vector<1x2x32xf32>
    %1057 = vector.shape_cast %1056 : vector<1x2x32xf32> to vector<2x32xf32>
    %1058 = vector.shape_cast %1054 : vector<2x32xf32> to vector<1x2x32xf32>
    tpu.vector_store %arg11[%1055, %c0_555, %c32_556], %1058 {strides = array<i32>} : memref<8x2x64xf32, #tpu.memory_space<vmem>>, vector<1x2x32xf32>,
    %cst_557 = arith.constant dense<0.000000e+00> : vector<2x64xf32>
    %1059 = tpu.matmul %1033, %729, %cst_557 {dimension_numbers = #tpu.dot_dimension_numbers<[1], [0], [0], [1], [0, 0, 1, 1], [], []>} : vector<2x64xf32>, vector<64x64xf32>, vector<2x64xf32> -> vector<2x64xf32>
    %1060 = arith.addf %1059, %741 : vector<2x64xf32>
    %1061 = vector.extract_strided_slice %1060 {offsets = [0, 0], sizes = [2, 32], strides = [1, 1]} : vector<2x64xf32> to vector<2x32xf32>
    %1062 = arith.index_cast %c7_i32_543 : i32 to index
    %c0_558 = arith.constant 0 : index
    %c0_559 = arith.constant 0 : index
    %1063 = vector.load %arg12[%1062, %c0_558, %c0_559] : memref<8x2x64xf32, #tpu.memory_space<vmem>>, vector<1x2x32xf32>
    %1064 = vector.shape_cast %1063 : vector<1x2x32xf32> to vector<2x32xf32>
    %1065 = vector.shape_cast %1061 : vector<2x32xf32> to vector<1x2x32xf32>
    tpu.vector_store %arg12[%1062, %c0_558, %c0_559], %1065 {strides = array<i32>} : memref<8x2x64xf32, #tpu.memory_space<vmem>>, vector<1x2x32xf32>,
    %1066 = vector.extract_strided_slice %1060 {offsets = [0, 32], sizes = [2, 32], strides = [1, 1]} : vector<2x64xf32> to vector<2x32xf32>
    %1067 = arith.index_cast %1034 : i32 to index
    %c0_560 = arith.constant 0 : index
    %c32_561 = arith.constant 32 : index
    %1068 = vector.load %arg12[%1067, %c0_560, %c32_561] : memref<8x2x64xf32, #tpu.memory_space<vmem>>, vector<1x2x32xf32>
    %1069 = vector.shape_cast %1068 : vector<1x2x32xf32> to vector<2x32xf32>
    %1070 = vector.shape_cast %1066 : vector<2x32xf32> to vector<1x2x32xf32>
    tpu.vector_store %arg12[%1067, %c0_560, %c32_561], %1070 {strides = array<i32>} : memref<8x2x64xf32, #tpu.memory_space<vmem>>, vector<1x2x32xf32>,
    %c8_i32_562 = arith.constant 8 : i32
    %cst_563 = arith.constant 0.000000e+00 : f32
    %1071 = vector.broadcast %cst_563 : f32 to vector<2x64xf32>
    %cst_564 = arith.constant dense<0.000000e+00> : vector<2x64xf32>
    %1072 = tpu.matmul %1071, %731, %cst_564 {dimension_numbers = #tpu.dot_dimension_numbers<[1], [0], [0], [1], [0, 0, 1, 1], [], []>} : vector<2x64xf32>, vector<64x64xf32>, vector<2x64xf32> -> vector<2x64xf32>
    %cst_565 = arith.constant dense<0.000000e+00> : vector<2x64xf32>
    %1073 = tpu.matmul %1071, %733, %cst_565 {dimension_numbers = #tpu.dot_dimension_numbers<[1], [0], [0], [1], [0, 0, 1, 1], [], []>} : vector<2x64xf32>, vector<64x64xf32>, vector<2x64xf32> -> vector<2x64xf32>
    %cst_566 = arith.constant dense<0.000000e+00> : vector<2x64xf32>
    %1074 = tpu.matmul %1071, %735, %cst_566 {dimension_numbers = #tpu.dot_dimension_numbers<[1], [0], [0], [1], [0, 0, 1, 1], [], []>} : vector<2x64xf32>, vector<64x64xf32>, vector<2x64xf32> -> vector<2x64xf32>
    %c0_567 = arith.constant 0 : index
    %c0_568 = arith.constant 0 : index
    %c0_569 = arith.constant 0 : index
    %1075 = vector.load %arg10[%c0_567, %c0_568, %c0_569] : memref<8x2x64xf32, #tpu.memory_space<vmem>>, vector<1x2x64xf32>
    %1076 = vector.shape_cast %1075 : vector<1x2x64xf32> to vector<2x64xf32>
    %1077 = arith.addf %1076, %1072 : vector<2x64xf32>
    %1078 = arith.negf %1077 : vector<2x64xf32>
    %1079 = math.exp %1078 : vector<2x64xf32>
    %cst_570 = arith.constant 1.000000e+00 : f32
    %1080 = vector.broadcast %cst_570 : f32 to vector<2x64xf32>
    %1081 = arith.addf %1080, %1079 : vector<2x64xf32>
    %1082 = arith.divf %1080, %1081 : vector<2x64xf32>
    %c0_571 = arith.constant 0 : index
    %c0_572 = arith.constant 0 : index
    %c0_573 = arith.constant 0 : index
    %1083 = vector.load %arg11[%c0_571, %c0_572, %c0_573] : memref<8x2x64xf32, #tpu.memory_space<vmem>>, vector<1x2x64xf32>
    %1084 = vector.shape_cast %1083 : vector<1x2x64xf32> to vector<2x64xf32>
    %1085 = arith.addf %1084, %1073 : vector<2x64xf32>
    %1086 = arith.negf %1085 : vector<2x64xf32>
    %1087 = math.exp %1086 : vector<2x64xf32>
    %cst_574 = arith.constant 1.000000e+00 : f32
    %1088 = vector.broadcast %cst_574 : f32 to vector<2x64xf32>
    %1089 = arith.addf %1088, %1087 : vector<2x64xf32>
    %1090 = arith.divf %1088, %1089 : vector<2x64xf32>
    %c0_575 = arith.constant 0 : index
    %c0_576 = arith.constant 0 : index
    %c0_577 = arith.constant 0 : index
    %1091 = vector.load %arg12[%c0_575, %c0_576, %c0_577] : memref<8x2x64xf32, #tpu.memory_space<vmem>>, vector<1x2x64xf32>
    %1092 = vector.shape_cast %1091 : vector<1x2x64xf32> to vector<2x64xf32>
    %1093 = arith.addf %1074, %742 : vector<2x64xf32>
    %1094 = arith.mulf %1082, %1093 : vector<2x64xf32>
    %1095 = arith.addf %1092, %1094 : vector<2x64xf32>
    %1096 = math.tanh %1095 : vector<2x64xf32>
    %1097 = arith.subf %1071, %1096 : vector<2x64xf32>
    %1098 = arith.mulf %1090, %1097 : vector<2x64xf32>
    %1099 = arith.addf %1096, %1098 : vector<2x64xf32>
    %c0_578 = arith.constant 0 : index
    %c0_579 = arith.constant 0 : index
    %c0_580 = arith.constant 0 : index
    %1100 = vector.load %arg13[%c0_578, %c0_579, %c0_580] : memref<8x2x64xf32, #tpu.memory_space<vmem>>, vector<1x2x64xf32>
    %1101 = vector.shape_cast %1100 : vector<1x2x64xf32> to vector<2x64xf32>
    %1102 = vector.shape_cast %1099 : vector<2x64xf32> to vector<1x2x64xf32>
    tpu.vector_store %arg13[%c0_578, %c0_579, %c0_580], %1102 {strides = array<i32>} : memref<8x2x64xf32, #tpu.memory_space<vmem>>, vector<1x2x64xf32>,
    %cst_581 = arith.constant dense<0.000000e+00> : vector<2x64xf32>
    %1103 = tpu.matmul %1099, %731, %cst_581 {dimension_numbers = #tpu.dot_dimension_numbers<[1], [0], [0], [1], [0, 0, 1, 1], [], []>} : vector<2x64xf32>, vector<64x64xf32>, vector<2x64xf32> -> vector<2x64xf32>
    %cst_582 = arith.constant dense<0.000000e+00> : vector<2x64xf32>
    %1104 = tpu.matmul %1099, %733, %cst_582 {dimension_numbers = #tpu.dot_dimension_numbers<[1], [0], [0], [1], [0, 0, 1, 1], [], []>} : vector<2x64xf32>, vector<64x64xf32>, vector<2x64xf32> -> vector<2x64xf32>
    %cst_583 = arith.constant dense<0.000000e+00> : vector<2x64xf32>
    %1105 = tpu.matmul %1099, %735, %cst_583 {dimension_numbers = #tpu.dot_dimension_numbers<[1], [0], [0], [1], [0, 0, 1, 1], [], []>} : vector<2x64xf32>, vector<64x64xf32>, vector<2x64xf32> -> vector<2x64xf32>
    %c1_584 = arith.constant 1 : index
    %c0_585 = arith.constant 0 : index
    %c0_586 = arith.constant 0 : index
    %1106 = vector.load %arg10[%c1_584, %c0_585, %c0_586] : memref<8x2x64xf32, #tpu.memory_space<vmem>>, vector<1x2x64xf32>
    %1107 = vector.shape_cast %1106 : vector<1x2x64xf32> to vector<2x64xf32>
    %1108 = arith.addf %1107, %1103 : vector<2x64xf32>
    %1109 = arith.negf %1108 : vector<2x64xf32>
    %1110 = math.exp %1109 : vector<2x64xf32>
    %cst_587 = arith.constant 1.000000e+00 : f32
    %1111 = vector.broadcast %cst_587 : f32 to vector<2x64xf32>
    %1112 = arith.addf %1111, %1110 : vector<2x64xf32>
    %1113 = arith.divf %1111, %1112 : vector<2x64xf32>
    %c1_588 = arith.constant 1 : index
    %c0_589 = arith.constant 0 : index
    %c0_590 = arith.constant 0 : index
    %1114 = vector.load %arg11[%c1_588, %c0_589, %c0_590] : memref<8x2x64xf32, #tpu.memory_space<vmem>>, vector<1x2x64xf32>
    %1115 = vector.shape_cast %1114 : vector<1x2x64xf32> to vector<2x64xf32>
    %1116 = arith.addf %1115, %1104 : vector<2x64xf32>
    %1117 = arith.negf %1116 : vector<2x64xf32>
    %1118 = math.exp %1117 : vector<2x64xf32>
    %cst_591 = arith.constant 1.000000e+00 : f32
    %1119 = vector.broadcast %cst_591 : f32 to vector<2x64xf32>
    %1120 = arith.addf %1119, %1118 : vector<2x64xf32>
    %1121 = arith.divf %1119, %1120 : vector<2x64xf32>
    %c1_592 = arith.constant 1 : index
    %c0_593 = arith.constant 0 : index
    %c0_594 = arith.constant 0 : index
    %1122 = vector.load %arg12[%c1_592, %c0_593, %c0_594] : memref<8x2x64xf32, #tpu.memory_space<vmem>>, vector<1x2x64xf32>
    %1123 = vector.shape_cast %1122 : vector<1x2x64xf32> to vector<2x64xf32>
    %1124 = arith.addf %1105, %742 : vector<2x64xf32>
    %1125 = arith.mulf %1113, %1124 : vector<2x64xf32>
    %1126 = arith.addf %1123, %1125 : vector<2x64xf32>
    %1127 = math.tanh %1126 : vector<2x64xf32>
    %1128 = arith.subf %1099, %1127 : vector<2x64xf32>
    %1129 = arith.mulf %1121, %1128 : vector<2x64xf32>
    %1130 = arith.addf %1127, %1129 : vector<2x64xf32>
    %c1_595 = arith.constant 1 : index
    %c0_596 = arith.constant 0 : index
    %c0_597 = arith.constant 0 : index
    %1131 = vector.load %arg13[%c1_595, %c0_596, %c0_597] : memref<8x2x64xf32, #tpu.memory_space<vmem>>, vector<1x2x64xf32>
    %1132 = vector.shape_cast %1131 : vector<1x2x64xf32> to vector<2x64xf32>
    %1133 = vector.shape_cast %1130 : vector<2x64xf32> to vector<1x2x64xf32>
    tpu.vector_store %arg13[%c1_595, %c0_596, %c0_597], %1133 {strides = array<i32>} : memref<8x2x64xf32, #tpu.memory_space<vmem>>, vector<1x2x64xf32>,
    %cst_598 = arith.constant dense<0.000000e+00> : vector<2x64xf32>
    %1134 = tpu.matmul %1130, %731, %cst_598 {dimension_numbers = #tpu.dot_dimension_numbers<[1], [0], [0], [1], [0, 0, 1, 1], [], []>} : vector<2x64xf32>, vector<64x64xf32>, vector<2x64xf32> -> vector<2x64xf32>
    %cst_599 = arith.constant dense<0.000000e+00> : vector<2x64xf32>
    %1135 = tpu.matmul %1130, %733, %cst_599 {dimension_numbers = #tpu.dot_dimension_numbers<[1], [0], [0], [1], [0, 0, 1, 1], [], []>} : vector<2x64xf32>, vector<64x64xf32>, vector<2x64xf32> -> vector<2x64xf32>
    %cst_600 = arith.constant dense<0.000000e+00> : vector<2x64xf32>
    %1136 = tpu.matmul %1130, %735, %cst_600 {dimension_numbers = #tpu.dot_dimension_numbers<[1], [0], [0], [1], [0, 0, 1, 1], [], []>} : vector<2x64xf32>, vector<64x64xf32>, vector<2x64xf32> -> vector<2x64xf32>
    %c2_601 = arith.constant 2 : index
    %c0_602 = arith.constant 0 : index
    %c0_603 = arith.constant 0 : index
    %1137 = vector.load %arg10[%c2_601, %c0_602, %c0_603] : memref<8x2x64xf32, #tpu.memory_space<vmem>>, vector<1x2x64xf32>
    %1138 = vector.shape_cast %1137 : vector<1x2x64xf32> to vector<2x64xf32>
    %1139 = arith.addf %1138, %1134 : vector<2x64xf32>
    %1140 = arith.negf %1139 : vector<2x64xf32>
    %1141 = math.exp %1140 : vector<2x64xf32>
    %cst_604 = arith.constant 1.000000e+00 : f32
    %1142 = vector.broadcast %cst_604 : f32 to vector<2x64xf32>
    %1143 = arith.addf %1142, %1141 : vector<2x64xf32>
    %1144 = arith.divf %1142, %1143 : vector<2x64xf32>
    %c2_605 = arith.constant 2 : index
    %c0_606 = arith.constant 0 : index
    %c0_607 = arith.constant 0 : index
    %1145 = vector.load %arg11[%c2_605, %c0_606, %c0_607] : memref<8x2x64xf32, #tpu.memory_space<vmem>>, vector<1x2x64xf32>
    %1146 = vector.shape_cast %1145 : vector<1x2x64xf32> to vector<2x64xf32>
    %1147 = arith.addf %1146, %1135 : vector<2x64xf32>
    %1148 = arith.negf %1147 : vector<2x64xf32>
    %1149 = math.exp %1148 : vector<2x64xf32>
    %cst_608 = arith.constant 1.000000e+00 : f32
    %1150 = vector.broadcast %cst_608 : f32 to vector<2x64xf32>
    %1151 = arith.addf %1150, %1149 : vector<2x64xf32>
    %1152 = arith.divf %1150, %1151 : vector<2x64xf32>
    %c2_609 = arith.constant 2 : index
    %c0_610 = arith.constant 0 : index
    %c0_611 = arith.constant 0 : index
    %1153 = vector.load %arg12[%c2_609, %c0_610, %c0_611] : memref<8x2x64xf32, #tpu.memory_space<vmem>>, vector<1x2x64xf32>
    %1154 = vector.shape_cast %1153 : vector<1x2x64xf32> to vector<2x64xf32>
    %1155 = arith.addf %1136, %742 : vector<2x64xf32>
    %1156 = arith.mulf %1144, %1155 : vector<2x64xf32>
    %1157 = arith.addf %1154, %1156 : vector<2x64xf32>
    %1158 = math.tanh %1157 : vector<2x64xf32>
    %1159 = arith.subf %1130, %1158 : vector<2x64xf32>
    %1160 = arith.mulf %1152, %1159 : vector<2x64xf32>
    %1161 = arith.addf %1158, %1160 : vector<2x64xf32>
    %c2_612 = arith.constant 2 : index
    %c0_613 = arith.constant 0 : index
    %c0_614 = arith.constant 0 : index
    %1162 = vector.load %arg13[%c2_612, %c0_613, %c0_614] : memref<8x2x64xf32, #tpu.memory_space<vmem>>, vector<1x2x64xf32>
    %1163 = vector.shape_cast %1162 : vector<1x2x64xf32> to vector<2x64xf32>
    %1164 = vector.shape_cast %1161 : vector<2x64xf32> to vector<1x2x64xf32>
    tpu.vector_store %arg13[%c2_612, %c0_613, %c0_614], %1164 {strides = array<i32>} : memref<8x2x64xf32, #tpu.memory_space<vmem>>, vector<1x2x64xf32>,
    %cst_615 = arith.constant dense<0.000000e+00> : vector<2x64xf32>
    %1165 = tpu.matmul %1161, %731, %cst_615 {dimension_numbers = #tpu.dot_dimension_numbers<[1], [0], [0], [1], [0, 0, 1, 1], [], []>} : vector<2x64xf32>, vector<64x64xf32>, vector<2x64xf32> -> vector<2x64xf32>
    %cst_616 = arith.constant dense<0.000000e+00> : vector<2x64xf32>
    %1166 = tpu.matmul %1161, %733, %cst_616 {dimension_numbers = #tpu.dot_dimension_numbers<[1], [0], [0], [1], [0, 0, 1, 1], [], []>} : vector<2x64xf32>, vector<64x64xf32>, vector<2x64xf32> -> vector<2x64xf32>
    %cst_617 = arith.constant dense<0.000000e+00> : vector<2x64xf32>
    %1167 = tpu.matmul %1161, %735, %cst_617 {dimension_numbers = #tpu.dot_dimension_numbers<[1], [0], [0], [1], [0, 0, 1, 1], [], []>} : vector<2x64xf32>, vector<64x64xf32>, vector<2x64xf32> -> vector<2x64xf32>
    %c3_618 = arith.constant 3 : index
    %c0_619 = arith.constant 0 : index
    %c0_620 = arith.constant 0 : index
    %1168 = vector.load %arg10[%c3_618, %c0_619, %c0_620] : memref<8x2x64xf32, #tpu.memory_space<vmem>>, vector<1x2x64xf32>
    %1169 = vector.shape_cast %1168 : vector<1x2x64xf32> to vector<2x64xf32>
    %1170 = arith.addf %1169, %1165 : vector<2x64xf32>
    %1171 = arith.negf %1170 : vector<2x64xf32>
    %1172 = math.exp %1171 : vector<2x64xf32>
    %cst_621 = arith.constant 1.000000e+00 : f32
    %1173 = vector.broadcast %cst_621 : f32 to vector<2x64xf32>
    %1174 = arith.addf %1173, %1172 : vector<2x64xf32>
    %1175 = arith.divf %1173, %1174 : vector<2x64xf32>
    %c3_622 = arith.constant 3 : index
    %c0_623 = arith.constant 0 : index
    %c0_624 = arith.constant 0 : index
    %1176 = vector.load %arg11[%c3_622, %c0_623, %c0_624] : memref<8x2x64xf32, #tpu.memory_space<vmem>>, vector<1x2x64xf32>
    %1177 = vector.shape_cast %1176 : vector<1x2x64xf32> to vector<2x64xf32>
    %1178 = arith.addf %1177, %1166 : vector<2x64xf32>
    %1179 = arith.negf %1178 : vector<2x64xf32>
    %1180 = math.exp %1179 : vector<2x64xf32>
    %cst_625 = arith.constant 1.000000e+00 : f32
    %1181 = vector.broadcast %cst_625 : f32 to vector<2x64xf32>
    %1182 = arith.addf %1181, %1180 : vector<2x64xf32>
    %1183 = arith.divf %1181, %1182 : vector<2x64xf32>
    %c3_626 = arith.constant 3 : index
    %c0_627 = arith.constant 0 : index
    %c0_628 = arith.constant 0 : index
    %1184 = vector.load %arg12[%c3_626, %c0_627, %c0_628] : memref<8x2x64xf32, #tpu.memory_space<vmem>>, vector<1x2x64xf32>
    %1185 = vector.shape_cast %1184 : vector<1x2x64xf32> to vector<2x64xf32>
    %1186 = arith.addf %1167, %742 : vector<2x64xf32>
    %1187 = arith.mulf %1175, %1186 : vector<2x64xf32>
    %1188 = arith.addf %1185, %1187 : vector<2x64xf32>
    %1189 = math.tanh %1188 : vector<2x64xf32>
    %1190 = arith.subf %1161, %1189 : vector<2x64xf32>
    %1191 = arith.mulf %1183, %1190 : vector<2x64xf32>
    %1192 = arith.addf %1189, %1191 : vector<2x64xf32>
    %c3_629 = arith.constant 3 : index
    %c0_630 = arith.constant 0 : index
    %c0_631 = arith.constant 0 : index
    %1193 = vector.load %arg13[%c3_629, %c0_630, %c0_631] : memref<8x2x64xf32, #tpu.memory_space<vmem>>, vector<1x2x64xf32>
    %1194 = vector.shape_cast %1193 : vector<1x2x64xf32> to vector<2x64xf32>
    %1195 = vector.shape_cast %1192 : vector<2x64xf32> to vector<1x2x64xf32>
    tpu.vector_store %arg13[%c3_629, %c0_630, %c0_631], %1195 {strides = array<i32>} : memref<8x2x64xf32, #tpu.memory_space<vmem>>, vector<1x2x64xf32>,
    %cst_632 = arith.constant dense<0.000000e+00> : vector<2x64xf32>
    %1196 = tpu.matmul %1192, %731, %cst_632 {dimension_numbers = #tpu.dot_dimension_numbers<[1], [0], [0], [1], [0, 0, 1, 1], [], []>} : vector<2x64xf32>, vector<64x64xf32>, vector<2x64xf32> -> vector<2x64xf32>
    %cst_633 = arith.constant dense<0.000000e+00> : vector<2x64xf32>
    %1197 = tpu.matmul %1192, %733, %cst_633 {dimension_numbers = #tpu.dot_dimension_numbers<[1], [0], [0], [1], [0, 0, 1, 1], [], []>} : vector<2x64xf32>, vector<64x64xf32>, vector<2x64xf32> -> vector<2x64xf32>
    %cst_634 = arith.constant dense<0.000000e+00> : vector<2x64xf32>
    %1198 = tpu.matmul %1192, %735, %cst_634 {dimension_numbers = #tpu.dot_dimension_numbers<[1], [0], [0], [1], [0, 0, 1, 1], [], []>} : vector<2x64xf32>, vector<64x64xf32>, vector<2x64xf32> -> vector<2x64xf32>
    %c4_635 = arith.constant 4 : index
    %c0_636 = arith.constant 0 : index
    %c0_637 = arith.constant 0 : index
    %1199 = vector.load %arg10[%c4_635, %c0_636, %c0_637] : memref<8x2x64xf32, #tpu.memory_space<vmem>>, vector<1x2x64xf32>
    %1200 = vector.shape_cast %1199 : vector<1x2x64xf32> to vector<2x64xf32>
    %1201 = arith.addf %1200, %1196 : vector<2x64xf32>
    %1202 = arith.negf %1201 : vector<2x64xf32>
    %1203 = math.exp %1202 : vector<2x64xf32>
    %cst_638 = arith.constant 1.000000e+00 : f32
    %1204 = vector.broadcast %cst_638 : f32 to vector<2x64xf32>
    %1205 = arith.addf %1204, %1203 : vector<2x64xf32>
    %1206 = arith.divf %1204, %1205 : vector<2x64xf32>
    %c4_639 = arith.constant 4 : index
    %c0_640 = arith.constant 0 : index
    %c0_641 = arith.constant 0 : index
    %1207 = vector.load %arg11[%c4_639, %c0_640, %c0_641] : memref<8x2x64xf32, #tpu.memory_space<vmem>>, vector<1x2x64xf32>
    %1208 = vector.shape_cast %1207 : vector<1x2x64xf32> to vector<2x64xf32>
    %1209 = arith.addf %1208, %1197 : vector<2x64xf32>
    %1210 = arith.negf %1209 : vector<2x64xf32>
    %1211 = math.exp %1210 : vector<2x64xf32>
    %cst_642 = arith.constant 1.000000e+00 : f32
    %1212 = vector.broadcast %cst_642 : f32 to vector<2x64xf32>
    %1213 = arith.addf %1212, %1211 : vector<2x64xf32>
    %1214 = arith.divf %1212, %1213 : vector<2x64xf32>
    %c4_643 = arith.constant 4 : index
    %c0_644 = arith.constant 0 : index
    %c0_645 = arith.constant 0 : index
    %1215 = vector.load %arg12[%c4_643, %c0_644, %c0_645] : memref<8x2x64xf32, #tpu.memory_space<vmem>>, vector<1x2x64xf32>
    %1216 = vector.shape_cast %1215 : vector<1x2x64xf32> to vector<2x64xf32>
    %1217 = arith.addf %1198, %742 : vector<2x64xf32>
    %1218 = arith.mulf %1206, %1217 : vector<2x64xf32>
    %1219 = arith.addf %1216, %1218 : vector<2x64xf32>
    %1220 = math.tanh %1219 : vector<2x64xf32>
    %1221 = arith.subf %1192, %1220 : vector<2x64xf32>
    %1222 = arith.mulf %1214, %1221 : vector<2x64xf32>
    %1223 = arith.addf %1220, %1222 : vector<2x64xf32>
    %c4_646 = arith.constant 4 : index
    %c0_647 = arith.constant 0 : index
    %c0_648 = arith.constant 0 : index
    %1224 = vector.load %arg13[%c4_646, %c0_647, %c0_648] : memref<8x2x64xf32, #tpu.memory_space<vmem>>, vector<1x2x64xf32>
    %1225 = vector.shape_cast %1224 : vector<1x2x64xf32> to vector<2x64xf32>
    %1226 = vector.shape_cast %1223 : vector<2x64xf32> to vector<1x2x64xf32>
    tpu.vector_store %arg13[%c4_646, %c0_647, %c0_648], %1226 {strides = array<i32>} : memref<8x2x64xf32, #tpu.memory_space<vmem>>, vector<1x2x64xf32>,
    %cst_649 = arith.constant dense<0.000000e+00> : vector<2x64xf32>
    %1227 = tpu.matmul %1223, %731, %cst_649 {dimension_numbers = #tpu.dot_dimension_numbers<[1], [0], [0], [1], [0, 0, 1, 1], [], []>} : vector<2x64xf32>, vector<64x64xf32>, vector<2x64xf32> -> vector<2x64xf32>
    %cst_650 = arith.constant dense<0.000000e+00> : vector<2x64xf32>
    %1228 = tpu.matmul %1223, %733, %cst_650 {dimension_numbers = #tpu.dot_dimension_numbers<[1], [0], [0], [1], [0, 0, 1, 1], [], []>} : vector<2x64xf32>, vector<64x64xf32>, vector<2x64xf32> -> vector<2x64xf32>
    %cst_651 = arith.constant dense<0.000000e+00> : vector<2x64xf32>
    %1229 = tpu.matmul %1223, %735, %cst_651 {dimension_numbers = #tpu.dot_dimension_numbers<[1], [0], [0], [1], [0, 0, 1, 1], [], []>} : vector<2x64xf32>, vector<64x64xf32>, vector<2x64xf32> -> vector<2x64xf32>
    %c5_652 = arith.constant 5 : index
    %c0_653 = arith.constant 0 : index
    %c0_654 = arith.constant 0 : index
    %1230 = vector.load %arg10[%c5_652, %c0_653, %c0_654] : memref<8x2x64xf32, #tpu.memory_space<vmem>>, vector<1x2x64xf32>
    %1231 = vector.shape_cast %1230 : vector<1x2x64xf32> to vector<2x64xf32>
    %1232 = arith.addf %1231, %1227 : vector<2x64xf32>
    %1233 = arith.negf %1232 : vector<2x64xf32>
    %1234 = math.exp %1233 : vector<2x64xf32>
    %cst_655 = arith.constant 1.000000e+00 : f32
    %1235 = vector.broadcast %cst_655 : f32 to vector<2x64xf32>
    %1236 = arith.addf %1235, %1234 : vector<2x64xf32>
    %1237 = arith.divf %1235, %1236 : vector<2x64xf32>
    %c5_656 = arith.constant 5 : index
    %c0_657 = arith.constant 0 : index
    %c0_658 = arith.constant 0 : index
    %1238 = vector.load %arg11[%c5_656, %c0_657, %c0_658] : memref<8x2x64xf32, #tpu.memory_space<vmem>>, vector<1x2x64xf32>
    %1239 = vector.shape_cast %1238 : vector<1x2x64xf32> to vector<2x64xf32>
    %1240 = arith.addf %1239, %1228 : vector<2x64xf32>
    %1241 = arith.negf %1240 : vector<2x64xf32>
    %1242 = math.exp %1241 : vector<2x64xf32>
    %cst_659 = arith.constant 1.000000e+00 : f32
    %1243 = vector.broadcast %cst_659 : f32 to vector<2x64xf32>
    %1244 = arith.addf %1243, %1242 : vector<2x64xf32>
    %1245 = arith.divf %1243, %1244 : vector<2x64xf32>
    %c5_660 = arith.constant 5 : index
    %c0_661 = arith.constant 0 : index
    %c0_662 = arith.constant 0 : index
    %1246 = vector.load %arg12[%c5_660, %c0_661, %c0_662] : memref<8x2x64xf32, #tpu.memory_space<vmem>>, vector<1x2x64xf32>
    %1247 = vector.shape_cast %1246 : vector<1x2x64xf32> to vector<2x64xf32>
    %1248 = arith.addf %1229, %742 : vector<2x64xf32>
    %1249 = arith.mulf %1237, %1248 : vector<2x64xf32>
    %1250 = arith.addf %1247, %1249 : vector<2x64xf32>
    %1251 = math.tanh %1250 : vector<2x64xf32>
    %1252 = arith.subf %1223, %1251 : vector<2x64xf32>
    %1253 = arith.mulf %1245, %1252 : vector<2x64xf32>
    %1254 = arith.addf %1251, %1253 : vector<2x64xf32>
    %c5_663 = arith.constant 5 : index
    %c0_664 = arith.constant 0 : index
    %c0_665 = arith.constant 0 : index
    %1255 = vector.load %arg13[%c5_663, %c0_664, %c0_665] : memref<8x2x64xf32, #tpu.memory_space<vmem>>, vector<1x2x64xf32>
    %1256 = vector.shape_cast %1255 : vector<1x2x64xf32> to vector<2x64xf32>
    %1257 = vector.shape_cast %1254 : vector<2x64xf32> to vector<1x2x64xf32>
    tpu.vector_store %arg13[%c5_663, %c0_664, %c0_665], %1257 {strides = array<i32>} : memref<8x2x64xf32, #tpu.memory_space<vmem>>, vector<1x2x64xf32>,
    %cst_666 = arith.constant dense<0.000000e+00> : vector<2x64xf32>
    %1258 = tpu.matmul %1254, %731, %cst_666 {dimension_numbers = #tpu.dot_dimension_numbers<[1], [0], [0], [1], [0, 0, 1, 1], [], []>} : vector<2x64xf32>, vector<64x64xf32>, vector<2x64xf32> -> vector<2x64xf32>
    %cst_667 = arith.constant dense<0.000000e+00> : vector<2x64xf32>
    %1259 = tpu.matmul %1254, %733, %cst_667 {dimension_numbers = #tpu.dot_dimension_numbers<[1], [0], [0], [1], [0, 0, 1, 1], [], []>} : vector<2x64xf32>, vector<64x64xf32>, vector<2x64xf32> -> vector<2x64xf32>
    %cst_668 = arith.constant dense<0.000000e+00> : vector<2x64xf32>
    %1260 = tpu.matmul %1254, %735, %cst_668 {dimension_numbers = #tpu.dot_dimension_numbers<[1], [0], [0], [1], [0, 0, 1, 1], [], []>} : vector<2x64xf32>, vector<64x64xf32>, vector<2x64xf32> -> vector<2x64xf32>
    %c6_669 = arith.constant 6 : index
    %c0_670 = arith.constant 0 : index
    %c0_671 = arith.constant 0 : index
    %1261 = vector.load %arg10[%c6_669, %c0_670, %c0_671] : memref<8x2x64xf32, #tpu.memory_space<vmem>>, vector<1x2x64xf32>
    %1262 = vector.shape_cast %1261 : vector<1x2x64xf32> to vector<2x64xf32>
    %1263 = arith.addf %1262, %1258 : vector<2x64xf32>
    %1264 = arith.negf %1263 : vector<2x64xf32>
    %1265 = math.exp %1264 : vector<2x64xf32>
    %cst_672 = arith.constant 1.000000e+00 : f32
    %1266 = vector.broadcast %cst_672 : f32 to vector<2x64xf32>
    %1267 = arith.addf %1266, %1265 : vector<2x64xf32>
    %1268 = arith.divf %1266, %1267 : vector<2x64xf32>
    %c6_673 = arith.constant 6 : index
    %c0_674 = arith.constant 0 : index
    %c0_675 = arith.constant 0 : index
    %1269 = vector.load %arg11[%c6_673, %c0_674, %c0_675] : memref<8x2x64xf32, #tpu.memory_space<vmem>>, vector<1x2x64xf32>
    %1270 = vector.shape_cast %1269 : vector<1x2x64xf32> to vector<2x64xf32>
    %1271 = arith.addf %1270, %1259 : vector<2x64xf32>
    %1272 = arith.negf %1271 : vector<2x64xf32>
    %1273 = math.exp %1272 : vector<2x64xf32>
    %cst_676 = arith.constant 1.000000e+00 : f32
    %1274 = vector.broadcast %cst_676 : f32 to vector<2x64xf32>
    %1275 = arith.addf %1274, %1273 : vector<2x64xf32>
    %1276 = arith.divf %1274, %1275 : vector<2x64xf32>
    %c6_677 = arith.constant 6 : index
    %c0_678 = arith.constant 0 : index
    %c0_679 = arith.constant 0 : index
    %1277 = vector.load %arg12[%c6_677, %c0_678, %c0_679] : memref<8x2x64xf32, #tpu.memory_space<vmem>>, vector<1x2x64xf32>
    %1278 = vector.shape_cast %1277 : vector<1x2x64xf32> to vector<2x64xf32>
    %1279 = arith.addf %1260, %742 : vector<2x64xf32>
    %1280 = arith.mulf %1268, %1279 : vector<2x64xf32>
    %1281 = arith.addf %1278, %1280 : vector<2x64xf32>
    %1282 = math.tanh %1281 : vector<2x64xf32>
    %1283 = arith.subf %1254, %1282 : vector<2x64xf32>
    %1284 = arith.mulf %1276, %1283 : vector<2x64xf32>
    %1285 = arith.addf %1282, %1284 : vector<2x64xf32>
    %c6_680 = arith.constant 6 : index
    %c0_681 = arith.constant 0 : index
    %c0_682 = arith.constant 0 : index
    %1286 = vector.load %arg13[%c6_680, %c0_681, %c0_682] : memref<8x2x64xf32, #tpu.memory_space<vmem>>, vector<1x2x64xf32>
    %1287 = vector.shape_cast %1286 : vector<1x2x64xf32> to vector<2x64xf32>
    %1288 = vector.shape_cast %1285 : vector<2x64xf32> to vector<1x2x64xf32>
    tpu.vector_store %arg13[%c6_680, %c0_681, %c0_682], %1288 {strides = array<i32>} : memref<8x2x64xf32, #tpu.memory_space<vmem>>, vector<1x2x64xf32>,
    %cst_683 = arith.constant dense<0.000000e+00> : vector<2x64xf32>
    %1289 = tpu.matmul %1285, %731, %cst_683 {dimension_numbers = #tpu.dot_dimension_numbers<[1], [0], [0], [1], [0, 0, 1, 1], [], []>} : vector<2x64xf32>, vector<64x64xf32>, vector<2x64xf32> -> vector<2x64xf32>
    %cst_684 = arith.constant dense<0.000000e+00> : vector<2x64xf32>
    %1290 = tpu.matmul %1285, %733, %cst_684 {dimension_numbers = #tpu.dot_dimension_numbers<[1], [0], [0], [1], [0, 0, 1, 1], [], []>} : vector<2x64xf32>, vector<64x64xf32>, vector<2x64xf32> -> vector<2x64xf32>
    %cst_685 = arith.constant dense<0.000000e+00> : vector<2x64xf32>
    %1291 = tpu.matmul %1285, %735, %cst_685 {dimension_numbers = #tpu.dot_dimension_numbers<[1], [0], [0], [1], [0, 0, 1, 1], [], []>} : vector<2x64xf32>, vector<64x64xf32>, vector<2x64xf32> -> vector<2x64xf32>
    %c7_686 = arith.constant 7 : index
    %c0_687 = arith.constant 0 : index
    %c0_688 = arith.constant 0 : index
    %1292 = vector.load %arg10[%c7_686, %c0_687, %c0_688] : memref<8x2x64xf32, #tpu.memory_space<vmem>>, vector<1x2x64xf32>
    %1293 = vector.shape_cast %1292 : vector<1x2x64xf32> to vector<2x64xf32>
    %1294 = arith.addf %1293, %1289 : vector<2x64xf32>
    %1295 = arith.negf %1294 : vector<2x64xf32>
    %1296 = math.exp %1295 : vector<2x64xf32>
    %cst_689 = arith.constant 1.000000e+00 : f32
    %1297 = vector.broadcast %cst_689 : f32 to vector<2x64xf32>
    %1298 = arith.addf %1297, %1296 : vector<2x64xf32>
    %1299 = arith.divf %1297, %1298 : vector<2x64xf32>
    %c7_690 = arith.constant 7 : index
    %c0_691 = arith.constant 0 : index
    %c0_692 = arith.constant 0 : index
    %1300 = vector.load %arg11[%c7_690, %c0_691, %c0_692] : memref<8x2x64xf32, #tpu.memory_space<vmem>>, vector<1x2x64xf32>
    %1301 = vector.shape_cast %1300 : vector<1x2x64xf32> to vector<2x64xf32>
    %1302 = arith.addf %1301, %1290 : vector<2x64xf32>
    %1303 = arith.negf %1302 : vector<2x64xf32>
    %1304 = math.exp %1303 : vector<2x64xf32>
    %cst_693 = arith.constant 1.000000e+00 : f32
    %1305 = vector.broadcast %cst_693 : f32 to vector<2x64xf32>
    %1306 = arith.addf %1305, %1304 : vector<2x64xf32>
    %1307 = arith.divf %1305, %1306 : vector<2x64xf32>
    %c7_694 = arith.constant 7 : index
    %c0_695 = arith.constant 0 : index
    %c0_696 = arith.constant 0 : index
    %1308 = vector.load %arg12[%c7_694, %c0_695, %c0_696] : memref<8x2x64xf32, #tpu.memory_space<vmem>>, vector<1x2x64xf32>
    %1309 = vector.shape_cast %1308 : vector<1x2x64xf32> to vector<2x64xf32>
    %1310 = arith.addf %1291, %742 : vector<2x64xf32>
    %1311 = arith.mulf %1299, %1310 : vector<2x64xf32>
    %1312 = arith.addf %1309, %1311 : vector<2x64xf32>
    %1313 = math.tanh %1312 : vector<2x64xf32>
    %1314 = arith.subf %1285, %1313 : vector<2x64xf32>
    %1315 = arith.mulf %1307, %1314 : vector<2x64xf32>
    %1316 = arith.addf %1313, %1315 : vector<2x64xf32>
    %c7_697 = arith.constant 7 : index
    %c0_698 = arith.constant 0 : index
    %c0_699 = arith.constant 0 : index
    %1317 = vector.load %arg13[%c7_697, %c0_698, %c0_699] : memref<8x2x64xf32, #tpu.memory_space<vmem>>, vector<1x2x64xf32>
    %1318 = vector.shape_cast %1317 : vector<1x2x64xf32> to vector<2x64xf32>
    %1319 = vector.shape_cast %1316 : vector<2x64xf32> to vector<1x2x64xf32>
    tpu.vector_store %arg13[%c7_697, %c0_698, %c0_699], %1319 {strides = array<i32>} : memref<8x2x64xf32, #tpu.memory_space<vmem>>, vector<1x2x64xf32>,
    %c0_i32_700 = arith.constant 0 : i32
    %c7_i32_701 = arith.constant 7 : i32
    %1320 = arith.subi %c7_i32_701, %c0_i32_700 : i32
    %1321 = arith.index_cast %c0_i32_700 : i32 to index
    %c0_702 = arith.constant 0 : index
    %c0_703 = arith.constant 0 : index
    %1322 = vector.load %arg13[%1321, %c0_702, %c0_703] : memref<8x2x64xf32, #tpu.memory_space<vmem>>, vector<1x2x64xf32>
    %1323 = vector.shape_cast %1322 : vector<1x2x64xf32> to vector<2x64xf32>
    %1324 = arith.index_cast %1320 : i32 to index
    %c0_704 = arith.constant 0 : index
    %c0_705 = arith.constant 0 : index
    %1325 = vector.load %arg13[%1324, %c0_704, %c0_705] : memref<8x2x64xf32, #tpu.memory_space<vmem>>, vector<1x2x64xf32>
    %1326 = vector.shape_cast %1325 : vector<1x2x64xf32> to vector<2x64xf32>
    %1327 = vector.extract_strided_slice %1323 {offsets = [0, 0], sizes = [2, 32], strides = [1, 1]} : vector<2x64xf32> to vector<2x32xf32>
    %1328 = arith.index_cast %c0_i32_700 : i32 to index
    %c0_706 = arith.constant 0 : index
    %c64 = arith.constant 64 : index
    %1329 = vector.load %arg9[%1328, %c0_706, %c64] : memref<8x2x128xf32, #tpu.memory_space<vmem>>, vector<1x2x32xf32>
    %1330 = vector.shape_cast %1329 : vector<1x2x32xf32> to vector<2x32xf32>
    %1331 = vector.shape_cast %1327 : vector<2x32xf32> to vector<1x2x32xf32>
    tpu.vector_store %arg9[%1328, %c0_706, %c64], %1331 {strides = array<i32>} : memref<8x2x128xf32, #tpu.memory_space<vmem>>, vector<1x2x32xf32>,
    %1332 = vector.extract_strided_slice %1326 {offsets = [0, 32], sizes = [2, 32], strides = [1, 1]} : vector<2x64xf32> to vector<2x32xf32>
    %1333 = arith.index_cast %c0_i32_700 : i32 to index
    %c0_707 = arith.constant 0 : index
    %c96 = arith.constant 96 : index
    %1334 = vector.load %arg9[%1333, %c0_707, %c96] : memref<8x2x128xf32, #tpu.memory_space<vmem>>, vector<1x2x32xf32>
    %1335 = vector.shape_cast %1334 : vector<1x2x32xf32> to vector<2x32xf32>
    %1336 = vector.shape_cast %1332 : vector<2x32xf32> to vector<1x2x32xf32>
    tpu.vector_store %arg9[%1333, %c0_707, %c96], %1336 {strides = array<i32>} : memref<8x2x128xf32, #tpu.memory_space<vmem>>, vector<1x2x32xf32>,
    %c1_i32_708 = arith.constant 1 : i32
    %c7_i32_709 = arith.constant 7 : i32
    %1337 = arith.subi %c7_i32_709, %c1_i32_708 : i32
    %1338 = arith.index_cast %c1_i32_708 : i32 to index
    %c0_710 = arith.constant 0 : index
    %c0_711 = arith.constant 0 : index
    %1339 = vector.load %arg13[%1338, %c0_710, %c0_711] : memref<8x2x64xf32, #tpu.memory_space<vmem>>, vector<1x2x64xf32>
    %1340 = vector.shape_cast %1339 : vector<1x2x64xf32> to vector<2x64xf32>
    %1341 = arith.index_cast %1337 : i32 to index
    %c0_712 = arith.constant 0 : index
    %c0_713 = arith.constant 0 : index
    %1342 = vector.load %arg13[%1341, %c0_712, %c0_713] : memref<8x2x64xf32, #tpu.memory_space<vmem>>, vector<1x2x64xf32>
    %1343 = vector.shape_cast %1342 : vector<1x2x64xf32> to vector<2x64xf32>
    %1344 = vector.extract_strided_slice %1340 {offsets = [0, 0], sizes = [2, 32], strides = [1, 1]} : vector<2x64xf32> to vector<2x32xf32>
    %1345 = arith.index_cast %c1_i32_708 : i32 to index
    %c0_714 = arith.constant 0 : index
    %c64_715 = arith.constant 64 : index
    %1346 = vector.load %arg9[%1345, %c0_714, %c64_715] : memref<8x2x128xf32, #tpu.memory_space<vmem>>, vector<1x2x32xf32>
    %1347 = vector.shape_cast %1346 : vector<1x2x32xf32> to vector<2x32xf32>
    %1348 = vector.shape_cast %1344 : vector<2x32xf32> to vector<1x2x32xf32>
    tpu.vector_store %arg9[%1345, %c0_714, %c64_715], %1348 {strides = array<i32>} : memref<8x2x128xf32, #tpu.memory_space<vmem>>, vector<1x2x32xf32>,
    %1349 = vector.extract_strided_slice %1343 {offsets = [0, 32], sizes = [2, 32], strides = [1, 1]} : vector<2x64xf32> to vector<2x32xf32>
    %1350 = arith.index_cast %c1_i32_708 : i32 to index
    %c0_716 = arith.constant 0 : index
    %c96_717 = arith.constant 96 : index
    %1351 = vector.load %arg9[%1350, %c0_716, %c96_717] : memref<8x2x128xf32, #tpu.memory_space<vmem>>, vector<1x2x32xf32>
    %1352 = vector.shape_cast %1351 : vector<1x2x32xf32> to vector<2x32xf32>
    %1353 = vector.shape_cast %1349 : vector<2x32xf32> to vector<1x2x32xf32>
    tpu.vector_store %arg9[%1350, %c0_716, %c96_717], %1353 {strides = array<i32>} : memref<8x2x128xf32, #tpu.memory_space<vmem>>, vector<1x2x32xf32>,
    %c2_i32_718 = arith.constant 2 : i32
    %c7_i32_719 = arith.constant 7 : i32
    %1354 = arith.subi %c7_i32_719, %c2_i32_718 : i32
    %1355 = arith.index_cast %c2_i32_718 : i32 to index
    %c0_720 = arith.constant 0 : index
    %c0_721 = arith.constant 0 : index
    %1356 = vector.load %arg13[%1355, %c0_720, %c0_721] : memref<8x2x64xf32, #tpu.memory_space<vmem>>, vector<1x2x64xf32>
    %1357 = vector.shape_cast %1356 : vector<1x2x64xf32> to vector<2x64xf32>
    %1358 = arith.index_cast %1354 : i32 to index
    %c0_722 = arith.constant 0 : index
    %c0_723 = arith.constant 0 : index
    %1359 = vector.load %arg13[%1358, %c0_722, %c0_723] : memref<8x2x64xf32, #tpu.memory_space<vmem>>, vector<1x2x64xf32>
    %1360 = vector.shape_cast %1359 : vector<1x2x64xf32> to vector<2x64xf32>
    %1361 = vector.extract_strided_slice %1357 {offsets = [0, 0], sizes = [2, 32], strides = [1, 1]} : vector<2x64xf32> to vector<2x32xf32>
    %1362 = arith.index_cast %c2_i32_718 : i32 to index
    %c0_724 = arith.constant 0 : index
    %c64_725 = arith.constant 64 : index
    %1363 = vector.load %arg9[%1362, %c0_724, %c64_725] : memref<8x2x128xf32, #tpu.memory_space<vmem>>, vector<1x2x32xf32>
    %1364 = vector.shape_cast %1363 : vector<1x2x32xf32> to vector<2x32xf32>
    %1365 = vector.shape_cast %1361 : vector<2x32xf32> to vector<1x2x32xf32>
    tpu.vector_store %arg9[%1362, %c0_724, %c64_725], %1365 {strides = array<i32>} : memref<8x2x128xf32, #tpu.memory_space<vmem>>, vector<1x2x32xf32>,
    %1366 = vector.extract_strided_slice %1360 {offsets = [0, 32], sizes = [2, 32], strides = [1, 1]} : vector<2x64xf32> to vector<2x32xf32>
    %1367 = arith.index_cast %c2_i32_718 : i32 to index
    %c0_726 = arith.constant 0 : index
    %c96_727 = arith.constant 96 : index
    %1368 = vector.load %arg9[%1367, %c0_726, %c96_727] : memref<8x2x128xf32, #tpu.memory_space<vmem>>, vector<1x2x32xf32>
    %1369 = vector.shape_cast %1368 : vector<1x2x32xf32> to vector<2x32xf32>
    %1370 = vector.shape_cast %1366 : vector<2x32xf32> to vector<1x2x32xf32>
    tpu.vector_store %arg9[%1367, %c0_726, %c96_727], %1370 {strides = array<i32>} : memref<8x2x128xf32, #tpu.memory_space<vmem>>, vector<1x2x32xf32>,
    %c3_i32_728 = arith.constant 3 : i32
    %c7_i32_729 = arith.constant 7 : i32
    %1371 = arith.subi %c7_i32_729, %c3_i32_728 : i32
    %1372 = arith.index_cast %c3_i32_728 : i32 to index
    %c0_730 = arith.constant 0 : index
    %c0_731 = arith.constant 0 : index
    %1373 = vector.load %arg13[%1372, %c0_730, %c0_731] : memref<8x2x64xf32, #tpu.memory_space<vmem>>, vector<1x2x64xf32>
    %1374 = vector.shape_cast %1373 : vector<1x2x64xf32> to vector<2x64xf32>
    %1375 = arith.index_cast %1371 : i32 to index
    %c0_732 = arith.constant 0 : index
    %c0_733 = arith.constant 0 : index
    %1376 = vector.load %arg13[%1375, %c0_732, %c0_733] : memref<8x2x64xf32, #tpu.memory_space<vmem>>, vector<1x2x64xf32>
    %1377 = vector.shape_cast %1376 : vector<1x2x64xf32> to vector<2x64xf32>
    %1378 = vector.extract_strided_slice %1374 {offsets = [0, 0], sizes = [2, 32], strides = [1, 1]} : vector<2x64xf32> to vector<2x32xf32>
    %1379 = arith.index_cast %c3_i32_728 : i32 to index
    %c0_734 = arith.constant 0 : index
    %c64_735 = arith.constant 64 : index
    %1380 = vector.load %arg9[%1379, %c0_734, %c64_735] : memref<8x2x128xf32, #tpu.memory_space<vmem>>, vector<1x2x32xf32>
    %1381 = vector.shape_cast %1380 : vector<1x2x32xf32> to vector<2x32xf32>
    %1382 = vector.shape_cast %1378 : vector<2x32xf32> to vector<1x2x32xf32>
    tpu.vector_store %arg9[%1379, %c0_734, %c64_735], %1382 {strides = array<i32>} : memref<8x2x128xf32, #tpu.memory_space<vmem>>, vector<1x2x32xf32>,
    %1383 = vector.extract_strided_slice %1377 {offsets = [0, 32], sizes = [2, 32], strides = [1, 1]} : vector<2x64xf32> to vector<2x32xf32>
    %1384 = arith.index_cast %c3_i32_728 : i32 to index
    %c0_736 = arith.constant 0 : index
    %c96_737 = arith.constant 96 : index
    %1385 = vector.load %arg9[%1384, %c0_736, %c96_737] : memref<8x2x128xf32, #tpu.memory_space<vmem>>, vector<1x2x32xf32>
    %1386 = vector.shape_cast %1385 : vector<1x2x32xf32> to vector<2x32xf32>
    %1387 = vector.shape_cast %1383 : vector<2x32xf32> to vector<1x2x32xf32>
    tpu.vector_store %arg9[%1384, %c0_736, %c96_737], %1387 {strides = array<i32>} : memref<8x2x128xf32, #tpu.memory_space<vmem>>, vector<1x2x32xf32>,
    %c4_i32_738 = arith.constant 4 : i32
    %c7_i32_739 = arith.constant 7 : i32
    %1388 = arith.subi %c7_i32_739, %c4_i32_738 : i32
    %1389 = arith.index_cast %c4_i32_738 : i32 to index
    %c0_740 = arith.constant 0 : index
    %c0_741 = arith.constant 0 : index
    %1390 = vector.load %arg13[%1389, %c0_740, %c0_741] : memref<8x2x64xf32, #tpu.memory_space<vmem>>, vector<1x2x64xf32>
    %1391 = vector.shape_cast %1390 : vector<1x2x64xf32> to vector<2x64xf32>
    %1392 = arith.index_cast %1388 : i32 to index
    %c0_742 = arith.constant 0 : index
    %c0_743 = arith.constant 0 : index
    %1393 = vector.load %arg13[%1392, %c0_742, %c0_743] : memref<8x2x64xf32, #tpu.memory_space<vmem>>, vector<1x2x64xf32>
    %1394 = vector.shape_cast %1393 : vector<1x2x64xf32> to vector<2x64xf32>
    %1395 = vector.extract_strided_slice %1391 {offsets = [0, 0], sizes = [2, 32], strides = [1, 1]} : vector<2x64xf32> to vector<2x32xf32>
    %1396 = arith.index_cast %c4_i32_738 : i32 to index
    %c0_744 = arith.constant 0 : index
    %c64_745 = arith.constant 64 : index
    %1397 = vector.load %arg9[%1396, %c0_744, %c64_745] : memref<8x2x128xf32, #tpu.memory_space<vmem>>, vector<1x2x32xf32>
    %1398 = vector.shape_cast %1397 : vector<1x2x32xf32> to vector<2x32xf32>
    %1399 = vector.shape_cast %1395 : vector<2x32xf32> to vector<1x2x32xf32>
    tpu.vector_store %arg9[%1396, %c0_744, %c64_745], %1399 {strides = array<i32>} : memref<8x2x128xf32, #tpu.memory_space<vmem>>, vector<1x2x32xf32>,
    %1400 = vector.extract_strided_slice %1394 {offsets = [0, 32], sizes = [2, 32], strides = [1, 1]} : vector<2x64xf32> to vector<2x32xf32>
    %1401 = arith.index_cast %c4_i32_738 : i32 to index
    %c0_746 = arith.constant 0 : index
    %c96_747 = arith.constant 96 : index
    %1402 = vector.load %arg9[%1401, %c0_746, %c96_747] : memref<8x2x128xf32, #tpu.memory_space<vmem>>, vector<1x2x32xf32>
    %1403 = vector.shape_cast %1402 : vector<1x2x32xf32> to vector<2x32xf32>
    %1404 = vector.shape_cast %1400 : vector<2x32xf32> to vector<1x2x32xf32>
    tpu.vector_store %arg9[%1401, %c0_746, %c96_747], %1404 {strides = array<i32>} : memref<8x2x128xf32, #tpu.memory_space<vmem>>, vector<1x2x32xf32>,
    %c5_i32_748 = arith.constant 5 : i32
    %c7_i32_749 = arith.constant 7 : i32
    %1405 = arith.subi %c7_i32_749, %c5_i32_748 : i32
    %1406 = arith.index_cast %c5_i32_748 : i32 to index
    %c0_750 = arith.constant 0 : index
    %c0_751 = arith.constant 0 : index
    %1407 = vector.load %arg13[%1406, %c0_750, %c0_751] : memref<8x2x64xf32, #tpu.memory_space<vmem>>, vector<1x2x64xf32>
    %1408 = vector.shape_cast %1407 : vector<1x2x64xf32> to vector<2x64xf32>
    %1409 = arith.index_cast %1405 : i32 to index
    %c0_752 = arith.constant 0 : index
    %c0_753 = arith.constant 0 : index
    %1410 = vector.load %arg13[%1409, %c0_752, %c0_753] : memref<8x2x64xf32, #tpu.memory_space<vmem>>, vector<1x2x64xf32>
    %1411 = vector.shape_cast %1410 : vector<1x2x64xf32> to vector<2x64xf32>
    %1412 = vector.extract_strided_slice %1408 {offsets = [0, 0], sizes = [2, 32], strides = [1, 1]} : vector<2x64xf32> to vector<2x32xf32>
    %1413 = arith.index_cast %c5_i32_748 : i32 to index
    %c0_754 = arith.constant 0 : index
    %c64_755 = arith.constant 64 : index
    %1414 = vector.load %arg9[%1413, %c0_754, %c64_755] : memref<8x2x128xf32, #tpu.memory_space<vmem>>, vector<1x2x32xf32>
    %1415 = vector.shape_cast %1414 : vector<1x2x32xf32> to vector<2x32xf32>
    %1416 = vector.shape_cast %1412 : vector<2x32xf32> to vector<1x2x32xf32>
    tpu.vector_store %arg9[%1413, %c0_754, %c64_755], %1416 {strides = array<i32>} : memref<8x2x128xf32, #tpu.memory_space<vmem>>, vector<1x2x32xf32>,
    %1417 = vector.extract_strided_slice %1411 {offsets = [0, 32], sizes = [2, 32], strides = [1, 1]} : vector<2x64xf32> to vector<2x32xf32>
    %1418 = arith.index_cast %c5_i32_748 : i32 to index
    %c0_756 = arith.constant 0 : index
    %c96_757 = arith.constant 96 : index
    %1419 = vector.load %arg9[%1418, %c0_756, %c96_757] : memref<8x2x128xf32, #tpu.memory_space<vmem>>, vector<1x2x32xf32>
    %1420 = vector.shape_cast %1419 : vector<1x2x32xf32> to vector<2x32xf32>
    %1421 = vector.shape_cast %1417 : vector<2x32xf32> to vector<1x2x32xf32>
    tpu.vector_store %arg9[%1418, %c0_756, %c96_757], %1421 {strides = array<i32>} : memref<8x2x128xf32, #tpu.memory_space<vmem>>, vector<1x2x32xf32>,
    %c6_i32_758 = arith.constant 6 : i32
    %c7_i32_759 = arith.constant 7 : i32
    %1422 = arith.subi %c7_i32_759, %c6_i32_758 : i32
    %1423 = arith.index_cast %c6_i32_758 : i32 to index
    %c0_760 = arith.constant 0 : index
    %c0_761 = arith.constant 0 : index
    %1424 = vector.load %arg13[%1423, %c0_760, %c0_761] : memref<8x2x64xf32, #tpu.memory_space<vmem>>, vector<1x2x64xf32>
    %1425 = vector.shape_cast %1424 : vector<1x2x64xf32> to vector<2x64xf32>
    %1426 = arith.index_cast %1422 : i32 to index
    %c0_762 = arith.constant 0 : index
    %c0_763 = arith.constant 0 : index
    %1427 = vector.load %arg13[%1426, %c0_762, %c0_763] : memref<8x2x64xf32, #tpu.memory_space<vmem>>, vector<1x2x64xf32>
    %1428 = vector.shape_cast %1427 : vector<1x2x64xf32> to vector<2x64xf32>
    %1429 = vector.extract_strided_slice %1425 {offsets = [0, 0], sizes = [2, 32], strides = [1, 1]} : vector<2x64xf32> to vector<2x32xf32>
    %1430 = arith.index_cast %c6_i32_758 : i32 to index
    %c0_764 = arith.constant 0 : index
    %c64_765 = arith.constant 64 : index
    %1431 = vector.load %arg9[%1430, %c0_764, %c64_765] : memref<8x2x128xf32, #tpu.memory_space<vmem>>, vector<1x2x32xf32>
    %1432 = vector.shape_cast %1431 : vector<1x2x32xf32> to vector<2x32xf32>
    %1433 = vector.shape_cast %1429 : vector<2x32xf32> to vector<1x2x32xf32>
    tpu.vector_store %arg9[%1430, %c0_764, %c64_765], %1433 {strides = array<i32>} : memref<8x2x128xf32, #tpu.memory_space<vmem>>, vector<1x2x32xf32>,
    %1434 = vector.extract_strided_slice %1428 {offsets = [0, 32], sizes = [2, 32], strides = [1, 1]} : vector<2x64xf32> to vector<2x32xf32>
    %1435 = arith.index_cast %c6_i32_758 : i32 to index
    %c0_766 = arith.constant 0 : index
    %c96_767 = arith.constant 96 : index
    %1436 = vector.load %arg9[%1435, %c0_766, %c96_767] : memref<8x2x128xf32, #tpu.memory_space<vmem>>, vector<1x2x32xf32>
    %1437 = vector.shape_cast %1436 : vector<1x2x32xf32> to vector<2x32xf32>
    %1438 = vector.shape_cast %1434 : vector<2x32xf32> to vector<1x2x32xf32>
    tpu.vector_store %arg9[%1435, %c0_766, %c96_767], %1438 {strides = array<i32>} : memref<8x2x128xf32, #tpu.memory_space<vmem>>, vector<1x2x32xf32>,
    %c7_i32_768 = arith.constant 7 : i32
    %c7_i32_769 = arith.constant 7 : i32
    %1439 = arith.subi %c7_i32_769, %c7_i32_768 : i32
    %1440 = arith.index_cast %c7_i32_768 : i32 to index
    %c0_770 = arith.constant 0 : index
    %c0_771 = arith.constant 0 : index
    %1441 = vector.load %arg13[%1440, %c0_770, %c0_771] : memref<8x2x64xf32, #tpu.memory_space<vmem>>, vector<1x2x64xf32>
    %1442 = vector.shape_cast %1441 : vector<1x2x64xf32> to vector<2x64xf32>
    %1443 = arith.index_cast %1439 : i32 to index
    %c0_772 = arith.constant 0 : index
    %c0_773 = arith.constant 0 : index
    %1444 = vector.load %arg13[%1443, %c0_772, %c0_773] : memref<8x2x64xf32, #tpu.memory_space<vmem>>, vector<1x2x64xf32>
    %1445 = vector.shape_cast %1444 : vector<1x2x64xf32> to vector<2x64xf32>
    %1446 = vector.extract_strided_slice %1442 {offsets = [0, 0], sizes = [2, 32], strides = [1, 1]} : vector<2x64xf32> to vector<2x32xf32>
    %1447 = arith.index_cast %c7_i32_768 : i32 to index
    %c0_774 = arith.constant 0 : index
    %c64_775 = arith.constant 64 : index
    %1448 = vector.load %arg9[%1447, %c0_774, %c64_775] : memref<8x2x128xf32, #tpu.memory_space<vmem>>, vector<1x2x32xf32>
    %1449 = vector.shape_cast %1448 : vector<1x2x32xf32> to vector<2x32xf32>
    %1450 = vector.shape_cast %1446 : vector<2x32xf32> to vector<1x2x32xf32>
    tpu.vector_store %arg9[%1447, %c0_774, %c64_775], %1450 {strides = array<i32>} : memref<8x2x128xf32, #tpu.memory_space<vmem>>, vector<1x2x32xf32>,
    %1451 = vector.extract_strided_slice %1445 {offsets = [0, 32], sizes = [2, 32], strides = [1, 1]} : vector<2x64xf32> to vector<2x32xf32>
    %1452 = arith.index_cast %c7_i32_768 : i32 to index
    %c0_776 = arith.constant 0 : index
    %c96_777 = arith.constant 96 : index
    %1453 = vector.load %arg9[%1452, %c0_776, %c96_777] : memref<8x2x128xf32, #tpu.memory_space<vmem>>, vector<1x2x32xf32>
    %1454 = vector.shape_cast %1453 : vector<1x2x32xf32> to vector<2x32xf32>
    %1455 = vector.shape_cast %1451 : vector<2x32xf32> to vector<1x2x32xf32>
    tpu.vector_store %arg9[%1452, %c0_776, %c96_777], %1455 {strides = array<i32>} : memref<8x2x128xf32, #tpu.memory_space<vmem>>, vector<1x2x32xf32>,
    %c8_i32_778 = arith.constant 8 : i32
    return
  }
}

</mosaic_0001>

<llo_original>
// kernel: _lambda_.1
$region0: #{_lambda_.1}
  #allocation0 [shape = 'u32[]', space=smem, size = 0x4, offset = 0x4, fixed_abs, tag = 'smem constant byte address 0x4 - core index']
  #allocation1 [shape = 'u32[72,128]{1,0:T(1,128)}', space=vmem, size = 0x9000, scoped, tag = 'internal scratch']
  #allocation2 [shape = 'f32[8,2,64]{2,1,0:T(2,128)}', space=vmem, size = 0x2000, scoped, tag = 'scratch operand']
  #allocation3 [shape = 'f32[8,2,64]{2,1,0:T(2,128)}', space=vmem, size = 0x2000, scoped, tag = 'scratch operand']
  #allocation4 [shape = 'f32[8,2,64]{2,1,0:T(2,128)}', space=vmem, size = 0x2000, scoped, tag = 'scratch operand']
  #allocation5 [shape = 'f32[8,2,64]{2,1,0:T(2,128)}', space=vmem, size = 0x2000, scoped, tag = 'scratch operand']
  %s0 = inlined_call_operand.vmem [shape: f32[8,2,16], index: 0, kind: input, shape index: {}]
  %s1 = inlined_call_operand.hbm [shape: f32[3,16,64], index: 1, kind: input, shape index: {}]
  %s2 = inlined_call_operand.hbm [shape: f32[3,64,64], index: 2, kind: input, shape index: {}]
  %s3 = inlined_call_operand.vmem [shape: f32[3,2,64], index: 3, kind: input, shape index: {}]
  %s4 = inlined_call_operand.vmem [shape: f32[2,64], index: 4, kind: input, shape index: {}]
  %s5 = inlined_call_operand.hbm [shape: f32[3,64,64], index: 5, kind: input, shape index: {}]
  %s6 = inlined_call_operand.hbm [shape: f32[3,64,64], index: 6, kind: input, shape index: {}]
  %s7 = inlined_call_operand.vmem [shape: f32[3,2,64], index: 7, kind: input, shape index: {}]
  %s8 = inlined_call_operand.vmem [shape: f32[2,64], index: 8, kind: input, shape index: {}]
  %s9 = inlined_call_operand.vmem [shape: f32[8,2,128], index: 9, kind: output, shape index: {}]
  %s10 = sld [smem:[#allocation0]]
  $region62: #{_lambda_.1} parent=0
    _
  %s12 = ssub.s32 1, %s10
  %s13 = scalar_select 0, %s12, %s10
  $region1: #{_lambda_.1} parent=0
    #allocation6 [shape = 'u8[24576]{0}', space=vmem, size = 0x6000, scoped, tag = 'input window, operand 1, single buffered']
    #allocation7 [shape = 's32[1]{0}', space=sflag, size = 0x4, scoped, tag = 'scoped memory for _lambda_.1']
    #allocation8 [shape = 'u8[98304]{0}', space=vmem, size = 0x18000, scoped, tag = 'input window, operand 2, single buffered']
    #allocation9 [shape = 's32[1]{0}', space=sflag, size = 0x4, scoped, tag = 'scoped memory for _lambda_.1']
    #allocation10 [shape = 'u8[98304]{0}', space=vmem, size = 0x18000, scoped, tag = 'input window, operand 5, single buffered']
    #allocation11 [shape = 'u8[98304]{0}', space=vmem, size = 0x18000, scoped, tag = 'input window, operand 6, single buffered']
    #allocation12 [shape = 's32[1]{0}', space=sflag, size = 0x4, scoped, tag = 'scoped memory for _lambda_.1']
    %14 = vsyncpa [#allocation7], 0
    %15 = vsyncpa [#allocation9], 0
    %16 = vsyncpa [#allocation12], 0
    // Predicated region
    $region2: #{_lambda_.1} parent=1 // pred_check
      _
    $region3: #{_lambda_.1} parent=1 // pred_check_branch
      %18 = sbr.rel (0) target = $region5
    $region4: #{_lambda_.1} parent=1 // pred_region
      _
    $region5: #{_lambda_.1} parent=1 // pred_fallthru
      _
    // Predicated region
    $region6: #{_lambda_.1} parent=1 // pred_check
      _
    $region7: #{_lambda_.1} parent=1 // pred_check_branch
      %20 = sbr.rel (0) target = $region9
    $region8: #{_lambda_.1} parent=1 // pred_region
      %22 = vsyncadd [#allocation7], 0
      %s23 = sshll.u32 %s1, 4
      %s24 = int_to_ptr.hbm [resolvable:$true] %s23
      %s25 = sshll.u32 [#allocation6], 4
      %s26 = int_to_ptr.vmem [resolvable:$true] %s25
      %31 = dma.hbm_to_vmem [thread:$0]  %s24, 768, %s26, [#allocation7], 128, 128, 8
    $region9: #{_lambda_.1} parent=1 // pred_fallthru
      _
    // Predicated region
    $region10: #{_lambda_.1} parent=1 // pred_check
      _
    $region11: #{_lambda_.1} parent=1 // pred_check_branch
      %33 = sbr.rel (0) target = $region13
    $region12: #{_lambda_.1} parent=1 // pred_region
      %35 = vsyncadd [#allocation9], 0
      %s36 = sshll.u32 %s2, 4
      %s37 = int_to_ptr.hbm [resolvable:$true] %s36
      %s38 = sshll.u32 [#allocation8], 4
      %s39 = int_to_ptr.vmem [resolvable:$true] %s38
      %44 = dma.hbm_to_vmem [thread:$0]  %s37, 3072, %s39, [#allocation9], 128, 128, 8
    $region13: #{_lambda_.1} parent=1 // pred_fallthru
      _
    // Predicated region
    $region14: #{_lambda_.1} parent=1 // pred_check
      _
    $region15: #{_lambda_.1} parent=1 // pred_check_branch
      %46 = sbr.rel (0) target = $region17
    $region16: #{_lambda_.1} parent=1 // pred_region
      _
    $region17: #{_lambda_.1} parent=1 // pred_fallthru
      _
    // Predicated region
    $region18: #{_lambda_.1} parent=1 // pred_check
      _
    $region19: #{_lambda_.1} parent=1 // pred_check_branch
      %48 = sbr.rel (0) target = $region21
    $region20: #{_lambda_.1} parent=1 // pred_region
      _
    $region21: #{_lambda_.1} parent=1 // pred_fallthru
      _
    // Predicated region
    $region22: #{_lambda_.1} parent=1 // pred_check
      _
    $region23: #{_lambda_.1} parent=1 // pred_check_branch
      %50 = sbr.rel (0) target = $region25
    $region24: #{_lambda_.1} parent=1 // pred_region
      %52 = vsyncadd [#allocation9], 0
      %s53 = sshll.u32 %s5, 4
      %s54 = int_to_ptr.hbm [resolvable:$true] %s53
      %s55 = sshll.u32 [#allocation10], 4
      %s56 = int_to_ptr.vmem [resolvable:$true] %s55
      %61 = dma.hbm_to_vmem [thread:$0]  %s54, 3072, %s56, [#allocation9], 128, 128, 8
    $region25: #{_lambda_.1} parent=1 // pred_fallthru
      _
    // Predicated region
    $region26: #{_lambda_.1} parent=1 // pred_check
      _
    $region27: #{_lambda_.1} parent=1 // pred_check_branch
      %63 = sbr.rel (0) target = $region29
    $region28: #{_lambda_.1} parent=1 // pred_region
      %65 = vsyncadd [#allocation12], 0
      %s66 = sshll.u32 %s6, 4
      %s67 = int_to_ptr.hbm [resolvable:$true] %s66
      %s68 = sshll.u32 [#allocation11], 4
      %s69 = int_to_ptr.vmem [resolvable:$true] %s68
      %74 = dma.hbm_to_vmem [thread:$0]  %s67, 3072, %s69, [#allocation12], 128, 128, 8
    $region29: #{_lambda_.1} parent=1 // pred_fallthru
      _
    // Predicated region
    $region30: #{_lambda_.1} parent=1 // pred_check
      _
    $region31: #{_lambda_.1} parent=1 // pred_check_branch
      %76 = sbr.rel (0) target = $region33
    $region32: #{_lambda_.1} parent=1 // pred_region
      _
    $region33: #{_lambda_.1} parent=1 // pred_fallthru
      _
    // Predicated region
    $region34: #{_lambda_.1} parent=1 // pred_check
      _
    $region35: #{_lambda_.1} parent=1 // pred_check_branch
      %78 = sbr.rel (0) target = $region37
    $region36: #{_lambda_.1} parent=1 // pred_region
      _
    $region37: #{_lambda_.1} parent=1 // pred_fallthru
      _
    // Predicated region
    $region38: #{_lambda_.1} parent=1 // pred_check
      _
    $region39: #{_lambda_.1} parent=1 // pred_check_branch
      %80 = sbr.rel (0) target = $region41
    $region40: #{_lambda_.1} parent=1 // pred_region
      %82 = dma.done [#allocation7], 768
    $region41: #{_lambda_.1} parent=1 // pred_fallthru
      _
    // Predicated region
    $region42: #{_lambda_.1} parent=1 // pred_check
      _
    $region43: #{_lambda_.1} parent=1 // pred_check_branch
      %84 = sbr.rel (0) target = $region45
    $region44: #{_lambda_.1} parent=1 // pred_region
      %86 = dma.done [#allocation9], 3072
    $region45: #{_lambda_.1} parent=1 // pred_fallthru
      _
    // Predicated region
    $region46: #{_lambda_.1} parent=1 // pred_check
      _
    $region47: #{_lambda_.1} parent=1 // pred_check_branch
      %88 = sbr.rel (0) target = $region49
    $region48: #{_lambda_.1} parent=1 // pred_region
      %90 = dma.done [#allocation9], 3072
    $region49: #{_lambda_.1} parent=1 // pred_fallthru
      _
    // Predicated region
    $region50: #{_lambda_.1} parent=1 // pred_check
      _
    $region51: #{_lambda_.1} parent=1 // pred_check_branch
      %92 = sbr.rel (0) target = $region53
    $region52: #{_lambda_.1} parent=1 // pred_region
      %94 = dma.done [#allocation12], 3072
    $region53: #{_lambda_.1} parent=1 // pred_fallthru
      _
    %v95 = vld [vmem:[#allocation6] sm:$0xff]
    %v96 = vld [vmem:[#allocation6 + $0x8] sm:$0xff]
    %s97 = scalar_lea.vmem [#allocation6], 16
    %v98 = vld [vmem:[%s97] sm:$0xff]
    %v99 = vld [vmem:[%s97 + $0x8] sm:$0xff]
    %s100 = scalar_lea.vmem [#allocation6], 32
    %v101 = vld [vmem:[%s100] sm:$0xff]
    %v102 = vld [vmem:[%s100 + $0x8] sm:$0xff]
    %v103 = vld [vmem:[#allocation8] sm:$0xff]
    %v104 = vld [vmem:[#allocation8 + $0x8] sm:$0xff]
    %v105 = vld [vmem:[#allocation8 + $0x10] sm:$0xff]
    %v106 = vld [vmem:[#allocation8 + $0x18] sm:$0xff]
    %v107 = vld [vmem:[#allocation8 + $0x20] sm:$0xff]
    %v108 = vld [vmem:[#allocation8 + $0x28] sm:$0xff]
    %v109 = vld [vmem:[#allocation8 + $0x30] sm:$0xff]
    %v110 = vld [vmem:[#allocation8 + $0x38] sm:$0xff]
    %s111 = scalar_lea.vmem [#allocation8], 64
    %v112 = vld [vmem:[%s111] sm:$0xff]
    %v113 = vld [vmem:[%s111 + $0x8] sm:$0xff]
    %v114 = vld [vmem:[%s111 + $0x10] sm:$0xff]
    %v115 = vld [vmem:[%s111 + $0x18] sm:$0xff]
    %v116 = vld [vmem:[%s111 + $0x20] sm:$0xff]
    %v117 = vld [vmem:[%s111 + $0x28] sm:$0xff]
    %v118 = vld [vmem:[%s111 + $0x30] sm:$0xff]
    %v119 = vld [vmem:[%s111 + $0x38] sm:$0xff]
    %s120 = scalar_lea.vmem [#allocation8], 128
    %v121 = vld [vmem:[%s120] sm:$0xff]
    %v122 = vld [vmem:[%s120 + $0x8] sm:$0xff]
    %v123 = vld [vmem:[%s120 + $0x10] sm:$0xff]
    %v124 = vld [vmem:[%s120 + $0x18] sm:$0xff]
    %v125 = vld [vmem:[%s120 + $0x20] sm:$0xff]
    %v126 = vld [vmem:[%s120 + $0x28] sm:$0xff]
    %v127 = vld [vmem:[%s120 + $0x30] sm:$0xff]
    %v128 = vld [vmem:[%s120 + $0x38] sm:$0xff]
    %v129 = vld [vmem:[%s3] sm:$0x3]
    %s130 = scalar_lea.vmem %s3, 2
    %v131 = vld [vmem:[%s130] sm:$0x3]
    %s132 = scalar_lea.vmem %s3, 4
    %v133 = vld [vmem:[%s132] sm:$0x3]
    %v134 = vld [vmem:[%s4] sm:$0x3]
    %v135 = vld [vmem:[%s0] sm:$0x3]
    %vm136 = vcmask 130048
    %v138 = vsel %vm136, %v135, 0
    %140 = vmatpush.msra.mxu0 0.0
    %141 = vmatpush.msra.mxu0 0.0
    %142 = vmatpush.msra.mxu0 0.0
    %143 = vmatpush.msra.mxu0 0.0
    %144 = vmatpush.msra.mxu0 0.0
    %145 = vmatpush.msra.mxu0 0.0
    %146 = vmatpush.msra.mxu0 0.0
    %147 = vmatpush.msra.mxu0 0.0
    %148 = vmatpush.msra.mxu0 0.0
    %149 = vmatpush.msra.mxu0 0.0
    %150 = vmatpush.msra.mxu0 0.0
    %151 = vmatpush.msra.mxu0 0.0
    %152 = vmatpush.msra.mxu0 0.0
    %153 = vmatpush.msra.mxu0 0.0
    %154 = vmatpush.msra.mxu0 %v96
    %155 = vmatpush.msra.mxu0 %v95
    %156 = vmatmul.f32.gmra.mxu0 %v138
    %v157 = vpop.f32.mrf.mxu0
    %v158 = vadd.f32 %v129, %v157
    %159 = vdwg.mxu0
    %vm160 = vcmask 254976
    %161 = vst.msk [vmem:[#allocation2] sm:$0x3] %vm160, %v158
    %s162 = scalar_lea.vmem [#allocation2], 14
    %vm163 = vcmask 517376
    %164 = vst.msk [vmem:[%s162] sm:$0x3] %vm163, %v158
    %165 = vmatpush.msra.mxu0 0.0
    %166 = vmatpush.msra.mxu0 0.0
    %167 = vmatpush.msra.mxu0 0.0
    %168 = vmatpush.msra.mxu0 0.0
    %169 = vmatpush.msra.mxu0 0.0
    %170 = vmatpush.msra.mxu0 0.0
    %171 = vmatpush.msra.mxu0 0.0
    %172 = vmatpush.msra.mxu0 0.0
    %173 = vmatpush.msra.mxu0 0.0
    %174 = vmatpush.msra.mxu0 0.0
    %175 = vmatpush.msra.mxu0 0.0
    %176 = vmatpush.msra.mxu0 0.0
    %177 = vmatpush.msra.mxu0 0.0
    %178 = vmatpush.msra.mxu0 0.0
    %179 = vmatpush.msra.mxu0 %v99
    %180 = vmatpush.msra.mxu0 %v98
    %181 = vmatmul.f32.gmra.mxu0 %v138
    %v182 = vpop.f32.mrf.mxu0
    %v183 = vadd.f32 %v131, %v182
    %184 = vdwg.mxu0
    %185 = vst.msk [vmem:[#allocation3] sm:$0x3] %vm160, %v183
    %s186 = scalar_lea.vmem [#allocation3], 14
    %187 = vst.msk [vmem:[%s186] sm:$0x3] %vm163, %v183
    %188 = vmatpush.msra.mxu0 0.0
    %189 = vmatpush.msra.mxu0 0.0
    %190 = vmatpush.msra.mxu0 0.0
    %191 = vmatpush.msra.mxu0 0.0
    %192 = vmatpush.msra.mxu0 0.0
    %193 = vmatpush.msra.mxu0 0.0
    %194 = vmatpush.msra.mxu0 0.0
    %195 = vmatpush.msra.mxu0 0.0
    %196 = vmatpush.msra.mxu0 0.0
    %197 = vmatpush.msra.mxu0 0.0
    %198 = vmatpush.msra.mxu0 0.0
    %199 = vmatpush.msra.mxu0 0.0
    %200 = vmatpush.msra.mxu0 0.0
    %201 = vmatpush.msra.mxu0 0.0
    %202 = vmatpush.msra.mxu0 %v102
    %203 = vmatpush.msra.mxu0 %v101
    %204 = vmatmul.f32.gmra.mxu0 %v138
    %v205 = vpop.f32.mrf.mxu0
    %v206 = vadd.f32 %v133, %v205
    %207 = vdwg.mxu0
    %208 = vst.msk [vmem:[#allocation4] sm:$0x3] %vm160, %v206
    %s209 = scalar_lea.vmem [#allocation4], 14
    %210 = vst.msk [vmem:[%s209] sm:$0x3] %vm163, %v206
    %s211 = scalar_lea.vmem %s0, 2
    %v212 = vld [vmem:[%s211] sm:$0x3]
    %v214 = vsel %vm136, %v212, 0
    %216 = vmatpush.msra.mxu0 0.0
    %217 = vmatpush.msra.mxu0 0.0
    %218 = vmatpush.msra.mxu0 0.0
    %219 = vmatpush.msra.mxu0 0.0
    %220 = vmatpush.msra.mxu0 0.0
    %221 = vmatpush.msra.mxu0 0.0
    %222 = vmatpush.msra.mxu0 0.0
    %223 = vmatpush.msra.mxu0 0.0
    %224 = vmatpush.msra.mxu0 0.0
    %225 = vmatpush.msra.mxu0 0.0
    %226 = vmatpush.msra.mxu0 0.0
    %227 = vmatpush.msra.mxu0 0.0
    %228 = vmatpush.msra.mxu0 0.0
    %229 = vmatpush.msra.mxu0 0.0
    %230 = vmatpush.msra.mxu0 %v96
    %231 = vmatpush.msra.mxu0 %v95
    %232 = vmatmul.f32.gmra.mxu0 %v214
    %v233 = vpop.f32.mrf.mxu0
    %v234 = vadd.f32 %v129, %v233
    %235 = vdwg.mxu0
    %s236 = scalar_lea.vmem [#allocation2], 2
    %237 = vst.msk [vmem:[%s236] sm:$0x3] %vm160, %v234
    %s238 = scalar_lea.vmem [#allocation2], 12
    %239 = vst.msk [vmem:[%s238] sm:$0x3] %vm163, %v234
    %240 = vmatpush.msra.mxu0 0.0
    %241 = vmatpush.msra.mxu0 0.0
    %242 = vmatpush.msra.mxu0 0.0
    %243 = vmatpush.msra.mxu0 0.0
    %244 = vmatpush.msra.mxu0 0.0
    %245 = vmatpush.msra.mxu0 0.0
    %246 = vmatpush.msra.mxu0 0.0
    %247 = vmatpush.msra.mxu0 0.0
    %248 = vmatpush.msra.mxu0 0.0
    %249 = vmatpush.msra.mxu0 0.0
    %250 = vmatpush.msra.mxu0 0.0
    %251 = vmatpush.msra.mxu0 0.0
    %252 = vmatpush.msra.mxu0 0.0
    %253 = vmatpush.msra.mxu0 0.0
    %254 = vmatpush.msra.mxu0 %v99
    %255 = vmatpush.msra.mxu0 %v98
    %256 = vmatmul.f32.gmra.mxu0 %v214
    %v257 = vpop.f32.mrf.mxu0
    %v258 = vadd.f32 %v131, %v257
    %259 = vdwg.mxu0
    %s260 = scalar_lea.vmem [#allocation3], 2
    %261 = vst.msk [vmem:[%s260] sm:$0x3] %vm160, %v258
    %s262 = scalar_lea.vmem [#allocation3], 12
    %263 = vst.msk [vmem:[%s262] sm:$0x3] %vm163, %v258
    %264 = vmatpush.msra.mxu0 0.0
    %265 = vmatpush.msra.mxu0 0.0
    %266 = vmatpush.msra.mxu0 0.0
    %267 = vmatpush.msra.mxu0 0.0
    %268 = vmatpush.msra.mxu0 0.0
    %269 = vmatpush.msra.mxu0 0.0
    %270 = vmatpush.msra.mxu0 0.0
    %271 = vmatpush.msra.mxu0 0.0
    %272 = vmatpush.msra.mxu0 0.0
    %273 = vmatpush.msra.mxu0 0.0
    %274 = vmatpush.msra.mxu0 0.0
    %275 = vmatpush.msra.mxu0 0.0
    %276 = vmatpush.msra.mxu0 0.0
    %277 = vmatpush.msra.mxu0 0.0
    %278 = vmatpush.msra.mxu0 %v102
    %279 = vmatpush.msra.mxu0 %v101
    %280 = vmatmul.f32.gmra.mxu0 %v214
    %v281 = vpop.f32.mrf.mxu0
    %v282 = vadd.f32 %v133, %v281
    %283 = vdwg.mxu0
    %s284 = scalar_lea.vmem [#allocation4], 2
    %285 = vst.msk [vmem:[%s284] sm:$0x3] %vm160, %v282
    %s286 = scalar_lea.vmem [#allocation4], 12
    %287 = vst.msk [vmem:[%s286] sm:$0x3] %vm163, %v282
    %s288 = scalar_lea.vmem %s0, 4
    %v289 = vld [vmem:[%s288] sm:$0x3]
    %v291 = vsel %vm136, %v289, 0
    %293 = vmatpush.msra.mxu0 0.0
    %294 = vmatpush.msra.mxu0 0.0
    %295 = vmatpush.msra.mxu0 0.0
    %296 = vmatpush.msra.mxu0 0.0
    %297 = vmatpush.msra.mxu0 0.0
    %298 = vmatpush.msra.mxu0 0.0
    %299 = vmatpush.msra.mxu0 0.0
    %300 = vmatpush.msra.mxu0 0.0
    %301 = vmatpush.msra.mxu0 0.0
    %302 = vmatpush.msra.mxu0 0.0
    %303 = vmatpush.msra.mxu0 0.0
    %304 = vmatpush.msra.mxu0 0.0
    %305 = vmatpush.msra.mxu0 0.0
    %306 = vmatpush.msra.mxu0 0.0
    %307 = vmatpush.msra.mxu0 %v96
    %308 = vmatpush.msra.mxu0 %v95
    %309 = vmatmul.f32.gmra.mxu0 %v291
    %v310 = vpop.f32.mrf.mxu0
    %v311 = vadd.f32 %v129, %v310
    %312 = vdwg.mxu0
    %s313 = scalar_lea.vmem [#allocation2], 4
    %314 = vst.msk [vmem:[%s313] sm:$0x3] %vm160, %v311
    %s315 = scalar_lea.vmem [#allocation2], 10
    %316 = vst.msk [vmem:[%s315] sm:$0x3] %vm163, %v311
    %317 = vmatpush.msra.mxu0 0.0
    %318 = vmatpush.msra.mxu0 0.0
    %319 = vmatpush.msra.mxu0 0.0
    %320 = vmatpush.msra.mxu0 0.0
    %321 = vmatpush.msra.mxu0 0.0
    %322 = vmatpush.msra.mxu0 0.0
    %323 = vmatpush.msra.mxu0 0.0
    %324 = vmatpush.msra.mxu0 0.0
    %325 = vmatpush.msra.mxu0 0.0
    %326 = vmatpush.msra.mxu0 0.0
    %327 = vmatpush.msra.mxu0 0.0
    %328 = vmatpush.msra.mxu0 0.0
    %329 = vmatpush.msra.mxu0 0.0
    %330 = vmatpush.msra.mxu0 0.0
    %331 = vmatpush.msra.mxu0 %v99
    %332 = vmatpush.msra.mxu0 %v98
    %333 = vmatmul.f32.gmra.mxu0 %v291
    %v334 = vpop.f32.mrf.mxu0
    %v335 = vadd.f32 %v131, %v334
    %336 = vdwg.mxu0
    %s337 = scalar_lea.vmem [#allocation3], 4
    %338 = vst.msk [vmem:[%s337] sm:$0x3] %vm160, %v335
    %s339 = scalar_lea.vmem [#allocation3], 10
    %340 = vst.msk [vmem:[%s339] sm:$0x3] %vm163, %v335
    %341 = vmatpush.msra.mxu0 0.0
    %342 = vmatpush.msra.mxu0 0.0
    %343 = vmatpush.msra.mxu0 0.0
    %344 = vmatpush.msra.mxu0 0.0
    %345 = vmatpush.msra.mxu0 0.0
    %346 = vmatpush.msra.mxu0 0.0
    %347 = vmatpush.msra.mxu0 0.0
    %348 = vmatpush.msra.mxu0 0.0
    %349 = vmatpush.msra.mxu0 0.0
    %350 = vmatpush.msra.mxu0 0.0
    %351 = vmatpush.msra.mxu0 0.0
    %352 = vmatpush.msra.mxu0 0.0
    %353 = vmatpush.msra.mxu0 0.0
    %354 = vmatpush.msra.mxu0 0.0
    %355 = vmatpush.msra.mxu0 %v102
    %356 = vmatpush.msra.mxu0 %v101
    %357 = vmatmul.f32.gmra.mxu0 %v291
    %v358 = vpop.f32.mrf.mxu0
    %v359 = vadd.f32 %v133, %v358
    %360 = vdwg.mxu0
    %s361 = scalar_lea.vmem [#allocation4], 4
    %362 = vst.msk [vmem:[%s361] sm:$0x3] %vm160, %v359
    %s363 = scalar_lea.vmem [#allocation4], 10
    %364 = vst.msk [vmem:[%s363] sm:$0x3] %vm163, %v359
    %s365 = scalar_lea.vmem %s0, 6
    %v366 = vld [vmem:[%s365] sm:$0x3]
    %v368 = vsel %vm136, %v366, 0
    %370 = vmatpush.msra.mxu0 0.0
    %371 = vmatpush.msra.mxu0 0.0
    %372 = vmatpush.msra.mxu0 0.0
    %373 = vmatpush.msra.mxu0 0.0
    %374 = vmatpush.msra.mxu0 0.0
    %375 = vmatpush.msra.mxu0 0.0
    %376 = vmatpush.msra.mxu0 0.0
    %377 = vmatpush.msra.mxu0 0.0
    %378 = vmatpush.msra.mxu0 0.0
    %379 = vmatpush.msra.mxu0 0.0
    %380 = vmatpush.msra.mxu0 0.0
    %381 = vmatpush.msra.mxu0 0.0
    %382 = vmatpush.msra.mxu0 0.0
    %383 = vmatpush.msra.mxu0 0.0
    %384 = vmatpush.msra.mxu0 %v96
    %385 = vmatpush.msra.mxu0 %v95
    %386 = vmatmul.f32.gmra.mxu0 %v368
    %v387 = vpop.f32.mrf.mxu0
    %v388 = vadd.f32 %v129, %v387
    %389 = vdwg.mxu0
    %s390 = scalar_lea.vmem [#allocation2], 6
    %391 = vst.msk [vmem:[%s390] sm:$0x3] %vm160, %v388
    %s392 = scalar_lea.vmem [#allocation2], 8
    %393 = vst.msk [vmem:[%s392] sm:$0x3] %vm163, %v388
    %394 = vmatpush.msra.mxu0 0.0
    %395 = vmatpush.msra.mxu0 0.0
    %396 = vmatpush.msra.mxu0 0.0
    %397 = vmatpush.msra.mxu0 0.0
    %398 = vmatpush.msra.mxu0 0.0
    %399 = vmatpush.msra.mxu0 0.0
    %400 = vmatpush.msra.mxu0 0.0
    %401 = vmatpush.msra.mxu0 0.0
    %402 = vmatpush.msra.mxu0 0.0
    %403 = vmatpush.msra.mxu0 0.0
    %404 = vmatpush.msra.mxu0 0.0
    %405 = vmatpush.msra.mxu0 0.0
    %406 = vmatpush.msra.mxu0 0.0
    %407 = vmatpush.msra.mxu0 0.0
    %408 = vmatpush.msra.mxu0 %v99
    %409 = vmatpush.msra.mxu0 %v98
    %410 = vmatmul.f32.gmra.mxu0 %v368
    %v411 = vpop.f32.mrf.mxu0
    %v412 = vadd.f32 %v131, %v411
    %413 = vdwg.mxu0
    %s414 = scalar_lea.vmem [#allocation3], 6
    %415 = vst.msk [vmem:[%s414] sm:$0x3] %vm160, %v412
    %s416 = scalar_lea.vmem [#allocation3], 8
    %417 = vst.msk [vmem:[%s416] sm:$0x3] %vm163, %v412
    %418 = vmatpush.msra.mxu0 0.0
    %419 = vmatpush.msra.mxu0 0.0
    %420 = vmatpush.msra.mxu0 0.0
    %421 = vmatpush.msra.mxu0 0.0
    %422 = vmatpush.msra.mxu0 0.0
    %423 = vmatpush.msra.mxu0 0.0
    %424 = vmatpush.msra.mxu0 0.0
    %425 = vmatpush.msra.mxu0 0.0
    %426 = vmatpush.msra.mxu0 0.0
    %427 = vmatpush.msra.mxu0 0.0
    %428 = vmatpush.msra.mxu0 0.0
    %429 = vmatpush.msra.mxu0 0.0
    %430 = vmatpush.msra.mxu0 0.0
    %431 = vmatpush.msra.mxu0 0.0
    %432 = vmatpush.msra.mxu0 %v102
    %433 = vmatpush.msra.mxu0 %v101
    %434 = vmatmul.f32.gmra.mxu0 %v368
    %v435 = vpop.f32.mrf.mxu0
    %v436 = vadd.f32 %v133, %v435
    %437 = vdwg.mxu0
    %s438 = scalar_lea.vmem [#allocation4], 6
    %439 = vst.msk [vmem:[%s438] sm:$0x3] %vm160, %v436
    %s440 = scalar_lea.vmem [#allocation4], 8
    %441 = vst.msk [vmem:[%s440] sm:$0x3] %vm163, %v436
    %s442 = scalar_lea.vmem %s0, 8
    %v443 = vld [vmem:[%s442] sm:$0x3]
    %v445 = vsel %vm136, %v443, 0
    %447 = vmatpush.msra.mxu0 0.0
    %448 = vmatpush.msra.mxu0 0.0
    %449 = vmatpush.msra.mxu0 0.0
    %450 = vmatpush.msra.mxu0 0.0
    %451 = vmatpush.msra.mxu0 0.0
    %452 = vmatpush.msra.mxu0 0.0
    %453 = vmatpush.msra.mxu0 0.0
    %454 = vmatpush.msra.mxu0 0.0
    %455 = vmatpush.msra.mxu0 0.0
    %456 = vmatpush.msra.mxu0 0.0
    %457 = vmatpush.msra.mxu0 0.0
    %458 = vmatpush.msra.mxu0 0.0
    %459 = vmatpush.msra.mxu0 0.0
    %460 = vmatpush.msra.mxu0 0.0
    %461 = vmatpush.msra.mxu0 %v96
    %462 = vmatpush.msra.mxu0 %v95
    %463 = vmatmul.f32.gmra.mxu0 %v445
    %v464 = vpop.f32.mrf.mxu0
    %v465 = vadd.f32 %v129, %v464
    %466 = vdwg.mxu0
    %467 = vst.msk [vmem:[%s392] sm:$0x3] %vm160, %v465
    %468 = vst.msk [vmem:[%s390] sm:$0x3] %vm163, %v465
    %469 = vmatpush.msra.mxu0 0.0
    %470 = vmatpush.msra.mxu0 0.0
    %471 = vmatpush.msra.mxu0 0.0
    %472 = vmatpush.msra.mxu0 0.0
    %473 = vmatpush.msra.mxu0 0.0
    %474 = vmatpush.msra.mxu0 0.0
    %475 = vmatpush.msra.mxu0 0.0
    %476 = vmatpush.msra.mxu0 0.0
    %477 = vmatpush.msra.mxu0 0.0
    %478 = vmatpush.msra.mxu0 0.0
    %479 = vmatpush.msra.mxu0 0.0
    %480 = vmatpush.msra.mxu0 0.0
    %481 = vmatpush.msra.mxu0 0.0
    %482 = vmatpush.msra.mxu0 0.0
    %483 = vmatpush.msra.mxu0 %v99
    %484 = vmatpush.msra.mxu0 %v98
    %485 = vmatmul.f32.gmra.mxu0 %v445
    %v486 = vpop.f32.mrf.mxu0
    %v487 = vadd.f32 %v131, %v486
    %488 = vdwg.mxu0
    %489 = vst.msk [vmem:[%s416] sm:$0x3] %vm160, %v487
    %490 = vst.msk [vmem:[%s414] sm:$0x3] %vm163, %v487
    %491 = vmatpush.msra.mxu0 0.0
    %492 = vmatpush.msra.mxu0 0.0
    %493 = vmatpush.msra.mxu0 0.0
    %494 = vmatpush.msra.mxu0 0.0
    %495 = vmatpush.msra.mxu0 0.0
    %496 = vmatpush.msra.mxu0 0.0
    %497 = vmatpush.msra.mxu0 0.0
    %498 = vmatpush.msra.mxu0 0.0
    %499 = vmatpush.msra.mxu0 0.0
    %500 = vmatpush.msra.mxu0 0.0
    %501 = vmatpush.msra.mxu0 0.0
    %502 = vmatpush.msra.mxu0 0.0
    %503 = vmatpush.msra.mxu0 0.0
    %504 = vmatpush.msra.mxu0 0.0
    %505 = vmatpush.msra.mxu0 %v102
    %506 = vmatpush.msra.mxu0 %v101
    %507 = vmatmul.f32.gmra.mxu0 %v445
    %v508 = vpop.f32.mrf.mxu0
    %v509 = vadd.f32 %v133, %v508
    %510 = vdwg.mxu0
    %511 = vst.msk [vmem:[%s440] sm:$0x3] %vm160, %v509
    %512 = vst.msk [vmem:[%s438] sm:$0x3] %vm163, %v509
    %s513 = scalar_lea.vmem %s0, 10
    %v514 = vld [vmem:[%s513] sm:$0x3]
    %v516 = vsel %vm136, %v514, 0
    %518 = vmatpush.msra.mxu0 0.0
    %519 = vmatpush.msra.mxu0 0.0
    %520 = vmatpush.msra.mxu0 0.0
    %521 = vmatpush.msra.mxu0 0.0
    %522 = vmatpush.msra.mxu0 0.0
    %523 = vmatpush.msra.mxu0 0.0
    %524 = vmatpush.msra.mxu0 0.0
    %525 = vmatpush.msra.mxu0 0.0
    %526 = vmatpush.msra.mxu0 0.0
    %527 = vmatpush.msra.mxu0 0.0
    %528 = vmatpush.msra.mxu0 0.0
    %529 = vmatpush.msra.mxu0 0.0
    %530 = vmatpush.msra.mxu0 0.0
    %531 = vmatpush.msra.mxu0 0.0
    %532 = vmatpush.msra.mxu0 %v96
    %533 = vmatpush.msra.mxu0 %v95
    %534 = vmatmul.f32.gmra.mxu0 %v516
    %v535 = vpop.f32.mrf.mxu0
    %v536 = vadd.f32 %v129, %v535
    %537 = vdwg.mxu0
    %538 = vst.msk [vmem:[%s315] sm:$0x3] %vm160, %v536
    %539 = vst.msk [vmem:[%s313] sm:$0x3] %vm163, %v536
    %540 = vmatpush.msra.mxu0 0.0
    %541 = vmatpush.msra.mxu0 0.0
    %542 = vmatpush.msra.mxu0 0.0
    %543 = vmatpush.msra.mxu0 0.0
    %544 = vmatpush.msra.mxu0 0.0
    %545 = vmatpush.msra.mxu0 0.0
    %546 = vmatpush.msra.mxu0 0.0
    %547 = vmatpush.msra.mxu0 0.0
    %548 = vmatpush.msra.mxu0 0.0
    %549 = vmatpush.msra.mxu0 0.0
    %550 = vmatpush.msra.mxu0 0.0
    %551 = vmatpush.msra.mxu0 0.0
    %552 = vmatpush.msra.mxu0 0.0
    %553 = vmatpush.msra.mxu0 0.0
    %554 = vmatpush.msra.mxu0 %v99
    %555 = vmatpush.msra.mxu0 %v98
    %556 = vmatmul.f32.gmra.mxu0 %v516
    %v557 = vpop.f32.mrf.mxu0
    %v558 = vadd.f32 %v131, %v557
    %559 = vdwg.mxu0
    %560 = vst.msk [vmem:[%s339] sm:$0x3] %vm160, %v558
    %561 = vst.msk [vmem:[%s337] sm:$0x3] %vm163, %v558
    %562 = vmatpush.msra.mxu0 0.0
    %563 = vmatpush.msra.mxu0 0.0
    %564 = vmatpush.msra.mxu0 0.0
    %565 = vmatpush.msra.mxu0 0.0
    %566 = vmatpush.msra.mxu0 0.0
    %567 = vmatpush.msra.mxu0 0.0
    %568 = vmatpush.msra.mxu0 0.0
    %569 = vmatpush.msra.mxu0 0.0
    %570 = vmatpush.msra.mxu0 0.0
    %571 = vmatpush.msra.mxu0 0.0
    %572 = vmatpush.msra.mxu0 0.0
    %573 = vmatpush.msra.mxu0 0.0
    %574 = vmatpush.msra.mxu0 0.0
    %575 = vmatpush.msra.mxu0 0.0
    %576 = vmatpush.msra.mxu0 %v102
    %577 = vmatpush.msra.mxu0 %v101
    %578 = vmatmul.f32.gmra.mxu0 %v516
    %v579 = vpop.f32.mrf.mxu0
    %v580 = vadd.f32 %v133, %v579
    %581 = vdwg.mxu0
    %582 = vst.msk [vmem:[%s363] sm:$0x3] %vm160, %v580
    %583 = vst.msk [vmem:[%s361] sm:$0x3] %vm163, %v580
    %s584 = scalar_lea.vmem %s0, 12
    %v585 = vld [vmem:[%s584] sm:$0x3]
    %v587 = vsel %vm136, %v585, 0
    %589 = vmatpush.msra.mxu0 0.0
    %590 = vmatpush.msra.mxu0 0.0
    %591 = vmatpush.msra.mxu0 0.0
    %592 = vmatpush.msra.mxu0 0.0
    %593 = vmatpush.msra.mxu0 0.0
    %594 = vmatpush.msra.mxu0 0.0
    %595 = vmatpush.msra.mxu0 0.0
    %596 = vmatpush.msra.mxu0 0.0
    %597 = vmatpush.msra.mxu0 0.0
    %598 = vmatpush.msra.mxu0 0.0
    %599 = vmatpush.msra.mxu0 0.0
    %600 = vmatpush.msra.mxu0 0.0
    %601 = vmatpush.msra.mxu0 0.0
    %602 = vmatpush.msra.mxu0 0.0
    %603 = vmatpush.msra.mxu0 %v96
    %604 = vmatpush.msra.mxu0 %v95
    %605 = vmatmul.f32.gmra.mxu0 %v587
    %v606 = vpop.f32.mrf.mxu0
    %v607 = vadd.f32 %v129, %v606
    %608 = vdwg.mxu0
    %609 = vst.msk [vmem:[%s238] sm:$0x3] %vm160, %v607
    %610 = vst.msk [vmem:[%s236] sm:$0x3] %vm163, %v607
    %611 = vmatpush.msra.mxu0 0.0
    %612 = vmatpush.msra.mxu0 0.0
    %613 = vmatpush.msra.mxu0 0.0
    %614 = vmatpush.msra.mxu0 0.0
    %615 = vmatpush.msra.mxu0 0.0
    %616 = vmatpush.msra.mxu0 0.0
    %617 = vmatpush.msra.mxu0 0.0
    %618 = vmatpush.msra.mxu0 0.0
    %619 = vmatpush.msra.mxu0 0.0
    %620 = vmatpush.msra.mxu0 0.0
    %621 = vmatpush.msra.mxu0 0.0
    %622 = vmatpush.msra.mxu0 0.0
    %623 = vmatpush.msra.mxu0 0.0
    %624 = vmatpush.msra.mxu0 0.0
    %625 = vmatpush.msra.mxu0 %v99
    %626 = vmatpush.msra.mxu0 %v98
    %627 = vmatmul.f32.gmra.mxu0 %v587
    %v628 = vpop.f32.mrf.mxu0
    %v629 = vadd.f32 %v131, %v628
    %630 = vdwg.mxu0
    %631 = vst.msk [vmem:[%s262] sm:$0x3] %vm160, %v629
    %632 = vst.msk [vmem:[%s260] sm:$0x3] %vm163, %v629
    %633 = vmatpush.msra.mxu0 0.0
    %634 = vmatpush.msra.mxu0 0.0
    %635 = vmatpush.msra.mxu0 0.0
    %636 = vmatpush.msra.mxu0 0.0
    %637 = vmatpush.msra.mxu0 0.0
    %638 = vmatpush.msra.mxu0 0.0
    %639 = vmatpush.msra.mxu0 0.0
    %640 = vmatpush.msra.mxu0 0.0
    %641 = vmatpush.msra.mxu0 0.0
    %642 = vmatpush.msra.mxu0 0.0
    %643 = vmatpush.msra.mxu0 0.0
    %644 = vmatpush.msra.mxu0 0.0
    %645 = vmatpush.msra.mxu0 0.0
    %646 = vmatpush.msra.mxu0 0.0
    %647 = vmatpush.msra.mxu0 %v102
    %648 = vmatpush.msra.mxu0 %v101
    %649 = vmatmul.f32.gmra.mxu0 %v587
    %v650 = vpop.f32.mrf.mxu0
    %v651 = vadd.f32 %v133, %v650
    %652 = vdwg.mxu0
    %653 = vst.msk [vmem:[%s286] sm:$0x3] %vm160, %v651
    %654 = vst.msk [vmem:[%s284] sm:$0x3] %vm163, %v651
    %s655 = scalar_lea.vmem %s0, 14
    %v656 = vld [vmem:[%s655] sm:$0x3]
    %v658 = vsel %vm136, %v656, 0
    %660 = vmatpush.msra.mxu0 0.0
    %661 = vmatpush.msra.mxu0 0.0
    %662 = vmatpush.msra.mxu0 0.0
    %663 = vmatpush.msra.mxu0 0.0
    %664 = vmatpush.msra.mxu0 0.0
    %665 = vmatpush.msra.mxu0 0.0
    %666 = vmatpush.msra.mxu0 0.0
    %667 = vmatpush.msra.mxu0 0.0
    %668 = vmatpush.msra.mxu0 0.0
    %669 = vmatpush.msra.mxu0 0.0
    %670 = vmatpush.msra.mxu0 0.0
    %671 = vmatpush.msra.mxu0 0.0
    %672 = vmatpush.msra.mxu0 0.0
    %673 = vmatpush.msra.mxu0 0.0
    %674 = vmatpush.msra.mxu0 %v96
    %675 = vmatpush.msra.mxu0 %v95
    %676 = vmatmul.f32.gmra.mxu0 %v658
    %v677 = vpop.f32.mrf.mxu0
    %v678 = vadd.f32 %v129, %v677
    %679 = vdwg.mxu0
    %680 = vst.msk [vmem:[%s162] sm:$0x3] %vm160, %v678
    %681 = vst.msk [vmem:[#allocation2] sm:$0x3] %vm163, %v678
    %682 = vmatpush.msra.mxu0 0.0
    %683 = vmatpush.msra.mxu0 0.0
    %684 = vmatpush.msra.mxu0 0.0
    %685 = vmatpush.msra.mxu0 0.0
    %686 = vmatpush.msra.mxu0 0.0
    %687 = vmatpush.msra.mxu0 0.0
    %688 = vmatpush.msra.mxu0 0.0
    %689 = vmatpush.msra.mxu0 0.0
    %690 = vmatpush.msra.mxu0 0.0
    %691 = vmatpush.msra.mxu0 0.0
    %692 = vmatpush.msra.mxu0 0.0
    %693 = vmatpush.msra.mxu0 0.0
    %694 = vmatpush.msra.mxu0 0.0
    %695 = vmatpush.msra.mxu0 0.0
    %696 = vmatpush.msra.mxu0 %v99
    %697 = vmatpush.msra.mxu0 %v98
    %698 = vmatmul.f32.gmra.mxu0 %v658
    %v699 = vpop.f32.mrf.mxu0
    %v700 = vadd.f32 %v131, %v699
    %701 = vdwg.mxu0
    %702 = vst.msk [vmem:[%s186] sm:$0x3] %vm160, %v700
    %703 = vst.msk [vmem:[#allocation3] sm:$0x3] %vm163, %v700
    %704 = vmatpush.msra.mxu0 0.0
    %705 = vmatpush.msra.mxu0 0.0
    %706 = vmatpush.msra.mxu0 0.0
    %707 = vmatpush.msra.mxu0 0.0
    %708 = vmatpush.msra.mxu0 0.0
    %709 = vmatpush.msra.mxu0 0.0
    %710 = vmatpush.msra.mxu0 0.0
    %711 = vmatpush.msra.mxu0 0.0
    %712 = vmatpush.msra.mxu0 0.0
    %713 = vmatpush.msra.mxu0 0.0
    %714 = vmatpush.msra.mxu0 0.0
    %715 = vmatpush.msra.mxu0 0.0
    %716 = vmatpush.msra.mxu0 0.0
    %717 = vmatpush.msra.mxu0 0.0
    %718 = vmatpush.msra.mxu0 %v102
    %719 = vmatpush.msra.mxu0 %v101
    %720 = vmatmul.f32.gmra.mxu0 %v658
    %v721 = vpop.f32.mrf.mxu0
    %v722 = vadd.f32 %v133, %v721
    %723 = vdwg.mxu0
    %724 = vst.msk [vmem:[%s209] sm:$0x3] %vm160, %v722
    %725 = vst.msk [vmem:[#allocation4] sm:$0x3] %vm163, %v722
    %vm726 = vcmask 523264
    %v728 = vsel %vm726, 0.0, 0
    %730 = vmatpush.msra.mxu0 0.0
    %731 = vmatpush.msra.mxu0 0.0
    %732 = vmatpush.msra.mxu0 0.0
    %733 = vmatpush.msra.mxu0 0.0
    %734 = vmatpush.msra.mxu0 0.0
    %735 = vmatpush.msra.mxu0 0.0
    %736 = vmatpush.msra.mxu0 0.0
    %737 = vmatpush.msra.mxu0 0.0
    %738 = vmatpush.msra.mxu0 %v110
    %739 = vmatpush.msra.mxu0 %v109
    %740 = vmatpush.msra.mxu0 %v108
    %741 = vmatpush.msra.mxu0 %v107
    %742 = vmatpush.msra.mxu0 %v106
    %743 = vmatpush.msra.mxu0 %v105
    %744 = vmatpush.msra.mxu0 %v104
    %745 = vmatpush.msra.mxu0 %v103
    %746 = vmatmul.f32.gmra.mxu0 %v728
    %v747 = vpop.f32.mrf.mxu0
    %v748 = vadd.f32 0.0, %v747
    %749 = vdwg.mxu0
    %750 = vmatpush.msra.mxu0 0.0
    %751 = vmatpush.msra.mxu0 0.0
    %752 = vmatpush.msra.mxu0 0.0
    %753 = vmatpush.msra.mxu0 0.0
    %754 = vmatpush.msra.mxu0 0.0
    %755 = vmatpush.msra.mxu0 0.0
    %756 = vmatpush.msra.mxu0 0.0
    %757 = vmatpush.msra.mxu0 0.0
    %758 = vmatpush.msra.mxu0 %v119
    %759 = vmatpush.msra.mxu0 %v118
    %760 = vmatpush.msra.mxu0 %v117
    %761 = vmatpush.msra.mxu0 %v116
    %762 = vmatpush.msra.mxu0 %v115
    %763 = vmatpush.msra.mxu0 %v114
    %764 = vmatpush.msra.mxu0 %v113
    %765 = vmatpush.msra.mxu0 %v112
    %766 = vmatmul.f32.gmra.mxu0 %v728
    %v767 = vpop.f32.mrf.mxu0
    %v768 = vadd.f32 0.0, %v767
    %769 = vdwg.mxu0
    %v770 = vld [vmem:[#allocation2] sm:$0x3]
    %v771 = vadd.f32 %v770, %v748
    %v772 = vxor.u32 %v771, 2147483648
    %v773 = vmul.f32 %v772, 1.442695
    %v774 = vpow.pop %v773
    %v775 = vadd.f32 %v774, 1.0
    %v776 = vrcp.pop %v775
    %v777 = vmul.f32 %v775, %v776
    %v778 = vsub.f32 1.0, %v777
    %v779 = vmul.f32 %v776, %v778
    %v780 = vadd.f32 %v776, %v779
    %vm781 = vweird.f32 %v775
    %vm782 = vweird.f32 %v776
    %vm783 = vmor %vm781, %vm782
    %v784 = vsel %vm783, %v776, %v780
    %v785 = vand.u32 2147483647, %v775
    %vm786 = vcmp.eq.f32.partialorder %v785, 8.507059e+37
    %v787 = vand.u32 %v775, 2147483648
    %v788 = vor.u32 1.1754944e-38, %v787
    %v789 = vsel %vm786, %v788, %v784
    %v790 = vmul.f32 1.0, %v789
    %v791 = vld [vmem:[#allocation3] sm:$0x3]
    %v792 = vadd.f32 %v791, %v768
    %v793 = vxor.u32 %v792, 2147483648
    %v794 = vmul.f32 %v793, 1.442695
    %v795 = vpow.pop %v794
    %v796 = vadd.f32 %v795, 1.0
    %v797 = vrcp.pop %v796
    %v798 = vmul.f32 %v796, %v797
    %v799 = vsub.f32 1.0, %v798
    %v800 = vmul.f32 %v797, %v799
    %v801 = vadd.f32 %v797, %v800
    %vm802 = vweird.f32 %v796
    %vm803 = vweird.f32 %v797
    %vm804 = vmor %vm802, %vm803
    %v805 = vsel %vm804, %v797, %v801
    %v806 = vand.u32 2147483647, %v796
    %vm807 = vcmp.eq.f32.partialorder %v806, 8.507059e+37
    %v808 = vand.u32 %v796, 2147483648
    %v809 = vor.u32 1.1754944e-38, %v808
    %v810 = vsel %vm807, %v809, %v805
    %v811 = vmul.f32 1.0, %v810
    %v812 = vld [vmem:[#allocation4] sm:$0x3]
    %813 = vmatpush.msra.mxu0 0.0
    %814 = vmatpush.msra.mxu0 0.0
    %815 = vmatpush.msra.mxu0 0.0
    %816 = vmatpush.msra.mxu0 0.0
    %817 = vmatpush.msra.mxu0 0.0
    %818 = vmatpush.msra.mxu0 0.0
    %819 = vmatpush.msra.mxu0 0.0
    %820 = vmatpush.msra.mxu0 0.0
    %821 = vmatpush.msra.mxu0 %v128
    %822 = vmatpush.msra.mxu0 %v127
    %823 = vmatpush.msra.mxu0 %v126
    %824 = vmatpush.msra.mxu0 %v125
    %825 = vmatpush.msra.mxu0 %v124
    %826 = vmatpush.msra.mxu0 %v123
    %827 = vmatpush.msra.mxu0 %v122
    %828 = vmatpush.msra.mxu0 %v121
    %829 = vmatmul.f32.gmra.mxu0 %v728
    %v830 = vpop.f32.mrf.mxu0
    %v831 = vadd.f32 %v134, %v830
    %832 = vdwg.mxu0
    %v833 = vmul.f32 %v790, %v831
    %v834 = vadd.f32 %v812, %v833
    %v835 = vtanh.pop %v834
    %v836 = vsub.f32 0.0, %v835
    %v837 = vmul.f32 %v811, %v836
    %v838 = vadd.f32 %v835, %v837
    %vm839 = vcmask 517120
    %840 = vst.msk [vmem:[#allocation5] sm:$0x3] %vm839, %v838
    %v842 = vsel %vm726, %v838, 0
    %844 = vmatpush.msra.mxu0 0.0
    %845 = vmatpush.msra.mxu0 0.0
    %846 = vmatpush.msra.mxu0 0.0
    %847 = vmatpush.msra.mxu0 0.0
    %848 = vmatpush.msra.mxu0 0.0
    %849 = vmatpush.msra.mxu0 0.0
    %850 = vmatpush.msra.mxu0 0.0
    %851 = vmatpush.msra.mxu0 0.0
    %852 = vmatpush.msra.mxu0 %v110
    %853 = vmatpush.msra.mxu0 %v109
    %854 = vmatpush.msra.mxu0 %v108
    %855 = vmatpush.msra.mxu0 %v107
    %856 = vmatpush.msra.mxu0 %v106
    %857 = vmatpush.msra.mxu0 %v105
    %858 = vmatpush.msra.mxu0 %v104
    %859 = vmatpush.msra.mxu0 %v103
    %860 = vmatmul.f32.gmra.mxu0 %v842
    %v861 = vpop.f32.mrf.mxu0
    %v862 = vadd.f32 0.0, %v861
    %863 = vdwg.mxu0
    %864 = vmatpush.msra.mxu0 0.0
    %865 = vmatpush.msra.mxu0 0.0
    %866 = vmatpush.msra.mxu0 0.0
    %867 = vmatpush.msra.mxu0 0.0
    %868 = vmatpush.msra.mxu0 0.0
    %869 = vmatpush.msra.mxu0 0.0
    %870 = vmatpush.msra.mxu0 0.0
    %871 = vmatpush.msra.mxu0 0.0
    %872 = vmatpush.msra.mxu0 %v119
    %873 = vmatpush.msra.mxu0 %v118
    %874 = vmatpush.msra.mxu0 %v117
    %875 = vmatpush.msra.mxu0 %v116
    %876 = vmatpush.msra.mxu0 %v115
    %877 = vmatpush.msra.mxu0 %v114
    %878 = vmatpush.msra.mxu0 %v113
    %879 = vmatpush.msra.mxu0 %v112
    %880 = vmatmul.f32.gmra.mxu0 %v842
    %v881 = vpop.f32.mrf.mxu0
    %v882 = vadd.f32 0.0, %v881
    %883 = vdwg.mxu0
    %v884 = vld [vmem:[%s236] sm:$0x3]
    %v885 = vadd.f32 %v884, %v862
    %v886 = vxor.u32 %v885, 2147483648
    %v887 = vmul.f32 %v886, 1.442695
    %v888 = vpow.pop %v887
    %v889 = vadd.f32 %v888, 1.0
    %v890 = vrcp.pop %v889
    %v891 = vmul.f32 %v889, %v890
    %v892 = vsub.f32 1.0, %v891
    %v893 = vmul.f32 %v890, %v892
    %v894 = vadd.f32 %v890, %v893
    %vm895 = vweird.f32 %v889
    %vm896 = vweird.f32 %v890
    %vm897 = vmor %vm895, %vm896
    %v898 = vsel %vm897, %v890, %v894
    %v899 = vand.u32 2147483647, %v889
    %vm900 = vcmp.eq.f32.partialorder %v899, 8.507059e+37
    %v901 = vand.u32 %v889, 2147483648
    %v902 = vor.u32 1.1754944e-38, %v901
    %v903 = vsel %vm900, %v902, %v898
    %v904 = vmul.f32 1.0, %v903
    %v905 = vld [vmem:[%s260] sm:$0x3]
    %v906 = vadd.f32 %v905, %v882
    %v907 = vxor.u32 %v906, 2147483648
    %v908 = vmul.f32 %v907, 1.442695
    %v909 = vpow.pop %v908
    %v910 = vadd.f32 %v909, 1.0
    %v911 = vrcp.pop %v910
    %v912 = vmul.f32 %v910, %v911
    %v913 = vsub.f32 1.0, %v912
    %v914 = vmul.f32 %v911, %v913
    %v915 = vadd.f32 %v911, %v914
    %vm916 = vweird.f32 %v910
    %vm917 = vweird.f32 %v911
    %vm918 = vmor %vm916, %vm917
    %v919 = vsel %vm918, %v911, %v915
    %v920 = vand.u32 2147483647, %v910
    %vm921 = vcmp.eq.f32.partialorder %v920, 8.507059e+37
    %v922 = vand.u32 %v910, 2147483648
    %v923 = vor.u32 1.1754944e-38, %v922
    %v924 = vsel %vm921, %v923, %v919
    %v925 = vmul.f32 1.0, %v924
    %v926 = vld [vmem:[%s284] sm:$0x3]
    %927 = vmatpush.msra.mxu0 0.0
    %928 = vmatpush.msra.mxu0 0.0
    %929 = vmatpush.msra.mxu0 0.0
    %930 = vmatpush.msra.mxu0 0.0
    %931 = vmatpush.msra.mxu0 0.0
    %932 = vmatpush.msra.mxu0 0.0
    %933 = vmatpush.msra.mxu0 0.0
    %934 = vmatpush.msra.mxu0 0.0
    %935 = vmatpush.msra.mxu0 %v128
    %936 = vmatpush.msra.mxu0 %v127
    %937 = vmatpush.msra.mxu0 %v126
    %938 = vmatpush.msra.mxu0 %v125
    %939 = vmatpush.msra.mxu0 %v124
    %940 = vmatpush.msra.mxu0 %v123
    %941 = vmatpush.msra.mxu0 %v122
    %942 = vmatpush.msra.mxu0 %v121
    %943 = vmatmul.f32.gmra.mxu0 %v842
    %v944 = vpop.f32.mrf.mxu0
    %v945 = vadd.f32 %v134, %v944
    %946 = vdwg.mxu0
    %v947 = vmul.f32 %v904, %v945
    %v948 = vadd.f32 %v926, %v947
    %v949 = vtanh.pop %v948
    %v950 = vsub.f32 %v838, %v949
    %v951 = vmul.f32 %v925, %v950
    %v952 = vadd.f32 %v949, %v951
    %s953 = scalar_lea.vmem [#allocation5], 2
    %954 = vst.msk [vmem:[%s953] sm:$0x3] %vm839, %v952
    %v956 = vsel %vm726, %v952, 0
    %958 = vmatpush.msra.mxu0 0.0
    %959 = vmatpush.msra.mxu0 0.0
    %960 = vmatpush.msra.mxu0 0.0
    %961 = vmatpush.msra.mxu0 0.0
    %962 = vmatpush.msra.mxu0 0.0
    %963 = vmatpush.msra.mxu0 0.0
    %964 = vmatpush.msra.mxu0 0.0
    %965 = vmatpush.msra.mxu0 0.0
    %966 = vmatpush.msra.mxu0 %v110
    %967 = vmatpush.msra.mxu0 %v109
    %968 = vmatpush.msra.mxu0 %v108
    %969 = vmatpush.msra.mxu0 %v107
    %970 = vmatpush.msra.mxu0 %v106
    %971 = vmatpush.msra.mxu0 %v105
    %972 = vmatpush.msra.mxu0 %v104
    %973 = vmatpush.msra.mxu0 %v103
    %974 = vmatmul.f32.gmra.mxu0 %v956
    %v975 = vpop.f32.mrf.mxu0
    %v976 = vadd.f32 0.0, %v975
    %977 = vdwg.mxu0
    %978 = vmatpush.msra.mxu0 0.0
    %979 = vmatpush.msra.mxu0 0.0
    %980 = vmatpush.msra.mxu0 0.0
    %981 = vmatpush.msra.mxu0 0.0
    %982 = vmatpush.msra.mxu0 0.0
    %983 = vmatpush.msra.mxu0 0.0
    %984 = vmatpush.msra.mxu0 0.0
    %985 = vmatpush.msra.mxu0 0.0
    %986 = vmatpush.msra.mxu0 %v119
    %987 = vmatpush.msra.mxu0 %v118
    %988 = vmatpush.msra.mxu0 %v117
    %989 = vmatpush.msra.mxu0 %v116
    %990 = vmatpush.msra.mxu0 %v115
    %991 = vmatpush.msra.mxu0 %v114
    %992 = vmatpush.msra.mxu0 %v113
    %993 = vmatpush.msra.mxu0 %v112
    %994 = vmatmul.f32.gmra.mxu0 %v956
    %v995 = vpop.f32.mrf.mxu0
    %v996 = vadd.f32 0.0, %v995
    %997 = vdwg.mxu0
    %v998 = vld [vmem:[%s313] sm:$0x3]
    %v999 = vadd.f32 %v998, %v976
    %v1000 = vxor.u32 %v999, 2147483648
    %v1001 = vmul.f32 %v1000, 1.442695
    %v1002 = vpow.pop %v1001
    %v1003 = vadd.f32 %v1002, 1.0
    %v1004 = vrcp.pop %v1003
    %v1005 = vmul.f32 %v1003, %v1004
    %v1006 = vsub.f32 1.0, %v1005
    %v1007 = vmul.f32 %v1004, %v1006
    %v1008 = vadd.f32 %v1004, %v1007
    %vm1009 = vweird.f32 %v1003
    %vm1010 = vweird.f32 %v1004
    %vm1011 = vmor %vm1009, %vm1010
    %v1012 = vsel %vm1011, %v1004, %v1008
    %v1013 = vand.u32 2147483647, %v1003
    %vm1014 = vcmp.eq.f32.partialorder %v1013, 8.507059e+37
    %v1015 = vand.u32 %v1003, 2147483648
    %v1016 = vor.u32 1.1754944e-38, %v1015
    %v1017 = vsel %vm1014, %v1016, %v1012
    %v1018 = vmul.f32 1.0, %v1017
    %v1019 = vld [vmem:[%s337] sm:$0x3]
    %v1020 = vadd.f32 %v1019, %v996
    %v1021 = vxor.u32 %v1020, 2147483648
    %v1022 = vmul.f32 %v1021, 1.442695
    %v1023 = vpow.pop %v1022
    %v1024 = vadd.f32 %v1023, 1.0
    %v1025 = vrcp.pop %v1024
    %v1026 = vmul.f32 %v1024, %v1025
    %v1027 = vsub.f32 1.0, %v1026
    %v1028 = vmul.f32 %v1025, %v1027
    %v1029 = vadd.f32 %v1025, %v1028
    %vm1030 = vweird.f32 %v1024
    %vm1031 = vweird.f32 %v1025
    %vm1032 = vmor %vm1030, %vm1031
    %v1033 = vsel %vm1032, %v1025, %v1029
    %v1034 = vand.u32 2147483647, %v1024
    %vm1035 = vcmp.eq.f32.partialorder %v1034, 8.507059e+37
    %v1036 = vand.u32 %v1024, 2147483648
    %v1037 = vor.u32 1.1754944e-38, %v1036
    %v1038 = vsel %vm1035, %v1037, %v1033
    %v1039 = vmul.f32 1.0, %v1038
    %v1040 = vld [vmem:[%s361] sm:$0x3]
    %1041 = vmatpush.msra.mxu0 0.0
    %1042 = vmatpush.msra.mxu0 0.0
    %1043 = vmatpush.msra.mxu0 0.0
    %1044 = vmatpush.msra.mxu0 0.0
    %1045 = vmatpush.msra.mxu0 0.0
    %1046 = vmatpush.msra.mxu0 0.0
    %1047 = vmatpush.msra.mxu0 0.0
    %1048 = vmatpush.msra.mxu0 0.0
    %1049 = vmatpush.msra.mxu0 %v128
    %1050 = vmatpush.msra.mxu0 %v127
    %1051 = vmatpush.msra.mxu0 %v126
    %1052 = vmatpush.msra.mxu0 %v125
    %1053 = vmatpush.msra.mxu0 %v124
    %1054 = vmatpush.msra.mxu0 %v123
    %1055 = vmatpush.msra.mxu0 %v122
    %1056 = vmatpush.msra.mxu0 %v121
    %1057 = vmatmul.f32.gmra.mxu0 %v956
    %v1058 = vpop.f32.mrf.mxu0
    %v1059 = vadd.f32 %v134, %v1058
    %1060 = vdwg.mxu0
    %v1061 = vmul.f32 %v1018, %v1059
    %v1062 = vadd.f32 %v1040, %v1061
    %v1063 = vtanh.pop %v1062
    %v1064 = vsub.f32 %v952, %v1063
    %v1065 = vmul.f32 %v1039, %v1064
    %v1066 = vadd.f32 %v1063, %v1065
    %s1067 = scalar_lea.vmem [#allocation5], 4
    %1068 = vst.msk [vmem:[%s1067] sm:$0x3] %vm839, %v1066
    %v1070 = vsel %vm726, %v1066, 0
    %1072 = vmatpush.msra.mxu0 0.0
    %1073 = vmatpush.msra.mxu0 0.0
    %1074 = vmatpush.msra.mxu0 0.0
    %1075 = vmatpush.msra.mxu0 0.0
    %1076 = vmatpush.msra.mxu0 0.0
    %1077 = vmatpush.msra.mxu0 0.0
    %1078 = vmatpush.msra.mxu0 0.0
    %1079 = vmatpush.msra.mxu0 0.0
    %1080 = vmatpush.msra.mxu0 %v110
    %1081 = vmatpush.msra.mxu0 %v109
    %1082 = vmatpush.msra.mxu0 %v108
    %1083 = vmatpush.msra.mxu0 %v107
    %1084 = vmatpush.msra.mxu0 %v106
    %1085 = vmatpush.msra.mxu0 %v105
    %1086 = vmatpush.msra.mxu0 %v104
    %1087 = vmatpush.msra.mxu0 %v103
    %1088 = vmatmul.f32.gmra.mxu0 %v1070
    %v1089 = vpop.f32.mrf.mxu0
    %v1090 = vadd.f32 0.0, %v1089
    %1091 = vdwg.mxu0
    %1092 = vmatpush.msra.mxu0 0.0
    %1093 = vmatpush.msra.mxu0 0.0
    %1094 = vmatpush.msra.mxu0 0.0
    %1095 = vmatpush.msra.mxu0 0.0
    %1096 = vmatpush.msra.mxu0 0.0
    %1097 = vmatpush.msra.mxu0 0.0
    %1098 = vmatpush.msra.mxu0 0.0
    %1099 = vmatpush.msra.mxu0 0.0
    %1100 = vmatpush.msra.mxu0 %v119
    %1101 = vmatpush.msra.mxu0 %v118
    %1102 = vmatpush.msra.mxu0 %v117
    %1103 = vmatpush.msra.mxu0 %v116
    %1104 = vmatpush.msra.mxu0 %v115
    %1105 = vmatpush.msra.mxu0 %v114
    %1106 = vmatpush.msra.mxu0 %v113
    %1107 = vmatpush.msra.mxu0 %v112
    %1108 = vmatmul.f32.gmra.mxu0 %v1070
    %v1109 = vpop.f32.mrf.mxu0
    %v1110 = vadd.f32 0.0, %v1109
    %1111 = vdwg.mxu0
    %v1112 = vld [vmem:[%s390] sm:$0x3]
    %v1113 = vadd.f32 %v1112, %v1090
    %v1114 = vxor.u32 %v1113, 2147483648
    %v1115 = vmul.f32 %v1114, 1.442695
    %v1116 = vpow.pop %v1115
    %v1117 = vadd.f32 %v1116, 1.0
    %v1118 = vrcp.pop %v1117
    %v1119 = vmul.f32 %v1117, %v1118
    %v1120 = vsub.f32 1.0, %v1119
    %v1121 = vmul.f32 %v1118, %v1120
    %v1122 = vadd.f32 %v1118, %v1121
    %vm1123 = vweird.f32 %v1117
    %vm1124 = vweird.f32 %v1118
    %vm1125 = vmor %vm1123, %vm1124
    %v1126 = vsel %vm1125, %v1118, %v1122
    %v1127 = vand.u32 2147483647, %v1117
    %vm1128 = vcmp.eq.f32.partialorder %v1127, 8.507059e+37
    %v1129 = vand.u32 %v1117, 2147483648
    %v1130 = vor.u32 1.1754944e-38, %v1129
    %v1131 = vsel %vm1128, %v1130, %v1126
    %v1132 = vmul.f32 1.0, %v1131
    %v1133 = vld [vmem:[%s414] sm:$0x3]
    %v1134 = vadd.f32 %v1133, %v1110
    %v1135 = vxor.u32 %v1134, 2147483648
    %v1136 = vmul.f32 %v1135, 1.442695
    %v1137 = vpow.pop %v1136
    %v1138 = vadd.f32 %v1137, 1.0
    %v1139 = vrcp.pop %v1138
    %v1140 = vmul.f32 %v1138, %v1139
    %v1141 = vsub.f32 1.0, %v1140
    %v1142 = vmul.f32 %v1139, %v1141
    %v1143 = vadd.f32 %v1139, %v1142
    %vm1144 = vweird.f32 %v1138
    %vm1145 = vweird.f32 %v1139
    %vm1146 = vmor %vm1144, %vm1145
    %v1147 = vsel %vm1146, %v1139, %v1143
    %v1148 = vand.u32 2147483647, %v1138
    %vm1149 = vcmp.eq.f32.partialorder %v1148, 8.507059e+37
    %v1150 = vand.u32 %v1138, 2147483648
    %v1151 = vor.u32 1.1754944e-38, %v1150
    %v1152 = vsel %vm1149, %v1151, %v1147
    %v1153 = vmul.f32 1.0, %v1152
    %v1154 = vld [vmem:[%s438] sm:$0x3]
    %1155 = vmatpush.msra.mxu0 0.0
    %1156 = vmatpush.msra.mxu0 0.0
    %1157 = vmatpush.msra.mxu0 0.0
    %1158 = vmatpush.msra.mxu0 0.0
    %1159 = vmatpush.msra.mxu0 0.0
    %1160 = vmatpush.msra.mxu0 0.0
    %1161 = vmatpush.msra.mxu0 0.0
    %1162 = vmatpush.msra.mxu0 0.0
    %1163 = vmatpush.msra.mxu0 %v128
    %1164 = vmatpush.msra.mxu0 %v127
    %1165 = vmatpush.msra.mxu0 %v126
    %1166 = vmatpush.msra.mxu0 %v125
    %1167 = vmatpush.msra.mxu0 %v124
    %1168 = vmatpush.msra.mxu0 %v123
    %1169 = vmatpush.msra.mxu0 %v122
    %1170 = vmatpush.msra.mxu0 %v121
    %1171 = vmatmul.f32.gmra.mxu0 %v1070
    %v1172 = vpop.f32.mrf.mxu0
    %v1173 = vadd.f32 %v134, %v1172
    %1174 = vdwg.mxu0
    %v1175 = vmul.f32 %v1132, %v1173
    %v1176 = vadd.f32 %v1154, %v1175
    %v1177 = vtanh.pop %v1176
    %v1178 = vsub.f32 %v1066, %v1177
    %v1179 = vmul.f32 %v1153, %v1178
    %v1180 = vadd.f32 %v1177, %v1179
    %s1181 = scalar_lea.vmem [#allocation5], 6
    %1182 = vst.msk [vmem:[%s1181] sm:$0x3] %vm839, %v1180
    %v1184 = vsel %vm726, %v1180, 0
    %1186 = vmatpush.msra.mxu0 0.0
    %1187 = vmatpush.msra.mxu0 0.0
    %1188 = vmatpush.msra.mxu0 0.0
    %1189 = vmatpush.msra.mxu0 0.0
    %1190 = vmatpush.msra.mxu0 0.0
    %1191 = vmatpush.msra.mxu0 0.0
    %1192 = vmatpush.msra.mxu0 0.0
    %1193 = vmatpush.msra.mxu0 0.0
    %1194 = vmatpush.msra.mxu0 %v110
    %1195 = vmatpush.msra.mxu0 %v109
    %1196 = vmatpush.msra.mxu0 %v108
    %1197 = vmatpush.msra.mxu0 %v107
    %1198 = vmatpush.msra.mxu0 %v106
    %1199 = vmatpush.msra.mxu0 %v105
    %1200 = vmatpush.msra.mxu0 %v104
    %1201 = vmatpush.msra.mxu0 %v103
    %1202 = vmatmul.f32.gmra.mxu0 %v1184
    %v1203 = vpop.f32.mrf.mxu0
    %v1204 = vadd.f32 0.0, %v1203
    %1205 = vdwg.mxu0
    %1206 = vmatpush.msra.mxu0 0.0
    %1207 = vmatpush.msra.mxu0 0.0
    %1208 = vmatpush.msra.mxu0 0.0
    %1209 = vmatpush.msra.mxu0 0.0
    %1210 = vmatpush.msra.mxu0 0.0
    %1211 = vmatpush.msra.mxu0 0.0
    %1212 = vmatpush.msra.mxu0 0.0
    %1213 = vmatpush.msra.mxu0 0.0
    %1214 = vmatpush.msra.mxu0 %v119
    %1215 = vmatpush.msra.mxu0 %v118
    %1216 = vmatpush.msra.mxu0 %v117
    %1217 = vmatpush.msra.mxu0 %v116
    %1218 = vmatpush.msra.mxu0 %v115
    %1219 = vmatpush.msra.mxu0 %v114
    %1220 = vmatpush.msra.mxu0 %v113
    %1221 = vmatpush.msra.mxu0 %v112
    %1222 = vmatmul.f32.gmra.mxu0 %v1184
    %v1223 = vpop.f32.mrf.mxu0
    %v1224 = vadd.f32 0.0, %v1223
    %1225 = vdwg.mxu0
    %v1226 = vld [vmem:[%s392] sm:$0x3]
    %v1227 = vadd.f32 %v1226, %v1204
    %v1228 = vxor.u32 %v1227, 2147483648
    %v1229 = vmul.f32 %v1228, 1.442695
    %v1230 = vpow.pop %v1229
    %v1231 = vadd.f32 %v1230, 1.0
    %v1232 = vrcp.pop %v1231
    %v1233 = vmul.f32 %v1231, %v1232
    %v1234 = vsub.f32 1.0, %v1233
    %v1235 = vmul.f32 %v1232, %v1234
    %v1236 = vadd.f32 %v1232, %v1235
    %vm1237 = vweird.f32 %v1231
    %vm1238 = vweird.f32 %v1232
    %vm1239 = vmor %vm1237, %vm1238
    %v1240 = vsel %vm1239, %v1232, %v1236
    %v1241 = vand.u32 2147483647, %v1231
    %vm1242 = vcmp.eq.f32.partialorder %v1241, 8.507059e+37
    %v1243 = vand.u32 %v1231, 2147483648
    %v1244 = vor.u32 1.1754944e-38, %v1243
    %v1245 = vsel %vm1242, %v1244, %v1240
    %v1246 = vmul.f32 1.0, %v1245
    %v1247 = vld [vmem:[%s416] sm:$0x3]
    %v1248 = vadd.f32 %v1247, %v1224
    %v1249 = vxor.u32 %v1248, 2147483648
    %v1250 = vmul.f32 %v1249, 1.442695
    %v1251 = vpow.pop %v1250
    %v1252 = vadd.f32 %v1251, 1.0
    %v1253 = vrcp.pop %v1252
    %v1254 = vmul.f32 %v1252, %v1253
    %v1255 = vsub.f32 1.0, %v1254
    %v1256 = vmul.f32 %v1253, %v1255
    %v1257 = vadd.f32 %v1253, %v1256
    %vm1258 = vweird.f32 %v1252
    %vm1259 = vweird.f32 %v1253
    %vm1260 = vmor %vm1258, %vm1259
    %v1261 = vsel %vm1260, %v1253, %v1257
    %v1262 = vand.u32 2147483647, %v1252
    %vm1263 = vcmp.eq.f32.partialorder %v1262, 8.507059e+37
    %v1264 = vand.u32 %v1252, 2147483648
    %v1265 = vor.u32 1.1754944e-38, %v1264
    %v1266 = vsel %vm1263, %v1265, %v1261
    %v1267 = vmul.f32 1.0, %v1266
    %v1268 = vld [vmem:[%s440] sm:$0x3]
    %1269 = vmatpush.msra.mxu0 0.0
    %1270 = vmatpush.msra.mxu0 0.0
    %1271 = vmatpush.msra.mxu0 0.0
    %1272 = vmatpush.msra.mxu0 0.0
    %1273 = vmatpush.msra.mxu0 0.0
    %1274 = vmatpush.msra.mxu0 0.0
    %1275 = vmatpush.msra.mxu0 0.0
    %1276 = vmatpush.msra.mxu0 0.0
    %1277 = vmatpush.msra.mxu0 %v128
    %1278 = vmatpush.msra.mxu0 %v127
    %1279 = vmatpush.msra.mxu0 %v126
    %1280 = vmatpush.msra.mxu0 %v125
    %1281 = vmatpush.msra.mxu0 %v124
    %1282 = vmatpush.msra.mxu0 %v123
    %1283 = vmatpush.msra.mxu0 %v122
    %1284 = vmatpush.msra.mxu0 %v121
    %1285 = vmatmul.f32.gmra.mxu0 %v1184
    %v1286 = vpop.f32.mrf.mxu0
    %v1287 = vadd.f32 %v134, %v1286
    %1288 = vdwg.mxu0
    %v1289 = vmul.f32 %v1246, %v1287
    %v1290 = vadd.f32 %v1268, %v1289
    %v1291 = vtanh.pop %v1290
    %v1292 = vsub.f32 %v1180, %v1291
    %v1293 = vmul.f32 %v1267, %v1292
    %v1294 = vadd.f32 %v1291, %v1293
    %s1295 = scalar_lea.vmem [#allocation5], 8
    %1296 = vst.msk [vmem:[%s1295] sm:$0x3] %vm839, %v1294
    %v1298 = vsel %vm726, %v1294, 0
    %1300 = vmatpush.msra.mxu0 0.0
    %1301 = vmatpush.msra.mxu0 0.0
    %1302 = vmatpush.msra.mxu0 0.0
    %1303 = vmatpush.msra.mxu0 0.0
    %1304 = vmatpush.msra.mxu0 0.0
    %1305 = vmatpush.msra.mxu0 0.0
    %1306 = vmatpush.msra.mxu0 0.0
    %1307 = vmatpush.msra.mxu0 0.0
    %1308 = vmatpush.msra.mxu0 %v110
    %1309 = vmatpush.msra.mxu0 %v109
    %1310 = vmatpush.msra.mxu0 %v108
    %1311 = vmatpush.msra.mxu0 %v107
    %1312 = vmatpush.msra.mxu0 %v106
    %1313 = vmatpush.msra.mxu0 %v105
    %1314 = vmatpush.msra.mxu0 %v104
    %1315 = vmatpush.msra.mxu0 %v103
    %1316 = vmatmul.f32.gmra.mxu0 %v1298
    %v1317 = vpop.f32.mrf.mxu0
    %v1318 = vadd.f32 0.0, %v1317
    %1319 = vdwg.mxu0
    %1320 = vmatpush.msra.mxu0 0.0
    %1321 = vmatpush.msra.mxu0 0.0
    %1322 = vmatpush.msra.mxu0 0.0
    %1323 = vmatpush.msra.mxu0 0.0
    %1324 = vmatpush.msra.mxu0 0.0
    %1325 = vmatpush.msra.mxu0 0.0
    %1326 = vmatpush.msra.mxu0 0.0
    %1327 = vmatpush.msra.mxu0 0.0
    %1328 = vmatpush.msra.mxu0 %v119
    %1329 = vmatpush.msra.mxu0 %v118
    %1330 = vmatpush.msra.mxu0 %v117
    %1331 = vmatpush.msra.mxu0 %v116
    %1332 = vmatpush.msra.mxu0 %v115
    %1333 = vmatpush.msra.mxu0 %v114
    %1334 = vmatpush.msra.mxu0 %v113
    %1335 = vmatpush.msra.mxu0 %v112
    %1336 = vmatmul.f32.gmra.mxu0 %v1298
    %v1337 = vpop.f32.mrf.mxu0
    %v1338 = vadd.f32 0.0, %v1337
    %1339 = vdwg.mxu0
    %v1340 = vld [vmem:[%s315] sm:$0x3]
    %v1341 = vadd.f32 %v1340, %v1318
    %v1342 = vxor.u32 %v1341, 2147483648
    %v1343 = vmul.f32 %v1342, 1.442695
    %v1344 = vpow.pop %v1343
    %v1345 = vadd.f32 %v1344, 1.0
    %v1346 = vrcp.pop %v1345
    %v1347 = vmul.f32 %v1345, %v1346
    %v1348 = vsub.f32 1.0, %v1347
    %v1349 = vmul.f32 %v1346, %v1348
    %v1350 = vadd.f32 %v1346, %v1349
    %vm1351 = vweird.f32 %v1345
    %vm1352 = vweird.f32 %v1346
    %vm1353 = vmor %vm1351, %vm1352
    %v1354 = vsel %vm1353, %v1346, %v1350
    %v1355 = vand.u32 2147483647, %v1345
    %vm1356 = vcmp.eq.f32.partialorder %v1355, 8.507059e+37
    %v1357 = vand.u32 %v1345, 2147483648
    %v1358 = vor.u32 1.1754944e-38, %v1357
    %v1359 = vsel %vm1356, %v1358, %v1354
    %v1360 = vmul.f32 1.0, %v1359
    %v1361 = vld [vmem:[%s339] sm:$0x3]
    %v1362 = vadd.f32 %v1361, %v1338
    %v1363 = vxor.u32 %v1362, 2147483648
    %v1364 = vmul.f32 %v1363, 1.442695
    %v1365 = vpow.pop %v1364
    %v1366 = vadd.f32 %v1365, 1.0
    %v1367 = vrcp.pop %v1366
    %v1368 = vmul.f32 %v1366, %v1367
    %v1369 = vsub.f32 1.0, %v1368
    %v1370 = vmul.f32 %v1367, %v1369
    %v1371 = vadd.f32 %v1367, %v1370
    %vm1372 = vweird.f32 %v1366
    %vm1373 = vweird.f32 %v1367
    %vm1374 = vmor %vm1372, %vm1373
    %v1375 = vsel %vm1374, %v1367, %v1371
    %v1376 = vand.u32 2147483647, %v1366
    %vm1377 = vcmp.eq.f32.partialorder %v1376, 8.507059e+37
    %v1378 = vand.u32 %v1366, 2147483648
    %v1379 = vor.u32 1.1754944e-38, %v1378
    %v1380 = vsel %vm1377, %v1379, %v1375
    %v1381 = vmul.f32 1.0, %v1380
    %v1382 = vld [vmem:[%s363] sm:$0x3]
    %1383 = vmatpush.msra.mxu0 0.0
    %1384 = vmatpush.msra.mxu0 0.0
    %1385 = vmatpush.msra.mxu0 0.0
    %1386 = vmatpush.msra.mxu0 0.0
    %1387 = vmatpush.msra.mxu0 0.0
    %1388 = vmatpush.msra.mxu0 0.0
    %1389 = vmatpush.msra.mxu0 0.0
    %1390 = vmatpush.msra.mxu0 0.0
    %1391 = vmatpush.msra.mxu0 %v128
    %1392 = vmatpush.msra.mxu0 %v127
    %1393 = vmatpush.msra.mxu0 %v126
    %1394 = vmatpush.msra.mxu0 %v125
    %1395 = vmatpush.msra.mxu0 %v124
    %1396 = vmatpush.msra.mxu0 %v123
    %1397 = vmatpush.msra.mxu0 %v122
    %1398 = vmatpush.msra.mxu0 %v121
    %1399 = vmatmul.f32.gmra.mxu0 %v1298
    %v1400 = vpop.f32.mrf.mxu0
    %v1401 = vadd.f32 %v134, %v1400
    %1402 = vdwg.mxu0
    %v1403 = vmul.f32 %v1360, %v1401
    %v1404 = vadd.f32 %v1382, %v1403
    %v1405 = vtanh.pop %v1404
    %v1406 = vsub.f32 %v1294, %v1405
    %v1407 = vmul.f32 %v1381, %v1406
    %v1408 = vadd.f32 %v1405, %v1407
    %s1409 = scalar_lea.vmem [#allocation5], 10
    %1410 = vst.msk [vmem:[%s1409] sm:$0x3] %vm839, %v1408
    %v1412 = vsel %vm726, %v1408, 0
    %1414 = vmatpush.msra.mxu0 0.0
    %1415 = vmatpush.msra.mxu0 0.0
    %1416 = vmatpush.msra.mxu0 0.0
    %1417 = vmatpush.msra.mxu0 0.0
    %1418 = vmatpush.msra.mxu0 0.0
    %1419 = vmatpush.msra.mxu0 0.0
    %1420 = vmatpush.msra.mxu0 0.0
    %1421 = vmatpush.msra.mxu0 0.0
    %1422 = vmatpush.msra.mxu0 %v110
    %1423 = vmatpush.msra.mxu0 %v109
    %1424 = vmatpush.msra.mxu0 %v108
    %1425 = vmatpush.msra.mxu0 %v107
    %1426 = vmatpush.msra.mxu0 %v106
    %1427 = vmatpush.msra.mxu0 %v105
    %1428 = vmatpush.msra.mxu0 %v104
    %1429 = vmatpush.msra.mxu0 %v103
    %1430 = vmatmul.f32.gmra.mxu0 %v1412
    %v1431 = vpop.f32.mrf.mxu0
    %v1432 = vadd.f32 0.0, %v1431
    %1433 = vdwg.mxu0
    %1434 = vmatpush.msra.mxu0 0.0
    %1435 = vmatpush.msra.mxu0 0.0
    %1436 = vmatpush.msra.mxu0 0.0
    %1437 = vmatpush.msra.mxu0 0.0
    %1438 = vmatpush.msra.mxu0 0.0
    %1439 = vmatpush.msra.mxu0 0.0
    %1440 = vmatpush.msra.mxu0 0.0
    %1441 = vmatpush.msra.mxu0 0.0
    %1442 = vmatpush.msra.mxu0 %v119
    %1443 = vmatpush.msra.mxu0 %v118
    %1444 = vmatpush.msra.mxu0 %v117
    %1445 = vmatpush.msra.mxu0 %v116
    %1446 = vmatpush.msra.mxu0 %v115
    %1447 = vmatpush.msra.mxu0 %v114
    %1448 = vmatpush.msra.mxu0 %v113
    %1449 = vmatpush.msra.mxu0 %v112
    %1450 = vmatmul.f32.gmra.mxu0 %v1412
    %v1451 = vpop.f32.mrf.mxu0
    %v1452 = vadd.f32 0.0, %v1451
    %1453 = vdwg.mxu0
    %v1454 = vld [vmem:[%s238] sm:$0x3]
    %v1455 = vadd.f32 %v1454, %v1432
    %v1456 = vxor.u32 %v1455, 2147483648
    %v1457 = vmul.f32 %v1456, 1.442695
    %v1458 = vpow.pop %v1457
    %v1459 = vadd.f32 %v1458, 1.0
    %v1460 = vrcp.pop %v1459
    %v1461 = vmul.f32 %v1459, %v1460
    %v1462 = vsub.f32 1.0, %v1461
    %v1463 = vmul.f32 %v1460, %v1462
    %v1464 = vadd.f32 %v1460, %v1463
    %vm1465 = vweird.f32 %v1459
    %vm1466 = vweird.f32 %v1460
    %vm1467 = vmor %vm1465, %vm1466
    %v1468 = vsel %vm1467, %v1460, %v1464
    %v1469 = vand.u32 2147483647, %v1459
    %vm1470 = vcmp.eq.f32.partialorder %v1469, 8.507059e+37
    %v1471 = vand.u32 %v1459, 2147483648
    %v1472 = vor.u32 1.1754944e-38, %v1471
    %v1473 = vsel %vm1470, %v1472, %v1468
    %v1474 = vmul.f32 1.0, %v1473
    %v1475 = vld [vmem:[%s262] sm:$0x3]
    %v1476 = vadd.f32 %v1475, %v1452
    %v1477 = vxor.u32 %v1476, 2147483648
    %v1478 = vmul.f32 %v1477, 1.442695
    %v1479 = vpow.pop %v1478
    %v1480 = vadd.f32 %v1479, 1.0
    %v1481 = vrcp.pop %v1480
    %v1482 = vmul.f32 %v1480, %v1481
    %v1483 = vsub.f32 1.0, %v1482
    %v1484 = vmul.f32 %v1481, %v1483
    %v1485 = vadd.f32 %v1481, %v1484
    %vm1486 = vweird.f32 %v1480
    %vm1487 = vweird.f32 %v1481
    %vm1488 = vmor %vm1486, %vm1487
    %v1489 = vsel %vm1488, %v1481, %v1485
    %v1490 = vand.u32 2147483647, %v1480
    %vm1491 = vcmp.eq.f32.partialorder %v1490, 8.507059e+37
    %v1492 = vand.u32 %v1480, 2147483648
    %v1493 = vor.u32 1.1754944e-38, %v1492
    %v1494 = vsel %vm1491, %v1493, %v1489
    %v1495 = vmul.f32 1.0, %v1494
    %v1496 = vld [vmem:[%s286] sm:$0x3]
    %1497 = vmatpush.msra.mxu0 0.0
    %1498 = vmatpush.msra.mxu0 0.0
    %1499 = vmatpush.msra.mxu0 0.0
    %1500 = vmatpush.msra.mxu0 0.0
    %1501 = vmatpush.msra.mxu0 0.0
    %1502 = vmatpush.msra.mxu0 0.0
    %1503 = vmatpush.msra.mxu0 0.0
    %1504 = vmatpush.msra.mxu0 0.0
    %1505 = vmatpush.msra.mxu0 %v128
    %1506 = vmatpush.msra.mxu0 %v127
    %1507 = vmatpush.msra.mxu0 %v126
    %1508 = vmatpush.msra.mxu0 %v125
    %1509 = vmatpush.msra.mxu0 %v124
    %1510 = vmatpush.msra.mxu0 %v123
    %1511 = vmatpush.msra.mxu0 %v122
    %1512 = vmatpush.msra.mxu0 %v121
    %1513 = vmatmul.f32.gmra.mxu0 %v1412
    %v1514 = vpop.f32.mrf.mxu0
    %v1515 = vadd.f32 %v134, %v1514
    %1516 = vdwg.mxu0
    %v1517 = vmul.f32 %v1474, %v1515
    %v1518 = vadd.f32 %v1496, %v1517
    %v1519 = vtanh.pop %v1518
    %v1520 = vsub.f32 %v1408, %v1519
    %v1521 = vmul.f32 %v1495, %v1520
    %v1522 = vadd.f32 %v1519, %v1521
    %s1523 = scalar_lea.vmem [#allocation5], 12
    %1524 = vst.msk [vmem:[%s1523] sm:$0x3] %vm839, %v1522
    %v1526 = vsel %vm726, %v1522, 0
    %1528 = vmatpush.msra.mxu0 0.0
    %1529 = vmatpush.msra.mxu0 0.0
    %1530 = vmatpush.msra.mxu0 0.0
    %1531 = vmatpush.msra.mxu0 0.0
    %1532 = vmatpush.msra.mxu0 0.0
    %1533 = vmatpush.msra.mxu0 0.0
    %1534 = vmatpush.msra.mxu0 0.0
    %1535 = vmatpush.msra.mxu0 0.0
    %1536 = vmatpush.msra.mxu0 %v110
    %1537 = vmatpush.msra.mxu0 %v109
    %1538 = vmatpush.msra.mxu0 %v108
    %1539 = vmatpush.msra.mxu0 %v107
    %1540 = vmatpush.msra.mxu0 %v106
    %1541 = vmatpush.msra.mxu0 %v105
    %1542 = vmatpush.msra.mxu0 %v104
    %1543 = vmatpush.msra.mxu0 %v103
    %1544 = vmatmul.f32.gmra.mxu0 %v1526
    %v1545 = vpop.f32.mrf.mxu0
    %v1546 = vadd.f32 0.0, %v1545
    %1547 = vdwg.mxu0
    %1548 = vmatpush.msra.mxu0 0.0
    %1549 = vmatpush.msra.mxu0 0.0
    %1550 = vmatpush.msra.mxu0 0.0
    %1551 = vmatpush.msra.mxu0 0.0
    %1552 = vmatpush.msra.mxu0 0.0
    %1553 = vmatpush.msra.mxu0 0.0
    %1554 = vmatpush.msra.mxu0 0.0
    %1555 = vmatpush.msra.mxu0 0.0
    %1556 = vmatpush.msra.mxu0 %v119
    %1557 = vmatpush.msra.mxu0 %v118
    %1558 = vmatpush.msra.mxu0 %v117
    %1559 = vmatpush.msra.mxu0 %v116
    %1560 = vmatpush.msra.mxu0 %v115
    %1561 = vmatpush.msra.mxu0 %v114
    %1562 = vmatpush.msra.mxu0 %v113
    %1563 = vmatpush.msra.mxu0 %v112
    %1564 = vmatmul.f32.gmra.mxu0 %v1526
    %v1565 = vpop.f32.mrf.mxu0
    %v1566 = vadd.f32 0.0, %v1565
    %1567 = vdwg.mxu0
    %v1568 = vld [vmem:[%s162] sm:$0x3]
    %v1569 = vadd.f32 %v1568, %v1546
    %v1570 = vxor.u32 %v1569, 2147483648
    %v1571 = vmul.f32 %v1570, 1.442695
    %v1572 = vpow.pop %v1571
    %v1573 = vadd.f32 %v1572, 1.0
    %v1574 = vrcp.pop %v1573
    %v1575 = vmul.f32 %v1573, %v1574
    %v1576 = vsub.f32 1.0, %v1575
    %v1577 = vmul.f32 %v1574, %v1576
    %v1578 = vadd.f32 %v1574, %v1577
    %vm1579 = vweird.f32 %v1573
    %vm1580 = vweird.f32 %v1574
    %vm1581 = vmor %vm1579, %vm1580
    %v1582 = vsel %vm1581, %v1574, %v1578
    %v1583 = vand.u32 2147483647, %v1573
    %vm1584 = vcmp.eq.f32.partialorder %v1583, 8.507059e+37
    %v1585 = vand.u32 %v1573, 2147483648
    %v1586 = vor.u32 1.1754944e-38, %v1585
    %v1587 = vsel %vm1584, %v1586, %v1582
    %v1588 = vmul.f32 1.0, %v1587
    %v1589 = vld [vmem:[%s186] sm:$0x3]
    %v1590 = vadd.f32 %v1589, %v1566
    %v1591 = vxor.u32 %v1590, 2147483648
    %v1592 = vmul.f32 %v1591, 1.442695
    %v1593 = vpow.pop %v1592
    %v1594 = vadd.f32 %v1593, 1.0
    %v1595 = vrcp.pop %v1594
    %v1596 = vmul.f32 %v1594, %v1595
    %v1597 = vsub.f32 1.0, %v1596
    %v1598 = vmul.f32 %v1595, %v1597
    %v1599 = vadd.f32 %v1595, %v1598
    %vm1600 = vweird.f32 %v1594
    %vm1601 = vweird.f32 %v1595
    %vm1602 = vmor %vm1600, %vm1601
    %v1603 = vsel %vm1602, %v1595, %v1599
    %v1604 = vand.u32 2147483647, %v1594
    %vm1605 = vcmp.eq.f32.partialorder %v1604, 8.507059e+37
    %v1606 = vand.u32 %v1594, 2147483648
    %v1607 = vor.u32 1.1754944e-38, %v1606
    %v1608 = vsel %vm1605, %v1607, %v1603
    %v1609 = vmul.f32 1.0, %v1608
    %v1610 = vld [vmem:[%s209] sm:$0x3]
    %1611 = vmatpush.msra.mxu0 0.0
    %1612 = vmatpush.msra.mxu0 0.0
    %1613 = vmatpush.msra.mxu0 0.0
    %1614 = vmatpush.msra.mxu0 0.0
    %1615 = vmatpush.msra.mxu0 0.0
    %1616 = vmatpush.msra.mxu0 0.0
    %1617 = vmatpush.msra.mxu0 0.0
    %1618 = vmatpush.msra.mxu0 0.0
    %1619 = vmatpush.msra.mxu0 %v128
    %1620 = vmatpush.msra.mxu0 %v127
    %1621 = vmatpush.msra.mxu0 %v126
    %1622 = vmatpush.msra.mxu0 %v125
    %1623 = vmatpush.msra.mxu0 %v124
    %1624 = vmatpush.msra.mxu0 %v123
    %1625 = vmatpush.msra.mxu0 %v122
    %1626 = vmatpush.msra.mxu0 %v121
    %1627 = vmatmul.f32.gmra.mxu0 %v1526
    %v1628 = vpop.f32.mrf.mxu0
    %v1629 = vadd.f32 %v134, %v1628
    %1630 = vdwg.mxu0
    %v1631 = vmul.f32 %v1588, %v1629
    %v1632 = vadd.f32 %v1610, %v1631
    %v1633 = vtanh.pop %v1632
    %v1634 = vsub.f32 %v1522, %v1633
    %v1635 = vmul.f32 %v1609, %v1634
    %v1636 = vadd.f32 %v1633, %v1635
    %s1637 = scalar_lea.vmem [#allocation5], 14
    %1638 = vst.msk [vmem:[%s1637] sm:$0x3] %vm839, %v1636
    %v1639 = vld [vmem:[#allocation5] sm:$0x3]
    %v1640 = vld [vmem:[%s1637] sm:$0x3]
    %1641 = vst.msk [vmem:[%s9] sm:$0x3] %vm160, %v1639
    %1642 = vst.msk [vmem:[%s9] sm:$0x3] %vm163, %v1640
    %v1643 = vld [vmem:[%s953] sm:$0x3]
    %v1644 = vld [vmem:[%s1523] sm:$0x3]
    %s1645 = scalar_lea.vmem %s9, 2
    %1646 = vst.msk [vmem:[%s1645] sm:$0x3] %vm160, %v1643
    %1647 = vst.msk [vmem:[%s1645] sm:$0x3] %vm163, %v1644
    %v1648 = vld [vmem:[%s1067] sm:$0x3]
    %v1649 = vld [vmem:[%s1409] sm:$0x3]
    %s1650 = scalar_lea.vmem %s9, 4
    %1651 = vst.msk [vmem:[%s1650] sm:$0x3] %vm160, %v1648
    %1652 = vst.msk [vmem:[%s1650] sm:$0x3] %vm163, %v1649
    %v1653 = vld [vmem:[%s1181] sm:$0x3]
    %v1654 = vld [vmem:[%s1295] sm:$0x3]
    %s1655 = scalar_lea.vmem %s9, 6
    %1656 = vst.msk [vmem:[%s1655] sm:$0x3] %vm160, %v1653
    %1657 = vst.msk [vmem:[%s1655] sm:$0x3] %vm163, %v1654
    %v1658 = vld [vmem:[%s1295] sm:$0x3]
    %v1659 = vld [vmem:[%s1181] sm:$0x3]
    %s1660 = scalar_lea.vmem %s9, 8
    %1661 = vst.msk [vmem:[%s1660] sm:$0x3] %vm160, %v1658
    %1662 = vst.msk [vmem:[%s1660] sm:$0x3] %vm163, %v1659
    %v1663 = vld [vmem:[%s1409] sm:$0x3]
    %v1664 = vld [vmem:[%s1067] sm:$0x3]
    %s1665 = scalar_lea.vmem %s9, 10
    %1666 = vst.msk [vmem:[%s1665] sm:$0x3] %vm160, %v1663
    %1667 = vst.msk [vmem:[%s1665] sm:$0x3] %vm163, %v1664
    %v1668 = vld [vmem:[%s1523] sm:$0x3]
    %v1669 = vld [vmem:[%s953] sm:$0x3]
    %s1670 = scalar_lea.vmem %s9, 12
    %1671 = vst.msk [vmem:[%s1670] sm:$0x3] %vm160, %v1668
    %1672 = vst.msk [vmem:[%s1670] sm:$0x3] %vm163, %v1669
    %v1673 = vld [vmem:[%s1637] sm:$0x3]
    %v1674 = vld [vmem:[#allocation5] sm:$0x3]
    %s1675 = scalar_lea.vmem %s9, 14
    %1676 = vst.msk [vmem:[%s1675] sm:$0x3] %vm160, %v1673
    %1677 = vst.msk [vmem:[%s1675] sm:$0x3] %vm163, %v1674
    %v1678 = vld [vmem:[#allocation10] sm:$0xff]
    %v1679 = vld [vmem:[#allocation10 + $0x8] sm:$0xff]
    %v1680 = vld [vmem:[#allocation10 + $0x10] sm:$0xff]
    %v1681 = vld [vmem:[#allocation10 + $0x18] sm:$0xff]
    %v1682 = vld [vmem:[#allocation10 + $0x20] sm:$0xff]
    %v1683 = vld [vmem:[#allocation10 + $0x28] sm:$0xff]
    %v1684 = vld [vmem:[#allocation10 + $0x30] sm:$0xff]
    %v1685 = vld [vmem:[#allocation10 + $0x38] sm:$0xff]
    %s1686 = scalar_lea.vmem [#allocation10], 64
    %v1687 = vld [vmem:[%s1686] sm:$0xff]
    %v1688 = vld [vmem:[%s1686 + $0x8] sm:$0xff]
    %v1689 = vld [vmem:[%s1686 + $0x10] sm:$0xff]
    %v1690 = vld [vmem:[%s1686 + $0x18] sm:$0xff]
    %v1691 = vld [vmem:[%s1686 + $0x20] sm:$0xff]
    %v1692 = vld [vmem:[%s1686 + $0x28] sm:$0xff]
    %v1693 = vld [vmem:[%s1686 + $0x30] sm:$0xff]
    %v1694 = vld [vmem:[%s1686 + $0x38] sm:$0xff]
    %s1695 = scalar_lea.vmem [#allocation10], 128
    %v1696 = vld [vmem:[%s1695] sm:$0xff]
    %v1697 = vld [vmem:[%s1695 + $0x8] sm:$0xff]
    %v1698 = vld [vmem:[%s1695 + $0x10] sm:$0xff]
    %v1699 = vld [vmem:[%s1695 + $0x18] sm:$0xff]
    %v1700 = vld [vmem:[%s1695 + $0x20] sm:$0xff]
    %v1701 = vld [vmem:[%s1695 + $0x28] sm:$0xff]
    %v1702 = vld [vmem:[%s1695 + $0x30] sm:$0xff]
    %v1703 = vld [vmem:[%s1695 + $0x38] sm:$0xff]
    %v1704 = vld [vmem:[#allocation11] sm:$0xff]
    %v1705 = vld [vmem:[#allocation11 + $0x8] sm:$0xff]
    %v1706 = vld [vmem:[#allocation11 + $0x10] sm:$0xff]
    %v1707 = vld [vmem:[#allocation11 + $0x18] sm:$0xff]
    %v1708 = vld [vmem:[#allocation11 + $0x20] sm:$0xff]
    %v1709 = vld [vmem:[#allocation11 + $0x28] sm:$0xff]
    %v1710 = vld [vmem:[#allocation11 + $0x30] sm:$0xff]
    %v1711 = vld [vmem:[#allocation11 + $0x38] sm:$0xff]
    %s1712 = scalar_lea.vmem [#allocation11], 64
    %v1713 = vld [vmem:[%s1712] sm:$0xff]
    %v1714 = vld [vmem:[%s1712 + $0x8] sm:$0xff]
    %v1715 = vld [vmem:[%s1712 + $0x10] sm:$0xff]
    %v1716 = vld [vmem:[%s1712 + $0x18] sm:$0xff]
    %v1717 = vld [vmem:[%s1712 + $0x20] sm:$0xff]
    %v1718 = vld [vmem:[%s1712 + $0x28] sm:$0xff]
    %v1719 = vld [vmem:[%s1712 + $0x30] sm:$0xff]
    %v1720 = vld [vmem:[%s1712 + $0x38] sm:$0xff]
    %s1721 = scalar_lea.vmem [#allocation11], 128
    %v1722 = vld [vmem:[%s1721] sm:$0xff]
    %v1723 = vld [vmem:[%s1721 + $0x8] sm:$0xff]
    %v1724 = vld [vmem:[%s1721 + $0x10] sm:$0xff]
    %v1725 = vld [vmem:[%s1721 + $0x18] sm:$0xff]
    %v1726 = vld [vmem:[%s1721 + $0x20] sm:$0xff]
    %v1727 = vld [vmem:[%s1721 + $0x28] sm:$0xff]
    %v1728 = vld [vmem:[%s1721 + $0x30] sm:$0xff]
    %v1729 = vld [vmem:[%s1721 + $0x38] sm:$0xff]
    %v1730 = vld [vmem:[%s7] sm:$0x3]
    %s1731 = scalar_lea.vmem %s7, 2
    %v1732 = vld [vmem:[%s1731] sm:$0x3]
    %s1733 = scalar_lea.vmem %s7, 4
    %v1734 = vld [vmem:[%s1733] sm:$0x3]
    %v1735 = vld [vmem:[%s8] sm:$0x3]
    %v1736 = vld [vmem:[%s9] sm:$0x3]
    %v1738 = vsel %vm726, %v1736, 0
    %1740 = vmatpush.msra.mxu0 0.0
    %1741 = vmatpush.msra.mxu0 0.0
    %1742 = vmatpush.msra.mxu0 0.0
    %1743 = vmatpush.msra.mxu0 0.0
    %1744 = vmatpush.msra.mxu0 0.0
    %1745 = vmatpush.msra.mxu0 0.0
    %1746 = vmatpush.msra.mxu0 0.0
    %1747 = vmatpush.msra.mxu0 0.0
    %1748 = vmatpush.msra.mxu0 %v1685
    %1749 = vmatpush.msra.mxu0 %v1684
    %1750 = vmatpush.msra.mxu0 %v1683
    %1751 = vmatpush.msra.mxu0 %v1682
    %1752 = vmatpush.msra.mxu0 %v1681
    %1753 = vmatpush.msra.mxu0 %v1680
    %1754 = vmatpush.msra.mxu0 %v1679
    %1755 = vmatpush.msra.mxu0 %v1678
    %1756 = vmatmul.f32.gmra.mxu0 %v1738
    %v1757 = vpop.f32.mrf.mxu0
    %v1758 = vadd.f32 %v1730, %v1757
    %1759 = vdwg.mxu0
    %1760 = vst.msk [vmem:[#allocation2] sm:$0x3] %vm160, %v1758
    %1761 = vst.msk [vmem:[%s162] sm:$0x3] %vm163, %v1758
    %1762 = vmatpush.msra.mxu0 0.0
    %1763 = vmatpush.msra.mxu0 0.0
    %1764 = vmatpush.msra.mxu0 0.0
    %1765 = vmatpush.msra.mxu0 0.0
    %1766 = vmatpush.msra.mxu0 0.0
    %1767 = vmatpush.msra.mxu0 0.0
    %1768 = vmatpush.msra.mxu0 0.0
    %1769 = vmatpush.msra.mxu0 0.0
    %1770 = vmatpush.msra.mxu0 %v1694
    %1771 = vmatpush.msra.mxu0 %v1693
    %1772 = vmatpush.msra.mxu0 %v1692
    %1773 = vmatpush.msra.mxu0 %v1691
    %1774 = vmatpush.msra.mxu0 %v1690
    %1775 = vmatpush.msra.mxu0 %v1689
    %1776 = vmatpush.msra.mxu0 %v1688
    %1777 = vmatpush.msra.mxu0 %v1687
    %1778 = vmatmul.f32.gmra.mxu0 %v1738
    %v1779 = vpop.f32.mrf.mxu0
    %v1780 = vadd.f32 %v1732, %v1779
    %1781 = vdwg.mxu0
    %1782 = vst.msk [vmem:[#allocation3] sm:$0x3] %vm160, %v1780
    %1783 = vst.msk [vmem:[%s186] sm:$0x3] %vm163, %v1780
    %1784 = vmatpush.msra.mxu0 0.0
    %1785 = vmatpush.msra.mxu0 0.0
    %1786 = vmatpush.msra.mxu0 0.0
    %1787 = vmatpush.msra.mxu0 0.0
    %1788 = vmatpush.msra.mxu0 0.0
    %1789 = vmatpush.msra.mxu0 0.0
    %1790 = vmatpush.msra.mxu0 0.0
    %1791 = vmatpush.msra.mxu0 0.0
    %1792 = vmatpush.msra.mxu0 %v1703
    %1793 = vmatpush.msra.mxu0 %v1702
    %1794 = vmatpush.msra.mxu0 %v1701
    %1795 = vmatpush.msra.mxu0 %v1700
    %1796 = vmatpush.msra.mxu0 %v1699
    %1797 = vmatpush.msra.mxu0 %v1698
    %1798 = vmatpush.msra.mxu0 %v1697
    %1799 = vmatpush.msra.mxu0 %v1696
    %1800 = vmatmul.f32.gmra.mxu0 %v1738
    %v1801 = vpop.f32.mrf.mxu0
    %v1802 = vadd.f32 %v1734, %v1801
    %1803 = vdwg.mxu0
    %1804 = vst.msk [vmem:[#allocation4] sm:$0x3] %vm160, %v1802
    %1805 = vst.msk [vmem:[%s209] sm:$0x3] %vm163, %v1802
    %v1806 = vld [vmem:[%s1645] sm:$0x3]
    %v1808 = vsel %vm726, %v1806, 0
    %1810 = vmatpush.msra.mxu0 0.0
    %1811 = vmatpush.msra.mxu0 0.0
    %1812 = vmatpush.msra.mxu0 0.0
    %1813 = vmatpush.msra.mxu0 0.0
    %1814 = vmatpush.msra.mxu0 0.0
    %1815 = vmatpush.msra.mxu0 0.0
    %1816 = vmatpush.msra.mxu0 0.0
    %1817 = vmatpush.msra.mxu0 0.0
    %1818 = vmatpush.msra.mxu0 %v1685
    %1819 = vmatpush.msra.mxu0 %v1684
    %1820 = vmatpush.msra.mxu0 %v1683
    %1821 = vmatpush.msra.mxu0 %v1682
    %1822 = vmatpush.msra.mxu0 %v1681
    %1823 = vmatpush.msra.mxu0 %v1680
    %1824 = vmatpush.msra.mxu0 %v1679
    %1825 = vmatpush.msra.mxu0 %v1678
    %1826 = vmatmul.f32.gmra.mxu0 %v1808
    %v1827 = vpop.f32.mrf.mxu0
    %v1828 = vadd.f32 %v1730, %v1827
    %1829 = vdwg.mxu0
    %1830 = vst.msk [vmem:[%s236] sm:$0x3] %vm160, %v1828
    %1831 = vst.msk [vmem:[%s238] sm:$0x3] %vm163, %v1828
    %1832 = vmatpush.msra.mxu0 0.0
    %1833 = vmatpush.msra.mxu0 0.0
    %1834 = vmatpush.msra.mxu0 0.0
    %1835 = vmatpush.msra.mxu0 0.0
    %1836 = vmatpush.msra.mxu0 0.0
    %1837 = vmatpush.msra.mxu0 0.0
    %1838 = vmatpush.msra.mxu0 0.0
    %1839 = vmatpush.msra.mxu0 0.0
    %1840 = vmatpush.msra.mxu0 %v1694
    %1841 = vmatpush.msra.mxu0 %v1693
    %1842 = vmatpush.msra.mxu0 %v1692
    %1843 = vmatpush.msra.mxu0 %v1691
    %1844 = vmatpush.msra.mxu0 %v1690
    %1845 = vmatpush.msra.mxu0 %v1689
    %1846 = vmatpush.msra.mxu0 %v1688
    %1847 = vmatpush.msra.mxu0 %v1687
    %1848 = vmatmul.f32.gmra.mxu0 %v1808
    %v1849 = vpop.f32.mrf.mxu0
    %v1850 = vadd.f32 %v1732, %v1849
    %1851 = vdwg.mxu0
    %1852 = vst.msk [vmem:[%s260] sm:$0x3] %vm160, %v1850
    %1853 = vst.msk [vmem:[%s262] sm:$0x3] %vm163, %v1850
    %1854 = vmatpush.msra.mxu0 0.0
    %1855 = vmatpush.msra.mxu0 0.0
    %1856 = vmatpush.msra.mxu0 0.0
    %1857 = vmatpush.msra.mxu0 0.0
    %1858 = vmatpush.msra.mxu0 0.0
    %1859 = vmatpush.msra.mxu0 0.0
    %1860 = vmatpush.msra.mxu0 0.0
    %1861 = vmatpush.msra.mxu0 0.0
    %1862 = vmatpush.msra.mxu0 %v1703
    %1863 = vmatpush.msra.mxu0 %v1702
    %1864 = vmatpush.msra.mxu0 %v1701
    %1865 = vmatpush.msra.mxu0 %v1700
    %1866 = vmatpush.msra.mxu0 %v1699
    %1867 = vmatpush.msra.mxu0 %v1698
    %1868 = vmatpush.msra.mxu0 %v1697
    %1869 = vmatpush.msra.mxu0 %v1696
    %1870 = vmatmul.f32.gmra.mxu0 %v1808
    %v1871 = vpop.f32.mrf.mxu0
    %v1872 = vadd.f32 %v1734, %v1871
    %1873 = vdwg.mxu0
    %1874 = vst.msk [vmem:[%s284] sm:$0x3] %vm160, %v1872
    %1875 = vst.msk [vmem:[%s286] sm:$0x3] %vm163, %v1872
    %v1876 = vld [vmem:[%s1650] sm:$0x3]
    %v1878 = vsel %vm726, %v1876, 0
    %1880 = vmatpush.msra.mxu0 0.0
    %1881 = vmatpush.msra.mxu0 0.0
    %1882 = vmatpush.msra.mxu0 0.0
    %1883 = vmatpush.msra.mxu0 0.0
    %1884 = vmatpush.msra.mxu0 0.0
    %1885 = vmatpush.msra.mxu0 0.0
    %1886 = vmatpush.msra.mxu0 0.0
    %1887 = vmatpush.msra.mxu0 0.0
    %1888 = vmatpush.msra.mxu0 %v1685
    %1889 = vmatpush.msra.mxu0 %v1684
    %1890 = vmatpush.msra.mxu0 %v1683
    %1891 = vmatpush.msra.mxu0 %v1682
    %1892 = vmatpush.msra.mxu0 %v1681
    %1893 = vmatpush.msra.mxu0 %v1680
    %1894 = vmatpush.msra.mxu0 %v1679
    %1895 = vmatpush.msra.mxu0 %v1678
    %1896 = vmatmul.f32.gmra.mxu0 %v1878
    %v1897 = vpop.f32.mrf.mxu0
    %v1898 = vadd.f32 %v1730, %v1897
    %1899 = vdwg.mxu0
    %1900 = vst.msk [vmem:[%s313] sm:$0x3] %vm160, %v1898
    %1901 = vst.msk [vmem:[%s315] sm:$0x3] %vm163, %v1898
    %1902 = vmatpush.msra.mxu0 0.0
    %1903 = vmatpush.msra.mxu0 0.0
    %1904 = vmatpush.msra.mxu0 0.0
    %1905 = vmatpush.msra.mxu0 0.0
    %1906 = vmatpush.msra.mxu0 0.0
    %1907 = vmatpush.msra.mxu0 0.0
    %1908 = vmatpush.msra.mxu0 0.0
    %1909 = vmatpush.msra.mxu0 0.0
    %1910 = vmatpush.msra.mxu0 %v1694
    %1911 = vmatpush.msra.mxu0 %v1693
    %1912 = vmatpush.msra.mxu0 %v1692
    %1913 = vmatpush.msra.mxu0 %v1691
    %1914 = vmatpush.msra.mxu0 %v1690
    %1915 = vmatpush.msra.mxu0 %v1689
    %1916 = vmatpush.msra.mxu0 %v1688
    %1917 = vmatpush.msra.mxu0 %v1687
    %1918 = vmatmul.f32.gmra.mxu0 %v1878
    %v1919 = vpop.f32.mrf.mxu0
    %v1920 = vadd.f32 %v1732, %v1919
    %1921 = vdwg.mxu0
    %1922 = vst.msk [vmem:[%s337] sm:$0x3] %vm160, %v1920
    %1923 = vst.msk [vmem:[%s339] sm:$0x3] %vm163, %v1920
    %1924 = vmatpush.msra.mxu0 0.0
    %1925 = vmatpush.msra.mxu0 0.0
    %1926 = vmatpush.msra.mxu0 0.0
    %1927 = vmatpush.msra.mxu0 0.0
    %1928 = vmatpush.msra.mxu0 0.0
    %1929 = vmatpush.msra.mxu0 0.0
    %1930 = vmatpush.msra.mxu0 0.0
    %1931 = vmatpush.msra.mxu0 0.0
    %1932 = vmatpush.msra.mxu0 %v1703
    %1933 = vmatpush.msra.mxu0 %v1702
    %1934 = vmatpush.msra.mxu0 %v1701
    %1935 = vmatpush.msra.mxu0 %v1700
    %1936 = vmatpush.msra.mxu0 %v1699
    %1937 = vmatpush.msra.mxu0 %v1698
    %1938 = vmatpush.msra.mxu0 %v1697
    %1939 = vmatpush.msra.mxu0 %v1696
    %1940 = vmatmul.f32.gmra.mxu0 %v1878
    %v1941 = vpop.f32.mrf.mxu0
    %v1942 = vadd.f32 %v1734, %v1941
    %1943 = vdwg.mxu0
    %1944 = vst.msk [vmem:[%s361] sm:$0x3] %vm160, %v1942
    %1945 = vst.msk [vmem:[%s363] sm:$0x3] %vm163, %v1942
    %v1946 = vld [vmem:[%s1655] sm:$0x3]
    %v1948 = vsel %vm726, %v1946, 0
    %1950 = vmatpush.msra.mxu0 0.0
    %1951 = vmatpush.msra.mxu0 0.0
    %1952 = vmatpush.msra.mxu0 0.0
    %1953 = vmatpush.msra.mxu0 0.0
    %1954 = vmatpush.msra.mxu0 0.0
    %1955 = vmatpush.msra.mxu0 0.0
    %1956 = vmatpush.msra.mxu0 0.0
    %1957 = vmatpush.msra.mxu0 0.0
    %1958 = vmatpush.msra.mxu0 %v1685
    %1959 = vmatpush.msra.mxu0 %v1684
    %1960 = vmatpush.msra.mxu0 %v1683
    %1961 = vmatpush.msra.mxu0 %v1682
    %1962 = vmatpush.msra.mxu0 %v1681
    %1963 = vmatpush.msra.mxu0 %v1680
    %1964 = vmatpush.msra.mxu0 %v1679
    %1965 = vmatpush.msra.mxu0 %v1678
    %1966 = vmatmul.f32.gmra.mxu0 %v1948
    %v1967 = vpop.f32.mrf.mxu0
    %v1968 = vadd.f32 %v1730, %v1967
    %1969 = vdwg.mxu0
    %1970 = vst.msk [vmem:[%s390] sm:$0x3] %vm160, %v1968
    %1971 = vst.msk [vmem:[%s392] sm:$0x3] %vm163, %v1968
    %1972 = vmatpush.msra.mxu0 0.0
    %1973 = vmatpush.msra.mxu0 0.0
    %1974 = vmatpush.msra.mxu0 0.0
    %1975 = vmatpush.msra.mxu0 0.0
    %1976 = vmatpush.msra.mxu0 0.0
    %1977 = vmatpush.msra.mxu0 0.0
    %1978 = vmatpush.msra.mxu0 0.0
    %1979 = vmatpush.msra.mxu0 0.0
    %1980 = vmatpush.msra.mxu0 %v1694
    %1981 = vmatpush.msra.mxu0 %v1693
    %1982 = vmatpush.msra.mxu0 %v1692
    %1983 = vmatpush.msra.mxu0 %v1691
    %1984 = vmatpush.msra.mxu0 %v1690
    %1985 = vmatpush.msra.mxu0 %v1689
    %1986 = vmatpush.msra.mxu0 %v1688
    %1987 = vmatpush.msra.mxu0 %v1687
    %1988 = vmatmul.f32.gmra.mxu0 %v1948
    %v1989 = vpop.f32.mrf.mxu0
    %v1990 = vadd.f32 %v1732, %v1989
    %1991 = vdwg.mxu0
    %1992 = vst.msk [vmem:[%s414] sm:$0x3] %vm160, %v1990
    %1993 = vst.msk [vmem:[%s416] sm:$0x3] %vm163, %v1990
    %1994 = vmatpush.msra.mxu0 0.0
    %1995 = vmatpush.msra.mxu0 0.0
    %1996 = vmatpush.msra.mxu0 0.0
    %1997 = vmatpush.msra.mxu0 0.0
    %1998 = vmatpush.msra.mxu0 0.0
    %1999 = vmatpush.msra.mxu0 0.0
    %2000 = vmatpush.msra.mxu0 0.0
    %2001 = vmatpush.msra.mxu0 0.0
    %2002 = vmatpush.msra.mxu0 %v1703
    %2003 = vmatpush.msra.mxu0 %v1702
    %2004 = vmatpush.msra.mxu0 %v1701
    %2005 = vmatpush.msra.mxu0 %v1700
    %2006 = vmatpush.msra.mxu0 %v1699
    %2007 = vmatpush.msra.mxu0 %v1698
    %2008 = vmatpush.msra.mxu0 %v1697
    %2009 = vmatpush.msra.mxu0 %v1696
    %2010 = vmatmul.f32.gmra.mxu0 %v1948
    %v2011 = vpop.f32.mrf.mxu0
    %v2012 = vadd.f32 %v1734, %v2011
    %2013 = vdwg.mxu0
    %2014 = vst.msk [vmem:[%s438] sm:$0x3] %vm160, %v2012
    %2015 = vst.msk [vmem:[%s440] sm:$0x3] %vm163, %v2012
    %v2016 = vld [vmem:[%s1660] sm:$0x3]
    %v2018 = vsel %vm726, %v2016, 0
    %2020 = vmatpush.msra.mxu0 0.0
    %2021 = vmatpush.msra.mxu0 0.0
    %2022 = vmatpush.msra.mxu0 0.0
    %2023 = vmatpush.msra.mxu0 0.0
    %2024 = vmatpush.msra.mxu0 0.0
    %2025 = vmatpush.msra.mxu0 0.0
    %2026 = vmatpush.msra.mxu0 0.0
    %2027 = vmatpush.msra.mxu0 0.0
    %2028 = vmatpush.msra.mxu0 %v1685
    %2029 = vmatpush.msra.mxu0 %v1684
    %2030 = vmatpush.msra.mxu0 %v1683
    %2031 = vmatpush.msra.mxu0 %v1682
    %2032 = vmatpush.msra.mxu0 %v1681
    %2033 = vmatpush.msra.mxu0 %v1680
    %2034 = vmatpush.msra.mxu0 %v1679
    %2035 = vmatpush.msra.mxu0 %v1678
    %2036 = vmatmul.f32.gmra.mxu0 %v2018
    %v2037 = vpop.f32.mrf.mxu0
    %v2038 = vadd.f32 %v1730, %v2037
    %2039 = vdwg.mxu0
    %2040 = vst.msk [vmem:[%s392] sm:$0x3] %vm160, %v2038
    %2041 = vst.msk [vmem:[%s390] sm:$0x3] %vm163, %v2038
    %2042 = vmatpush.msra.mxu0 0.0
    %2043 = vmatpush.msra.mxu0 0.0
    %2044 = vmatpush.msra.mxu0 0.0
    %2045 = vmatpush.msra.mxu0 0.0
    %2046 = vmatpush.msra.mxu0 0.0
    %2047 = vmatpush.msra.mxu0 0.0
    %2048 = vmatpush.msra.mxu0 0.0
    %2049 = vmatpush.msra.mxu0 0.0
    %2050 = vmatpush.msra.mxu0 %v1694
    %2051 = vmatpush.msra.mxu0 %v1693
    %2052 = vmatpush.msra.mxu0 %v1692
    %2053 = vmatpush.msra.mxu0 %v1691
    %2054 = vmatpush.msra.mxu0 %v1690
    %2055 = vmatpush.msra.mxu0 %v1689
    %2056 = vmatpush.msra.mxu0 %v1688
    %2057 = vmatpush.msra.mxu0 %v1687
    %2058 = vmatmul.f32.gmra.mxu0 %v2018
    %v2059 = vpop.f32.mrf.mxu0
    %v2060 = vadd.f32 %v1732, %v2059
    %2061 = vdwg.mxu0
    %2062 = vst.msk [vmem:[%s416] sm:$0x3] %vm160, %v2060
    %2063 = vst.msk [vmem:[%s414] sm:$0x3] %vm163, %v2060
    %2064 = vmatpush.msra.mxu0 0.0
    %2065 = vmatpush.msra.mxu0 0.0
    %2066 = vmatpush.msra.mxu0 0.0
    %2067 = vmatpush.msra.mxu0 0.0
    %2068 = vmatpush.msra.mxu0 0.0
    %2069 = vmatpush.msra.mxu0 0.0
    %2070 = vmatpush.msra.mxu0 0.0
    %2071 = vmatpush.msra.mxu0 0.0
    %2072 = vmatpush.msra.mxu0 %v1703
    %2073 = vmatpush.msra.mxu0 %v1702
    %2074 = vmatpush.msra.mxu0 %v1701
    %2075 = vmatpush.msra.mxu0 %v1700
    %2076 = vmatpush.msra.mxu0 %v1699
    %2077 = vmatpush.msra.mxu0 %v1698
    %2078 = vmatpush.msra.mxu0 %v1697
    %2079 = vmatpush.msra.mxu0 %v1696
    %2080 = vmatmul.f32.gmra.mxu0 %v2018
    %v2081 = vpop.f32.mrf.mxu0
    %v2082 = vadd.f32 %v1734, %v2081
    %2083 = vdwg.mxu0
    %2084 = vst.msk [vmem:[%s440] sm:$0x3] %vm160, %v2082
    %2085 = vst.msk [vmem:[%s438] sm:$0x3] %vm163, %v2082
    %v2086 = vld [vmem:[%s1665] sm:$0x3]
    %v2088 = vsel %vm726, %v2086, 0
    %2090 = vmatpush.msra.mxu0 0.0
    %2091 = vmatpush.msra.mxu0 0.0
    %2092 = vmatpush.msra.mxu0 0.0
    %2093 = vmatpush.msra.mxu0 0.0
    %2094 = vmatpush.msra.mxu0 0.0
    %2095 = vmatpush.msra.mxu0 0.0
    %2096 = vmatpush.msra.mxu0 0.0
    %2097 = vmatpush.msra.mxu0 0.0
    %2098 = vmatpush.msra.mxu0 %v1685
    %2099 = vmatpush.msra.mxu0 %v1684
    %2100 = vmatpush.msra.mxu0 %v1683
    %2101 = vmatpush.msra.mxu0 %v1682
    %2102 = vmatpush.msra.mxu0 %v1681
    %2103 = vmatpush.msra.mxu0 %v1680
    %2104 = vmatpush.msra.mxu0 %v1679
    %2105 = vmatpush.msra.mxu0 %v1678
    %2106 = vmatmul.f32.gmra.mxu0 %v2088
    %v2107 = vpop.f32.mrf.mxu0
    %v2108 = vadd.f32 %v1730, %v2107
    %2109 = vdwg.mxu0
    %2110 = vst.msk [vmem:[%s315] sm:$0x3] %vm160, %v2108
    %2111 = vst.msk [vmem:[%s313] sm:$0x3] %vm163, %v2108
    %2112 = vmatpush.msra.mxu0 0.0
    %2113 = vmatpush.msra.mxu0 0.0
    %2114 = vmatpush.msra.mxu0 0.0
    %2115 = vmatpush.msra.mxu0 0.0
    %2116 = vmatpush.msra.mxu0 0.0
    %2117 = vmatpush.msra.mxu0 0.0
    %2118 = vmatpush.msra.mxu0 0.0
    %2119 = vmatpush.msra.mxu0 0.0
    %2120 = vmatpush.msra.mxu0 %v1694
    %2121 = vmatpush.msra.mxu0 %v1693
    %2122 = vmatpush.msra.mxu0 %v1692
    %2123 = vmatpush.msra.mxu0 %v1691
    %2124 = vmatpush.msra.mxu0 %v1690
    %2125 = vmatpush.msra.mxu0 %v1689
    %2126 = vmatpush.msra.mxu0 %v1688
    %2127 = vmatpush.msra.mxu0 %v1687
    %2128 = vmatmul.f32.gmra.mxu0 %v2088
    %v2129 = vpop.f32.mrf.mxu0
    %v2130 = vadd.f32 %v1732, %v2129
    %2131 = vdwg.mxu0
    %2132 = vst.msk [vmem:[%s339] sm:$0x3] %vm160, %v2130
    %2133 = vst.msk [vmem:[%s337] sm:$0x3] %vm163, %v2130
    %2134 = vmatpush.msra.mxu0 0.0
    %2135 = vmatpush.msra.mxu0 0.0
    %2136 = vmatpush.msra.mxu0 0.0
    %2137 = vmatpush.msra.mxu0 0.0
    %2138 = vmatpush.msra.mxu0 0.0
    %2139 = vmatpush.msra.mxu0 0.0
    %2140 = vmatpush.msra.mxu0 0.0
    %2141 = vmatpush.msra.mxu0 0.0
    %2142 = vmatpush.msra.mxu0 %v1703
    %2143 = vmatpush.msra.mxu0 %v1702
    %2144 = vmatpush.msra.mxu0 %v1701
    %2145 = vmatpush.msra.mxu0 %v1700
    %2146 = vmatpush.msra.mxu0 %v1699
    %2147 = vmatpush.msra.mxu0 %v1698
    %2148 = vmatpush.msra.mxu0 %v1697
    %2149 = vmatpush.msra.mxu0 %v1696
    %2150 = vmatmul.f32.gmra.mxu0 %v2088
    %v2151 = vpop.f32.mrf.mxu0
    %v2152 = vadd.f32 %v1734, %v2151
    %2153 = vdwg.mxu0
    %2154 = vst.msk [vmem:[%s363] sm:$0x3] %vm160, %v2152
    %2155 = vst.msk [vmem:[%s361] sm:$0x3] %vm163, %v2152
    %v2156 = vld [vmem:[%s1670] sm:$0x3]
    %v2158 = vsel %vm726, %v2156, 0
    %2160 = vmatpush.msra.mxu0 0.0
    %2161 = vmatpush.msra.mxu0 0.0
    %2162 = vmatpush.msra.mxu0 0.0
    %2163 = vmatpush.msra.mxu0 0.0
    %2164 = vmatpush.msra.mxu0 0.0
    %2165 = vmatpush.msra.mxu0 0.0
    %2166 = vmatpush.msra.mxu0 0.0
    %2167 = vmatpush.msra.mxu0 0.0
    %2168 = vmatpush.msra.mxu0 %v1685
    %2169 = vmatpush.msra.mxu0 %v1684
    %2170 = vmatpush.msra.mxu0 %v1683
    %2171 = vmatpush.msra.mxu0 %v1682
    %2172 = vmatpush.msra.mxu0 %v1681
    %2173 = vmatpush.msra.mxu0 %v1680
    %2174 = vmatpush.msra.mxu0 %v1679
    %2175 = vmatpush.msra.mxu0 %v1678
    %2176 = vmatmul.f32.gmra.mxu0 %v2158
    %v2177 = vpop.f32.mrf.mxu0
    %v2178 = vadd.f32 %v1730, %v2177
    %2179 = vdwg.mxu0
    %2180 = vst.msk [vmem:[%s238] sm:$0x3] %vm160, %v2178
    %2181 = vst.msk [vmem:[%s236] sm:$0x3] %vm163, %v2178
    %2182 = vmatpush.msra.mxu0 0.0
    %2183 = vmatpush.msra.mxu0 0.0
    %2184 = vmatpush.msra.mxu0 0.0
    %2185 = vmatpush.msra.mxu0 0.0
    %2186 = vmatpush.msra.mxu0 0.0
    %2187 = vmatpush.msra.mxu0 0.0
    %2188 = vmatpush.msra.mxu0 0.0
    %2189 = vmatpush.msra.mxu0 0.0
    %2190 = vmatpush.msra.mxu0 %v1694
    %2191 = vmatpush.msra.mxu0 %v1693
    %2192 = vmatpush.msra.mxu0 %v1692
    %2193 = vmatpush.msra.mxu0 %v1691
    %2194 = vmatpush.msra.mxu0 %v1690
    %2195 = vmatpush.msra.mxu0 %v1689
    %2196 = vmatpush.msra.mxu0 %v1688
    %2197 = vmatpush.msra.mxu0 %v1687
    %2198 = vmatmul.f32.gmra.mxu0 %v2158
    %v2199 = vpop.f32.mrf.mxu0
    %v2200 = vadd.f32 %v1732, %v2199
    %2201 = vdwg.mxu0
    %2202 = vst.msk [vmem:[%s262] sm:$0x3] %vm160, %v2200
    %2203 = vst.msk [vmem:[%s260] sm:$0x3] %vm163, %v2200
    %2204 = vmatpush.msra.mxu0 0.0
    %2205 = vmatpush.msra.mxu0 0.0
    %2206 = vmatpush.msra.mxu0 0.0
    %2207 = vmatpush.msra.mxu0 0.0
    %2208 = vmatpush.msra.mxu0 0.0
    %2209 = vmatpush.msra.mxu0 0.0
    %2210 = vmatpush.msra.mxu0 0.0
    %2211 = vmatpush.msra.mxu0 0.0
    %2212 = vmatpush.msra.mxu0 %v1703
    %2213 = vmatpush.msra.mxu0 %v1702
    %2214 = vmatpush.msra.mxu0 %v1701
    %2215 = vmatpush.msra.mxu0 %v1700
    %2216 = vmatpush.msra.mxu0 %v1699
    %2217 = vmatpush.msra.mxu0 %v1698
    %2218 = vmatpush.msra.mxu0 %v1697
    %2219 = vmatpush.msra.mxu0 %v1696
    %2220 = vmatmul.f32.gmra.mxu0 %v2158
    %v2221 = vpop.f32.mrf.mxu0
    %v2222 = vadd.f32 %v1734, %v2221
    %2223 = vdwg.mxu0
    %2224 = vst.msk [vmem:[%s286] sm:$0x3] %vm160, %v2222
    %2225 = vst.msk [vmem:[%s284] sm:$0x3] %vm163, %v2222
    %v2226 = vld [vmem:[%s1675] sm:$0x3]
    %v2228 = vsel %vm726, %v2226, 0
    %2230 = vmatpush.msra.mxu0 0.0
    %2231 = vmatpush.msra.mxu0 0.0
    %2232 = vmatpush.msra.mxu0 0.0
    %2233 = vmatpush.msra.mxu0 0.0
    %2234 = vmatpush.msra.mxu0 0.0
    %2235 = vmatpush.msra.mxu0 0.0
    %2236 = vmatpush.msra.mxu0 0.0
    %2237 = vmatpush.msra.mxu0 0.0
    %2238 = vmatpush.msra.mxu0 %v1685
    %2239 = vmatpush.msra.mxu0 %v1684
    %2240 = vmatpush.msra.mxu0 %v1683
    %2241 = vmatpush.msra.mxu0 %v1682
    %2242 = vmatpush.msra.mxu0 %v1681
    %2243 = vmatpush.msra.mxu0 %v1680
    %2244 = vmatpush.msra.mxu0 %v1679
    %2245 = vmatpush.msra.mxu0 %v1678
    %2246 = vmatmul.f32.gmra.mxu0 %v2228
    %v2247 = vpop.f32.mrf.mxu0
    %v2248 = vadd.f32 %v1730, %v2247
    %2249 = vdwg.mxu0
    %2250 = vst.msk [vmem:[%s162] sm:$0x3] %vm160, %v2248
    %2251 = vst.msk [vmem:[#allocation2] sm:$0x3] %vm163, %v2248
    %2252 = vmatpush.msra.mxu0 0.0
    %2253 = vmatpush.msra.mxu0 0.0
    %2254 = vmatpush.msra.mxu0 0.0
    %2255 = vmatpush.msra.mxu0 0.0
    %2256 = vmatpush.msra.mxu0 0.0
    %2257 = vmatpush.msra.mxu0 0.0
    %2258 = vmatpush.msra.mxu0 0.0
    %2259 = vmatpush.msra.mxu0 0.0
    %2260 = vmatpush.msra.mxu0 %v1694
    %2261 = vmatpush.msra.mxu0 %v1693
    %2262 = vmatpush.msra.mxu0 %v1692
    %2263 = vmatpush.msra.mxu0 %v1691
    %2264 = vmatpush.msra.mxu0 %v1690
    %2265 = vmatpush.msra.mxu0 %v1689
    %2266 = vmatpush.msra.mxu0 %v1688
    %2267 = vmatpush.msra.mxu0 %v1687
    %2268 = vmatmul.f32.gmra.mxu0 %v2228
    %v2269 = vpop.f32.mrf.mxu0
    %v2270 = vadd.f32 %v1732, %v2269
    %2271 = vdwg.mxu0
    %2272 = vst.msk [vmem:[%s186] sm:$0x3] %vm160, %v2270
    %2273 = vst.msk [vmem:[#allocation3] sm:$0x3] %vm163, %v2270
    %2274 = vmatpush.msra.mxu0 0.0
    %2275 = vmatpush.msra.mxu0 0.0
    %2276 = vmatpush.msra.mxu0 0.0
    %2277 = vmatpush.msra.mxu0 0.0
    %2278 = vmatpush.msra.mxu0 0.0
    %2279 = vmatpush.msra.mxu0 0.0
    %2280 = vmatpush.msra.mxu0 0.0
    %2281 = vmatpush.msra.mxu0 0.0
    %2282 = vmatpush.msra.mxu0 %v1703
    %2283 = vmatpush.msra.mxu0 %v1702
    %2284 = vmatpush.msra.mxu0 %v1701
    %2285 = vmatpush.msra.mxu0 %v1700
    %2286 = vmatpush.msra.mxu0 %v1699
    %2287 = vmatpush.msra.mxu0 %v1698
    %2288 = vmatpush.msra.mxu0 %v1697
    %2289 = vmatpush.msra.mxu0 %v1696
    %2290 = vmatmul.f32.gmra.mxu0 %v2228
    %v2291 = vpop.f32.mrf.mxu0
    %v2292 = vadd.f32 %v1734, %v2291
    %2293 = vdwg.mxu0
    %2294 = vst.msk [vmem:[%s209] sm:$0x3] %vm160, %v2292
    %2295 = vst.msk [vmem:[#allocation4] sm:$0x3] %vm163, %v2292
    %2296 = vmatpush.msra.mxu0 0.0
    %2297 = vmatpush.msra.mxu0 0.0
    %2298 = vmatpush.msra.mxu0 0.0
    %2299 = vmatpush.msra.mxu0 0.0
    %2300 = vmatpush.msra.mxu0 0.0
    %2301 = vmatpush.msra.mxu0 0.0
    %2302 = vmatpush.msra.mxu0 0.0
    %2303 = vmatpush.msra.mxu0 0.0
    %2304 = vmatpush.msra.mxu0 %v1711
    %2305 = vmatpush.msra.mxu0 %v1710
    %2306 = vmatpush.msra.mxu0 %v1709
    %2307 = vmatpush.msra.mxu0 %v1708
    %2308 = vmatpush.msra.mxu0 %v1707
    %2309 = vmatpush.msra.mxu0 %v1706
    %2310 = vmatpush.msra.mxu0 %v1705
    %2311 = vmatpush.msra.mxu0 %v1704
    %2312 = vmatmul.f32.gmra.mxu0 %v728
    %v2313 = vpop.f32.mrf.mxu0
    %v2314 = vadd.f32 0.0, %v2313
    %2315 = vdwg.mxu0
    %2316 = vmatpush.msra.mxu0 0.0
    %2317 = vmatpush.msra.mxu0 0.0
    %2318 = vmatpush.msra.mxu0 0.0
    %2319 = vmatpush.msra.mxu0 0.0
    %2320 = vmatpush.msra.mxu0 0.0
    %2321 = vmatpush.msra.mxu0 0.0
    %2322 = vmatpush.msra.mxu0 0.0
    %2323 = vmatpush.msra.mxu0 0.0
    %2324 = vmatpush.msra.mxu0 %v1720
    %2325 = vmatpush.msra.mxu0 %v1719
    %2326 = vmatpush.msra.mxu0 %v1718
    %2327 = vmatpush.msra.mxu0 %v1717
    %2328 = vmatpush.msra.mxu0 %v1716
    %2329 = vmatpush.msra.mxu0 %v1715
    %2330 = vmatpush.msra.mxu0 %v1714
    %2331 = vmatpush.msra.mxu0 %v1713
    %2332 = vmatmul.f32.gmra.mxu0 %v728
    %v2333 = vpop.f32.mrf.mxu0
    %v2334 = vadd.f32 0.0, %v2333
    %2335 = vdwg.mxu0
    %v2336 = vld [vmem:[#allocation2] sm:$0x3]
    %v2337 = vadd.f32 %v2336, %v2314
    %v2338 = vxor.u32 %v2337, 2147483648
    %v2339 = vmul.f32 %v2338, 1.442695
    %v2340 = vpow.pop %v2339
    %v2341 = vadd.f32 %v2340, 1.0
    %v2342 = vrcp.pop %v2341
    %v2343 = vmul.f32 %v2341, %v2342
    %v2344 = vsub.f32 1.0, %v2343
    %v2345 = vmul.f32 %v2342, %v2344
    %v2346 = vadd.f32 %v2342, %v2345
    %vm2347 = vweird.f32 %v2341
    %vm2348 = vweird.f32 %v2342
    %vm2349 = vmor %vm2347, %vm2348
    %v2350 = vsel %vm2349, %v2342, %v2346
    %v2351 = vand.u32 2147483647, %v2341
    %vm2352 = vcmp.eq.f32.partialorder %v2351, 8.507059e+37
    %v2353 = vand.u32 %v2341, 2147483648
    %v2354 = vor.u32 1.1754944e-38, %v2353
    %v2355 = vsel %vm2352, %v2354, %v2350
    %v2356 = vmul.f32 1.0, %v2355
    %v2357 = vld [vmem:[#allocation3] sm:$0x3]
    %v2358 = vadd.f32 %v2357, %v2334
    %v2359 = vxor.u32 %v2358, 2147483648
    %v2360 = vmul.f32 %v2359, 1.442695
    %v2361 = vpow.pop %v2360
    %v2362 = vadd.f32 %v2361, 1.0
    %v2363 = vrcp.pop %v2362
    %v2364 = vmul.f32 %v2362, %v2363
    %v2365 = vsub.f32 1.0, %v2364
    %v2366 = vmul.f32 %v2363, %v2365
    %v2367 = vadd.f32 %v2363, %v2366
    %vm2368 = vweird.f32 %v2362
    %vm2369 = vweird.f32 %v2363
    %vm2370 = vmor %vm2368, %vm2369
    %v2371 = vsel %vm2370, %v2363, %v2367
    %v2372 = vand.u32 2147483647, %v2362
    %vm2373 = vcmp.eq.f32.partialorder %v2372, 8.507059e+37
    %v2374 = vand.u32 %v2362, 2147483648
    %v2375 = vor.u32 1.1754944e-38, %v2374
    %v2376 = vsel %vm2373, %v2375, %v2371
    %v2377 = vmul.f32 1.0, %v2376
    %v2378 = vld [vmem:[#allocation4] sm:$0x3]
    %2379 = vmatpush.msra.mxu0 0.0
    %2380 = vmatpush.msra.mxu0 0.0
    %2381 = vmatpush.msra.mxu0 0.0
    %2382 = vmatpush.msra.mxu0 0.0
    %2383 = vmatpush.msra.mxu0 0.0
    %2384 = vmatpush.msra.mxu0 0.0
    %2385 = vmatpush.msra.mxu0 0.0
    %2386 = vmatpush.msra.mxu0 0.0
    %2387 = vmatpush.msra.mxu0 %v1729
    %2388 = vmatpush.msra.mxu0 %v1728
    %2389 = vmatpush.msra.mxu0 %v1727
    %2390 = vmatpush.msra.mxu0 %v1726
    %2391 = vmatpush.msra.mxu0 %v1725
    %2392 = vmatpush.msra.mxu0 %v1724
    %2393 = vmatpush.msra.mxu0 %v1723
    %2394 = vmatpush.msra.mxu0 %v1722
    %2395 = vmatmul.f32.gmra.mxu0 %v728
    %v2396 = vpop.f32.mrf.mxu0
    %v2397 = vadd.f32 %v1735, %v2396
    %2398 = vdwg.mxu0
    %v2399 = vmul.f32 %v2356, %v2397
    %v2400 = vadd.f32 %v2378, %v2399
    %v2401 = vtanh.pop %v2400
    %v2402 = vsub.f32 0.0, %v2401
    %v2403 = vmul.f32 %v2377, %v2402
    %v2404 = vadd.f32 %v2401, %v2403
    %2405 = vst.msk [vmem:[#allocation5] sm:$0x3] %vm839, %v2404
    %v2407 = vsel %vm726, %v2404, 0
    %2409 = vmatpush.msra.mxu0 0.0
    %2410 = vmatpush.msra.mxu0 0.0
    %2411 = vmatpush.msra.mxu0 0.0
    %2412 = vmatpush.msra.mxu0 0.0
    %2413 = vmatpush.msra.mxu0 0.0
    %2414 = vmatpush.msra.mxu0 0.0
    %2415 = vmatpush.msra.mxu0 0.0
    %2416 = vmatpush.msra.mxu0 0.0
    %2417 = vmatpush.msra.mxu0 %v1711
    %2418 = vmatpush.msra.mxu0 %v1710
    %2419 = vmatpush.msra.mxu0 %v1709
    %2420 = vmatpush.msra.mxu0 %v1708
    %2421 = vmatpush.msra.mxu0 %v1707
    %2422 = vmatpush.msra.mxu0 %v1706
    %2423 = vmatpush.msra.mxu0 %v1705
    %2424 = vmatpush.msra.mxu0 %v1704
    %2425 = vmatmul.f32.gmra.mxu0 %v2407
    %v2426 = vpop.f32.mrf.mxu0
    %v2427 = vadd.f32 0.0, %v2426
    %2428 = vdwg.mxu0
    %2429 = vmatpush.msra.mxu0 0.0
    %2430 = vmatpush.msra.mxu0 0.0
    %2431 = vmatpush.msra.mxu0 0.0
    %2432 = vmatpush.msra.mxu0 0.0
    %2433 = vmatpush.msra.mxu0 0.0
    %2434 = vmatpush.msra.mxu0 0.0
    %2435 = vmatpush.msra.mxu0 0.0
    %2436 = vmatpush.msra.mxu0 0.0
    %2437 = vmatpush.msra.mxu0 %v1720
    %2438 = vmatpush.msra.mxu0 %v1719
    %2439 = vmatpush.msra.mxu0 %v1718
    %2440 = vmatpush.msra.mxu0 %v1717
    %2441 = vmatpush.msra.mxu0 %v1716
    %2442 = vmatpush.msra.mxu0 %v1715
    %2443 = vmatpush.msra.mxu0 %v1714
    %2444 = vmatpush.msra.mxu0 %v1713
    %2445 = vmatmul.f32.gmra.mxu0 %v2407
    %v2446 = vpop.f32.mrf.mxu0
    %v2447 = vadd.f32 0.0, %v2446
    %2448 = vdwg.mxu0
    %v2449 = vld [vmem:[%s236] sm:$0x3]
    %v2450 = vadd.f32 %v2449, %v2427
    %v2451 = vxor.u32 %v2450, 2147483648
    %v2452 = vmul.f32 %v2451, 1.442695
    %v2453 = vpow.pop %v2452
    %v2454 = vadd.f32 %v2453, 1.0
    %v2455 = vrcp.pop %v2454
    %v2456 = vmul.f32 %v2454, %v2455
    %v2457 = vsub.f32 1.0, %v2456
    %v2458 = vmul.f32 %v2455, %v2457
    %v2459 = vadd.f32 %v2455, %v2458
    %vm2460 = vweird.f32 %v2454
    %vm2461 = vweird.f32 %v2455
    %vm2462 = vmor %vm2460, %vm2461
    %v2463 = vsel %vm2462, %v2455, %v2459
    %v2464 = vand.u32 2147483647, %v2454
    %vm2465 = vcmp.eq.f32.partialorder %v2464, 8.507059e+37
    %v2466 = vand.u32 %v2454, 2147483648
    %v2467 = vor.u32 1.1754944e-38, %v2466
    %v2468 = vsel %vm2465, %v2467, %v2463
    %v2469 = vmul.f32 1.0, %v2468
    %v2470 = vld [vmem:[%s260] sm:$0x3]
    %v2471 = vadd.f32 %v2470, %v2447
    %v2472 = vxor.u32 %v2471, 2147483648
    %v2473 = vmul.f32 %v2472, 1.442695
    %v2474 = vpow.pop %v2473
    %v2475 = vadd.f32 %v2474, 1.0
    %v2476 = vrcp.pop %v2475
    %v2477 = vmul.f32 %v2475, %v2476
    %v2478 = vsub.f32 1.0, %v2477
    %v2479 = vmul.f32 %v2476, %v2478
    %v2480 = vadd.f32 %v2476, %v2479
    %vm2481 = vweird.f32 %v2475
    %vm2482 = vweird.f32 %v2476
    %vm2483 = vmor %vm2481, %vm2482
    %v2484 = vsel %vm2483, %v2476, %v2480
    %v2485 = vand.u32 2147483647, %v2475
    %vm2486 = vcmp.eq.f32.partialorder %v2485, 8.507059e+37
    %v2487 = vand.u32 %v2475, 2147483648
    %v2488 = vor.u32 1.1754944e-38, %v2487
    %v2489 = vsel %vm2486, %v2488, %v2484
    %v2490 = vmul.f32 1.0, %v2489
    %v2491 = vld [vmem:[%s284] sm:$0x3]
    %2492 = vmatpush.msra.mxu0 0.0
    %2493 = vmatpush.msra.mxu0 0.0
    %2494 = vmatpush.msra.mxu0 0.0
    %2495 = vmatpush.msra.mxu0 0.0
    %2496 = vmatpush.msra.mxu0 0.0
    %2497 = vmatpush.msra.mxu0 0.0
    %2498 = vmatpush.msra.mxu0 0.0
    %2499 = vmatpush.msra.mxu0 0.0
    %2500 = vmatpush.msra.mxu0 %v1729
    %2501 = vmatpush.msra.mxu0 %v1728
    %2502 = vmatpush.msra.mxu0 %v1727
    %2503 = vmatpush.msra.mxu0 %v1726
    %2504 = vmatpush.msra.mxu0 %v1725
    %2505 = vmatpush.msra.mxu0 %v1724
    %2506 = vmatpush.msra.mxu0 %v1723
    %2507 = vmatpush.msra.mxu0 %v1722
    %2508 = vmatmul.f32.gmra.mxu0 %v2407
    %v2509 = vpop.f32.mrf.mxu0
    %v2510 = vadd.f32 %v1735, %v2509
    %2511 = vdwg.mxu0
    %v2512 = vmul.f32 %v2469, %v2510
    %v2513 = vadd.f32 %v2491, %v2512
    %v2514 = vtanh.pop %v2513
    %v2515 = vsub.f32 %v2404, %v2514
    %v2516 = vmul.f32 %v2490, %v2515
    %v2517 = vadd.f32 %v2514, %v2516
    %2518 = vst.msk [vmem:[%s953] sm:$0x3] %vm839, %v2517
    %v2520 = vsel %vm726, %v2517, 0
    %2522 = vmatpush.msra.mxu0 0.0
    %2523 = vmatpush.msra.mxu0 0.0
    %2524 = vmatpush.msra.mxu0 0.0
    %2525 = vmatpush.msra.mxu0 0.0
    %2526 = vmatpush.msra.mxu0 0.0
    %2527 = vmatpush.msra.mxu0 0.0
    %2528 = vmatpush.msra.mxu0 0.0
    %2529 = vmatpush.msra.mxu0 0.0
    %2530 = vmatpush.msra.mxu0 %v1711
    %2531 = vmatpush.msra.mxu0 %v1710
    %2532 = vmatpush.msra.mxu0 %v1709
    %2533 = vmatpush.msra.mxu0 %v1708
    %2534 = vmatpush.msra.mxu0 %v1707
    %2535 = vmatpush.msra.mxu0 %v1706
    %2536 = vmatpush.msra.mxu0 %v1705
    %2537 = vmatpush.msra.mxu0 %v1704
    %2538 = vmatmul.f32.gmra.mxu0 %v2520
    %v2539 = vpop.f32.mrf.mxu0
    %v2540 = vadd.f32 0.0, %v2539
    %2541 = vdwg.mxu0
    %2542 = vmatpush.msra.mxu0 0.0
    %2543 = vmatpush.msra.mxu0 0.0
    %2544 = vmatpush.msra.mxu0 0.0
    %2545 = vmatpush.msra.mxu0 0.0
    %2546 = vmatpush.msra.mxu0 0.0
    %2547 = vmatpush.msra.mxu0 0.0
    %2548 = vmatpush.msra.mxu0 0.0
    %2549 = vmatpush.msra.mxu0 0.0
    %2550 = vmatpush.msra.mxu0 %v1720
    %2551 = vmatpush.msra.mxu0 %v1719
    %2552 = vmatpush.msra.mxu0 %v1718
    %2553 = vmatpush.msra.mxu0 %v1717
    %2554 = vmatpush.msra.mxu0 %v1716
    %2555 = vmatpush.msra.mxu0 %v1715
    %2556 = vmatpush.msra.mxu0 %v1714
    %2557 = vmatpush.msra.mxu0 %v1713
    %2558 = vmatmul.f32.gmra.mxu0 %v2520
    %v2559 = vpop.f32.mrf.mxu0
    %v2560 = vadd.f32 0.0, %v2559
    %2561 = vdwg.mxu0
    %v2562 = vld [vmem:[%s313] sm:$0x3]
    %v2563 = vadd.f32 %v2562, %v2540
    %v2564 = vxor.u32 %v2563, 2147483648
    %v2565 = vmul.f32 %v2564, 1.442695
    %v2566 = vpow.pop %v2565
    %v2567 = vadd.f32 %v2566, 1.0
    %v2568 = vrcp.pop %v2567
    %v2569 = vmul.f32 %v2567, %v2568
    %v2570 = vsub.f32 1.0, %v2569
    %v2571 = vmul.f32 %v2568, %v2570
    %v2572 = vadd.f32 %v2568, %v2571
    %vm2573 = vweird.f32 %v2567
    %vm2574 = vweird.f32 %v2568
    %vm2575 = vmor %vm2573, %vm2574
    %v2576 = vsel %vm2575, %v2568, %v2572
    %v2577 = vand.u32 2147483647, %v2567
    %vm2578 = vcmp.eq.f32.partialorder %v2577, 8.507059e+37
    %v2579 = vand.u32 %v2567, 2147483648
    %v2580 = vor.u32 1.1754944e-38, %v2579
    %v2581 = vsel %vm2578, %v2580, %v2576
    %v2582 = vmul.f32 1.0, %v2581
    %v2583 = vld [vmem:[%s337] sm:$0x3]
    %v2584 = vadd.f32 %v2583, %v2560
    %v2585 = vxor.u32 %v2584, 2147483648
    %v2586 = vmul.f32 %v2585, 1.442695
    %v2587 = vpow.pop %v2586
    %v2588 = vadd.f32 %v2587, 1.0
    %v2589 = vrcp.pop %v2588
    %v2590 = vmul.f32 %v2588, %v2589
    %v2591 = vsub.f32 1.0, %v2590
    %v2592 = vmul.f32 %v2589, %v2591
    %v2593 = vadd.f32 %v2589, %v2592
    %vm2594 = vweird.f32 %v2588
    %vm2595 = vweird.f32 %v2589
    %vm2596 = vmor %vm2594, %vm2595
    %v2597 = vsel %vm2596, %v2589, %v2593
    %v2598 = vand.u32 2147483647, %v2588
    %vm2599 = vcmp.eq.f32.partialorder %v2598, 8.507059e+37
    %v2600 = vand.u32 %v2588, 2147483648
    %v2601 = vor.u32 1.1754944e-38, %v2600
    %v2602 = vsel %vm2599, %v2601, %v2597
    %v2603 = vmul.f32 1.0, %v2602
    %v2604 = vld [vmem:[%s361] sm:$0x3]
    %2605 = vmatpush.msra.mxu0 0.0
    %2606 = vmatpush.msra.mxu0 0.0
    %2607 = vmatpush.msra.mxu0 0.0
    %2608 = vmatpush.msra.mxu0 0.0
    %2609 = vmatpush.msra.mxu0 0.0
    %2610 = vmatpush.msra.mxu0 0.0
    %2611 = vmatpush.msra.mxu0 0.0
    %2612 = vmatpush.msra.mxu0 0.0
    %2613 = vmatpush.msra.mxu0 %v1729
    %2614 = vmatpush.msra.mxu0 %v1728
    %2615 = vmatpush.msra.mxu0 %v1727
    %2616 = vmatpush.msra.mxu0 %v1726
    %2617 = vmatpush.msra.mxu0 %v1725
    %2618 = vmatpush.msra.mxu0 %v1724
    %2619 = vmatpush.msra.mxu0 %v1723
    %2620 = vmatpush.msra.mxu0 %v1722
    %2621 = vmatmul.f32.gmra.mxu0 %v2520
    %v2622 = vpop.f32.mrf.mxu0
    %v2623 = vadd.f32 %v1735, %v2622
    %2624 = vdwg.mxu0
    %v2625 = vmul.f32 %v2582, %v2623
    %v2626 = vadd.f32 %v2604, %v2625
    %v2627 = vtanh.pop %v2626
    %v2628 = vsub.f32 %v2517, %v2627
    %v2629 = vmul.f32 %v2603, %v2628
    %v2630 = vadd.f32 %v2627, %v2629
    %2631 = vst.msk [vmem:[%s1067] sm:$0x3] %vm839, %v2630
    %v2633 = vsel %vm726, %v2630, 0
    %2635 = vmatpush.msra.mxu0 0.0
    %2636 = vmatpush.msra.mxu0 0.0
    %2637 = vmatpush.msra.mxu0 0.0
    %2638 = vmatpush.msra.mxu0 0.0
    %2639 = vmatpush.msra.mxu0 0.0
    %2640 = vmatpush.msra.mxu0 0.0
    %2641 = vmatpush.msra.mxu0 0.0
    %2642 = vmatpush.msra.mxu0 0.0
    %2643 = vmatpush.msra.mxu0 %v1711
    %2644 = vmatpush.msra.mxu0 %v1710
    %2645 = vmatpush.msra.mxu0 %v1709
    %2646 = vmatpush.msra.mxu0 %v1708
    %2647 = vmatpush.msra.mxu0 %v1707
    %2648 = vmatpush.msra.mxu0 %v1706
    %2649 = vmatpush.msra.mxu0 %v1705
    %2650 = vmatpush.msra.mxu0 %v1704
    %2651 = vmatmul.f32.gmra.mxu0 %v2633
    %v2652 = vpop.f32.mrf.mxu0
    %v2653 = vadd.f32 0.0, %v2652
    %2654 = vdwg.mxu0
    %2655 = vmatpush.msra.mxu0 0.0
    %2656 = vmatpush.msra.mxu0 0.0
    %2657 = vmatpush.msra.mxu0 0.0
    %2658 = vmatpush.msra.mxu0 0.0
    %2659 = vmatpush.msra.mxu0 0.0
    %2660 = vmatpush.msra.mxu0 0.0
    %2661 = vmatpush.msra.mxu0 0.0
    %2662 = vmatpush.msra.mxu0 0.0
    %2663 = vmatpush.msra.mxu0 %v1720
    %2664 = vmatpush.msra.mxu0 %v1719
    %2665 = vmatpush.msra.mxu0 %v1718
    %2666 = vmatpush.msra.mxu0 %v1717
    %2667 = vmatpush.msra.mxu0 %v1716
    %2668 = vmatpush.msra.mxu0 %v1715
    %2669 = vmatpush.msra.mxu0 %v1714
    %2670 = vmatpush.msra.mxu0 %v1713
    %2671 = vmatmul.f32.gmra.mxu0 %v2633
    %v2672 = vpop.f32.mrf.mxu0
    %v2673 = vadd.f32 0.0, %v2672
    %2674 = vdwg.mxu0
    %v2675 = vld [vmem:[%s390] sm:$0x3]
    %v2676 = vadd.f32 %v2675, %v2653
    %v2677 = vxor.u32 %v2676, 2147483648
    %v2678 = vmul.f32 %v2677, 1.442695
    %v2679 = vpow.pop %v2678
    %v2680 = vadd.f32 %v2679, 1.0
    %v2681 = vrcp.pop %v2680
    %v2682 = vmul.f32 %v2680, %v2681
    %v2683 = vsub.f32 1.0, %v2682
    %v2684 = vmul.f32 %v2681, %v2683
    %v2685 = vadd.f32 %v2681, %v2684
    %vm2686 = vweird.f32 %v2680
    %vm2687 = vweird.f32 %v2681
    %vm2688 = vmor %vm2686, %vm2687
    %v2689 = vsel %vm2688, %v2681, %v2685
    %v2690 = vand.u32 2147483647, %v2680
    %vm2691 = vcmp.eq.f32.partialorder %v2690, 8.507059e+37
    %v2692 = vand.u32 %v2680, 2147483648
    %v2693 = vor.u32 1.1754944e-38, %v2692
    %v2694 = vsel %vm2691, %v2693, %v2689
    %v2695 = vmul.f32 1.0, %v2694
    %v2696 = vld [vmem:[%s414] sm:$0x3]
    %v2697 = vadd.f32 %v2696, %v2673
    %v2698 = vxor.u32 %v2697, 2147483648
    %v2699 = vmul.f32 %v2698, 1.442695
    %v2700 = vpow.pop %v2699
    %v2701 = vadd.f32 %v2700, 1.0
    %v2702 = vrcp.pop %v2701
    %v2703 = vmul.f32 %v2701, %v2702
    %v2704 = vsub.f32 1.0, %v2703
    %v2705 = vmul.f32 %v2702, %v2704
    %v2706 = vadd.f32 %v2702, %v2705
    %vm2707 = vweird.f32 %v2701
    %vm2708 = vweird.f32 %v2702
    %vm2709 = vmor %vm2707, %vm2708
    %v2710 = vsel %vm2709, %v2702, %v2706
    %v2711 = vand.u32 2147483647, %v2701
    %vm2712 = vcmp.eq.f32.partialorder %v2711, 8.507059e+37
    %v2713 = vand.u32 %v2701, 2147483648
    %v2714 = vor.u32 1.1754944e-38, %v2713
    %v2715 = vsel %vm2712, %v2714, %v2710
    %v2716 = vmul.f32 1.0, %v2715
    %v2717 = vld [vmem:[%s438] sm:$0x3]
    %2718 = vmatpush.msra.mxu0 0.0
    %2719 = vmatpush.msra.mxu0 0.0
    %2720 = vmatpush.msra.mxu0 0.0
    %2721 = vmatpush.msra.mxu0 0.0
    %2722 = vmatpush.msra.mxu0 0.0
    %2723 = vmatpush.msra.mxu0 0.0
    %2724 = vmatpush.msra.mxu0 0.0
    %2725 = vmatpush.msra.mxu0 0.0
    %2726 = vmatpush.msra.mxu0 %v1729
    %2727 = vmatpush.msra.mxu0 %v1728
    %2728 = vmatpush.msra.mxu0 %v1727
    %2729 = vmatpush.msra.mxu0 %v1726
    %2730 = vmatpush.msra.mxu0 %v1725
    %2731 = vmatpush.msra.mxu0 %v1724
    %2732 = vmatpush.msra.mxu0 %v1723
    %2733 = vmatpush.msra.mxu0 %v1722
    %2734 = vmatmul.f32.gmra.mxu0 %v2633
    %v2735 = vpop.f32.mrf.mxu0
    %v2736 = vadd.f32 %v1735, %v2735
    %2737 = vdwg.mxu0
    %v2738 = vmul.f32 %v2695, %v2736
    %v2739 = vadd.f32 %v2717, %v2738
    %v2740 = vtanh.pop %v2739
    %v2741 = vsub.f32 %v2630, %v2740
    %v2742 = vmul.f32 %v2716, %v2741
    %v2743 = vadd.f32 %v2740, %v2742
    %2744 = vst.msk [vmem:[%s1181] sm:$0x3] %vm839, %v2743
    %v2746 = vsel %vm726, %v2743, 0
    %2748 = vmatpush.msra.mxu0 0.0
    %2749 = vmatpush.msra.mxu0 0.0
    %2750 = vmatpush.msra.mxu0 0.0
    %2751 = vmatpush.msra.mxu0 0.0
    %2752 = vmatpush.msra.mxu0 0.0
    %2753 = vmatpush.msra.mxu0 0.0
    %2754 = vmatpush.msra.mxu0 0.0
    %2755 = vmatpush.msra.mxu0 0.0
    %2756 = vmatpush.msra.mxu0 %v1711
    %2757 = vmatpush.msra.mxu0 %v1710
    %2758 = vmatpush.msra.mxu0 %v1709
    %2759 = vmatpush.msra.mxu0 %v1708
    %2760 = vmatpush.msra.mxu0 %v1707
    %2761 = vmatpush.msra.mxu0 %v1706
    %2762 = vmatpush.msra.mxu0 %v1705
    %2763 = vmatpush.msra.mxu0 %v1704
    %2764 = vmatmul.f32.gmra.mxu0 %v2746
    %v2765 = vpop.f32.mrf.mxu0
    %v2766 = vadd.f32 0.0, %v2765
    %2767 = vdwg.mxu0
    %2768 = vmatpush.msra.mxu0 0.0
    %2769 = vmatpush.msra.mxu0 0.0
    %2770 = vmatpush.msra.mxu0 0.0
    %2771 = vmatpush.msra.mxu0 0.0
    %2772 = vmatpush.msra.mxu0 0.0
    %2773 = vmatpush.msra.mxu0 0.0
    %2774 = vmatpush.msra.mxu0 0.0
    %2775 = vmatpush.msra.mxu0 0.0
    %2776 = vmatpush.msra.mxu0 %v1720
    %2777 = vmatpush.msra.mxu0 %v1719
    %2778 = vmatpush.msra.mxu0 %v1718
    %2779 = vmatpush.msra.mxu0 %v1717
    %2780 = vmatpush.msra.mxu0 %v1716
    %2781 = vmatpush.msra.mxu0 %v1715
    %2782 = vmatpush.msra.mxu0 %v1714
    %2783 = vmatpush.msra.mxu0 %v1713
    %2784 = vmatmul.f32.gmra.mxu0 %v2746
    %v2785 = vpop.f32.mrf.mxu0
    %v2786 = vadd.f32 0.0, %v2785
    %2787 = vdwg.mxu0
    %v2788 = vld [vmem:[%s392] sm:$0x3]
    %v2789 = vadd.f32 %v2788, %v2766
    %v2790 = vxor.u32 %v2789, 2147483648
    %v2791 = vmul.f32 %v2790, 1.442695
    %v2792 = vpow.pop %v2791
    %v2793 = vadd.f32 %v2792, 1.0
    %v2794 = vrcp.pop %v2793
    %v2795 = vmul.f32 %v2793, %v2794
    %v2796 = vsub.f32 1.0, %v2795
    %v2797 = vmul.f32 %v2794, %v2796
    %v2798 = vadd.f32 %v2794, %v2797
    %vm2799 = vweird.f32 %v2793
    %vm2800 = vweird.f32 %v2794
    %vm2801 = vmor %vm2799, %vm2800
    %v2802 = vsel %vm2801, %v2794, %v2798
    %v2803 = vand.u32 2147483647, %v2793
    %vm2804 = vcmp.eq.f32.partialorder %v2803, 8.507059e+37
    %v2805 = vand.u32 %v2793, 2147483648
    %v2806 = vor.u32 1.1754944e-38, %v2805
    %v2807 = vsel %vm2804, %v2806, %v2802
    %v2808 = vmul.f32 1.0, %v2807
    %v2809 = vld [vmem:[%s416] sm:$0x3]
    %v2810 = vadd.f32 %v2809, %v2786
    %v2811 = vxor.u32 %v2810, 2147483648
    %v2812 = vmul.f32 %v2811, 1.442695
    %v2813 = vpow.pop %v2812
    %v2814 = vadd.f32 %v2813, 1.0
    %v2815 = vrcp.pop %v2814
    %v2816 = vmul.f32 %v2814, %v2815
    %v2817 = vsub.f32 1.0, %v2816
    %v2818 = vmul.f32 %v2815, %v2817
    %v2819 = vadd.f32 %v2815, %v2818
    %vm2820 = vweird.f32 %v2814
    %vm2821 = vweird.f32 %v2815
    %vm2822 = vmor %vm2820, %vm2821
    %v2823 = vsel %vm2822, %v2815, %v2819
    %v2824 = vand.u32 2147483647, %v2814
    %vm2825 = vcmp.eq.f32.partialorder %v2824, 8.507059e+37
    %v2826 = vand.u32 %v2814, 2147483648
    %v2827 = vor.u32 1.1754944e-38, %v2826
    %v2828 = vsel %vm2825, %v2827, %v2823
    %v2829 = vmul.f32 1.0, %v2828
    %v2830 = vld [vmem:[%s440] sm:$0x3]
    %2831 = vmatpush.msra.mxu0 0.0
    %2832 = vmatpush.msra.mxu0 0.0
    %2833 = vmatpush.msra.mxu0 0.0
    %2834 = vmatpush.msra.mxu0 0.0
    %2835 = vmatpush.msra.mxu0 0.0
    %2836 = vmatpush.msra.mxu0 0.0
    %2837 = vmatpush.msra.mxu0 0.0
    %2838 = vmatpush.msra.mxu0 0.0
    %2839 = vmatpush.msra.mxu0 %v1729
    %2840 = vmatpush.msra.mxu0 %v1728
    %2841 = vmatpush.msra.mxu0 %v1727
    %2842 = vmatpush.msra.mxu0 %v1726
    %2843 = vmatpush.msra.mxu0 %v1725
    %2844 = vmatpush.msra.mxu0 %v1724
    %2845 = vmatpush.msra.mxu0 %v1723
    %2846 = vmatpush.msra.mxu0 %v1722
    %2847 = vmatmul.f32.gmra.mxu0 %v2746
    %v2848 = vpop.f32.mrf.mxu0
    %v2849 = vadd.f32 %v1735, %v2848
    %2850 = vdwg.mxu0
    %v2851 = vmul.f32 %v2808, %v2849
    %v2852 = vadd.f32 %v2830, %v2851
    %v2853 = vtanh.pop %v2852
    %v2854 = vsub.f32 %v2743, %v2853
    %v2855 = vmul.f32 %v2829, %v2854
    %v2856 = vadd.f32 %v2853, %v2855
    %2857 = vst.msk [vmem:[%s1295] sm:$0x3] %vm839, %v2856
    %v2859 = vsel %vm726, %v2856, 0
    %2861 = vmatpush.msra.mxu0 0.0
    %2862 = vmatpush.msra.mxu0 0.0
    %2863 = vmatpush.msra.mxu0 0.0
    %2864 = vmatpush.msra.mxu0 0.0
    %2865 = vmatpush.msra.mxu0 0.0
    %2866 = vmatpush.msra.mxu0 0.0
    %2867 = vmatpush.msra.mxu0 0.0
    %2868 = vmatpush.msra.mxu0 0.0
    %2869 = vmatpush.msra.mxu0 %v1711
    %2870 = vmatpush.msra.mxu0 %v1710
    %2871 = vmatpush.msra.mxu0 %v1709
    %2872 = vmatpush.msra.mxu0 %v1708
    %2873 = vmatpush.msra.mxu0 %v1707
    %2874 = vmatpush.msra.mxu0 %v1706
    %2875 = vmatpush.msra.mxu0 %v1705
    %2876 = vmatpush.msra.mxu0 %v1704
    %2877 = vmatmul.f32.gmra.mxu0 %v2859
    %v2878 = vpop.f32.mrf.mxu0
    %v2879 = vadd.f32 0.0, %v2878
    %2880 = vdwg.mxu0
    %2881 = vmatpush.msra.mxu0 0.0
    %2882 = vmatpush.msra.mxu0 0.0
    %2883 = vmatpush.msra.mxu0 0.0
    %2884 = vmatpush.msra.mxu0 0.0
    %2885 = vmatpush.msra.mxu0 0.0
    %2886 = vmatpush.msra.mxu0 0.0
    %2887 = vmatpush.msra.mxu0 0.0
    %2888 = vmatpush.msra.mxu0 0.0
    %2889 = vmatpush.msra.mxu0 %v1720
    %2890 = vmatpush.msra.mxu0 %v1719
    %2891 = vmatpush.msra.mxu0 %v1718
    %2892 = vmatpush.msra.mxu0 %v1717
    %2893 = vmatpush.msra.mxu0 %v1716
    %2894 = vmatpush.msra.mxu0 %v1715
    %2895 = vmatpush.msra.mxu0 %v1714
    %2896 = vmatpush.msra.mxu0 %v1713
    %2897 = vmatmul.f32.gmra.mxu0 %v2859
    %v2898 = vpop.f32.mrf.mxu0
    %v2899 = vadd.f32 0.0, %v2898
    %2900 = vdwg.mxu0
    %v2901 = vld [vmem:[%s315] sm:$0x3]
    %v2902 = vadd.f32 %v2901, %v2879
    %v2903 = vxor.u32 %v2902, 2147483648
    %v2904 = vmul.f32 %v2903, 1.442695
    %v2905 = vpow.pop %v2904
    %v2906 = vadd.f32 %v2905, 1.0
    %v2907 = vrcp.pop %v2906
    %v2908 = vmul.f32 %v2906, %v2907
    %v2909 = vsub.f32 1.0, %v2908
    %v2910 = vmul.f32 %v2907, %v2909
    %v2911 = vadd.f32 %v2907, %v2910
    %vm2912 = vweird.f32 %v2906
    %vm2913 = vweird.f32 %v2907
    %vm2914 = vmor %vm2912, %vm2913
    %v2915 = vsel %vm2914, %v2907, %v2911
    %v2916 = vand.u32 2147483647, %v2906
    %vm2917 = vcmp.eq.f32.partialorder %v2916, 8.507059e+37
    %v2918 = vand.u32 %v2906, 2147483648
    %v2919 = vor.u32 1.1754944e-38, %v2918
    %v2920 = vsel %vm2917, %v2919, %v2915
    %v2921 = vmul.f32 1.0, %v2920
    %v2922 = vld [vmem:[%s339] sm:$0x3]
    %v2923 = vadd.f32 %v2922, %v2899
    %v2924 = vxor.u32 %v2923, 2147483648
    %v2925 = vmul.f32 %v2924, 1.442695
    %v2926 = vpow.pop %v2925
    %v2927 = vadd.f32 %v2926, 1.0
    %v2928 = vrcp.pop %v2927
    %v2929 = vmul.f32 %v2927, %v2928
    %v2930 = vsub.f32 1.0, %v2929
    %v2931 = vmul.f32 %v2928, %v2930
    %v2932 = vadd.f32 %v2928, %v2931
    %vm2933 = vweird.f32 %v2927
    %vm2934 = vweird.f32 %v2928
    %vm2935 = vmor %vm2933, %vm2934
    %v2936 = vsel %vm2935, %v2928, %v2932
    %v2937 = vand.u32 2147483647, %v2927
    %vm2938 = vcmp.eq.f32.partialorder %v2937, 8.507059e+37
    %v2939 = vand.u32 %v2927, 2147483648
    %v2940 = vor.u32 1.1754944e-38, %v2939
    %v2941 = vsel %vm2938, %v2940, %v2936
    %v2942 = vmul.f32 1.0, %v2941
    %v2943 = vld [vmem:[%s363] sm:$0x3]
    %2944 = vmatpush.msra.mxu0 0.0
    %2945 = vmatpush.msra.mxu0 0.0
    %2946 = vmatpush.msra.mxu0 0.0
    %2947 = vmatpush.msra.mxu0 0.0
    %2948 = vmatpush.msra.mxu0 0.0
    %2949 = vmatpush.msra.mxu0 0.0
    %2950 = vmatpush.msra.mxu0 0.0
    %2951 = vmatpush.msra.mxu0 0.0
    %2952 = vmatpush.msra.mxu0 %v1729
    %2953 = vmatpush.msra.mxu0 %v1728
    %2954 = vmatpush.msra.mxu0 %v1727
    %2955 = vmatpush.msra.mxu0 %v1726
    %2956 = vmatpush.msra.mxu0 %v1725
    %2957 = vmatpush.msra.mxu0 %v1724
    %2958 = vmatpush.msra.mxu0 %v1723
    %2959 = vmatpush.msra.mxu0 %v1722
    %2960 = vmatmul.f32.gmra.mxu0 %v2859
    %v2961 = vpop.f32.mrf.mxu0
    %v2962 = vadd.f32 %v1735, %v2961
    %2963 = vdwg.mxu0
    %v2964 = vmul.f32 %v2921, %v2962
    %v2965 = vadd.f32 %v2943, %v2964
    %v2966 = vtanh.pop %v2965
    %v2967 = vsub.f32 %v2856, %v2966
    %v2968 = vmul.f32 %v2942, %v2967
    %v2969 = vadd.f32 %v2966, %v2968
    %2970 = vst.msk [vmem:[%s1409] sm:$0x3] %vm839, %v2969
    %v2972 = vsel %vm726, %v2969, 0
    %2974 = vmatpush.msra.mxu0 0.0
    %2975 = vmatpush.msra.mxu0 0.0
    %2976 = vmatpush.msra.mxu0 0.0
    %2977 = vmatpush.msra.mxu0 0.0
    %2978 = vmatpush.msra.mxu0 0.0
    %2979 = vmatpush.msra.mxu0 0.0
    %2980 = vmatpush.msra.mxu0 0.0
    %2981 = vmatpush.msra.mxu0 0.0
    %2982 = vmatpush.msra.mxu0 %v1711
    %2983 = vmatpush.msra.mxu0 %v1710
    %2984 = vmatpush.msra.mxu0 %v1709
    %2985 = vmatpush.msra.mxu0 %v1708
    %2986 = vmatpush.msra.mxu0 %v1707
    %2987 = vmatpush.msra.mxu0 %v1706
    %2988 = vmatpush.msra.mxu0 %v1705
    %2989 = vmatpush.msra.mxu0 %v1704
    %2990 = vmatmul.f32.gmra.mxu0 %v2972
    %v2991 = vpop.f32.mrf.mxu0
    %v2992 = vadd.f32 0.0, %v2991
    %2993 = vdwg.mxu0
    %2994 = vmatpush.msra.mxu0 0.0
    %2995 = vmatpush.msra.mxu0 0.0
    %2996 = vmatpush.msra.mxu0 0.0
    %2997 = vmatpush.msra.mxu0 0.0
    %2998 = vmatpush.msra.mxu0 0.0
    %2999 = vmatpush.msra.mxu0 0.0
    %3000 = vmatpush.msra.mxu0 0.0
    %3001 = vmatpush.msra.mxu0 0.0
    %3002 = vmatpush.msra.mxu0 %v1720
    %3003 = vmatpush.msra.mxu0 %v1719
    %3004 = vmatpush.msra.mxu0 %v1718
    %3005 = vmatpush.msra.mxu0 %v1717
    %3006 = vmatpush.msra.mxu0 %v1716
    %3007 = vmatpush.msra.mxu0 %v1715
    %3008 = vmatpush.msra.mxu0 %v1714
    %3009 = vmatpush.msra.mxu0 %v1713
    %3010 = vmatmul.f32.gmra.mxu0 %v2972
    %v3011 = vpop.f32.mrf.mxu0
    %v3012 = vadd.f32 0.0, %v3011
    %3013 = vdwg.mxu0
    %v3014 = vld [vmem:[%s238] sm:$0x3]
    %v3015 = vadd.f32 %v3014, %v2992
    %v3016 = vxor.u32 %v3015, 2147483648
    %v3017 = vmul.f32 %v3016, 1.442695
    %v3018 = vpow.pop %v3017
    %v3019 = vadd.f32 %v3018, 1.0
    %v3020 = vrcp.pop %v3019
    %v3021 = vmul.f32 %v3019, %v3020
    %v3022 = vsub.f32 1.0, %v3021
    %v3023 = vmul.f32 %v3020, %v3022
    %v3024 = vadd.f32 %v3020, %v3023
    %vm3025 = vweird.f32 %v3019
    %vm3026 = vweird.f32 %v3020
    %vm3027 = vmor %vm3025, %vm3026
    %v3028 = vsel %vm3027, %v3020, %v3024
    %v3029 = vand.u32 2147483647, %v3019
    %vm3030 = vcmp.eq.f32.partialorder %v3029, 8.507059e+37
    %v3031 = vand.u32 %v3019, 2147483648
    %v3032 = vor.u32 1.1754944e-38, %v3031
    %v3033 = vsel %vm3030, %v3032, %v3028
    %v3034 = vmul.f32 1.0, %v3033
    %v3035 = vld [vmem:[%s262] sm:$0x3]
    %v3036 = vadd.f32 %v3035, %v3012
    %v3037 = vxor.u32 %v3036, 2147483648
    %v3038 = vmul.f32 %v3037, 1.442695
    %v3039 = vpow.pop %v3038
    %v3040 = vadd.f32 %v3039, 1.0
    %v3041 = vrcp.pop %v3040
    %v3042 = vmul.f32 %v3040, %v3041
    %v3043 = vsub.f32 1.0, %v3042
    %v3044 = vmul.f32 %v3041, %v3043
    %v3045 = vadd.f32 %v3041, %v3044
    %vm3046 = vweird.f32 %v3040
    %vm3047 = vweird.f32 %v3041
    %vm3048 = vmor %vm3046, %vm3047
    %v3049 = vsel %vm3048, %v3041, %v3045
    %v3050 = vand.u32 2147483647, %v3040
    %vm3051 = vcmp.eq.f32.partialorder %v3050, 8.507059e+37
    %v3052 = vand.u32 %v3040, 2147483648
    %v3053 = vor.u32 1.1754944e-38, %v3052
    %v3054 = vsel %vm3051, %v3053, %v3049
    %v3055 = vmul.f32 1.0, %v3054
    %v3056 = vld [vmem:[%s286] sm:$0x3]
    %3057 = vmatpush.msra.mxu0 0.0
    %3058 = vmatpush.msra.mxu0 0.0
    %3059 = vmatpush.msra.mxu0 0.0
    %3060 = vmatpush.msra.mxu0 0.0
    %3061 = vmatpush.msra.mxu0 0.0
    %3062 = vmatpush.msra.mxu0 0.0
    %3063 = vmatpush.msra.mxu0 0.0
    %3064 = vmatpush.msra.mxu0 0.0
    %3065 = vmatpush.msra.mxu0 %v1729
    %3066 = vmatpush.msra.mxu0 %v1728
    %3067 = vmatpush.msra.mxu0 %v1727
    %3068 = vmatpush.msra.mxu0 %v1726
    %3069 = vmatpush.msra.mxu0 %v1725
    %3070 = vmatpush.msra.mxu0 %v1724
    %3071 = vmatpush.msra.mxu0 %v1723
    %3072 = vmatpush.msra.mxu0 %v1722
    %3073 = vmatmul.f32.gmra.mxu0 %v2972
    %v3074 = vpop.f32.mrf.mxu0
    %v3075 = vadd.f32 %v1735, %v3074
    %3076 = vdwg.mxu0
    %v3077 = vmul.f32 %v3034, %v3075
    %v3078 = vadd.f32 %v3056, %v3077
    %v3079 = vtanh.pop %v3078
    %v3080 = vsub.f32 %v2969, %v3079
    %v3081 = vmul.f32 %v3055, %v3080
    %v3082 = vadd.f32 %v3079, %v3081
    %3083 = vst.msk [vmem:[%s1523] sm:$0x3] %vm839, %v3082
    %v3085 = vsel %vm726, %v3082, 0
    %3087 = vmatpush.msra.mxu0 0.0
    %3088 = vmatpush.msra.mxu0 0.0
    %3089 = vmatpush.msra.mxu0 0.0
    %3090 = vmatpush.msra.mxu0 0.0
    %3091 = vmatpush.msra.mxu0 0.0
    %3092 = vmatpush.msra.mxu0 0.0
    %3093 = vmatpush.msra.mxu0 0.0
    %3094 = vmatpush.msra.mxu0 0.0
    %3095 = vmatpush.msra.mxu0 %v1711
    %3096 = vmatpush.msra.mxu0 %v1710
    %3097 = vmatpush.msra.mxu0 %v1709
    %3098 = vmatpush.msra.mxu0 %v1708
    %3099 = vmatpush.msra.mxu0 %v1707
    %3100 = vmatpush.msra.mxu0 %v1706
    %3101 = vmatpush.msra.mxu0 %v1705
    %3102 = vmatpush.msra.mxu0 %v1704
    %3103 = vmatmul.f32.gmra.mxu0 %v3085
    %v3104 = vpop.f32.mrf.mxu0
    %v3105 = vadd.f32 0.0, %v3104
    %3106 = vdwg.mxu0
    %3107 = vmatpush.msra.mxu0 0.0
    %3108 = vmatpush.msra.mxu0 0.0
    %3109 = vmatpush.msra.mxu0 0.0
    %3110 = vmatpush.msra.mxu0 0.0
    %3111 = vmatpush.msra.mxu0 0.0
    %3112 = vmatpush.msra.mxu0 0.0
    %3113 = vmatpush.msra.mxu0 0.0
    %3114 = vmatpush.msra.mxu0 0.0
    %3115 = vmatpush.msra.mxu0 %v1720
    %3116 = vmatpush.msra.mxu0 %v1719
    %3117 = vmatpush.msra.mxu0 %v1718
    %3118 = vmatpush.msra.mxu0 %v1717
    %3119 = vmatpush.msra.mxu0 %v1716
    %3120 = vmatpush.msra.mxu0 %v1715
    %3121 = vmatpush.msra.mxu0 %v1714
    %3122 = vmatpush.msra.mxu0 %v1713
    %3123 = vmatmul.f32.gmra.mxu0 %v3085
    %v3124 = vpop.f32.mrf.mxu0
    %v3125 = vadd.f32 0.0, %v3124
    %3126 = vdwg.mxu0
    %v3127 = vld [vmem:[%s162] sm:$0x3]
    %v3128 = vadd.f32 %v3127, %v3105
    %v3129 = vxor.u32 %v3128, 2147483648
    %v3130 = vmul.f32 %v3129, 1.442695
    %v3131 = vpow.pop %v3130
    %v3132 = vadd.f32 %v3131, 1.0
    %v3133 = vrcp.pop %v3132
    %v3134 = vmul.f32 %v3132, %v3133
    %v3135 = vsub.f32 1.0, %v3134
    %v3136 = vmul.f32 %v3133, %v3135
    %v3137 = vadd.f32 %v3133, %v3136
    %vm3138 = vweird.f32 %v3132
    %vm3139 = vweird.f32 %v3133
    %vm3140 = vmor %vm3138, %vm3139
    %v3141 = vsel %vm3140, %v3133, %v3137
    %v3142 = vand.u32 2147483647, %v3132
    %vm3143 = vcmp.eq.f32.partialorder %v3142, 8.507059e+37
    %v3144 = vand.u32 %v3132, 2147483648
    %v3145 = vor.u32 1.1754944e-38, %v3144
    %v3146 = vsel %vm3143, %v3145, %v3141
    %v3147 = vmul.f32 1.0, %v3146
    %v3148 = vld [vmem:[%s186] sm:$0x3]
    %v3149 = vadd.f32 %v3148, %v3125
    %v3150 = vxor.u32 %v3149, 2147483648
    %v3151 = vmul.f32 %v3150, 1.442695
    %v3152 = vpow.pop %v3151
    %v3153 = vadd.f32 %v3152, 1.0
    %v3154 = vrcp.pop %v3153
    %v3155 = vmul.f32 %v3153, %v3154
    %v3156 = vsub.f32 1.0, %v3155
    %v3157 = vmul.f32 %v3154, %v3156
    %v3158 = vadd.f32 %v3154, %v3157
    %vm3159 = vweird.f32 %v3153
    %vm3160 = vweird.f32 %v3154
    %vm3161 = vmor %vm3159, %vm3160
    %v3162 = vsel %vm3161, %v3154, %v3158
    %v3163 = vand.u32 2147483647, %v3153
    %vm3164 = vcmp.eq.f32.partialorder %v3163, 8.507059e+37
    %v3165 = vand.u32 %v3153, 2147483648
    %v3166 = vor.u32 1.1754944e-38, %v3165
    %v3167 = vsel %vm3164, %v3166, %v3162
    %v3168 = vmul.f32 1.0, %v3167
    %v3169 = vld [vmem:[%s209] sm:$0x3]
    %3170 = vmatpush.msra.mxu0 0.0
    %3171 = vmatpush.msra.mxu0 0.0
    %3172 = vmatpush.msra.mxu0 0.0
    %3173 = vmatpush.msra.mxu0 0.0
    %3174 = vmatpush.msra.mxu0 0.0
    %3175 = vmatpush.msra.mxu0 0.0
    %3176 = vmatpush.msra.mxu0 0.0
    %3177 = vmatpush.msra.mxu0 0.0
    %3178 = vmatpush.msra.mxu0 %v1729
    %3179 = vmatpush.msra.mxu0 %v1728
    %3180 = vmatpush.msra.mxu0 %v1727
    %3181 = vmatpush.msra.mxu0 %v1726
    %3182 = vmatpush.msra.mxu0 %v1725
    %3183 = vmatpush.msra.mxu0 %v1724
    %3184 = vmatpush.msra.mxu0 %v1723
    %3185 = vmatpush.msra.mxu0 %v1722
    %3186 = vmatmul.f32.gmra.mxu0 %v3085
    %v3187 = vpop.f32.mrf.mxu0
    %v3188 = vadd.f32 %v1735, %v3187
    %3189 = vdwg.mxu0
    %v3190 = vmul.f32 %v3147, %v3188
    %v3191 = vadd.f32 %v3169, %v3190
    %v3192 = vtanh.pop %v3191
    %v3193 = vsub.f32 %v3082, %v3192
    %v3194 = vmul.f32 %v3168, %v3193
    %v3195 = vadd.f32 %v3192, %v3194
    %3196 = vst.msk [vmem:[%s1637] sm:$0x3] %vm839, %v3195
    %v3197 = vld [vmem:[#allocation5] sm:$0x3]
    %v3198 = vld [vmem:[%s1637] sm:$0x3]
    %3200 = vrot.lane.b32.xlu0 %v3197, 64
    %v3201 = vpop.permute.xlu0 %3200
    %vm3203 = vcmask 779776
    %3204 = vst.msk [vmem:[%s9] sm:$0x3] %vm3203, %v3201
    %3206 = vrot.lane.b32.xlu0 %v3198, 64
    %v3207 = vpop.permute.xlu0 %3206
    %vm3209 = vcmask 1042176
    %3210 = vst.msk [vmem:[%s9] sm:$0x3] %vm3209, %v3207
    %v3211 = vld [vmem:[%s953] sm:$0x3]
    %v3212 = vld [vmem:[%s1523] sm:$0x3]
    %3214 = vrot.lane.b32.xlu0 %v3211, 64
    %v3215 = vpop.permute.xlu0 %3214
    %3217 = vst.msk [vmem:[%s1645] sm:$0x3] %vm3203, %v3215
    %3219 = vrot.lane.b32.xlu0 %v3212, 64
    %v3220 = vpop.permute.xlu0 %3219
    %3222 = vst.msk [vmem:[%s1645] sm:$0x3] %vm3209, %v3220
    %v3223 = vld [vmem:[%s1067] sm:$0x3]
    %v3224 = vld [vmem:[%s1409] sm:$0x3]
    %3226 = vrot.lane.b32.xlu0 %v3223, 64
    %v3227 = vpop.permute.xlu0 %3226
    %3229 = vst.msk [vmem:[%s1650] sm:$0x3] %vm3203, %v3227
    %3231 = vrot.lane.b32.xlu0 %v3224, 64
    %v3232 = vpop.permute.xlu0 %3231
    %3234 = vst.msk [vmem:[%s1650] sm:$0x3] %vm3209, %v3232
    %v3235 = vld [vmem:[%s1181] sm:$0x3]
    %v3236 = vld [vmem:[%s1295] sm:$0x3]
    %3238 = vrot.lane.b32.xlu0 %v3235, 64
    %v3239 = vpop.permute.xlu0 %3238
    %3241 = vst.msk [vmem:[%s1655] sm:$0x3] %vm3203, %v3239
    %3243 = vrot.lane.b32.xlu0 %v3236, 64
    %v3244 = vpop.permute.xlu0 %3243
    %3246 = vst.msk [vmem:[%s1655] sm:$0x3] %vm3209, %v3244
    %v3247 = vld [vmem:[%s1295] sm:$0x3]
    %v3248 = vld [vmem:[%s1181] sm:$0x3]
    %3250 = vrot.lane.b32.xlu0 %v3247, 64
    %v3251 = vpop.permute.xlu0 %3250
    %3253 = vst.msk [vmem:[%s1660] sm:$0x3] %vm3203, %v3251
    %3255 = vrot.lane.b32.xlu0 %v3248, 64
    %v3256 = vpop.permute.xlu0 %3255
    %3258 = vst.msk [vmem:[%s1660] sm:$0x3] %vm3209, %v3256
    %v3259 = vld [vmem:[%s1409] sm:$0x3]
    %v3260 = vld [vmem:[%s1067] sm:$0x3]
    %3262 = vrot.lane.b32.xlu0 %v3259, 64
    %v3263 = vpop.permute.xlu0 %3262
    %3265 = vst.msk [vmem:[%s1665] sm:$0x3] %vm3203, %v3263
    %3267 = vrot.lane.b32.xlu0 %v3260, 64
    %v3268 = vpop.permute.xlu0 %3267
    %3270 = vst.msk [vmem:[%s1665] sm:$0x3] %vm3209, %v3268
    %v3271 = vld [vmem:[%s1523] sm:$0x3]
    %v3272 = vld [vmem:[%s953] sm:$0x3]
    %3274 = vrot.lane.b32.xlu0 %v3271, 64
    %v3275 = vpop.permute.xlu0 %3274
    %3277 = vst.msk [vmem:[%s1670] sm:$0x3] %vm3203, %v3275
    %3279 = vrot.lane.b32.xlu0 %v3272, 64
    %v3280 = vpop.permute.xlu0 %3279
    %3282 = vst.msk [vmem:[%s1670] sm:$0x3] %vm3209, %v3280
    %v3283 = vld [vmem:[%s1637] sm:$0x3]
    %v3284 = vld [vmem:[#allocation5] sm:$0x3]
    %3286 = vrot.lane.b32.xlu0 %v3283, 64
    %v3287 = vpop.permute.xlu0 %3286
    %3289 = vst.msk [vmem:[%s1675] sm:$0x3] %vm3203, %v3287
    %3291 = vrot.lane.b32.xlu0 %v3284, 64
    %v3292 = vpop.permute.xlu0 %3291
    %3294 = vst.msk [vmem:[%s1675] sm:$0x3] %vm3209, %v3292
    // Predicated region
    $region54: #{_lambda_.1} parent=1 // pred_check
      _
    $region55: #{_lambda_.1} parent=1 // pred_check_branch
      %3296 = sbr.rel (0) target = $region57
    $region56: #{_lambda_.1} parent=1 // pred_region
      _
    $region57: #{_lambda_.1} parent=1 // pred_fallthru
      _
    // Predicated region
    $region58: #{_lambda_.1} parent=1 // pred_check
      _
    $region59: #{_lambda_.1} parent=1 // pred_check_branch
      %3298 = sbr.rel (0) target = $region61
    $region60: #{_lambda_.1} parent=1 // pred_region
      _
    $region61: #{_lambda_.1} parent=1 // pred_fallthru
      _
    %3299 = vsyncpa [#allocation7], 1
    %3300 = vsyncpa [#allocation9], 1
    %3301 = vsyncpa [#allocation12], 1

</llo_original>
